<compile_context>
chip_gen: v7x
topology: tpu7x:2x2x1
jax: 0.10.0
libtpu: 0.0.40
codegen_flags: <defaults>
</compile_context>

<pallas_src>
import functools

import jax
import jax.numpy as jnp
from jax import lax
from jax.experimental import pallas as pl
from jax.experimental.pallas import tpu as pltpu

NEG = -1e30  # fill for padded logit lanes so argmax never picks a pad column


# ----------------------------------------------------------------------------- kernel ---
def seq2seq_kernel(tf_ref,                        # SMEM (T_trg,) i32 teacher-forcing mask
                   src_oh_ref, trg_oh_ref,        # VMEM (T_src,Bp,Vsp) / (T_trg,Bp,Vtp) bf16
                   enc_w_ref, enc_whh_ref, enc_b_ref,   # fused (Vsp,4Hp) bf16, (Hp,4Hp) bf16, (Bp,4Hp) f32
                   dec_w_ref, dec_whh_ref, dec_b_ref,
                   wout_ref, bout_ref,            # (Hp,Vtp) bf16, (Bp,Vtp) f32
                   out_ref,                       # VMEM (T_trg,Bp,Vtp) f32
                   h_sc, c_sc, tok_sc):           # scratch (Bp,Hp) f32, (Bp,Hp) f32, (Bp,Vtp) bf16
    t_src, bp, _ = src_oh_ref.shape
    t_trg = trg_oh_ref.shape[0]
    hp = h_sc.shape[-1]
    vtp = out_ref.shape[-1]

    h_sc[...] = jnp.zeros_like(h_sc)
    c_sc[...] = jnp.zeros_like(c_sc)

    # -------- loop invariants hoisted out of the sequential time loops --------
    enc_bias = enc_b_ref[...]                                   # (Bp, 4Hp) f32, pre-broadcast
    dec_bias = dec_b_ref[...]
    out_bias = bout_ref[...]                                    # (Bp, Vtp) f32 (pad lanes = NEG)
    vidx = lax.broadcasted_iota(jnp.int32, (bp, vtp), 1)

    def cell(x_gates, whh_ref, bias):
        # x_gates already contains the fused (embedding @ W_ih) contribution.
        gates = (x_gates
                 + jnp.dot(h_sc[...].astype(jnp.bfloat16), whh_ref[...],
                           preferred_element_type=jnp.float32)
                 + bias)
        # Hp-aligned gate slabs -> pure 128-lane vreg slices, no cross-lane relayout.
        i = jax.nn.sigmoid(gates[:, 0 * hp:1 * hp])
        f = jax.nn.sigmoid(gates[:, 1 * hp:2 * hp])
        g = jnp.tanh(gates[:, 2 * hp:3 * hp])
        o = jax.nn.sigmoid(gates[:, 3 * hp:4 * hp])
        c_new = f * c_sc[...] + i * g
        c_sc[...] = c_new
        h_sc[...] = o * jnp.tanh(c_new)

    # ---------------- encoder: run LSTM over src, keep final (h, c) ----------------
    def enc_step(t, carry):
        x_gates = jnp.dot(src_oh_ref[t], enc_w_ref[...],
                          preferred_element_type=jnp.float32)   # one-hot -> fused gate preact
        cell(x_gates, enc_whh_ref, enc_bias)
        return carry

    lax.fori_loop(0, t_src, enc_step, 0, unroll=True)

    # ---------------- decoder: sequential greedy / teacher-forced decode ----------------
    out_ref[0] = jnp.zeros((bp, vtp), jnp.float32)              # outputs[:, 0, :] stays zero
    tok_sc[...] = trg_oh_ref[0]                                 # input_token = trg[:, 0]

    def dec_step(t, carry):
        x_gates = jnp.dot(tok_sc[...], dec_w_ref[...],
                          preferred_element_type=jnp.float32)
        cell(x_gates, dec_whh_ref, dec_bias)

        logits = (jnp.dot(h_sc[...].astype(jnp.bfloat16), wout_ref[...],
                          preferred_element_type=jnp.float32) + out_bias)
        out_ref[t] = logits                                     # (8,128) full-tile store

        # argmax -> one-hot of first max index (pad lanes hold NEG, never selected)
        maxv = jnp.max(logits, axis=-1, keepdims=True)
        idx = jnp.min(jnp.where(logits >= maxv, vidx, vtp), axis=-1, keepdims=True)
        top = (vidx == idx).astype(jnp.bfloat16)

        tok_sc[...] = jnp.where(tf_ref[t] > 0, trg_oh_ref[t], top)
        return carry

    lax.fori_loop(1, t_trg, dec_step, 0, unroll=True)


# --------------------------------------------------------------------------- wrappers ---
def _pad_gate_cols(w, h, hp):
    """(R, 4h) -> (R, 4hp): zero-pad each of the 4 gate blocks from h to hp columns."""
    r = w.shape[0]
    w4 = jnp.pad(w.reshape(r, 4, h), ((0, 0), (0, 0), (0, hp - h)))
    return w4.reshape(r, 4 * hp)


def _pad_rows(w, rows):
    return jnp.pad(w, ((0, rows - w.shape[0]), (0, 0)))


def prepare_params(params):
    """Fuse emb@W_ih, pad gates/vocab to 128 lanes, cast weights to bf16.

    Returns (kernel_params, ref_params); ref_params are the SAME bf16-rounded weights
    (dequantized, unpadded) so the pure-JAX reference mirrors the kernel arithmetic."""
    h = params["enc_whh"].shape[0]
    v_src = params["enc_emb"].shape[0]
    v_trg = params["dec_emb"].shape[0]
    hp = pl.cdiv(h, 128) * 128
    vsp = pl.cdiv(v_src, 128) * 128
    vtp = pl.cdiv(v_trg, 128) * 128

    # fold embedding lookup into the input->gates weight (one MXU dot per step)
    enc_win = (params["enc_emb"] @ params["enc_wih"]).astype(jnp.bfloat16)   # (Vs, 4H)
    dec_win = (params["dec_emb"] @ params["dec_wih"]).astype(jnp.bfloat16)   # (Vt, 4H)
    enc_whh = params["enc_whh"].astype(jnp.bfloat16)
    dec_whh = params["dec_whh"].astype(jnp.bfloat16)
    wout = params["wout"].astype(jnp.bfloat16)

    kparams = {
        "enc_w":   _pad_rows(_pad_gate_cols(enc_win, h, hp), vsp),   # (Vsp, 4Hp) bf16
        "enc_whh": _pad_rows(_pad_gate_cols(enc_whh, h, hp), hp),    # (Hp, 4Hp) bf16
        "enc_b":   _pad_gate_cols(params["enc_b"], h, hp),           # (1, 4Hp) f32
        "dec_w":   _pad_rows(_pad_gate_cols(dec_win, h, hp), vtp),
        "dec_whh": _pad_rows(_pad_gate_cols(dec_whh, h, hp), hp),
        "dec_b":   _pad_gate_cols(params["dec_b"], h, hp),
        "wout":    jnp.pad(wout, ((0, hp - h), (0, vtp - v_trg))),   # (Hp, Vtp) bf16
        "bout":    jnp.full((1, vtp), NEG, jnp.float32).at[:, :v_trg].set(params["bout"]),
    }
    ref_params = {
        "enc_win": enc_win.astype(jnp.float32), "enc_whh": enc_whh.astype(jnp.float32),
        "enc_b": params["enc_b"],
        "dec_win": dec_win.astype(jnp.float32), "dec_whh": dec_whh.astype(jnp.float32),
        "dec_b": params["dec_b"],
        "wout": wout.astype(jnp.float32), "bout": params["bout"],
    }
    return kparams, ref_params


@functools.partial(jax.jit, static_argnames=("v_trg",))
def lstm_seq2seq(kparams, src, trg, tf_mask, *, v_trg):
    """src: (B,T_src) i32, trg: (B,T_trg) i32, tf_mask: (T_trg,) i32 -> (B,T_trg,V_trg) f32."""
    b, t_src = src.shape
    _, t_trg = trg.shape
    vsp = kparams["enc_w"].shape[0]
    hp, g = kparams["enc_whh"].shape
    vtp = kparams["wout"].shape[1]
    bp = ((b + 7) // 8) * 8                                     # sublane-full batch

    # one-hot token streams (bf16, exact), time-major, batch padded to Bp
    src_oh = jnp.transpose(jax.nn.one_hot(src, vsp, dtype=jnp.bfloat16), (1, 0, 2))
    trg_oh = jnp.transpose(jax.nn.one_hot(trg, vtp, dtype=jnp.bfloat16), (1, 0, 2))
    src_oh = jnp.pad(src_oh, ((0, 0), (0, bp - b), (0, 0)))
    trg_oh = jnp.pad(trg_oh, ((0, 0), (0, bp - b), (0, 0)))

    # biases pre-broadcast once outside the kernel (no per-step broadcast_in_dim inside)
    enc_b = jnp.broadcast_to(kparams["enc_b"], (bp, g))
    dec_b = jnp.broadcast_to(kparams["dec_b"], (bp, g))
    bout = jnp.broadcast_to(kparams["bout"], (bp, vtp))

    vmem = pl.BlockSpec(memory_space=pltpu.MemorySpace.VMEM)
    smem = pl.BlockSpec(memory_space=pltpu.MemorySpace.SMEM)

    flops = 2 * (t_src * (bp * vsp * g + bp * hp * g)
                 + (t_trg - 1) * (bp * vtp * g + bp * hp * g + bp * hp * vtp))
    transcendentals = (t_src + t_trg - 1) * bp * 5 * hp
    bytes_accessed = int(
        src_oh.size * 2 + trg_oh.size * 2
        + sum(int(v.size) * v.dtype.itemsize for v in kparams.values())
        + (2 * bp * g + bp * vtp) * 4
        + t_trg * bp * vtp * 4)

    out_tm = pl.pallas_call(
        seq2seq_kernel,
        out_shape=jax.ShapeDtypeStruct((t_trg, bp, vtp), jnp.float32),
        in_specs=[smem] + [vmem] * 10,
        out_specs=vmem,
        scratch_shapes=[
            pltpu.VMEM((bp, hp), jnp.float32),      # h
            pltpu.VMEM((bp, hp), jnp.float32),      # c
            pltpu.VMEM((bp, vtp), jnp.bfloat16),    # current input token (one-hot)
        ],
        compiler_params=pltpu.CompilerParams(vmem_limit_bytes=16 * 1024 * 1024),
        cost_estimate=pl.CostEstimate(flops=flops, transcendentals=transcendentals,
                                      bytes_accessed=bytes_accessed),
    )(tf_mask, src_oh, trg_oh,
      kparams["enc_w"], kparams["enc_whh"], enc_b,
      kparams["dec_w"], kparams["dec_whh"], dec_b,
      kparams["wout"], bout)

    # time-major -> batch-major, drop batch/vocab padding (negligible at these sizes)
    return jnp.transpose(out_tm, (1, 0, 2))[:b, :, :v_trg]


# ----------------------------------------------------------------- init & reference ----
def init_params(key, v_src, v_trg, e, h):
    """Deterministic init, uniform(-0.08, 0.08) like LSTMSeq2seq.init_weights()."""
    def u(k, shape):
        return jax.random.uniform(k, shape, jnp.float32, -0.08, 0.08)
    ks = jax.random.split(key, 12)
    return {
        "enc_emb": u(ks[0], (v_src, e)),
        "enc_wih": u(ks[1], (e, 4 * h)),
        "enc_whh": u(ks[2], (h, 4 * h)),
        "enc_b":   u(ks[3], (1, 4 * h)) + u(ks[4], (1, 4 * h)),   # b_ih + b_hh
        "dec_emb": u(ks[5], (v_trg, e)),
        "dec_wih": u(ks[6], (e, 4 * h)),
        "dec_whh": u(ks[7], (h, 4 * h)),
        "dec_b":   u(ks[8], (1, 4 * h)) + u(ks[9], (1, 4 * h)),
        "wout":    u(ks[10], (h, v_trg)),
        "bout":    u(ks[11], (1, v_trg)),
    }


def reference(ref_params, src, trg, tf_mask):
    """Pure-JAX mirror of the PyTorch forward, using the same bf16-rounded weights and
    f32 accumulation as the kernel (so greedy decode decisions agree)."""
    b, t_trg = trg.shape
    h_dim = ref_params["enc_whh"].shape[0]
    v_trg = ref_params["wout"].shape[1]

    def q(x):  # mirror the kernel's bf16 rounding of MXU operands
        return x.astype(jnp.bfloat16).astype(jnp.float32)

    def cell(xg, h, c, whh, bias):
        gates = xg + q(h) @ whh + bias
        i = jax.nn.sigmoid(gates[:, :h_dim])
        f = jax.nn.sigmoid(gates[:, h_dim:2 * h_dim])
        g = jnp.tanh(gates[:, 2 * h_dim:3 * h_dim])
        o = jax.nn.sigmoid(gates[:, 3 * h_dim:])
        c = f * c + i * g
        return o * jnp.tanh(c), c

    h = jnp.zeros((b, h_dim), jnp.float32)
    c = jnp.zeros((b, h_dim), jnp.float32)
    for t in range(src.shape[1]):
        h, c = cell(ref_params["enc_win"][src[:, t]], h, c,
                    ref_params["enc_whh"], ref_params["enc_b"])

    outputs = [jnp.zeros((b, v_trg), jnp.float32)]
    tok = trg[:, 0]
    for t in range(1, t_trg):
        h, c = cell(ref_params["dec_win"][tok], h, c,
                    ref_params["dec_whh"], ref_params["dec_b"])
        logits = q(h) @ ref_params["wout"] + ref_params["bout"]
        outputs.append(logits)
        top = jnp.argmax(logits, axis=-1).astype(jnp.int32)
        tok = jnp.where(tf_mask[t] > 0, trg[:, t], top)
    return jnp.stack(outputs, axis=1)


# --------------------------------------------------------------------------------- main -
if __name__ == "__main__":
    B, T_SRC, T_TRG = 4, 8, 8
    V_SRC, V_TRG, E, H = 48, 48, 16, 32
    TF_RATIO = 0.5

    key = jax.random.PRNGKey(0)
    kp, ks, kt, kf = jax.random.split(key, 4)

    params = init_params(kp, V_SRC, V_TRG, E, H)
    kparams, ref_params = prepare_params(params)

    src = jax.random.randint(ks, (B, T_SRC), 0, V_SRC, dtype=jnp.int32)
    trg = jax.random.randint(kt, (B, T_TRG), 0, V_TRG, dtype=jnp.int32)
    # deterministic stand-in for python random.random() < tf_ratio per step
    tf_mask = (jax.random.uniform(kf, (T_TRG,)) < TF_RATIO).astype(jnp.int32)

    out = lstm_seq2seq(kparams, src, trg, tf_mask, v_trg=V_TRG)
    jax.block_until_ready(out)

    ref = reference(ref_params, src, trg, tf_mask)
    assert out.shape == (B, T_TRG, V_TRG), out.shape
    assert bool(jnp.all(jnp.isfinite(out)))
    assert bool(jnp.allclose(out, ref, atol=5e-3, rtol=1e-3)), "mismatch vs reference"

    print("KERNEL_OK")
</pallas_src>

<mosaic_0001>
module attributes {stable_mosaic.version = 11 : i64} {
  func.func @seq2seq_kernel(%arg0: memref<8xi32, #tpu.memory_space<smem>>, %arg1: memref<8x8x128xbf16, #tpu.memory_space<vmem>>, %arg2: memref<8x8x128xbf16, #tpu.memory_space<vmem>>, %arg3: memref<128x512xbf16, #tpu.memory_space<vmem>>, %arg4: memref<128x512xbf16, #tpu.memory_space<vmem>>, %arg5: memref<8x512xf32, #tpu.memory_space<vmem>>, %arg6: memref<128x512xbf16, #tpu.memory_space<vmem>>, %arg7: memref<128x512xbf16, #tpu.memory_space<vmem>>, %arg8: memref<8x512xf32, #tpu.memory_space<vmem>>, %arg9: memref<128x128xbf16, #tpu.memory_space<vmem>>, %arg10: memref<8x128xf32, #tpu.memory_space<vmem>>, %arg11: memref<8x8x128xf32, #tpu.memory_space<vmem>>, %arg12: memref<8x128xf32, #tpu.memory_space<vmem>>, %arg13: memref<8x128xf32, #tpu.memory_space<vmem>>, %arg14: memref<8x128xbf16, #tpu.memory_space<vmem>>) attributes {dimension_semantics = [], scalar_prefetch = 0 : i64, scratch_operands = 3 : i64, tpu.core_type = #tpu.core_type<tc>} {
    %cst = arith.constant 0.000000e+00 : f32
    %0 = vector.broadcast %cst : f32 to vector<8x128xf32>
    %c0 = arith.constant 0 : index
    %c0_0 = arith.constant 0 : index
    %1 = vector.load %arg12[%c0, %c0_0] : memref<8x128xf32, #tpu.memory_space<vmem>>, vector<8x128xf32>
    tpu.vector_store %arg12[%c0, %c0_0], %0 {strides = array<i32>} : memref<8x128xf32, #tpu.memory_space<vmem>>, vector<8x128xf32>,
    %cst_1 = arith.constant 0.000000e+00 : f32
    %2 = vector.broadcast %cst_1 : f32 to vector<8x128xf32>
    %c0_2 = arith.constant 0 : index
    %c0_3 = arith.constant 0 : index
    %3 = vector.load %arg13[%c0_2, %c0_3] : memref<8x128xf32, #tpu.memory_space<vmem>>, vector<8x128xf32>
    tpu.vector_store %arg13[%c0_2, %c0_3], %2 {strides = array<i32>} : memref<8x128xf32, #tpu.memory_space<vmem>>, vector<8x128xf32>,
    %c0_4 = arith.constant 0 : index
    %c0_5 = arith.constant 0 : index
    %4 = vector.load %arg5[%c0_4, %c0_5] : memref<8x512xf32, #tpu.memory_space<vmem>>, vector<8x512xf32>
    %c0_6 = arith.constant 0 : index
    %c0_7 = arith.constant 0 : index
    %5 = vector.load %arg8[%c0_6, %c0_7] : memref<8x512xf32, #tpu.memory_space<vmem>>, vector<8x512xf32>
    %c0_8 = arith.constant 0 : index
    %c0_9 = arith.constant 0 : index
    %6 = vector.load %arg10[%c0_8, %c0_9] : memref<8x128xf32, #tpu.memory_space<vmem>>, vector<8x128xf32>
    %7 = tpu.iota {dimensions = array<i32: 1>} : vector<8x128xi32>
    %c0_i32 = arith.constant 0 : i32
    %8 = arith.index_cast %c0_i32 : i32 to index
    %c0_10 = arith.constant 0 : index
    %c0_11 = arith.constant 0 : index
    %9 = vector.load %arg1[%8, %c0_10, %c0_11] : memref<8x8x128xbf16, #tpu.memory_space<vmem>>, vector<1x8x128xbf16>
    %10 = vector.shape_cast %9 : vector<1x8x128xbf16> to vector<8x128xbf16>
    %c0_12 = arith.constant 0 : index
    %c0_13 = arith.constant 0 : index
    %11 = vector.load %arg3[%c0_12, %c0_13] : memref<128x512xbf16, #tpu.memory_space<vmem>>, vector<128x512xbf16>
    %cst_14 = arith.constant dense<0.000000e+00> : vector<8x512xf32>
    %12 = tpu.matmul %10, %11, %cst_14 {dimension_numbers = #tpu.dot_dimension_numbers<[1], [0], [0], [1], [0, 0, 1, 1], [], []>} : vector<8x128xbf16>, vector<128x512xbf16>, vector<8x512xf32> -> vector<8x512xf32>
    %c0_15 = arith.constant 0 : index
    %c0_16 = arith.constant 0 : index
    %13 = vector.load %arg12[%c0_15, %c0_16] : memref<8x128xf32, #tpu.memory_space<vmem>>, vector<8x128xf32>
    %14 = arith.truncf %13 : vector<8x128xf32> to vector<8x128xbf16>
    %c0_17 = arith.constant 0 : index
    %c0_18 = arith.constant 0 : index
    %15 = vector.load %arg4[%c0_17, %c0_18] : memref<128x512xbf16, #tpu.memory_space<vmem>>, vector<128x512xbf16>
    %cst_19 = arith.constant dense<0.000000e+00> : vector<8x512xf32>
    %16 = tpu.matmul %14, %15, %cst_19 {dimension_numbers = #tpu.dot_dimension_numbers<[1], [0], [0], [1], [0, 0, 1, 1], [], []>} : vector<8x128xbf16>, vector<128x512xbf16>, vector<8x512xf32> -> vector<8x512xf32>
    %17 = arith.addf %12, %16 : vector<8x512xf32>
    %18 = arith.addf %17, %4 : vector<8x512xf32>
    %19 = vector.extract_strided_slice %18 {offsets = [0, 0], sizes = [8, 128], strides = [1, 1]} : vector<8x512xf32> to vector<8x128xf32>
    %20 = arith.negf %19 : vector<8x128xf32>
    %21 = math.exp %20 : vector<8x128xf32>
    %cst_20 = arith.constant 1.000000e+00 : f32
    %22 = vector.broadcast %cst_20 : f32 to vector<8x128xf32>
    %23 = arith.addf %22, %21 : vector<8x128xf32>
    %24 = arith.divf %22, %23 : vector<8x128xf32>
    %25 = vector.extract_strided_slice %18 {offsets = [0, 128], sizes = [8, 128], strides = [1, 1]} : vector<8x512xf32> to vector<8x128xf32>
    %26 = arith.negf %25 : vector<8x128xf32>
    %27 = math.exp %26 : vector<8x128xf32>
    %cst_21 = arith.constant 1.000000e+00 : f32
    %28 = vector.broadcast %cst_21 : f32 to vector<8x128xf32>
    %29 = arith.addf %28, %27 : vector<8x128xf32>
    %30 = arith.divf %28, %29 : vector<8x128xf32>
    %31 = vector.extract_strided_slice %18 {offsets = [0, 256], sizes = [8, 128], strides = [1, 1]} : vector<8x512xf32> to vector<8x128xf32>
    %32 = math.tanh %31 : vector<8x128xf32>
    %33 = vector.extract_strided_slice %18 {offsets = [0, 384], sizes = [8, 128], strides = [1, 1]} : vector<8x512xf32> to vector<8x128xf32>
    %34 = arith.negf %33 : vector<8x128xf32>
    %35 = math.exp %34 : vector<8x128xf32>
    %cst_22 = arith.constant 1.000000e+00 : f32
    %36 = vector.broadcast %cst_22 : f32 to vector<8x128xf32>
    %37 = arith.addf %36, %35 : vector<8x128xf32>
    %38 = arith.divf %36, %37 : vector<8x128xf32>
    %c0_23 = arith.constant 0 : index
    %c0_24 = arith.constant 0 : index
    %39 = vector.load %arg13[%c0_23, %c0_24] : memref<8x128xf32, #tpu.memory_space<vmem>>, vector<8x128xf32>
    %40 = arith.mulf %30, %39 : vector<8x128xf32>
    %41 = arith.mulf %24, %32 : vector<8x128xf32>
    %42 = arith.addf %40, %41 : vector<8x128xf32>
    %c0_25 = arith.constant 0 : index
    %c0_26 = arith.constant 0 : index
    %43 = vector.load %arg13[%c0_25, %c0_26] : memref<8x128xf32, #tpu.memory_space<vmem>>, vector<8x128xf32>
    tpu.vector_store %arg13[%c0_25, %c0_26], %42 {strides = array<i32>} : memref<8x128xf32, #tpu.memory_space<vmem>>, vector<8x128xf32>,
    %44 = math.tanh %42 : vector<8x128xf32>
    %45 = arith.mulf %38, %44 : vector<8x128xf32>
    %c0_27 = arith.constant 0 : index
    %c0_28 = arith.constant 0 : index
    %46 = vector.load %arg12[%c0_27, %c0_28] : memref<8x128xf32, #tpu.memory_space<vmem>>, vector<8x128xf32>
    tpu.vector_store %arg12[%c0_27, %c0_28], %45 {strides = array<i32>} : memref<8x128xf32, #tpu.memory_space<vmem>>, vector<8x128xf32>,
    %c1_i32 = arith.constant 1 : i32
    %47 = arith.index_cast %c1_i32 : i32 to index
    %c0_29 = arith.constant 0 : index
    %c0_30 = arith.constant 0 : index
    %48 = vector.load %arg1[%47, %c0_29, %c0_30] : memref<8x8x128xbf16, #tpu.memory_space<vmem>>, vector<1x8x128xbf16>
    %49 = vector.shape_cast %48 : vector<1x8x128xbf16> to vector<8x128xbf16>
    %c0_31 = arith.constant 0 : index
    %c0_32 = arith.constant 0 : index
    %50 = vector.load %arg3[%c0_31, %c0_32] : memref<128x512xbf16, #tpu.memory_space<vmem>>, vector<128x512xbf16>
    %cst_33 = arith.constant dense<0.000000e+00> : vector<8x512xf32>
    %51 = tpu.matmul %49, %50, %cst_33 {dimension_numbers = #tpu.dot_dimension_numbers<[1], [0], [0], [1], [0, 0, 1, 1], [], []>} : vector<8x128xbf16>, vector<128x512xbf16>, vector<8x512xf32> -> vector<8x512xf32>
    %c0_34 = arith.constant 0 : index
    %c0_35 = arith.constant 0 : index
    %52 = vector.load %arg12[%c0_34, %c0_35] : memref<8x128xf32, #tpu.memory_space<vmem>>, vector<8x128xf32>
    %53 = arith.truncf %52 : vector<8x128xf32> to vector<8x128xbf16>
    %c0_36 = arith.constant 0 : index
    %c0_37 = arith.constant 0 : index
    %54 = vector.load %arg4[%c0_36, %c0_37] : memref<128x512xbf16, #tpu.memory_space<vmem>>, vector<128x512xbf16>
    %cst_38 = arith.constant dense<0.000000e+00> : vector<8x512xf32>
    %55 = tpu.matmul %53, %54, %cst_38 {dimension_numbers = #tpu.dot_dimension_numbers<[1], [0], [0], [1], [0, 0, 1, 1], [], []>} : vector<8x128xbf16>, vector<128x512xbf16>, vector<8x512xf32> -> vector<8x512xf32>
    %56 = arith.addf %51, %55 : vector<8x512xf32>
    %57 = arith.addf %56, %4 : vector<8x512xf32>
    %58 = vector.extract_strided_slice %57 {offsets = [0, 0], sizes = [8, 128], strides = [1, 1]} : vector<8x512xf32> to vector<8x128xf32>
    %59 = arith.negf %58 : vector<8x128xf32>
    %60 = math.exp %59 : vector<8x128xf32>
    %cst_39 = arith.constant 1.000000e+00 : f32
    %61 = vector.broadcast %cst_39 : f32 to vector<8x128xf32>
    %62 = arith.addf %61, %60 : vector<8x128xf32>
    %63 = arith.divf %61, %62 : vector<8x128xf32>
    %64 = vector.extract_strided_slice %57 {offsets = [0, 128], sizes = [8, 128], strides = [1, 1]} : vector<8x512xf32> to vector<8x128xf32>
    %65 = arith.negf %64 : vector<8x128xf32>
    %66 = math.exp %65 : vector<8x128xf32>
    %cst_40 = arith.constant 1.000000e+00 : f32
    %67 = vector.broadcast %cst_40 : f32 to vector<8x128xf32>
    %68 = arith.addf %67, %66 : vector<8x128xf32>
    %69 = arith.divf %67, %68 : vector<8x128xf32>
    %70 = vector.extract_strided_slice %57 {offsets = [0, 256], sizes = [8, 128], strides = [1, 1]} : vector<8x512xf32> to vector<8x128xf32>
    %71 = math.tanh %70 : vector<8x128xf32>
    %72 = vector.extract_strided_slice %57 {offsets = [0, 384], sizes = [8, 128], strides = [1, 1]} : vector<8x512xf32> to vector<8x128xf32>
    %73 = arith.negf %72 : vector<8x128xf32>
    %74 = math.exp %73 : vector<8x128xf32>
    %cst_41 = arith.constant 1.000000e+00 : f32
    %75 = vector.broadcast %cst_41 : f32 to vector<8x128xf32>
    %76 = arith.addf %75, %74 : vector<8x128xf32>
    %77 = arith.divf %75, %76 : vector<8x128xf32>
    %c0_42 = arith.constant 0 : index
    %c0_43 = arith.constant 0 : index
    %78 = vector.load %arg13[%c0_42, %c0_43] : memref<8x128xf32, #tpu.memory_space<vmem>>, vector<8x128xf32>
    %79 = arith.mulf %69, %78 : vector<8x128xf32>
    %80 = arith.mulf %63, %71 : vector<8x128xf32>
    %81 = arith.addf %79, %80 : vector<8x128xf32>
    %c0_44 = arith.constant 0 : index
    %c0_45 = arith.constant 0 : index
    %82 = vector.load %arg13[%c0_44, %c0_45] : memref<8x128xf32, #tpu.memory_space<vmem>>, vector<8x128xf32>
    tpu.vector_store %arg13[%c0_44, %c0_45], %81 {strides = array<i32>} : memref<8x128xf32, #tpu.memory_space<vmem>>, vector<8x128xf32>,
    %83 = math.tanh %81 : vector<8x128xf32>
    %84 = arith.mulf %77, %83 : vector<8x128xf32>
    %c0_46 = arith.constant 0 : index
    %c0_47 = arith.constant 0 : index
    %85 = vector.load %arg12[%c0_46, %c0_47] : memref<8x128xf32, #tpu.memory_space<vmem>>, vector<8x128xf32>
    tpu.vector_store %arg12[%c0_46, %c0_47], %84 {strides = array<i32>} : memref<8x128xf32, #tpu.memory_space<vmem>>, vector<8x128xf32>,
    %c2_i32 = arith.constant 2 : i32
    %86 = arith.index_cast %c2_i32 : i32 to index
    %c0_48 = arith.constant 0 : index
    %c0_49 = arith.constant 0 : index
    %87 = vector.load %arg1[%86, %c0_48, %c0_49] : memref<8x8x128xbf16, #tpu.memory_space<vmem>>, vector<1x8x128xbf16>
    %88 = vector.shape_cast %87 : vector<1x8x128xbf16> to vector<8x128xbf16>
    %c0_50 = arith.constant 0 : index
    %c0_51 = arith.constant 0 : index
    %89 = vector.load %arg3[%c0_50, %c0_51] : memref<128x512xbf16, #tpu.memory_space<vmem>>, vector<128x512xbf16>
    %cst_52 = arith.constant dense<0.000000e+00> : vector<8x512xf32>
    %90 = tpu.matmul %88, %89, %cst_52 {dimension_numbers = #tpu.dot_dimension_numbers<[1], [0], [0], [1], [0, 0, 1, 1], [], []>} : vector<8x128xbf16>, vector<128x512xbf16>, vector<8x512xf32> -> vector<8x512xf32>
    %c0_53 = arith.constant 0 : index
    %c0_54 = arith.constant 0 : index
    %91 = vector.load %arg12[%c0_53, %c0_54] : memref<8x128xf32, #tpu.memory_space<vmem>>, vector<8x128xf32>
    %92 = arith.truncf %91 : vector<8x128xf32> to vector<8x128xbf16>
    %c0_55 = arith.constant 0 : index
    %c0_56 = arith.constant 0 : index
    %93 = vector.load %arg4[%c0_55, %c0_56] : memref<128x512xbf16, #tpu.memory_space<vmem>>, vector<128x512xbf16>
    %cst_57 = arith.constant dense<0.000000e+00> : vector<8x512xf32>
    %94 = tpu.matmul %92, %93, %cst_57 {dimension_numbers = #tpu.dot_dimension_numbers<[1], [0], [0], [1], [0, 0, 1, 1], [], []>} : vector<8x128xbf16>, vector<128x512xbf16>, vector<8x512xf32> -> vector<8x512xf32>
    %95 = arith.addf %90, %94 : vector<8x512xf32>
    %96 = arith.addf %95, %4 : vector<8x512xf32>
    %97 = vector.extract_strided_slice %96 {offsets = [0, 0], sizes = [8, 128], strides = [1, 1]} : vector<8x512xf32> to vector<8x128xf32>
    %98 = arith.negf %97 : vector<8x128xf32>
    %99 = math.exp %98 : vector<8x128xf32>
    %cst_58 = arith.constant 1.000000e+00 : f32
    %100 = vector.broadcast %cst_58 : f32 to vector<8x128xf32>
    %101 = arith.addf %100, %99 : vector<8x128xf32>
    %102 = arith.divf %100, %101 : vector<8x128xf32>
    %103 = vector.extract_strided_slice %96 {offsets = [0, 128], sizes = [8, 128], strides = [1, 1]} : vector<8x512xf32> to vector<8x128xf32>
    %104 = arith.negf %103 : vector<8x128xf32>
    %105 = math.exp %104 : vector<8x128xf32>
    %cst_59 = arith.constant 1.000000e+00 : f32
    %106 = vector.broadcast %cst_59 : f32 to vector<8x128xf32>
    %107 = arith.addf %106, %105 : vector<8x128xf32>
    %108 = arith.divf %106, %107 : vector<8x128xf32>
    %109 = vector.extract_strided_slice %96 {offsets = [0, 256], sizes = [8, 128], strides = [1, 1]} : vector<8x512xf32> to vector<8x128xf32>
    %110 = math.tanh %109 : vector<8x128xf32>
    %111 = vector.extract_strided_slice %96 {offsets = [0, 384], sizes = [8, 128], strides = [1, 1]} : vector<8x512xf32> to vector<8x128xf32>
    %112 = arith.negf %111 : vector<8x128xf32>
    %113 = math.exp %112 : vector<8x128xf32>
    %cst_60 = arith.constant 1.000000e+00 : f32
    %114 = vector.broadcast %cst_60 : f32 to vector<8x128xf32>
    %115 = arith.addf %114, %113 : vector<8x128xf32>
    %116 = arith.divf %114, %115 : vector<8x128xf32>
    %c0_61 = arith.constant 0 : index
    %c0_62 = arith.constant 0 : index
    %117 = vector.load %arg13[%c0_61, %c0_62] : memref<8x128xf32, #tpu.memory_space<vmem>>, vector<8x128xf32>
    %118 = arith.mulf %108, %117 : vector<8x128xf32>
    %119 = arith.mulf %102, %110 : vector<8x128xf32>
    %120 = arith.addf %118, %119 : vector<8x128xf32>
    %c0_63 = arith.constant 0 : index
    %c0_64 = arith.constant 0 : index
    %121 = vector.load %arg13[%c0_63, %c0_64] : memref<8x128xf32, #tpu.memory_space<vmem>>, vector<8x128xf32>
    tpu.vector_store %arg13[%c0_63, %c0_64], %120 {strides = array<i32>} : memref<8x128xf32, #tpu.memory_space<vmem>>, vector<8x128xf32>,
    %122 = math.tanh %120 : vector<8x128xf32>
    %123 = arith.mulf %116, %122 : vector<8x128xf32>
    %c0_65 = arith.constant 0 : index
    %c0_66 = arith.constant 0 : index
    %124 = vector.load %arg12[%c0_65, %c0_66] : memref<8x128xf32, #tpu.memory_space<vmem>>, vector<8x128xf32>
    tpu.vector_store %arg12[%c0_65, %c0_66], %123 {strides = array<i32>} : memref<8x128xf32, #tpu.memory_space<vmem>>, vector<8x128xf32>,
    %c3_i32 = arith.constant 3 : i32
    %125 = arith.index_cast %c3_i32 : i32 to index
    %c0_67 = arith.constant 0 : index
    %c0_68 = arith.constant 0 : index
    %126 = vector.load %arg1[%125, %c0_67, %c0_68] : memref<8x8x128xbf16, #tpu.memory_space<vmem>>, vector<1x8x128xbf16>
    %127 = vector.shape_cast %126 : vector<1x8x128xbf16> to vector<8x128xbf16>
    %c0_69 = arith.constant 0 : index
    %c0_70 = arith.constant 0 : index
    %128 = vector.load %arg3[%c0_69, %c0_70] : memref<128x512xbf16, #tpu.memory_space<vmem>>, vector<128x512xbf16>
    %cst_71 = arith.constant dense<0.000000e+00> : vector<8x512xf32>
    %129 = tpu.matmul %127, %128, %cst_71 {dimension_numbers = #tpu.dot_dimension_numbers<[1], [0], [0], [1], [0, 0, 1, 1], [], []>} : vector<8x128xbf16>, vector<128x512xbf16>, vector<8x512xf32> -> vector<8x512xf32>
    %c0_72 = arith.constant 0 : index
    %c0_73 = arith.constant 0 : index
    %130 = vector.load %arg12[%c0_72, %c0_73] : memref<8x128xf32, #tpu.memory_space<vmem>>, vector<8x128xf32>
    %131 = arith.truncf %130 : vector<8x128xf32> to vector<8x128xbf16>
    %c0_74 = arith.constant 0 : index
    %c0_75 = arith.constant 0 : index
    %132 = vector.load %arg4[%c0_74, %c0_75] : memref<128x512xbf16, #tpu.memory_space<vmem>>, vector<128x512xbf16>
    %cst_76 = arith.constant dense<0.000000e+00> : vector<8x512xf32>
    %133 = tpu.matmul %131, %132, %cst_76 {dimension_numbers = #tpu.dot_dimension_numbers<[1], [0], [0], [1], [0, 0, 1, 1], [], []>} : vector<8x128xbf16>, vector<128x512xbf16>, vector<8x512xf32> -> vector<8x512xf32>
    %134 = arith.addf %129, %133 : vector<8x512xf32>
    %135 = arith.addf %134, %4 : vector<8x512xf32>
    %136 = vector.extract_strided_slice %135 {offsets = [0, 0], sizes = [8, 128], strides = [1, 1]} : vector<8x512xf32> to vector<8x128xf32>
    %137 = arith.negf %136 : vector<8x128xf32>
    %138 = math.exp %137 : vector<8x128xf32>
    %cst_77 = arith.constant 1.000000e+00 : f32
    %139 = vector.broadcast %cst_77 : f32 to vector<8x128xf32>
    %140 = arith.addf %139, %138 : vector<8x128xf32>
    %141 = arith.divf %139, %140 : vector<8x128xf32>
    %142 = vector.extract_strided_slice %135 {offsets = [0, 128], sizes = [8, 128], strides = [1, 1]} : vector<8x512xf32> to vector<8x128xf32>
    %143 = arith.negf %142 : vector<8x128xf32>
    %144 = math.exp %143 : vector<8x128xf32>
    %cst_78 = arith.constant 1.000000e+00 : f32
    %145 = vector.broadcast %cst_78 : f32 to vector<8x128xf32>
    %146 = arith.addf %145, %144 : vector<8x128xf32>
    %147 = arith.divf %145, %146 : vector<8x128xf32>
    %148 = vector.extract_strided_slice %135 {offsets = [0, 256], sizes = [8, 128], strides = [1, 1]} : vector<8x512xf32> to vector<8x128xf32>
    %149 = math.tanh %148 : vector<8x128xf32>
    %150 = vector.extract_strided_slice %135 {offsets = [0, 384], sizes = [8, 128], strides = [1, 1]} : vector<8x512xf32> to vector<8x128xf32>
    %151 = arith.negf %150 : vector<8x128xf32>
    %152 = math.exp %151 : vector<8x128xf32>
    %cst_79 = arith.constant 1.000000e+00 : f32
    %153 = vector.broadcast %cst_79 : f32 to vector<8x128xf32>
    %154 = arith.addf %153, %152 : vector<8x128xf32>
    %155 = arith.divf %153, %154 : vector<8x128xf32>
    %c0_80 = arith.constant 0 : index
    %c0_81 = arith.constant 0 : index
    %156 = vector.load %arg13[%c0_80, %c0_81] : memref<8x128xf32, #tpu.memory_space<vmem>>, vector<8x128xf32>
    %157 = arith.mulf %147, %156 : vector<8x128xf32>
    %158 = arith.mulf %141, %149 : vector<8x128xf32>
    %159 = arith.addf %157, %158 : vector<8x128xf32>
    %c0_82 = arith.constant 0 : index
    %c0_83 = arith.constant 0 : index
    %160 = vector.load %arg13[%c0_82, %c0_83] : memref<8x128xf32, #tpu.memory_space<vmem>>, vector<8x128xf32>
    tpu.vector_store %arg13[%c0_82, %c0_83], %159 {strides = array<i32>} : memref<8x128xf32, #tpu.memory_space<vmem>>, vector<8x128xf32>,
    %161 = math.tanh %159 : vector<8x128xf32>
    %162 = arith.mulf %155, %161 : vector<8x128xf32>
    %c0_84 = arith.constant 0 : index
    %c0_85 = arith.constant 0 : index
    %163 = vector.load %arg12[%c0_84, %c0_85] : memref<8x128xf32, #tpu.memory_space<vmem>>, vector<8x128xf32>
    tpu.vector_store %arg12[%c0_84, %c0_85], %162 {strides = array<i32>} : memref<8x128xf32, #tpu.memory_space<vmem>>, vector<8x128xf32>,
    %c4_i32 = arith.constant 4 : i32
    %164 = arith.index_cast %c4_i32 : i32 to index
    %c0_86 = arith.constant 0 : index
    %c0_87 = arith.constant 0 : index
    %165 = vector.load %arg1[%164, %c0_86, %c0_87] : memref<8x8x128xbf16, #tpu.memory_space<vmem>>, vector<1x8x128xbf16>
    %166 = vector.shape_cast %165 : vector<1x8x128xbf16> to vector<8x128xbf16>
    %c0_88 = arith.constant 0 : index
    %c0_89 = arith.constant 0 : index
    %167 = vector.load %arg3[%c0_88, %c0_89] : memref<128x512xbf16, #tpu.memory_space<vmem>>, vector<128x512xbf16>
    %cst_90 = arith.constant dense<0.000000e+00> : vector<8x512xf32>
    %168 = tpu.matmul %166, %167, %cst_90 {dimension_numbers = #tpu.dot_dimension_numbers<[1], [0], [0], [1], [0, 0, 1, 1], [], []>} : vector<8x128xbf16>, vector<128x512xbf16>, vector<8x512xf32> -> vector<8x512xf32>
    %c0_91 = arith.constant 0 : index
    %c0_92 = arith.constant 0 : index
    %169 = vector.load %arg12[%c0_91, %c0_92] : memref<8x128xf32, #tpu.memory_space<vmem>>, vector<8x128xf32>
    %170 = arith.truncf %169 : vector<8x128xf32> to vector<8x128xbf16>
    %c0_93 = arith.constant 0 : index
    %c0_94 = arith.constant 0 : index
    %171 = vector.load %arg4[%c0_93, %c0_94] : memref<128x512xbf16, #tpu.memory_space<vmem>>, vector<128x512xbf16>
    %cst_95 = arith.constant dense<0.000000e+00> : vector<8x512xf32>
    %172 = tpu.matmul %170, %171, %cst_95 {dimension_numbers = #tpu.dot_dimension_numbers<[1], [0], [0], [1], [0, 0, 1, 1], [], []>} : vector<8x128xbf16>, vector<128x512xbf16>, vector<8x512xf32> -> vector<8x512xf32>
    %173 = arith.addf %168, %172 : vector<8x512xf32>
    %174 = arith.addf %173, %4 : vector<8x512xf32>
    %175 = vector.extract_strided_slice %174 {offsets = [0, 0], sizes = [8, 128], strides = [1, 1]} : vector<8x512xf32> to vector<8x128xf32>
    %176 = arith.negf %175 : vector<8x128xf32>
    %177 = math.exp %176 : vector<8x128xf32>
    %cst_96 = arith.constant 1.000000e+00 : f32
    %178 = vector.broadcast %cst_96 : f32 to vector<8x128xf32>
    %179 = arith.addf %178, %177 : vector<8x128xf32>
    %180 = arith.divf %178, %179 : vector<8x128xf32>
    %181 = vector.extract_strided_slice %174 {offsets = [0, 128], sizes = [8, 128], strides = [1, 1]} : vector<8x512xf32> to vector<8x128xf32>
    %182 = arith.negf %181 : vector<8x128xf32>
    %183 = math.exp %182 : vector<8x128xf32>
    %cst_97 = arith.constant 1.000000e+00 : f32
    %184 = vector.broadcast %cst_97 : f32 to vector<8x128xf32>
    %185 = arith.addf %184, %183 : vector<8x128xf32>
    %186 = arith.divf %184, %185 : vector<8x128xf32>
    %187 = vector.extract_strided_slice %174 {offsets = [0, 256], sizes = [8, 128], strides = [1, 1]} : vector<8x512xf32> to vector<8x128xf32>
    %188 = math.tanh %187 : vector<8x128xf32>
    %189 = vector.extract_strided_slice %174 {offsets = [0, 384], sizes = [8, 128], strides = [1, 1]} : vector<8x512xf32> to vector<8x128xf32>
    %190 = arith.negf %189 : vector<8x128xf32>
    %191 = math.exp %190 : vector<8x128xf32>
    %cst_98 = arith.constant 1.000000e+00 : f32
    %192 = vector.broadcast %cst_98 : f32 to vector<8x128xf32>
    %193 = arith.addf %192, %191 : vector<8x128xf32>
    %194 = arith.divf %192, %193 : vector<8x128xf32>
    %c0_99 = arith.constant 0 : index
    %c0_100 = arith.constant 0 : index
    %195 = vector.load %arg13[%c0_99, %c0_100] : memref<8x128xf32, #tpu.memory_space<vmem>>, vector<8x128xf32>
    %196 = arith.mulf %186, %195 : vector<8x128xf32>
    %197 = arith.mulf %180, %188 : vector<8x128xf32>
    %198 = arith.addf %196, %197 : vector<8x128xf32>
    %c0_101 = arith.constant 0 : index
    %c0_102 = arith.constant 0 : index
    %199 = vector.load %arg13[%c0_101, %c0_102] : memref<8x128xf32, #tpu.memory_space<vmem>>, vector<8x128xf32>
    tpu.vector_store %arg13[%c0_101, %c0_102], %198 {strides = array<i32>} : memref<8x128xf32, #tpu.memory_space<vmem>>, vector<8x128xf32>,
    %200 = math.tanh %198 : vector<8x128xf32>
    %201 = arith.mulf %194, %200 : vector<8x128xf32>
    %c0_103 = arith.constant 0 : index
    %c0_104 = arith.constant 0 : index
    %202 = vector.load %arg12[%c0_103, %c0_104] : memref<8x128xf32, #tpu.memory_space<vmem>>, vector<8x128xf32>
    tpu.vector_store %arg12[%c0_103, %c0_104], %201 {strides = array<i32>} : memref<8x128xf32, #tpu.memory_space<vmem>>, vector<8x128xf32>,
    %c5_i32 = arith.constant 5 : i32
    %203 = arith.index_cast %c5_i32 : i32 to index
    %c0_105 = arith.constant 0 : index
    %c0_106 = arith.constant 0 : index
    %204 = vector.load %arg1[%203, %c0_105, %c0_106] : memref<8x8x128xbf16, #tpu.memory_space<vmem>>, vector<1x8x128xbf16>
    %205 = vector.shape_cast %204 : vector<1x8x128xbf16> to vector<8x128xbf16>
    %c0_107 = arith.constant 0 : index
    %c0_108 = arith.constant 0 : index
    %206 = vector.load %arg3[%c0_107, %c0_108] : memref<128x512xbf16, #tpu.memory_space<vmem>>, vector<128x512xbf16>
    %cst_109 = arith.constant dense<0.000000e+00> : vector<8x512xf32>
    %207 = tpu.matmul %205, %206, %cst_109 {dimension_numbers = #tpu.dot_dimension_numbers<[1], [0], [0], [1], [0, 0, 1, 1], [], []>} : vector<8x128xbf16>, vector<128x512xbf16>, vector<8x512xf32> -> vector<8x512xf32>
    %c0_110 = arith.constant 0 : index
    %c0_111 = arith.constant 0 : index
    %208 = vector.load %arg12[%c0_110, %c0_111] : memref<8x128xf32, #tpu.memory_space<vmem>>, vector<8x128xf32>
    %209 = arith.truncf %208 : vector<8x128xf32> to vector<8x128xbf16>
    %c0_112 = arith.constant 0 : index
    %c0_113 = arith.constant 0 : index
    %210 = vector.load %arg4[%c0_112, %c0_113] : memref<128x512xbf16, #tpu.memory_space<vmem>>, vector<128x512xbf16>
    %cst_114 = arith.constant dense<0.000000e+00> : vector<8x512xf32>
    %211 = tpu.matmul %209, %210, %cst_114 {dimension_numbers = #tpu.dot_dimension_numbers<[1], [0], [0], [1], [0, 0, 1, 1], [], []>} : vector<8x128xbf16>, vector<128x512xbf16>, vector<8x512xf32> -> vector<8x512xf32>
    %212 = arith.addf %207, %211 : vector<8x512xf32>
    %213 = arith.addf %212, %4 : vector<8x512xf32>
    %214 = vector.extract_strided_slice %213 {offsets = [0, 0], sizes = [8, 128], strides = [1, 1]} : vector<8x512xf32> to vector<8x128xf32>
    %215 = arith.negf %214 : vector<8x128xf32>
    %216 = math.exp %215 : vector<8x128xf32>
    %cst_115 = arith.constant 1.000000e+00 : f32
    %217 = vector.broadcast %cst_115 : f32 to vector<8x128xf32>
    %218 = arith.addf %217, %216 : vector<8x128xf32>
    %219 = arith.divf %217, %218 : vector<8x128xf32>
    %220 = vector.extract_strided_slice %213 {offsets = [0, 128], sizes = [8, 128], strides = [1, 1]} : vector<8x512xf32> to vector<8x128xf32>
    %221 = arith.negf %220 : vector<8x128xf32>
    %222 = math.exp %221 : vector<8x128xf32>
    %cst_116 = arith.constant 1.000000e+00 : f32
    %223 = vector.broadcast %cst_116 : f32 to vector<8x128xf32>
    %224 = arith.addf %223, %222 : vector<8x128xf32>
    %225 = arith.divf %223, %224 : vector<8x128xf32>
    %226 = vector.extract_strided_slice %213 {offsets = [0, 256], sizes = [8, 128], strides = [1, 1]} : vector<8x512xf32> to vector<8x128xf32>
    %227 = math.tanh %226 : vector<8x128xf32>
    %228 = vector.extract_strided_slice %213 {offsets = [0, 384], sizes = [8, 128], strides = [1, 1]} : vector<8x512xf32> to vector<8x128xf32>
    %229 = arith.negf %228 : vector<8x128xf32>
    %230 = math.exp %229 : vector<8x128xf32>
    %cst_117 = arith.constant 1.000000e+00 : f32
    %231 = vector.broadcast %cst_117 : f32 to vector<8x128xf32>
    %232 = arith.addf %231, %230 : vector<8x128xf32>
    %233 = arith.divf %231, %232 : vector<8x128xf32>
    %c0_118 = arith.constant 0 : index
    %c0_119 = arith.constant 0 : index
    %234 = vector.load %arg13[%c0_118, %c0_119] : memref<8x128xf32, #tpu.memory_space<vmem>>, vector<8x128xf32>
    %235 = arith.mulf %225, %234 : vector<8x128xf32>
    %236 = arith.mulf %219, %227 : vector<8x128xf32>
    %237 = arith.addf %235, %236 : vector<8x128xf32>
    %c0_120 = arith.constant 0 : index
    %c0_121 = arith.constant 0 : index
    %238 = vector.load %arg13[%c0_120, %c0_121] : memref<8x128xf32, #tpu.memory_space<vmem>>, vector<8x128xf32>
    tpu.vector_store %arg13[%c0_120, %c0_121], %237 {strides = array<i32>} : memref<8x128xf32, #tpu.memory_space<vmem>>, vector<8x128xf32>,
    %239 = math.tanh %237 : vector<8x128xf32>
    %240 = arith.mulf %233, %239 : vector<8x128xf32>
    %c0_122 = arith.constant 0 : index
    %c0_123 = arith.constant 0 : index
    %241 = vector.load %arg12[%c0_122, %c0_123] : memref<8x128xf32, #tpu.memory_space<vmem>>, vector<8x128xf32>
    tpu.vector_store %arg12[%c0_122, %c0_123], %240 {strides = array<i32>} : memref<8x128xf32, #tpu.memory_space<vmem>>, vector<8x128xf32>,
    %c6_i32 = arith.constant 6 : i32
    %242 = arith.index_cast %c6_i32 : i32 to index
    %c0_124 = arith.constant 0 : index
    %c0_125 = arith.constant 0 : index
    %243 = vector.load %arg1[%242, %c0_124, %c0_125] : memref<8x8x128xbf16, #tpu.memory_space<vmem>>, vector<1x8x128xbf16>
    %244 = vector.shape_cast %243 : vector<1x8x128xbf16> to vector<8x128xbf16>
    %c0_126 = arith.constant 0 : index
    %c0_127 = arith.constant 0 : index
    %245 = vector.load %arg3[%c0_126, %c0_127] : memref<128x512xbf16, #tpu.memory_space<vmem>>, vector<128x512xbf16>
    %cst_128 = arith.constant dense<0.000000e+00> : vector<8x512xf32>
    %246 = tpu.matmul %244, %245, %cst_128 {dimension_numbers = #tpu.dot_dimension_numbers<[1], [0], [0], [1], [0, 0, 1, 1], [], []>} : vector<8x128xbf16>, vector<128x512xbf16>, vector<8x512xf32> -> vector<8x512xf32>
    %c0_129 = arith.constant 0 : index
    %c0_130 = arith.constant 0 : index
    %247 = vector.load %arg12[%c0_129, %c0_130] : memref<8x128xf32, #tpu.memory_space<vmem>>, vector<8x128xf32>
    %248 = arith.truncf %247 : vector<8x128xf32> to vector<8x128xbf16>
    %c0_131 = arith.constant 0 : index
    %c0_132 = arith.constant 0 : index
    %249 = vector.load %arg4[%c0_131, %c0_132] : memref<128x512xbf16, #tpu.memory_space<vmem>>, vector<128x512xbf16>
    %cst_133 = arith.constant dense<0.000000e+00> : vector<8x512xf32>
    %250 = tpu.matmul %248, %249, %cst_133 {dimension_numbers = #tpu.dot_dimension_numbers<[1], [0], [0], [1], [0, 0, 1, 1], [], []>} : vector<8x128xbf16>, vector<128x512xbf16>, vector<8x512xf32> -> vector<8x512xf32>
    %251 = arith.addf %246, %250 : vector<8x512xf32>
    %252 = arith.addf %251, %4 : vector<8x512xf32>
    %253 = vector.extract_strided_slice %252 {offsets = [0, 0], sizes = [8, 128], strides = [1, 1]} : vector<8x512xf32> to vector<8x128xf32>
    %254 = arith.negf %253 : vector<8x128xf32>
    %255 = math.exp %254 : vector<8x128xf32>
    %cst_134 = arith.constant 1.000000e+00 : f32
    %256 = vector.broadcast %cst_134 : f32 to vector<8x128xf32>
    %257 = arith.addf %256, %255 : vector<8x128xf32>
    %258 = arith.divf %256, %257 : vector<8x128xf32>
    %259 = vector.extract_strided_slice %252 {offsets = [0, 128], sizes = [8, 128], strides = [1, 1]} : vector<8x512xf32> to vector<8x128xf32>
    %260 = arith.negf %259 : vector<8x128xf32>
    %261 = math.exp %260 : vector<8x128xf32>
    %cst_135 = arith.constant 1.000000e+00 : f32
    %262 = vector.broadcast %cst_135 : f32 to vector<8x128xf32>
    %263 = arith.addf %262, %261 : vector<8x128xf32>
    %264 = arith.divf %262, %263 : vector<8x128xf32>
    %265 = vector.extract_strided_slice %252 {offsets = [0, 256], sizes = [8, 128], strides = [1, 1]} : vector<8x512xf32> to vector<8x128xf32>
    %266 = math.tanh %265 : vector<8x128xf32>
    %267 = vector.extract_strided_slice %252 {offsets = [0, 384], sizes = [8, 128], strides = [1, 1]} : vector<8x512xf32> to vector<8x128xf32>
    %268 = arith.negf %267 : vector<8x128xf32>
    %269 = math.exp %268 : vector<8x128xf32>
    %cst_136 = arith.constant 1.000000e+00 : f32
    %270 = vector.broadcast %cst_136 : f32 to vector<8x128xf32>
    %271 = arith.addf %270, %269 : vector<8x128xf32>
    %272 = arith.divf %270, %271 : vector<8x128xf32>
    %c0_137 = arith.constant 0 : index
    %c0_138 = arith.constant 0 : index
    %273 = vector.load %arg13[%c0_137, %c0_138] : memref<8x128xf32, #tpu.memory_space<vmem>>, vector<8x128xf32>
    %274 = arith.mulf %264, %273 : vector<8x128xf32>
    %275 = arith.mulf %258, %266 : vector<8x128xf32>
    %276 = arith.addf %274, %275 : vector<8x128xf32>
    %c0_139 = arith.constant 0 : index
    %c0_140 = arith.constant 0 : index
    %277 = vector.load %arg13[%c0_139, %c0_140] : memref<8x128xf32, #tpu.memory_space<vmem>>, vector<8x128xf32>
    tpu.vector_store %arg13[%c0_139, %c0_140], %276 {strides = array<i32>} : memref<8x128xf32, #tpu.memory_space<vmem>>, vector<8x128xf32>,
    %278 = math.tanh %276 : vector<8x128xf32>
    %279 = arith.mulf %272, %278 : vector<8x128xf32>
    %c0_141 = arith.constant 0 : index
    %c0_142 = arith.constant 0 : index
    %280 = vector.load %arg12[%c0_141, %c0_142] : memref<8x128xf32, #tpu.memory_space<vmem>>, vector<8x128xf32>
    tpu.vector_store %arg12[%c0_141, %c0_142], %279 {strides = array<i32>} : memref<8x128xf32, #tpu.memory_space<vmem>>, vector<8x128xf32>,
    %c7_i32 = arith.constant 7 : i32
    %281 = arith.index_cast %c7_i32 : i32 to index
    %c0_143 = arith.constant 0 : index
    %c0_144 = arith.constant 0 : index
    %282 = vector.load %arg1[%281, %c0_143, %c0_144] : memref<8x8x128xbf16, #tpu.memory_space<vmem>>, vector<1x8x128xbf16>
    %283 = vector.shape_cast %282 : vector<1x8x128xbf16> to vector<8x128xbf16>
    %c0_145 = arith.constant 0 : index
    %c0_146 = arith.constant 0 : index
    %284 = vector.load %arg3[%c0_145, %c0_146] : memref<128x512xbf16, #tpu.memory_space<vmem>>, vector<128x512xbf16>
    %cst_147 = arith.constant dense<0.000000e+00> : vector<8x512xf32>
    %285 = tpu.matmul %283, %284, %cst_147 {dimension_numbers = #tpu.dot_dimension_numbers<[1], [0], [0], [1], [0, 0, 1, 1], [], []>} : vector<8x128xbf16>, vector<128x512xbf16>, vector<8x512xf32> -> vector<8x512xf32>
    %c0_148 = arith.constant 0 : index
    %c0_149 = arith.constant 0 : index
    %286 = vector.load %arg12[%c0_148, %c0_149] : memref<8x128xf32, #tpu.memory_space<vmem>>, vector<8x128xf32>
    %287 = arith.truncf %286 : vector<8x128xf32> to vector<8x128xbf16>
    %c0_150 = arith.constant 0 : index
    %c0_151 = arith.constant 0 : index
    %288 = vector.load %arg4[%c0_150, %c0_151] : memref<128x512xbf16, #tpu.memory_space<vmem>>, vector<128x512xbf16>
    %cst_152 = arith.constant dense<0.000000e+00> : vector<8x512xf32>
    %289 = tpu.matmul %287, %288, %cst_152 {dimension_numbers = #tpu.dot_dimension_numbers<[1], [0], [0], [1], [0, 0, 1, 1], [], []>} : vector<8x128xbf16>, vector<128x512xbf16>, vector<8x512xf32> -> vector<8x512xf32>
    %290 = arith.addf %285, %289 : vector<8x512xf32>
    %291 = arith.addf %290, %4 : vector<8x512xf32>
    %292 = vector.extract_strided_slice %291 {offsets = [0, 0], sizes = [8, 128], strides = [1, 1]} : vector<8x512xf32> to vector<8x128xf32>
    %293 = arith.negf %292 : vector<8x128xf32>
    %294 = math.exp %293 : vector<8x128xf32>
    %cst_153 = arith.constant 1.000000e+00 : f32
    %295 = vector.broadcast %cst_153 : f32 to vector<8x128xf32>
    %296 = arith.addf %295, %294 : vector<8x128xf32>
    %297 = arith.divf %295, %296 : vector<8x128xf32>
    %298 = vector.extract_strided_slice %291 {offsets = [0, 128], sizes = [8, 128], strides = [1, 1]} : vector<8x512xf32> to vector<8x128xf32>
    %299 = arith.negf %298 : vector<8x128xf32>
    %300 = math.exp %299 : vector<8x128xf32>
    %cst_154 = arith.constant 1.000000e+00 : f32
    %301 = vector.broadcast %cst_154 : f32 to vector<8x128xf32>
    %302 = arith.addf %301, %300 : vector<8x128xf32>
    %303 = arith.divf %301, %302 : vector<8x128xf32>
    %304 = vector.extract_strided_slice %291 {offsets = [0, 256], sizes = [8, 128], strides = [1, 1]} : vector<8x512xf32> to vector<8x128xf32>
    %305 = math.tanh %304 : vector<8x128xf32>
    %306 = vector.extract_strided_slice %291 {offsets = [0, 384], sizes = [8, 128], strides = [1, 1]} : vector<8x512xf32> to vector<8x128xf32>
    %307 = arith.negf %306 : vector<8x128xf32>
    %308 = math.exp %307 : vector<8x128xf32>
    %cst_155 = arith.constant 1.000000e+00 : f32
    %309 = vector.broadcast %cst_155 : f32 to vector<8x128xf32>
    %310 = arith.addf %309, %308 : vector<8x128xf32>
    %311 = arith.divf %309, %310 : vector<8x128xf32>
    %c0_156 = arith.constant 0 : index
    %c0_157 = arith.constant 0 : index
    %312 = vector.load %arg13[%c0_156, %c0_157] : memref<8x128xf32, #tpu.memory_space<vmem>>, vector<8x128xf32>
    %313 = arith.mulf %303, %312 : vector<8x128xf32>
    %314 = arith.mulf %297, %305 : vector<8x128xf32>
    %315 = arith.addf %313, %314 : vector<8x128xf32>
    %c0_158 = arith.constant 0 : index
    %c0_159 = arith.constant 0 : index
    %316 = vector.load %arg13[%c0_158, %c0_159] : memref<8x128xf32, #tpu.memory_space<vmem>>, vector<8x128xf32>
    tpu.vector_store %arg13[%c0_158, %c0_159], %315 {strides = array<i32>} : memref<8x128xf32, #tpu.memory_space<vmem>>, vector<8x128xf32>,
    %317 = math.tanh %315 : vector<8x128xf32>
    %318 = arith.mulf %311, %317 : vector<8x128xf32>
    %c0_160 = arith.constant 0 : index
    %c0_161 = arith.constant 0 : index
    %319 = vector.load %arg12[%c0_160, %c0_161] : memref<8x128xf32, #tpu.memory_space<vmem>>, vector<8x128xf32>
    tpu.vector_store %arg12[%c0_160, %c0_161], %318 {strides = array<i32>} : memref<8x128xf32, #tpu.memory_space<vmem>>, vector<8x128xf32>,
    %c8_i32 = arith.constant 8 : i32
    %cst_162 = arith.constant 0.000000e+00 : f32
    %320 = vector.broadcast %cst_162 : f32 to vector<8x128xf32>
    %c0_163 = arith.constant 0 : index
    %c0_164 = arith.constant 0 : index
    %c0_165 = arith.constant 0 : index
    %321 = vector.load %arg11[%c0_163, %c0_164, %c0_165] : memref<8x8x128xf32, #tpu.memory_space<vmem>>, vector<1x8x128xf32>
    %322 = vector.shape_cast %321 : vector<1x8x128xf32> to vector<8x128xf32>
    %323 = vector.shape_cast %320 : vector<8x128xf32> to vector<1x8x128xf32>
    tpu.vector_store %arg11[%c0_163, %c0_164, %c0_165], %323 {strides = array<i32>} : memref<8x8x128xf32, #tpu.memory_space<vmem>>, vector<1x8x128xf32>,
    %c0_166 = arith.constant 0 : index
    %c0_167 = arith.constant 0 : index
    %c0_168 = arith.constant 0 : index
    %324 = vector.load %arg2[%c0_166, %c0_167, %c0_168] : memref<8x8x128xbf16, #tpu.memory_space<vmem>>, vector<1x8x128xbf16>
    %325 = vector.shape_cast %324 : vector<1x8x128xbf16> to vector<8x128xbf16>
    %c0_169 = arith.constant 0 : index
    %c0_170 = arith.constant 0 : index
    %326 = vector.load %arg14[%c0_169, %c0_170] : memref<8x128xbf16, #tpu.memory_space<vmem>>, vector<8x128xbf16>
    tpu.vector_store %arg14[%c0_169, %c0_170], %325 {strides = array<i32>} : memref<8x128xbf16, #tpu.memory_space<vmem>>, vector<8x128xbf16>,
    %c1_i32_171 = arith.constant 1 : i32
    %c0_172 = arith.constant 0 : index
    %c0_173 = arith.constant 0 : index
    %327 = vector.load %arg14[%c0_172, %c0_173] : memref<8x128xbf16, #tpu.memory_space<vmem>>, vector<8x128xbf16>
    %c0_174 = arith.constant 0 : index
    %c0_175 = arith.constant 0 : index
    %328 = vector.load %arg6[%c0_174, %c0_175] : memref<128x512xbf16, #tpu.memory_space<vmem>>, vector<128x512xbf16>
    %cst_176 = arith.constant dense<0.000000e+00> : vector<8x512xf32>
    %329 = tpu.matmul %327, %328, %cst_176 {dimension_numbers = #tpu.dot_dimension_numbers<[1], [0], [0], [1], [0, 0, 1, 1], [], []>} : vector<8x128xbf16>, vector<128x512xbf16>, vector<8x512xf32> -> vector<8x512xf32>
    %c0_177 = arith.constant 0 : index
    %c0_178 = arith.constant 0 : index
    %330 = vector.load %arg12[%c0_177, %c0_178] : memref<8x128xf32, #tpu.memory_space<vmem>>, vector<8x128xf32>
    %331 = arith.truncf %330 : vector<8x128xf32> to vector<8x128xbf16>
    %c0_179 = arith.constant 0 : index
    %c0_180 = arith.constant 0 : index
    %332 = vector.load %arg7[%c0_179, %c0_180] : memref<128x512xbf16, #tpu.memory_space<vmem>>, vector<128x512xbf16>
    %cst_181 = arith.constant dense<0.000000e+00> : vector<8x512xf32>
    %333 = tpu.matmul %331, %332, %cst_181 {dimension_numbers = #tpu.dot_dimension_numbers<[1], [0], [0], [1], [0, 0, 1, 1], [], []>} : vector<8x128xbf16>, vector<128x512xbf16>, vector<8x512xf32> -> vector<8x512xf32>
    %334 = arith.addf %329, %333 : vector<8x512xf32>
    %335 = arith.addf %334, %5 : vector<8x512xf32>
    %336 = vector.extract_strided_slice %335 {offsets = [0, 0], sizes = [8, 128], strides = [1, 1]} : vector<8x512xf32> to vector<8x128xf32>
    %337 = arith.negf %336 : vector<8x128xf32>
    %338 = math.exp %337 : vector<8x128xf32>
    %cst_182 = arith.constant 1.000000e+00 : f32
    %339 = vector.broadcast %cst_182 : f32 to vector<8x128xf32>
    %340 = arith.addf %339, %338 : vector<8x128xf32>
    %341 = arith.divf %339, %340 : vector<8x128xf32>
    %342 = vector.extract_strided_slice %335 {offsets = [0, 128], sizes = [8, 128], strides = [1, 1]} : vector<8x512xf32> to vector<8x128xf32>
    %343 = arith.negf %342 : vector<8x128xf32>
    %344 = math.exp %343 : vector<8x128xf32>
    %cst_183 = arith.constant 1.000000e+00 : f32
    %345 = vector.broadcast %cst_183 : f32 to vector<8x128xf32>
    %346 = arith.addf %345, %344 : vector<8x128xf32>
    %347 = arith.divf %345, %346 : vector<8x128xf32>
    %348 = vector.extract_strided_slice %335 {offsets = [0, 256], sizes = [8, 128], strides = [1, 1]} : vector<8x512xf32> to vector<8x128xf32>
    %349 = math.tanh %348 : vector<8x128xf32>
    %350 = vector.extract_strided_slice %335 {offsets = [0, 384], sizes = [8, 128], strides = [1, 1]} : vector<8x512xf32> to vector<8x128xf32>
    %351 = arith.negf %350 : vector<8x128xf32>
    %352 = math.exp %351 : vector<8x128xf32>
    %cst_184 = arith.constant 1.000000e+00 : f32
    %353 = vector.broadcast %cst_184 : f32 to vector<8x128xf32>
    %354 = arith.addf %353, %352 : vector<8x128xf32>
    %355 = arith.divf %353, %354 : vector<8x128xf32>
    %c0_185 = arith.constant 0 : index
    %c0_186 = arith.constant 0 : index
    %356 = vector.load %arg13[%c0_185, %c0_186] : memref<8x128xf32, #tpu.memory_space<vmem>>, vector<8x128xf32>
    %357 = arith.mulf %347, %356 : vector<8x128xf32>
    %358 = arith.mulf %341, %349 : vector<8x128xf32>
    %359 = arith.addf %357, %358 : vector<8x128xf32>
    %c0_187 = arith.constant 0 : index
    %c0_188 = arith.constant 0 : index
    %360 = vector.load %arg13[%c0_187, %c0_188] : memref<8x128xf32, #tpu.memory_space<vmem>>, vector<8x128xf32>
    tpu.vector_store %arg13[%c0_187, %c0_188], %359 {strides = array<i32>} : memref<8x128xf32, #tpu.memory_space<vmem>>, vector<8x128xf32>,
    %361 = math.tanh %359 : vector<8x128xf32>
    %362 = arith.mulf %355, %361 : vector<8x128xf32>
    %c0_189 = arith.constant 0 : index
    %c0_190 = arith.constant 0 : index
    %363 = vector.load %arg12[%c0_189, %c0_190] : memref<8x128xf32, #tpu.memory_space<vmem>>, vector<8x128xf32>
    tpu.vector_store %arg12[%c0_189, %c0_190], %362 {strides = array<i32>} : memref<8x128xf32, #tpu.memory_space<vmem>>, vector<8x128xf32>,
    %c0_191 = arith.constant 0 : index
    %c0_192 = arith.constant 0 : index
    %364 = vector.load %arg12[%c0_191, %c0_192] : memref<8x128xf32, #tpu.memory_space<vmem>>, vector<8x128xf32>
    %365 = arith.truncf %364 : vector<8x128xf32> to vector<8x128xbf16>
    %c0_193 = arith.constant 0 : index
    %c0_194 = arith.constant 0 : index
    %366 = vector.load %arg9[%c0_193, %c0_194] : memref<128x128xbf16, #tpu.memory_space<vmem>>, vector<128x128xbf16>
    %cst_195 = arith.constant dense<0.000000e+00> : vector<8x128xf32>
    %367 = tpu.matmul %365, %366, %cst_195 {dimension_numbers = #tpu.dot_dimension_numbers<[1], [0], [0], [1], [0, 0, 1, 1], [], []>} : vector<8x128xbf16>, vector<128x128xbf16>, vector<8x128xf32> -> vector<8x128xf32>
    %368 = arith.addf %367, %6 : vector<8x128xf32>
    %369 = arith.index_cast %c1_i32_171 : i32 to index
    %c0_196 = arith.constant 0 : index
    %c0_197 = arith.constant 0 : index
    %370 = vector.load %arg11[%369, %c0_196, %c0_197] : memref<8x8x128xf32, #tpu.memory_space<vmem>>, vector<1x8x128xf32>
    %371 = vector.shape_cast %370 : vector<1x8x128xf32> to vector<8x128xf32>
    %372 = vector.shape_cast %368 : vector<8x128xf32> to vector<1x8x128xf32>
    tpu.vector_store %arg11[%369, %c0_196, %c0_197], %372 {strides = array<i32>} : memref<8x8x128xf32, #tpu.memory_space<vmem>>, vector<1x8x128xf32>,
    %cst_198 = arith.constant dense<0xFF800000> : vector<8xf32>
    %373 = vector.multi_reduction <maximumf>, %368, %cst_198 [1] : vector<8x128xf32> to vector<8xf32>
    %374 = vector.shape_cast %373 : vector<8xf32> to vector<8x1xf32>
    %375 = vector.broadcast %374 : vector<8x1xf32> to vector<8x128xf32>
    %376 = arith.cmpf oge, %368, %375 : vector<8x128xf32>
    %c128_i32 = arith.constant 128 : i32
    %377 = vector.broadcast %c128_i32 : i32 to vector<8x128xi32>
    %378 = arith.select %376, %7, %377 : vector<8x128xi1>, vector<8x128xi32>
    %cst_199 = arith.constant dense<2147483647> : vector<8xi32>
    %379 = vector.multi_reduction <minsi>, %378, %cst_199 [1] : vector<8x128xi32> to vector<8xi32>
    %380 = vector.shape_cast %379 : vector<8xi32> to vector<8x1xi32>
    %381 = vector.broadcast %380 : vector<8x1xi32> to vector<8x128xi32>
    %382 = arith.cmpi eq, %7, %381 : vector<8x128xi32>
    %383 = arith.extui %382 : vector<8x128xi1> to vector<8x128xi32>
    %384 = arith.sitofp %383 : vector<8x128xi32> to vector<8x128xf32>
    %385 = arith.truncf %384 : vector<8x128xf32> to vector<8x128xbf16>
    %386 = arith.index_cast %c1_i32_171 : i32 to index
    %387 = memref.load %arg0[%386] : memref<8xi32, #tpu.memory_space<smem>>
    %c0_i32_200 = arith.constant 0 : i32
    %388 = arith.cmpi sgt, %387, %c0_i32_200 : i32
    %389 = arith.index_cast %c1_i32_171 : i32 to index
    %c0_201 = arith.constant 0 : index
    %c0_202 = arith.constant 0 : index
    %390 = vector.load %arg2[%389, %c0_201, %c0_202] : memref<8x8x128xbf16, #tpu.memory_space<vmem>>, vector<1x8x128xbf16>
    %391 = vector.shape_cast %390 : vector<1x8x128xbf16> to vector<8x128xbf16>
    %392 = arith.select %388, %391, %385 : vector<8x128xbf16>
    %c0_203 = arith.constant 0 : index
    %c0_204 = arith.constant 0 : index
    %393 = vector.load %arg14[%c0_203, %c0_204] : memref<8x128xbf16, #tpu.memory_space<vmem>>, vector<8x128xbf16>
    tpu.vector_store %arg14[%c0_203, %c0_204], %392 {strides = array<i32>} : memref<8x128xbf16, #tpu.memory_space<vmem>>, vector<8x128xbf16>,
    %c2_i32_205 = arith.constant 2 : i32
    %c0_206 = arith.constant 0 : index
    %c0_207 = arith.constant 0 : index
    %394 = vector.load %arg14[%c0_206, %c0_207] : memref<8x128xbf16, #tpu.memory_space<vmem>>, vector<8x128xbf16>
    %c0_208 = arith.constant 0 : index
    %c0_209 = arith.constant 0 : index
    %395 = vector.load %arg6[%c0_208, %c0_209] : memref<128x512xbf16, #tpu.memory_space<vmem>>, vector<128x512xbf16>
    %cst_210 = arith.constant dense<0.000000e+00> : vector<8x512xf32>
    %396 = tpu.matmul %394, %395, %cst_210 {dimension_numbers = #tpu.dot_dimension_numbers<[1], [0], [0], [1], [0, 0, 1, 1], [], []>} : vector<8x128xbf16>, vector<128x512xbf16>, vector<8x512xf32> -> vector<8x512xf32>
    %c0_211 = arith.constant 0 : index
    %c0_212 = arith.constant 0 : index
    %397 = vector.load %arg12[%c0_211, %c0_212] : memref<8x128xf32, #tpu.memory_space<vmem>>, vector<8x128xf32>
    %398 = arith.truncf %397 : vector<8x128xf32> to vector<8x128xbf16>
    %c0_213 = arith.constant 0 : index
    %c0_214 = arith.constant 0 : index
    %399 = vector.load %arg7[%c0_213, %c0_214] : memref<128x512xbf16, #tpu.memory_space<vmem>>, vector<128x512xbf16>
    %cst_215 = arith.constant dense<0.000000e+00> : vector<8x512xf32>
    %400 = tpu.matmul %398, %399, %cst_215 {dimension_numbers = #tpu.dot_dimension_numbers<[1], [0], [0], [1], [0, 0, 1, 1], [], []>} : vector<8x128xbf16>, vector<128x512xbf16>, vector<8x512xf32> -> vector<8x512xf32>
    %401 = arith.addf %396, %400 : vector<8x512xf32>
    %402 = arith.addf %401, %5 : vector<8x512xf32>
    %403 = vector.extract_strided_slice %402 {offsets = [0, 0], sizes = [8, 128], strides = [1, 1]} : vector<8x512xf32> to vector<8x128xf32>
    %404 = arith.negf %403 : vector<8x128xf32>
    %405 = math.exp %404 : vector<8x128xf32>
    %cst_216 = arith.constant 1.000000e+00 : f32
    %406 = vector.broadcast %cst_216 : f32 to vector<8x128xf32>
    %407 = arith.addf %406, %405 : vector<8x128xf32>
    %408 = arith.divf %406, %407 : vector<8x128xf32>
    %409 = vector.extract_strided_slice %402 {offsets = [0, 128], sizes = [8, 128], strides = [1, 1]} : vector<8x512xf32> to vector<8x128xf32>
    %410 = arith.negf %409 : vector<8x128xf32>
    %411 = math.exp %410 : vector<8x128xf32>
    %cst_217 = arith.constant 1.000000e+00 : f32
    %412 = vector.broadcast %cst_217 : f32 to vector<8x128xf32>
    %413 = arith.addf %412, %411 : vector<8x128xf32>
    %414 = arith.divf %412, %413 : vector<8x128xf32>
    %415 = vector.extract_strided_slice %402 {offsets = [0, 256], sizes = [8, 128], strides = [1, 1]} : vector<8x512xf32> to vector<8x128xf32>
    %416 = math.tanh %415 : vector<8x128xf32>
    %417 = vector.extract_strided_slice %402 {offsets = [0, 384], sizes = [8, 128], strides = [1, 1]} : vector<8x512xf32> to vector<8x128xf32>
    %418 = arith.negf %417 : vector<8x128xf32>
    %419 = math.exp %418 : vector<8x128xf32>
    %cst_218 = arith.constant 1.000000e+00 : f32
    %420 = vector.broadcast %cst_218 : f32 to vector<8x128xf32>
    %421 = arith.addf %420, %419 : vector<8x128xf32>
    %422 = arith.divf %420, %421 : vector<8x128xf32>
    %c0_219 = arith.constant 0 : index
    %c0_220 = arith.constant 0 : index
    %423 = vector.load %arg13[%c0_219, %c0_220] : memref<8x128xf32, #tpu.memory_space<vmem>>, vector<8x128xf32>
    %424 = arith.mulf %414, %423 : vector<8x128xf32>
    %425 = arith.mulf %408, %416 : vector<8x128xf32>
    %426 = arith.addf %424, %425 : vector<8x128xf32>
    %c0_221 = arith.constant 0 : index
    %c0_222 = arith.constant 0 : index
    %427 = vector.load %arg13[%c0_221, %c0_222] : memref<8x128xf32, #tpu.memory_space<vmem>>, vector<8x128xf32>
    tpu.vector_store %arg13[%c0_221, %c0_222], %426 {strides = array<i32>} : memref<8x128xf32, #tpu.memory_space<vmem>>, vector<8x128xf32>,
    %428 = math.tanh %426 : vector<8x128xf32>
    %429 = arith.mulf %422, %428 : vector<8x128xf32>
    %c0_223 = arith.constant 0 : index
    %c0_224 = arith.constant 0 : index
    %430 = vector.load %arg12[%c0_223, %c0_224] : memref<8x128xf32, #tpu.memory_space<vmem>>, vector<8x128xf32>
    tpu.vector_store %arg12[%c0_223, %c0_224], %429 {strides = array<i32>} : memref<8x128xf32, #tpu.memory_space<vmem>>, vector<8x128xf32>,
    %c0_225 = arith.constant 0 : index
    %c0_226 = arith.constant 0 : index
    %431 = vector.load %arg12[%c0_225, %c0_226] : memref<8x128xf32, #tpu.memory_space<vmem>>, vector<8x128xf32>
    %432 = arith.truncf %431 : vector<8x128xf32> to vector<8x128xbf16>
    %c0_227 = arith.constant 0 : index
    %c0_228 = arith.constant 0 : index
    %433 = vector.load %arg9[%c0_227, %c0_228] : memref<128x128xbf16, #tpu.memory_space<vmem>>, vector<128x128xbf16>
    %cst_229 = arith.constant dense<0.000000e+00> : vector<8x128xf32>
    %434 = tpu.matmul %432, %433, %cst_229 {dimension_numbers = #tpu.dot_dimension_numbers<[1], [0], [0], [1], [0, 0, 1, 1], [], []>} : vector<8x128xbf16>, vector<128x128xbf16>, vector<8x128xf32> -> vector<8x128xf32>
    %435 = arith.addf %434, %6 : vector<8x128xf32>
    %436 = arith.index_cast %c2_i32_205 : i32 to index
    %c0_230 = arith.constant 0 : index
    %c0_231 = arith.constant 0 : index
    %437 = vector.load %arg11[%436, %c0_230, %c0_231] : memref<8x8x128xf32, #tpu.memory_space<vmem>>, vector<1x8x128xf32>
    %438 = vector.shape_cast %437 : vector<1x8x128xf32> to vector<8x128xf32>
    %439 = vector.shape_cast %435 : vector<8x128xf32> to vector<1x8x128xf32>
    tpu.vector_store %arg11[%436, %c0_230, %c0_231], %439 {strides = array<i32>} : memref<8x8x128xf32, #tpu.memory_space<vmem>>, vector<1x8x128xf32>,
    %cst_232 = arith.constant dense<0xFF800000> : vector<8xf32>
    %440 = vector.multi_reduction <maximumf>, %435, %cst_232 [1] : vector<8x128xf32> to vector<8xf32>
    %441 = vector.shape_cast %440 : vector<8xf32> to vector<8x1xf32>
    %442 = vector.broadcast %441 : vector<8x1xf32> to vector<8x128xf32>
    %443 = arith.cmpf oge, %435, %442 : vector<8x128xf32>
    %c128_i32_233 = arith.constant 128 : i32
    %444 = vector.broadcast %c128_i32_233 : i32 to vector<8x128xi32>
    %445 = arith.select %443, %7, %444 : vector<8x128xi1>, vector<8x128xi32>
    %cst_234 = arith.constant dense<2147483647> : vector<8xi32>
    %446 = vector.multi_reduction <minsi>, %445, %cst_234 [1] : vector<8x128xi32> to vector<8xi32>
    %447 = vector.shape_cast %446 : vector<8xi32> to vector<8x1xi32>
    %448 = vector.broadcast %447 : vector<8x1xi32> to vector<8x128xi32>
    %449 = arith.cmpi eq, %7, %448 : vector<8x128xi32>
    %450 = arith.extui %449 : vector<8x128xi1> to vector<8x128xi32>
    %451 = arith.sitofp %450 : vector<8x128xi32> to vector<8x128xf32>
    %452 = arith.truncf %451 : vector<8x128xf32> to vector<8x128xbf16>
    %453 = arith.index_cast %c2_i32_205 : i32 to index
    %454 = memref.load %arg0[%453] : memref<8xi32, #tpu.memory_space<smem>>
    %c0_i32_235 = arith.constant 0 : i32
    %455 = arith.cmpi sgt, %454, %c0_i32_235 : i32
    %456 = arith.index_cast %c2_i32_205 : i32 to index
    %c0_236 = arith.constant 0 : index
    %c0_237 = arith.constant 0 : index
    %457 = vector.load %arg2[%456, %c0_236, %c0_237] : memref<8x8x128xbf16, #tpu.memory_space<vmem>>, vector<1x8x128xbf16>
    %458 = vector.shape_cast %457 : vector<1x8x128xbf16> to vector<8x128xbf16>
    %459 = arith.select %455, %458, %452 : vector<8x128xbf16>
    %c0_238 = arith.constant 0 : index
    %c0_239 = arith.constant 0 : index
    %460 = vector.load %arg14[%c0_238, %c0_239] : memref<8x128xbf16, #tpu.memory_space<vmem>>, vector<8x128xbf16>
    tpu.vector_store %arg14[%c0_238, %c0_239], %459 {strides = array<i32>} : memref<8x128xbf16, #tpu.memory_space<vmem>>, vector<8x128xbf16>,
    %c3_i32_240 = arith.constant 3 : i32
    %c0_241 = arith.constant 0 : index
    %c0_242 = arith.constant 0 : index
    %461 = vector.load %arg14[%c0_241, %c0_242] : memref<8x128xbf16, #tpu.memory_space<vmem>>, vector<8x128xbf16>
    %c0_243 = arith.constant 0 : index
    %c0_244 = arith.constant 0 : index
    %462 = vector.load %arg6[%c0_243, %c0_244] : memref<128x512xbf16, #tpu.memory_space<vmem>>, vector<128x512xbf16>
    %cst_245 = arith.constant dense<0.000000e+00> : vector<8x512xf32>
    %463 = tpu.matmul %461, %462, %cst_245 {dimension_numbers = #tpu.dot_dimension_numbers<[1], [0], [0], [1], [0, 0, 1, 1], [], []>} : vector<8x128xbf16>, vector<128x512xbf16>, vector<8x512xf32> -> vector<8x512xf32>
    %c0_246 = arith.constant 0 : index
    %c0_247 = arith.constant 0 : index
    %464 = vector.load %arg12[%c0_246, %c0_247] : memref<8x128xf32, #tpu.memory_space<vmem>>, vector<8x128xf32>
    %465 = arith.truncf %464 : vector<8x128xf32> to vector<8x128xbf16>
    %c0_248 = arith.constant 0 : index
    %c0_249 = arith.constant 0 : index
    %466 = vector.load %arg7[%c0_248, %c0_249] : memref<128x512xbf16, #tpu.memory_space<vmem>>, vector<128x512xbf16>
    %cst_250 = arith.constant dense<0.000000e+00> : vector<8x512xf32>
    %467 = tpu.matmul %465, %466, %cst_250 {dimension_numbers = #tpu.dot_dimension_numbers<[1], [0], [0], [1], [0, 0, 1, 1], [], []>} : vector<8x128xbf16>, vector<128x512xbf16>, vector<8x512xf32> -> vector<8x512xf32>
    %468 = arith.addf %463, %467 : vector<8x512xf32>
    %469 = arith.addf %468, %5 : vector<8x512xf32>
    %470 = vector.extract_strided_slice %469 {offsets = [0, 0], sizes = [8, 128], strides = [1, 1]} : vector<8x512xf32> to vector<8x128xf32>
    %471 = arith.negf %470 : vector<8x128xf32>
    %472 = math.exp %471 : vector<8x128xf32>
    %cst_251 = arith.constant 1.000000e+00 : f32
    %473 = vector.broadcast %cst_251 : f32 to vector<8x128xf32>
    %474 = arith.addf %473, %472 : vector<8x128xf32>
    %475 = arith.divf %473, %474 : vector<8x128xf32>
    %476 = vector.extract_strided_slice %469 {offsets = [0, 128], sizes = [8, 128], strides = [1, 1]} : vector<8x512xf32> to vector<8x128xf32>
    %477 = arith.negf %476 : vector<8x128xf32>
    %478 = math.exp %477 : vector<8x128xf32>
    %cst_252 = arith.constant 1.000000e+00 : f32
    %479 = vector.broadcast %cst_252 : f32 to vector<8x128xf32>
    %480 = arith.addf %479, %478 : vector<8x128xf32>
    %481 = arith.divf %479, %480 : vector<8x128xf32>
    %482 = vector.extract_strided_slice %469 {offsets = [0, 256], sizes = [8, 128], strides = [1, 1]} : vector<8x512xf32> to vector<8x128xf32>
    %483 = math.tanh %482 : vector<8x128xf32>
    %484 = vector.extract_strided_slice %469 {offsets = [0, 384], sizes = [8, 128], strides = [1, 1]} : vector<8x512xf32> to vector<8x128xf32>
    %485 = arith.negf %484 : vector<8x128xf32>
    %486 = math.exp %485 : vector<8x128xf32>
    %cst_253 = arith.constant 1.000000e+00 : f32
    %487 = vector.broadcast %cst_253 : f32 to vector<8x128xf32>
    %488 = arith.addf %487, %486 : vector<8x128xf32>
    %489 = arith.divf %487, %488 : vector<8x128xf32>
    %c0_254 = arith.constant 0 : index
    %c0_255 = arith.constant 0 : index
    %490 = vector.load %arg13[%c0_254, %c0_255] : memref<8x128xf32, #tpu.memory_space<vmem>>, vector<8x128xf32>
    %491 = arith.mulf %481, %490 : vector<8x128xf32>
    %492 = arith.mulf %475, %483 : vector<8x128xf32>
    %493 = arith.addf %491, %492 : vector<8x128xf32>
    %c0_256 = arith.constant 0 : index
    %c0_257 = arith.constant 0 : index
    %494 = vector.load %arg13[%c0_256, %c0_257] : memref<8x128xf32, #tpu.memory_space<vmem>>, vector<8x128xf32>
    tpu.vector_store %arg13[%c0_256, %c0_257], %493 {strides = array<i32>} : memref<8x128xf32, #tpu.memory_space<vmem>>, vector<8x128xf32>,
    %495 = math.tanh %493 : vector<8x128xf32>
    %496 = arith.mulf %489, %495 : vector<8x128xf32>
    %c0_258 = arith.constant 0 : index
    %c0_259 = arith.constant 0 : index
    %497 = vector.load %arg12[%c0_258, %c0_259] : memref<8x128xf32, #tpu.memory_space<vmem>>, vector<8x128xf32>
    tpu.vector_store %arg12[%c0_258, %c0_259], %496 {strides = array<i32>} : memref<8x128xf32, #tpu.memory_space<vmem>>, vector<8x128xf32>,
    %c0_260 = arith.constant 0 : index
    %c0_261 = arith.constant 0 : index
    %498 = vector.load %arg12[%c0_260, %c0_261] : memref<8x128xf32, #tpu.memory_space<vmem>>, vector<8x128xf32>
    %499 = arith.truncf %498 : vector<8x128xf32> to vector<8x128xbf16>
    %c0_262 = arith.constant 0 : index
    %c0_263 = arith.constant 0 : index
    %500 = vector.load %arg9[%c0_262, %c0_263] : memref<128x128xbf16, #tpu.memory_space<vmem>>, vector<128x128xbf16>
    %cst_264 = arith.constant dense<0.000000e+00> : vector<8x128xf32>
    %501 = tpu.matmul %499, %500, %cst_264 {dimension_numbers = #tpu.dot_dimension_numbers<[1], [0], [0], [1], [0, 0, 1, 1], [], []>} : vector<8x128xbf16>, vector<128x128xbf16>, vector<8x128xf32> -> vector<8x128xf32>
    %502 = arith.addf %501, %6 : vector<8x128xf32>
    %503 = arith.index_cast %c3_i32_240 : i32 to index
    %c0_265 = arith.constant 0 : index
    %c0_266 = arith.constant 0 : index
    %504 = vector.load %arg11[%503, %c0_265, %c0_266] : memref<8x8x128xf32, #tpu.memory_space<vmem>>, vector<1x8x128xf32>
    %505 = vector.shape_cast %504 : vector<1x8x128xf32> to vector<8x128xf32>
    %506 = vector.shape_cast %502 : vector<8x128xf32> to vector<1x8x128xf32>
    tpu.vector_store %arg11[%503, %c0_265, %c0_266], %506 {strides = array<i32>} : memref<8x8x128xf32, #tpu.memory_space<vmem>>, vector<1x8x128xf32>,
    %cst_267 = arith.constant dense<0xFF800000> : vector<8xf32>
    %507 = vector.multi_reduction <maximumf>, %502, %cst_267 [1] : vector<8x128xf32> to vector<8xf32>
    %508 = vector.shape_cast %507 : vector<8xf32> to vector<8x1xf32>
    %509 = vector.broadcast %508 : vector<8x1xf32> to vector<8x128xf32>
    %510 = arith.cmpf oge, %502, %509 : vector<8x128xf32>
    %c128_i32_268 = arith.constant 128 : i32
    %511 = vector.broadcast %c128_i32_268 : i32 to vector<8x128xi32>
    %512 = arith.select %510, %7, %511 : vector<8x128xi1>, vector<8x128xi32>
    %cst_269 = arith.constant dense<2147483647> : vector<8xi32>
    %513 = vector.multi_reduction <minsi>, %512, %cst_269 [1] : vector<8x128xi32> to vector<8xi32>
    %514 = vector.shape_cast %513 : vector<8xi32> to vector<8x1xi32>
    %515 = vector.broadcast %514 : vector<8x1xi32> to vector<8x128xi32>
    %516 = arith.cmpi eq, %7, %515 : vector<8x128xi32>
    %517 = arith.extui %516 : vector<8x128xi1> to vector<8x128xi32>
    %518 = arith.sitofp %517 : vector<8x128xi32> to vector<8x128xf32>
    %519 = arith.truncf %518 : vector<8x128xf32> to vector<8x128xbf16>
    %520 = arith.index_cast %c3_i32_240 : i32 to index
    %521 = memref.load %arg0[%520] : memref<8xi32, #tpu.memory_space<smem>>
    %c0_i32_270 = arith.constant 0 : i32
    %522 = arith.cmpi sgt, %521, %c0_i32_270 : i32
    %523 = arith.index_cast %c3_i32_240 : i32 to index
    %c0_271 = arith.constant 0 : index
    %c0_272 = arith.constant 0 : index
    %524 = vector.load %arg2[%523, %c0_271, %c0_272] : memref<8x8x128xbf16, #tpu.memory_space<vmem>>, vector<1x8x128xbf16>
    %525 = vector.shape_cast %524 : vector<1x8x128xbf16> to vector<8x128xbf16>
    %526 = arith.select %522, %525, %519 : vector<8x128xbf16>
    %c0_273 = arith.constant 0 : index
    %c0_274 = arith.constant 0 : index
    %527 = vector.load %arg14[%c0_273, %c0_274] : memref<8x128xbf16, #tpu.memory_space<vmem>>, vector<8x128xbf16>
    tpu.vector_store %arg14[%c0_273, %c0_274], %526 {strides = array<i32>} : memref<8x128xbf16, #tpu.memory_space<vmem>>, vector<8x128xbf16>,
    %c4_i32_275 = arith.constant 4 : i32
    %c0_276 = arith.constant 0 : index
    %c0_277 = arith.constant 0 : index
    %528 = vector.load %arg14[%c0_276, %c0_277] : memref<8x128xbf16, #tpu.memory_space<vmem>>, vector<8x128xbf16>
    %c0_278 = arith.constant 0 : index
    %c0_279 = arith.constant 0 : index
    %529 = vector.load %arg6[%c0_278, %c0_279] : memref<128x512xbf16, #tpu.memory_space<vmem>>, vector<128x512xbf16>
    %cst_280 = arith.constant dense<0.000000e+00> : vector<8x512xf32>
    %530 = tpu.matmul %528, %529, %cst_280 {dimension_numbers = #tpu.dot_dimension_numbers<[1], [0], [0], [1], [0, 0, 1, 1], [], []>} : vector<8x128xbf16>, vector<128x512xbf16>, vector<8x512xf32> -> vector<8x512xf32>
    %c0_281 = arith.constant 0 : index
    %c0_282 = arith.constant 0 : index
    %531 = vector.load %arg12[%c0_281, %c0_282] : memref<8x128xf32, #tpu.memory_space<vmem>>, vector<8x128xf32>
    %532 = arith.truncf %531 : vector<8x128xf32> to vector<8x128xbf16>
    %c0_283 = arith.constant 0 : index
    %c0_284 = arith.constant 0 : index
    %533 = vector.load %arg7[%c0_283, %c0_284] : memref<128x512xbf16, #tpu.memory_space<vmem>>, vector<128x512xbf16>
    %cst_285 = arith.constant dense<0.000000e+00> : vector<8x512xf32>
    %534 = tpu.matmul %532, %533, %cst_285 {dimension_numbers = #tpu.dot_dimension_numbers<[1], [0], [0], [1], [0, 0, 1, 1], [], []>} : vector<8x128xbf16>, vector<128x512xbf16>, vector<8x512xf32> -> vector<8x512xf32>
    %535 = arith.addf %530, %534 : vector<8x512xf32>
    %536 = arith.addf %535, %5 : vector<8x512xf32>
    %537 = vector.extract_strided_slice %536 {offsets = [0, 0], sizes = [8, 128], strides = [1, 1]} : vector<8x512xf32> to vector<8x128xf32>
    %538 = arith.negf %537 : vector<8x128xf32>
    %539 = math.exp %538 : vector<8x128xf32>
    %cst_286 = arith.constant 1.000000e+00 : f32
    %540 = vector.broadcast %cst_286 : f32 to vector<8x128xf32>
    %541 = arith.addf %540, %539 : vector<8x128xf32>
    %542 = arith.divf %540, %541 : vector<8x128xf32>
    %543 = vector.extract_strided_slice %536 {offsets = [0, 128], sizes = [8, 128], strides = [1, 1]} : vector<8x512xf32> to vector<8x128xf32>
    %544 = arith.negf %543 : vector<8x128xf32>
    %545 = math.exp %544 : vector<8x128xf32>
    %cst_287 = arith.constant 1.000000e+00 : f32
    %546 = vector.broadcast %cst_287 : f32 to vector<8x128xf32>
    %547 = arith.addf %546, %545 : vector<8x128xf32>
    %548 = arith.divf %546, %547 : vector<8x128xf32>
    %549 = vector.extract_strided_slice %536 {offsets = [0, 256], sizes = [8, 128], strides = [1, 1]} : vector<8x512xf32> to vector<8x128xf32>
    %550 = math.tanh %549 : vector<8x128xf32>
    %551 = vector.extract_strided_slice %536 {offsets = [0, 384], sizes = [8, 128], strides = [1, 1]} : vector<8x512xf32> to vector<8x128xf32>
    %552 = arith.negf %551 : vector<8x128xf32>
    %553 = math.exp %552 : vector<8x128xf32>
    %cst_288 = arith.constant 1.000000e+00 : f32
    %554 = vector.broadcast %cst_288 : f32 to vector<8x128xf32>
    %555 = arith.addf %554, %553 : vector<8x128xf32>
    %556 = arith.divf %554, %555 : vector<8x128xf32>
    %c0_289 = arith.constant 0 : index
    %c0_290 = arith.constant 0 : index
    %557 = vector.load %arg13[%c0_289, %c0_290] : memref<8x128xf32, #tpu.memory_space<vmem>>, vector<8x128xf32>
    %558 = arith.mulf %548, %557 : vector<8x128xf32>
    %559 = arith.mulf %542, %550 : vector<8x128xf32>
    %560 = arith.addf %558, %559 : vector<8x128xf32>
    %c0_291 = arith.constant 0 : index
    %c0_292 = arith.constant 0 : index
    %561 = vector.load %arg13[%c0_291, %c0_292] : memref<8x128xf32, #tpu.memory_space<vmem>>, vector<8x128xf32>
    tpu.vector_store %arg13[%c0_291, %c0_292], %560 {strides = array<i32>} : memref<8x128xf32, #tpu.memory_space<vmem>>, vector<8x128xf32>,
    %562 = math.tanh %560 : vector<8x128xf32>
    %563 = arith.mulf %556, %562 : vector<8x128xf32>
    %c0_293 = arith.constant 0 : index
    %c0_294 = arith.constant 0 : index
    %564 = vector.load %arg12[%c0_293, %c0_294] : memref<8x128xf32, #tpu.memory_space<vmem>>, vector<8x128xf32>
    tpu.vector_store %arg12[%c0_293, %c0_294], %563 {strides = array<i32>} : memref<8x128xf32, #tpu.memory_space<vmem>>, vector<8x128xf32>,
    %c0_295 = arith.constant 0 : index
    %c0_296 = arith.constant 0 : index
    %565 = vector.load %arg12[%c0_295, %c0_296] : memref<8x128xf32, #tpu.memory_space<vmem>>, vector<8x128xf32>
    %566 = arith.truncf %565 : vector<8x128xf32> to vector<8x128xbf16>
    %c0_297 = arith.constant 0 : index
    %c0_298 = arith.constant 0 : index
    %567 = vector.load %arg9[%c0_297, %c0_298] : memref<128x128xbf16, #tpu.memory_space<vmem>>, vector<128x128xbf16>
    %cst_299 = arith.constant dense<0.000000e+00> : vector<8x128xf32>
    %568 = tpu.matmul %566, %567, %cst_299 {dimension_numbers = #tpu.dot_dimension_numbers<[1], [0], [0], [1], [0, 0, 1, 1], [], []>} : vector<8x128xbf16>, vector<128x128xbf16>, vector<8x128xf32> -> vector<8x128xf32>
    %569 = arith.addf %568, %6 : vector<8x128xf32>
    %570 = arith.index_cast %c4_i32_275 : i32 to index
    %c0_300 = arith.constant 0 : index
    %c0_301 = arith.constant 0 : index
    %571 = vector.load %arg11[%570, %c0_300, %c0_301] : memref<8x8x128xf32, #tpu.memory_space<vmem>>, vector<1x8x128xf32>
    %572 = vector.shape_cast %571 : vector<1x8x128xf32> to vector<8x128xf32>
    %573 = vector.shape_cast %569 : vector<8x128xf32> to vector<1x8x128xf32>
    tpu.vector_store %arg11[%570, %c0_300, %c0_301], %573 {strides = array<i32>} : memref<8x8x128xf32, #tpu.memory_space<vmem>>, vector<1x8x128xf32>,
    %cst_302 = arith.constant dense<0xFF800000> : vector<8xf32>
    %574 = vector.multi_reduction <maximumf>, %569, %cst_302 [1] : vector<8x128xf32> to vector<8xf32>
    %575 = vector.shape_cast %574 : vector<8xf32> to vector<8x1xf32>
    %576 = vector.broadcast %575 : vector<8x1xf32> to vector<8x128xf32>
    %577 = arith.cmpf oge, %569, %576 : vector<8x128xf32>
    %c128_i32_303 = arith.constant 128 : i32
    %578 = vector.broadcast %c128_i32_303 : i32 to vector<8x128xi32>
    %579 = arith.select %577, %7, %578 : vector<8x128xi1>, vector<8x128xi32>
    %cst_304 = arith.constant dense<2147483647> : vector<8xi32>
    %580 = vector.multi_reduction <minsi>, %579, %cst_304 [1] : vector<8x128xi32> to vector<8xi32>
    %581 = vector.shape_cast %580 : vector<8xi32> to vector<8x1xi32>
    %582 = vector.broadcast %581 : vector<8x1xi32> to vector<8x128xi32>
    %583 = arith.cmpi eq, %7, %582 : vector<8x128xi32>
    %584 = arith.extui %583 : vector<8x128xi1> to vector<8x128xi32>
    %585 = arith.sitofp %584 : vector<8x128xi32> to vector<8x128xf32>
    %586 = arith.truncf %585 : vector<8x128xf32> to vector<8x128xbf16>
    %587 = arith.index_cast %c4_i32_275 : i32 to index
    %588 = memref.load %arg0[%587] : memref<8xi32, #tpu.memory_space<smem>>
    %c0_i32_305 = arith.constant 0 : i32
    %589 = arith.cmpi sgt, %588, %c0_i32_305 : i32
    %590 = arith.index_cast %c4_i32_275 : i32 to index
    %c0_306 = arith.constant 0 : index
    %c0_307 = arith.constant 0 : index
    %591 = vector.load %arg2[%590, %c0_306, %c0_307] : memref<8x8x128xbf16, #tpu.memory_space<vmem>>, vector<1x8x128xbf16>
    %592 = vector.shape_cast %591 : vector<1x8x128xbf16> to vector<8x128xbf16>
    %593 = arith.select %589, %592, %586 : vector<8x128xbf16>
    %c0_308 = arith.constant 0 : index
    %c0_309 = arith.constant 0 : index
    %594 = vector.load %arg14[%c0_308, %c0_309] : memref<8x128xbf16, #tpu.memory_space<vmem>>, vector<8x128xbf16>
    tpu.vector_store %arg14[%c0_308, %c0_309], %593 {strides = array<i32>} : memref<8x128xbf16, #tpu.memory_space<vmem>>, vector<8x128xbf16>,
    %c5_i32_310 = arith.constant 5 : i32
    %c0_311 = arith.constant 0 : index
    %c0_312 = arith.constant 0 : index
    %595 = vector.load %arg14[%c0_311, %c0_312] : memref<8x128xbf16, #tpu.memory_space<vmem>>, vector<8x128xbf16>
    %c0_313 = arith.constant 0 : index
    %c0_314 = arith.constant 0 : index
    %596 = vector.load %arg6[%c0_313, %c0_314] : memref<128x512xbf16, #tpu.memory_space<vmem>>, vector<128x512xbf16>
    %cst_315 = arith.constant dense<0.000000e+00> : vector<8x512xf32>
    %597 = tpu.matmul %595, %596, %cst_315 {dimension_numbers = #tpu.dot_dimension_numbers<[1], [0], [0], [1], [0, 0, 1, 1], [], []>} : vector<8x128xbf16>, vector<128x512xbf16>, vector<8x512xf32> -> vector<8x512xf32>
    %c0_316 = arith.constant 0 : index
    %c0_317 = arith.constant 0 : index
    %598 = vector.load %arg12[%c0_316, %c0_317] : memref<8x128xf32, #tpu.memory_space<vmem>>, vector<8x128xf32>
    %599 = arith.truncf %598 : vector<8x128xf32> to vector<8x128xbf16>
    %c0_318 = arith.constant 0 : index
    %c0_319 = arith.constant 0 : index
    %600 = vector.load %arg7[%c0_318, %c0_319] : memref<128x512xbf16, #tpu.memory_space<vmem>>, vector<128x512xbf16>
    %cst_320 = arith.constant dense<0.000000e+00> : vector<8x512xf32>
    %601 = tpu.matmul %599, %600, %cst_320 {dimension_numbers = #tpu.dot_dimension_numbers<[1], [0], [0], [1], [0, 0, 1, 1], [], []>} : vector<8x128xbf16>, vector<128x512xbf16>, vector<8x512xf32> -> vector<8x512xf32>
    %602 = arith.addf %597, %601 : vector<8x512xf32>
    %603 = arith.addf %602, %5 : vector<8x512xf32>
    %604 = vector.extract_strided_slice %603 {offsets = [0, 0], sizes = [8, 128], strides = [1, 1]} : vector<8x512xf32> to vector<8x128xf32>
    %605 = arith.negf %604 : vector<8x128xf32>
    %606 = math.exp %605 : vector<8x128xf32>
    %cst_321 = arith.constant 1.000000e+00 : f32
    %607 = vector.broadcast %cst_321 : f32 to vector<8x128xf32>
    %608 = arith.addf %607, %606 : vector<8x128xf32>
    %609 = arith.divf %607, %608 : vector<8x128xf32>
    %610 = vector.extract_strided_slice %603 {offsets = [0, 128], sizes = [8, 128], strides = [1, 1]} : vector<8x512xf32> to vector<8x128xf32>
    %611 = arith.negf %610 : vector<8x128xf32>
    %612 = math.exp %611 : vector<8x128xf32>
    %cst_322 = arith.constant 1.000000e+00 : f32
    %613 = vector.broadcast %cst_322 : f32 to vector<8x128xf32>
    %614 = arith.addf %613, %612 : vector<8x128xf32>
    %615 = arith.divf %613, %614 : vector<8x128xf32>
    %616 = vector.extract_strided_slice %603 {offsets = [0, 256], sizes = [8, 128], strides = [1, 1]} : vector<8x512xf32> to vector<8x128xf32>
    %617 = math.tanh %616 : vector<8x128xf32>
    %618 = vector.extract_strided_slice %603 {offsets = [0, 384], sizes = [8, 128], strides = [1, 1]} : vector<8x512xf32> to vector<8x128xf32>
    %619 = arith.negf %618 : vector<8x128xf32>
    %620 = math.exp %619 : vector<8x128xf32>
    %cst_323 = arith.constant 1.000000e+00 : f32
    %621 = vector.broadcast %cst_323 : f32 to vector<8x128xf32>
    %622 = arith.addf %621, %620 : vector<8x128xf32>
    %623 = arith.divf %621, %622 : vector<8x128xf32>
    %c0_324 = arith.constant 0 : index
    %c0_325 = arith.constant 0 : index
    %624 = vector.load %arg13[%c0_324, %c0_325] : memref<8x128xf32, #tpu.memory_space<vmem>>, vector<8x128xf32>
    %625 = arith.mulf %615, %624 : vector<8x128xf32>
    %626 = arith.mulf %609, %617 : vector<8x128xf32>
    %627 = arith.addf %625, %626 : vector<8x128xf32>
    %c0_326 = arith.constant 0 : index
    %c0_327 = arith.constant 0 : index
    %628 = vector.load %arg13[%c0_326, %c0_327] : memref<8x128xf32, #tpu.memory_space<vmem>>, vector<8x128xf32>
    tpu.vector_store %arg13[%c0_326, %c0_327], %627 {strides = array<i32>} : memref<8x128xf32, #tpu.memory_space<vmem>>, vector<8x128xf32>,
    %629 = math.tanh %627 : vector<8x128xf32>
    %630 = arith.mulf %623, %629 : vector<8x128xf32>
    %c0_328 = arith.constant 0 : index
    %c0_329 = arith.constant 0 : index
    %631 = vector.load %arg12[%c0_328, %c0_329] : memref<8x128xf32, #tpu.memory_space<vmem>>, vector<8x128xf32>
    tpu.vector_store %arg12[%c0_328, %c0_329], %630 {strides = array<i32>} : memref<8x128xf32, #tpu.memory_space<vmem>>, vector<8x128xf32>,
    %c0_330 = arith.constant 0 : index
    %c0_331 = arith.constant 0 : index
    %632 = vector.load %arg12[%c0_330, %c0_331] : memref<8x128xf32, #tpu.memory_space<vmem>>, vector<8x128xf32>
    %633 = arith.truncf %632 : vector<8x128xf32> to vector<8x128xbf16>
    %c0_332 = arith.constant 0 : index
    %c0_333 = arith.constant 0 : index
    %634 = vector.load %arg9[%c0_332, %c0_333] : memref<128x128xbf16, #tpu.memory_space<vmem>>, vector<128x128xbf16>
    %cst_334 = arith.constant dense<0.000000e+00> : vector<8x128xf32>
    %635 = tpu.matmul %633, %634, %cst_334 {dimension_numbers = #tpu.dot_dimension_numbers<[1], [0], [0], [1], [0, 0, 1, 1], [], []>} : vector<8x128xbf16>, vector<128x128xbf16>, vector<8x128xf32> -> vector<8x128xf32>
    %636 = arith.addf %635, %6 : vector<8x128xf32>
    %637 = arith.index_cast %c5_i32_310 : i32 to index
    %c0_335 = arith.constant 0 : index
    %c0_336 = arith.constant 0 : index
    %638 = vector.load %arg11[%637, %c0_335, %c0_336] : memref<8x8x128xf32, #tpu.memory_space<vmem>>, vector<1x8x128xf32>
    %639 = vector.shape_cast %638 : vector<1x8x128xf32> to vector<8x128xf32>
    %640 = vector.shape_cast %636 : vector<8x128xf32> to vector<1x8x128xf32>
    tpu.vector_store %arg11[%637, %c0_335, %c0_336], %640 {strides = array<i32>} : memref<8x8x128xf32, #tpu.memory_space<vmem>>, vector<1x8x128xf32>,
    %cst_337 = arith.constant dense<0xFF800000> : vector<8xf32>
    %641 = vector.multi_reduction <maximumf>, %636, %cst_337 [1] : vector<8x128xf32> to vector<8xf32>
    %642 = vector.shape_cast %641 : vector<8xf32> to vector<8x1xf32>
    %643 = vector.broadcast %642 : vector<8x1xf32> to vector<8x128xf32>
    %644 = arith.cmpf oge, %636, %643 : vector<8x128xf32>
    %c128_i32_338 = arith.constant 128 : i32
    %645 = vector.broadcast %c128_i32_338 : i32 to vector<8x128xi32>
    %646 = arith.select %644, %7, %645 : vector<8x128xi1>, vector<8x128xi32>
    %cst_339 = arith.constant dense<2147483647> : vector<8xi32>
    %647 = vector.multi_reduction <minsi>, %646, %cst_339 [1] : vector<8x128xi32> to vector<8xi32>
    %648 = vector.shape_cast %647 : vector<8xi32> to vector<8x1xi32>
    %649 = vector.broadcast %648 : vector<8x1xi32> to vector<8x128xi32>
    %650 = arith.cmpi eq, %7, %649 : vector<8x128xi32>
    %651 = arith.extui %650 : vector<8x128xi1> to vector<8x128xi32>
    %652 = arith.sitofp %651 : vector<8x128xi32> to vector<8x128xf32>
    %653 = arith.truncf %652 : vector<8x128xf32> to vector<8x128xbf16>
    %654 = arith.index_cast %c5_i32_310 : i32 to index
    %655 = memref.load %arg0[%654] : memref<8xi32, #tpu.memory_space<smem>>
    %c0_i32_340 = arith.constant 0 : i32
    %656 = arith.cmpi sgt, %655, %c0_i32_340 : i32
    %657 = arith.index_cast %c5_i32_310 : i32 to index
    %c0_341 = arith.constant 0 : index
    %c0_342 = arith.constant 0 : index
    %658 = vector.load %arg2[%657, %c0_341, %c0_342] : memref<8x8x128xbf16, #tpu.memory_space<vmem>>, vector<1x8x128xbf16>
    %659 = vector.shape_cast %658 : vector<1x8x128xbf16> to vector<8x128xbf16>
    %660 = arith.select %656, %659, %653 : vector<8x128xbf16>
    %c0_343 = arith.constant 0 : index
    %c0_344 = arith.constant 0 : index
    %661 = vector.load %arg14[%c0_343, %c0_344] : memref<8x128xbf16, #tpu.memory_space<vmem>>, vector<8x128xbf16>
    tpu.vector_store %arg14[%c0_343, %c0_344], %660 {strides = array<i32>} : memref<8x128xbf16, #tpu.memory_space<vmem>>, vector<8x128xbf16>,
    %c6_i32_345 = arith.constant 6 : i32
    %c0_346 = arith.constant 0 : index
    %c0_347 = arith.constant 0 : index
    %662 = vector.load %arg14[%c0_346, %c0_347] : memref<8x128xbf16, #tpu.memory_space<vmem>>, vector<8x128xbf16>
    %c0_348 = arith.constant 0 : index
    %c0_349 = arith.constant 0 : index
    %663 = vector.load %arg6[%c0_348, %c0_349] : memref<128x512xbf16, #tpu.memory_space<vmem>>, vector<128x512xbf16>
    %cst_350 = arith.constant dense<0.000000e+00> : vector<8x512xf32>
    %664 = tpu.matmul %662, %663, %cst_350 {dimension_numbers = #tpu.dot_dimension_numbers<[1], [0], [0], [1], [0, 0, 1, 1], [], []>} : vector<8x128xbf16>, vector<128x512xbf16>, vector<8x512xf32> -> vector<8x512xf32>
    %c0_351 = arith.constant 0 : index
    %c0_352 = arith.constant 0 : index
    %665 = vector.load %arg12[%c0_351, %c0_352] : memref<8x128xf32, #tpu.memory_space<vmem>>, vector<8x128xf32>
    %666 = arith.truncf %665 : vector<8x128xf32> to vector<8x128xbf16>
    %c0_353 = arith.constant 0 : index
    %c0_354 = arith.constant 0 : index
    %667 = vector.load %arg7[%c0_353, %c0_354] : memref<128x512xbf16, #tpu.memory_space<vmem>>, vector<128x512xbf16>
    %cst_355 = arith.constant dense<0.000000e+00> : vector<8x512xf32>
    %668 = tpu.matmul %666, %667, %cst_355 {dimension_numbers = #tpu.dot_dimension_numbers<[1], [0], [0], [1], [0, 0, 1, 1], [], []>} : vector<8x128xbf16>, vector<128x512xbf16>, vector<8x512xf32> -> vector<8x512xf32>
    %669 = arith.addf %664, %668 : vector<8x512xf32>
    %670 = arith.addf %669, %5 : vector<8x512xf32>
    %671 = vector.extract_strided_slice %670 {offsets = [0, 0], sizes = [8, 128], strides = [1, 1]} : vector<8x512xf32> to vector<8x128xf32>
    %672 = arith.negf %671 : vector<8x128xf32>
    %673 = math.exp %672 : vector<8x128xf32>
    %cst_356 = arith.constant 1.000000e+00 : f32
    %674 = vector.broadcast %cst_356 : f32 to vector<8x128xf32>
    %675 = arith.addf %674, %673 : vector<8x128xf32>
    %676 = arith.divf %674, %675 : vector<8x128xf32>
    %677 = vector.extract_strided_slice %670 {offsets = [0, 128], sizes = [8, 128], strides = [1, 1]} : vector<8x512xf32> to vector<8x128xf32>
    %678 = arith.negf %677 : vector<8x128xf32>
    %679 = math.exp %678 : vector<8x128xf32>
    %cst_357 = arith.constant 1.000000e+00 : f32
    %680 = vector.broadcast %cst_357 : f32 to vector<8x128xf32>
    %681 = arith.addf %680, %679 : vector<8x128xf32>
    %682 = arith.divf %680, %681 : vector<8x128xf32>
    %683 = vector.extract_strided_slice %670 {offsets = [0, 256], sizes = [8, 128], strides = [1, 1]} : vector<8x512xf32> to vector<8x128xf32>
    %684 = math.tanh %683 : vector<8x128xf32>
    %685 = vector.extract_strided_slice %670 {offsets = [0, 384], sizes = [8, 128], strides = [1, 1]} : vector<8x512xf32> to vector<8x128xf32>
    %686 = arith.negf %685 : vector<8x128xf32>
    %687 = math.exp %686 : vector<8x128xf32>
    %cst_358 = arith.constant 1.000000e+00 : f32
    %688 = vector.broadcast %cst_358 : f32 to vector<8x128xf32>
    %689 = arith.addf %688, %687 : vector<8x128xf32>
    %690 = arith.divf %688, %689 : vector<8x128xf32>
    %c0_359 = arith.constant 0 : index
    %c0_360 = arith.constant 0 : index
    %691 = vector.load %arg13[%c0_359, %c0_360] : memref<8x128xf32, #tpu.memory_space<vmem>>, vector<8x128xf32>
    %692 = arith.mulf %682, %691 : vector<8x128xf32>
    %693 = arith.mulf %676, %684 : vector<8x128xf32>
    %694 = arith.addf %692, %693 : vector<8x128xf32>
    %c0_361 = arith.constant 0 : index
    %c0_362 = arith.constant 0 : index
    %695 = vector.load %arg13[%c0_361, %c0_362] : memref<8x128xf32, #tpu.memory_space<vmem>>, vector<8x128xf32>
    tpu.vector_store %arg13[%c0_361, %c0_362], %694 {strides = array<i32>} : memref<8x128xf32, #tpu.memory_space<vmem>>, vector<8x128xf32>,
    %696 = math.tanh %694 : vector<8x128xf32>
    %697 = arith.mulf %690, %696 : vector<8x128xf32>
    %c0_363 = arith.constant 0 : index
    %c0_364 = arith.constant 0 : index
    %698 = vector.load %arg12[%c0_363, %c0_364] : memref<8x128xf32, #tpu.memory_space<vmem>>, vector<8x128xf32>
    tpu.vector_store %arg12[%c0_363, %c0_364], %697 {strides = array<i32>} : memref<8x128xf32, #tpu.memory_space<vmem>>, vector<8x128xf32>,
    %c0_365 = arith.constant 0 : index
    %c0_366 = arith.constant 0 : index
    %699 = vector.load %arg12[%c0_365, %c0_366] : memref<8x128xf32, #tpu.memory_space<vmem>>, vector<8x128xf32>
    %700 = arith.truncf %699 : vector<8x128xf32> to vector<8x128xbf16>
    %c0_367 = arith.constant 0 : index
    %c0_368 = arith.constant 0 : index
    %701 = vector.load %arg9[%c0_367, %c0_368] : memref<128x128xbf16, #tpu.memory_space<vmem>>, vector<128x128xbf16>
    %cst_369 = arith.constant dense<0.000000e+00> : vector<8x128xf32>
    %702 = tpu.matmul %700, %701, %cst_369 {dimension_numbers = #tpu.dot_dimension_numbers<[1], [0], [0], [1], [0, 0, 1, 1], [], []>} : vector<8x128xbf16>, vector<128x128xbf16>, vector<8x128xf32> -> vector<8x128xf32>
    %703 = arith.addf %702, %6 : vector<8x128xf32>
    %704 = arith.index_cast %c6_i32_345 : i32 to index
    %c0_370 = arith.constant 0 : index
    %c0_371 = arith.constant 0 : index
    %705 = vector.load %arg11[%704, %c0_370, %c0_371] : memref<8x8x128xf32, #tpu.memory_space<vmem>>, vector<1x8x128xf32>
    %706 = vector.shape_cast %705 : vector<1x8x128xf32> to vector<8x128xf32>
    %707 = vector.shape_cast %703 : vector<8x128xf32> to vector<1x8x128xf32>
    tpu.vector_store %arg11[%704, %c0_370, %c0_371], %707 {strides = array<i32>} : memref<8x8x128xf32, #tpu.memory_space<vmem>>, vector<1x8x128xf32>,
    %cst_372 = arith.constant dense<0xFF800000> : vector<8xf32>
    %708 = vector.multi_reduction <maximumf>, %703, %cst_372 [1] : vector<8x128xf32> to vector<8xf32>
    %709 = vector.shape_cast %708 : vector<8xf32> to vector<8x1xf32>
    %710 = vector.broadcast %709 : vector<8x1xf32> to vector<8x128xf32>
    %711 = arith.cmpf oge, %703, %710 : vector<8x128xf32>
    %c128_i32_373 = arith.constant 128 : i32
    %712 = vector.broadcast %c128_i32_373 : i32 to vector<8x128xi32>
    %713 = arith.select %711, %7, %712 : vector<8x128xi1>, vector<8x128xi32>
    %cst_374 = arith.constant dense<2147483647> : vector<8xi32>
    %714 = vector.multi_reduction <minsi>, %713, %cst_374 [1] : vector<8x128xi32> to vector<8xi32>
    %715 = vector.shape_cast %714 : vector<8xi32> to vector<8x1xi32>
    %716 = vector.broadcast %715 : vector<8x1xi32> to vector<8x128xi32>
    %717 = arith.cmpi eq, %7, %716 : vector<8x128xi32>
    %718 = arith.extui %717 : vector<8x128xi1> to vector<8x128xi32>
    %719 = arith.sitofp %718 : vector<8x128xi32> to vector<8x128xf32>
    %720 = arith.truncf %719 : vector<8x128xf32> to vector<8x128xbf16>
    %721 = arith.index_cast %c6_i32_345 : i32 to index
    %722 = memref.load %arg0[%721] : memref<8xi32, #tpu.memory_space<smem>>
    %c0_i32_375 = arith.constant 0 : i32
    %723 = arith.cmpi sgt, %722, %c0_i32_375 : i32
    %724 = arith.index_cast %c6_i32_345 : i32 to index
    %c0_376 = arith.constant 0 : index
    %c0_377 = arith.constant 0 : index
    %725 = vector.load %arg2[%724, %c0_376, %c0_377] : memref<8x8x128xbf16, #tpu.memory_space<vmem>>, vector<1x8x128xbf16>
    %726 = vector.shape_cast %725 : vector<1x8x128xbf16> to vector<8x128xbf16>
    %727 = arith.select %723, %726, %720 : vector<8x128xbf16>
    %c0_378 = arith.constant 0 : index
    %c0_379 = arith.constant 0 : index
    %728 = vector.load %arg14[%c0_378, %c0_379] : memref<8x128xbf16, #tpu.memory_space<vmem>>, vector<8x128xbf16>
    tpu.vector_store %arg14[%c0_378, %c0_379], %727 {strides = array<i32>} : memref<8x128xbf16, #tpu.memory_space<vmem>>, vector<8x128xbf16>,
    %c7_i32_380 = arith.constant 7 : i32
    %c0_381 = arith.constant 0 : index
    %c0_382 = arith.constant 0 : index
    %729 = vector.load %arg14[%c0_381, %c0_382] : memref<8x128xbf16, #tpu.memory_space<vmem>>, vector<8x128xbf16>
    %c0_383 = arith.constant 0 : index
    %c0_384 = arith.constant 0 : index
    %730 = vector.load %arg6[%c0_383, %c0_384] : memref<128x512xbf16, #tpu.memory_space<vmem>>, vector<128x512xbf16>
    %cst_385 = arith.constant dense<0.000000e+00> : vector<8x512xf32>
    %731 = tpu.matmul %729, %730, %cst_385 {dimension_numbers = #tpu.dot_dimension_numbers<[1], [0], [0], [1], [0, 0, 1, 1], [], []>} : vector<8x128xbf16>, vector<128x512xbf16>, vector<8x512xf32> -> vector<8x512xf32>
    %c0_386 = arith.constant 0 : index
    %c0_387 = arith.constant 0 : index
    %732 = vector.load %arg12[%c0_386, %c0_387] : memref<8x128xf32, #tpu.memory_space<vmem>>, vector<8x128xf32>
    %733 = arith.truncf %732 : vector<8x128xf32> to vector<8x128xbf16>
    %c0_388 = arith.constant 0 : index
    %c0_389 = arith.constant 0 : index
    %734 = vector.load %arg7[%c0_388, %c0_389] : memref<128x512xbf16, #tpu.memory_space<vmem>>, vector<128x512xbf16>
    %cst_390 = arith.constant dense<0.000000e+00> : vector<8x512xf32>
    %735 = tpu.matmul %733, %734, %cst_390 {dimension_numbers = #tpu.dot_dimension_numbers<[1], [0], [0], [1], [0, 0, 1, 1], [], []>} : vector<8x128xbf16>, vector<128x512xbf16>, vector<8x512xf32> -> vector<8x512xf32>
    %736 = arith.addf %731, %735 : vector<8x512xf32>
    %737 = arith.addf %736, %5 : vector<8x512xf32>
    %738 = vector.extract_strided_slice %737 {offsets = [0, 0], sizes = [8, 128], strides = [1, 1]} : vector<8x512xf32> to vector<8x128xf32>
    %739 = arith.negf %738 : vector<8x128xf32>
    %740 = math.exp %739 : vector<8x128xf32>
    %cst_391 = arith.constant 1.000000e+00 : f32
    %741 = vector.broadcast %cst_391 : f32 to vector<8x128xf32>
    %742 = arith.addf %741, %740 : vector<8x128xf32>
    %743 = arith.divf %741, %742 : vector<8x128xf32>
    %744 = vector.extract_strided_slice %737 {offsets = [0, 128], sizes = [8, 128], strides = [1, 1]} : vector<8x512xf32> to vector<8x128xf32>
    %745 = arith.negf %744 : vector<8x128xf32>
    %746 = math.exp %745 : vector<8x128xf32>
    %cst_392 = arith.constant 1.000000e+00 : f32
    %747 = vector.broadcast %cst_392 : f32 to vector<8x128xf32>
    %748 = arith.addf %747, %746 : vector<8x128xf32>
    %749 = arith.divf %747, %748 : vector<8x128xf32>
    %750 = vector.extract_strided_slice %737 {offsets = [0, 256], sizes = [8, 128], strides = [1, 1]} : vector<8x512xf32> to vector<8x128xf32>
    %751 = math.tanh %750 : vector<8x128xf32>
    %752 = vector.extract_strided_slice %737 {offsets = [0, 384], sizes = [8, 128], strides = [1, 1]} : vector<8x512xf32> to vector<8x128xf32>
    %753 = arith.negf %752 : vector<8x128xf32>
    %754 = math.exp %753 : vector<8x128xf32>
    %cst_393 = arith.constant 1.000000e+00 : f32
    %755 = vector.broadcast %cst_393 : f32 to vector<8x128xf32>
    %756 = arith.addf %755, %754 : vector<8x128xf32>
    %757 = arith.divf %755, %756 : vector<8x128xf32>
    %c0_394 = arith.constant 0 : index
    %c0_395 = arith.constant 0 : index
    %758 = vector.load %arg13[%c0_394, %c0_395] : memref<8x128xf32, #tpu.memory_space<vmem>>, vector<8x128xf32>
    %759 = arith.mulf %749, %758 : vector<8x128xf32>
    %760 = arith.mulf %743, %751 : vector<8x128xf32>
    %761 = arith.addf %759, %760 : vector<8x128xf32>
    %c0_396 = arith.constant 0 : index
    %c0_397 = arith.constant 0 : index
    %762 = vector.load %arg13[%c0_396, %c0_397] : memref<8x128xf32, #tpu.memory_space<vmem>>, vector<8x128xf32>
    tpu.vector_store %arg13[%c0_396, %c0_397], %761 {strides = array<i32>} : memref<8x128xf32, #tpu.memory_space<vmem>>, vector<8x128xf32>,
    %763 = math.tanh %761 : vector<8x128xf32>
    %764 = arith.mulf %757, %763 : vector<8x128xf32>
    %c0_398 = arith.constant 0 : index
    %c0_399 = arith.constant 0 : index
    %765 = vector.load %arg12[%c0_398, %c0_399] : memref<8x128xf32, #tpu.memory_space<vmem>>, vector<8x128xf32>
    tpu.vector_store %arg12[%c0_398, %c0_399], %764 {strides = array<i32>} : memref<8x128xf32, #tpu.memory_space<vmem>>, vector<8x128xf32>,
    %c0_400 = arith.constant 0 : index
    %c0_401 = arith.constant 0 : index
    %766 = vector.load %arg12[%c0_400, %c0_401] : memref<8x128xf32, #tpu.memory_space<vmem>>, vector<8x128xf32>
    %767 = arith.truncf %766 : vector<8x128xf32> to vector<8x128xbf16>
    %c0_402 = arith.constant 0 : index
    %c0_403 = arith.constant 0 : index
    %768 = vector.load %arg9[%c0_402, %c0_403] : memref<128x128xbf16, #tpu.memory_space<vmem>>, vector<128x128xbf16>
    %cst_404 = arith.constant dense<0.000000e+00> : vector<8x128xf32>
    %769 = tpu.matmul %767, %768, %cst_404 {dimension_numbers = #tpu.dot_dimension_numbers<[1], [0], [0], [1], [0, 0, 1, 1], [], []>} : vector<8x128xbf16>, vector<128x128xbf16>, vector<8x128xf32> -> vector<8x128xf32>
    %770 = arith.addf %769, %6 : vector<8x128xf32>
    %771 = arith.index_cast %c7_i32_380 : i32 to index
    %c0_405 = arith.constant 0 : index
    %c0_406 = arith.constant 0 : index
    %772 = vector.load %arg11[%771, %c0_405, %c0_406] : memref<8x8x128xf32, #tpu.memory_space<vmem>>, vector<1x8x128xf32>
    %773 = vector.shape_cast %772 : vector<1x8x128xf32> to vector<8x128xf32>
    %774 = vector.shape_cast %770 : vector<8x128xf32> to vector<1x8x128xf32>
    tpu.vector_store %arg11[%771, %c0_405, %c0_406], %774 {strides = array<i32>} : memref<8x8x128xf32, #tpu.memory_space<vmem>>, vector<1x8x128xf32>,
    %cst_407 = arith.constant dense<0xFF800000> : vector<8xf32>
    %775 = vector.multi_reduction <maximumf>, %770, %cst_407 [1] : vector<8x128xf32> to vector<8xf32>
    %776 = vector.shape_cast %775 : vector<8xf32> to vector<8x1xf32>
    %777 = vector.broadcast %776 : vector<8x1xf32> to vector<8x128xf32>
    %778 = arith.cmpf oge, %770, %777 : vector<8x128xf32>
    %c128_i32_408 = arith.constant 128 : i32
    %779 = vector.broadcast %c128_i32_408 : i32 to vector<8x128xi32>
    %780 = arith.select %778, %7, %779 : vector<8x128xi1>, vector<8x128xi32>
    %cst_409 = arith.constant dense<2147483647> : vector<8xi32>
    %781 = vector.multi_reduction <minsi>, %780, %cst_409 [1] : vector<8x128xi32> to vector<8xi32>
    %782 = vector.shape_cast %781 : vector<8xi32> to vector<8x1xi32>
    %783 = vector.broadcast %782 : vector<8x1xi32> to vector<8x128xi32>
    %784 = arith.cmpi eq, %7, %783 : vector<8x128xi32>
    %785 = arith.extui %784 : vector<8x128xi1> to vector<8x128xi32>
    %786 = arith.sitofp %785 : vector<8x128xi32> to vector<8x128xf32>
    %787 = arith.truncf %786 : vector<8x128xf32> to vector<8x128xbf16>
    %788 = arith.index_cast %c7_i32_380 : i32 to index
    %789 = memref.load %arg0[%788] : memref<8xi32, #tpu.memory_space<smem>>
    %c0_i32_410 = arith.constant 0 : i32
    %790 = arith.cmpi sgt, %789, %c0_i32_410 : i32
    %791 = arith.index_cast %c7_i32_380 : i32 to index
    %c0_411 = arith.constant 0 : index
    %c0_412 = arith.constant 0 : index
    %792 = vector.load %arg2[%791, %c0_411, %c0_412] : memref<8x8x128xbf16, #tpu.memory_space<vmem>>, vector<1x8x128xbf16>
    %793 = vector.shape_cast %792 : vector<1x8x128xbf16> to vector<8x128xbf16>
    %794 = arith.select %790, %793, %787 : vector<8x128xbf16>
    %c0_413 = arith.constant 0 : index
    %c0_414 = arith.constant 0 : index
    %795 = vector.load %arg14[%c0_413, %c0_414] : memref<8x128xbf16, #tpu.memory_space<vmem>>, vector<8x128xbf16>
    tpu.vector_store %arg14[%c0_413, %c0_414], %794 {strides = array<i32>} : memref<8x128xbf16, #tpu.memory_space<vmem>>, vector<8x128xbf16>,
    %c7_i32_415 = arith.constant 7 : i32
    return
  }
}

</mosaic_0001>

<llo_original>
// kernel: lstm_seq2seq.1
$region0: #{lstm_seq2seq.1}
  #allocation0 [shape = 'u32[]', space=smem, size = 0x4, offset = 0x4, fixed_abs, tag = 'smem constant byte address 0x4 - core index']
  #allocation1 [shape = 'u32[144,128]{1,0:T(1,128)}', space=vmem, size = 0x12000, scoped, tag = 'internal scratch']
  #allocation2 [shape = 'f32[8,128]{1,0:T(8,128)}', space=vmem, size = 0x1000, scoped, tag = 'scratch operand']
  #allocation3 [shape = 'f32[8,128]{1,0:T(8,128)}', space=vmem, size = 0x1000, scoped, tag = 'scratch operand']
  #allocation4 [shape = 'bf16[8,128]{1,0:T(8,128)(2,1)}', space=vmem, size = 0x800, scoped, tag = 'scratch operand']
  %s0 = inlined_call_operand.vmem [shape: s32[8], index: 0, kind: input, shape index: {}]
  %s1 = inlined_call_operand.vmem [shape: bf16[8,8,128], index: 1, kind: input, shape index: {}]
  %s2 = inlined_call_operand.vmem [shape: bf16[8,8,128], index: 2, kind: input, shape index: {}]
  %s3 = inlined_call_operand.vmem [shape: bf16[128,512], index: 3, kind: input, shape index: {}]
  %s4 = inlined_call_operand.hbm [shape: bf16[128,512], index: 4, kind: input, shape index: {}]
  %s5 = inlined_call_operand.vmem [shape: f32[8,512], index: 5, kind: input, shape index: {}]
  %s6 = inlined_call_operand.hbm [shape: bf16[128,512], index: 6, kind: input, shape index: {}]
  %s7 = inlined_call_operand.hbm [shape: bf16[128,512], index: 7, kind: input, shape index: {}]
  %s8 = inlined_call_operand.vmem [shape: f32[8,512], index: 8, kind: input, shape index: {}]
  %s9 = inlined_call_operand.hbm [shape: bf16[128,128], index: 9, kind: input, shape index: {}]
  %s10 = inlined_call_operand.vmem [shape: f32[8,128], index: 10, kind: input, shape index: {}]
  %s11 = inlined_call_operand.vmem [shape: f32[8,8,128], index: 11, kind: output, shape index: {}]
  %s12 = sld [smem:[#allocation0]]
  $region74: #{lstm_seq2seq.1} parent=0
    _
  %s14 = ssub.s32 1, %s12
  %s15 = scalar_select 0, %s14, %s12
  $region1: #{lstm_seq2seq.1} parent=0
    #allocation5 [shape = 'u8[512]{0}', space=smem, size = 0x200, scoped, tag = 'input window, operand 0, single buffered']
    #allocation6 [shape = 's32[1]{0}', space=sflag, size = 0x4, scoped, tag = 'scoped memory for lstm_seq2seq.1']
    #allocation7 [shape = 's32[1]{0}', space=sflag, size = 0x4, scoped, tag = 'scoped memory for lstm_seq2seq.1']
    #allocation8 [shape = 'u8[131072]{0}', space=vmem, size = 0x20000, scoped, tag = 'input window, operand 4, single buffered']
    #allocation9 [shape = 'u8[131072]{0}', space=vmem, size = 0x20000, scoped, tag = 'input window, operand 6, single buffered']
    #allocation10 [shape = 's32[1]{0}', space=sflag, size = 0x4, scoped, tag = 'scoped memory for lstm_seq2seq.1']
    #allocation11 [shape = 'u8[131072]{0}', space=vmem, size = 0x20000, scoped, tag = 'input window, operand 7, single buffered']
    #allocation12 [shape = 'u8[32768]{0}', space=vmem, size = 0x8000, scoped, tag = 'input window, operand 9, single buffered']
    #allocation13 [shape = 's32[1]{0}', space=sflag, size = 0x4, scoped, tag = 'scoped memory for lstm_seq2seq.1']
    %16 = vsyncpa [#allocation7], 0
    %17 = vsyncpa [#allocation6], 0
    %18 = vsyncpa [#allocation10], 0
    %19 = vsyncpa [#allocation13], 0
    // Predicated region
    $region2: #{lstm_seq2seq.1} parent=1 // pred_check
      _
    $region3: #{lstm_seq2seq.1} parent=1 // pred_check_branch
      %21 = sbr.rel (0) target = $region5
    $region4: #{lstm_seq2seq.1} parent=1 // pred_region
      %s23 = ssub.s32 16, 16
      %24 = vsyncadd [#allocation7], %s23
      %s26 = sshll.u32 %s0, 4
      %s27 = int_to_ptr.vmem [resolvable:$true] %s26
      %29 = dma.vmem_to_smem %s27, 16, [#allocation5], [#allocation7]
    $region5: #{lstm_seq2seq.1} parent=1 // pred_fallthru
      _
    // Predicated region
    $region6: #{lstm_seq2seq.1} parent=1 // pred_check
      _
    $region7: #{lstm_seq2seq.1} parent=1 // pred_check_branch
      %31 = sbr.rel (0) target = $region9
    $region8: #{lstm_seq2seq.1} parent=1 // pred_region
      _
    $region9: #{lstm_seq2seq.1} parent=1 // pred_fallthru
      _
    // Predicated region
    $region10: #{lstm_seq2seq.1} parent=1 // pred_check
      _
    $region11: #{lstm_seq2seq.1} parent=1 // pred_check_branch
      %33 = sbr.rel (0) target = $region13
    $region12: #{lstm_seq2seq.1} parent=1 // pred_region
      _
    $region13: #{lstm_seq2seq.1} parent=1 // pred_fallthru
      _
    // Predicated region
    $region14: #{lstm_seq2seq.1} parent=1 // pred_check
      _
    $region15: #{lstm_seq2seq.1} parent=1 // pred_check_branch
      %35 = sbr.rel (0) target = $region17
    $region16: #{lstm_seq2seq.1} parent=1 // pred_region
      _
    $region17: #{lstm_seq2seq.1} parent=1 // pred_fallthru
      _
    // Predicated region
    $region18: #{lstm_seq2seq.1} parent=1 // pred_check
      _
    $region19: #{lstm_seq2seq.1} parent=1 // pred_check_branch
      %37 = sbr.rel (0) target = $region21
    $region20: #{lstm_seq2seq.1} parent=1 // pred_region
      %s39 = ssub.s32 4096, 4096
      %40 = vsyncadd [#allocation6], %s39
      %s41 = sshll.u32 [#allocation8], 4
      %s42 = int_to_ptr.vmem [resolvable:$true] %s41
      %47 = dma.hbm_to_vmem [thread:$0]  %s4, 4096, %s42, [#allocation6], 256, 256, 16
    $region21: #{lstm_seq2seq.1} parent=1 // pred_fallthru
      _
    // Predicated region
    $region22: #{lstm_seq2seq.1} parent=1 // pred_check
      _
    $region23: #{lstm_seq2seq.1} parent=1 // pred_check_branch
      %49 = sbr.rel (0) target = $region25
    $region24: #{lstm_seq2seq.1} parent=1 // pred_region
      _
    $region25: #{lstm_seq2seq.1} parent=1 // pred_fallthru
      _
    // Predicated region
    $region26: #{lstm_seq2seq.1} parent=1 // pred_check
      _
    $region27: #{lstm_seq2seq.1} parent=1 // pred_check_branch
      %51 = sbr.rel (0) target = $region29
    $region28: #{lstm_seq2seq.1} parent=1 // pred_region
      %s53 = ssub.s32 4096, 4096
      %54 = vsyncadd [#allocation10], %s53
      %s55 = sshll.u32 [#allocation9], 4
      %s56 = int_to_ptr.vmem [resolvable:$true] %s55
      %61 = dma.hbm_to_vmem [thread:$0]  %s6, 4096, %s56, [#allocation10], 256, 256, 16
    $region29: #{lstm_seq2seq.1} parent=1 // pred_fallthru
      _
    // Predicated region
    $region30: #{lstm_seq2seq.1} parent=1 // pred_check
      _
    $region31: #{lstm_seq2seq.1} parent=1 // pred_check_branch
      %63 = sbr.rel (0) target = $region33
    $region32: #{lstm_seq2seq.1} parent=1 // pred_region
      %s65 = ssub.s32 4096, 4096
      %66 = vsyncadd [#allocation10], %s65
      %s67 = sshll.u32 [#allocation11], 4
      %s68 = int_to_ptr.vmem [resolvable:$true] %s67
      %73 = dma.hbm_to_vmem [thread:$0]  %s7, 4096, %s68, [#allocation10], 256, 256, 16
    $region33: #{lstm_seq2seq.1} parent=1 // pred_fallthru
      _
    // Predicated region
    $region34: #{lstm_seq2seq.1} parent=1 // pred_check
      _
    $region35: #{lstm_seq2seq.1} parent=1 // pred_check_branch
      %75 = sbr.rel (0) target = $region37
    $region36: #{lstm_seq2seq.1} parent=1 // pred_region
      _
    $region37: #{lstm_seq2seq.1} parent=1 // pred_fallthru
      _
    // Predicated region
    $region38: #{lstm_seq2seq.1} parent=1 // pred_check
      _
    $region39: #{lstm_seq2seq.1} parent=1 // pred_check_branch
      %77 = sbr.rel (0) target = $region41
    $region40: #{lstm_seq2seq.1} parent=1 // pred_region
      %s79 = ssub.s32 1024, 1024
      %80 = vsyncadd [#allocation13], %s79
      %s81 = sshll.u32 [#allocation12], 4
      %s82 = int_to_ptr.vmem [resolvable:$true] %s81
      %87 = dma.hbm_to_vmem [thread:$0]  %s9, 1024, %s82, [#allocation13], 64, 64, 4
    $region41: #{lstm_seq2seq.1} parent=1 // pred_fallthru
      _
    // Predicated region
    $region42: #{lstm_seq2seq.1} parent=1 // pred_check
      _
    $region43: #{lstm_seq2seq.1} parent=1 // pred_check_branch
      %89 = sbr.rel (0) target = $region45
    $region44: #{lstm_seq2seq.1} parent=1 // pred_region
      _
    $region45: #{lstm_seq2seq.1} parent=1 // pred_fallthru
      _
    // Predicated region
    $region46: #{lstm_seq2seq.1} parent=1 // pred_check
      _
    $region47: #{lstm_seq2seq.1} parent=1 // pred_check_branch
      %91 = sbr.rel (0) target = $region49
    $region48: #{lstm_seq2seq.1} parent=1 // pred_region
      %92 = dma.done [#allocation7], 16
    $region49: #{lstm_seq2seq.1} parent=1 // pred_fallthru
      _
    // Predicated region
    $region50: #{lstm_seq2seq.1} parent=1 // pred_check
      _
    $region51: #{lstm_seq2seq.1} parent=1 // pred_check_branch
      %94 = sbr.rel (0) target = $region53
    $region52: #{lstm_seq2seq.1} parent=1 // pred_region
      %95 = dma.done [#allocation6], 4096
    $region53: #{lstm_seq2seq.1} parent=1 // pred_fallthru
      _
    // Predicated region
    $region54: #{lstm_seq2seq.1} parent=1 // pred_check
      _
    $region55: #{lstm_seq2seq.1} parent=1 // pred_check_branch
      %97 = sbr.rel (0) target = $region57
    $region56: #{lstm_seq2seq.1} parent=1 // pred_region
      %98 = dma.done [#allocation10], 4096
    $region57: #{lstm_seq2seq.1} parent=1 // pred_fallthru
      _
    // Predicated region
    $region58: #{lstm_seq2seq.1} parent=1 // pred_check
      _
    $region59: #{lstm_seq2seq.1} parent=1 // pred_check_branch
      %100 = sbr.rel (0) target = $region61
    $region60: #{lstm_seq2seq.1} parent=1 // pred_region
      %101 = dma.done [#allocation10], 4096
    $region61: #{lstm_seq2seq.1} parent=1 // pred_fallthru
      _
    // Predicated region
    $region62: #{lstm_seq2seq.1} parent=1 // pred_check
      _
    $region63: #{lstm_seq2seq.1} parent=1 // pred_check_branch
      %103 = sbr.rel (0) target = $region65
    $region64: #{lstm_seq2seq.1} parent=1 // pred_region
      %104 = dma.done [#allocation13], 1024
    $region65: #{lstm_seq2seq.1} parent=1 // pred_fallthru
      _
    %105 = sfence
    %107 = vst [vmem:[#allocation2] sm:$0xff] 0.0
    %108 = vst [vmem:[#allocation3] sm:$0xff] 0.0
    %v109 = vld [vmem:[%s5] sm:$0xff]
    %v110 = vld [vmem:[%s5 + $0x8] sm:$0xff]
    %v111 = vld [vmem:[%s5 + $0x10] sm:$0xff]
    %v112 = vld [vmem:[%s5 + $0x18] sm:$0xff]
    %v113 = vld [vmem:[%s8] sm:$0xff]
    %v114 = vld [vmem:[%s8 + $0x8] sm:$0xff]
    %v115 = vld [vmem:[%s8 + $0x10] sm:$0xff]
    %v116 = vld [vmem:[%s8 + $0x18] sm:$0xff]
    %v117 = vld [vmem:[%s10] sm:$0xff]
    %v118 = vlaneseq
    %v119 = vand.u32 %v118, 127
    %v120 = vld [vmem:[%s1] sm:$0xf]
    %v121 = vld [vmem:[%s3] sm:$0xff]
    %v122 = vld [vmem:[%s3 + $0x8] sm:$0xff]
    %v123 = vld [vmem:[%s3 + $0x10] sm:$0xff]
    %v124 = vld [vmem:[%s3 + $0x18] sm:$0xff]
    %v125 = vld [vmem:[%s3 + $0x20] sm:$0xff]
    %v126 = vld [vmem:[%s3 + $0x28] sm:$0xff]
    %v127 = vld [vmem:[%s3 + $0x30] sm:$0xff]
    %v128 = vld [vmem:[%s3 + $0x38] sm:$0xff]
    %v129 = vld [vmem:[%s3 + $0x40] sm:$0xff]
    %v130 = vld [vmem:[%s3 + $0x48] sm:$0xff]
    %v131 = vld [vmem:[%s3 + $0x50] sm:$0xff]
    %v132 = vld [vmem:[%s3 + $0x58] sm:$0xff]
    %v133 = vld [vmem:[%s3 + $0x60] sm:$0xff]
    %v134 = vld [vmem:[%s3 + $0x68] sm:$0xff]
    %v135 = vld [vmem:[%s3 + $0x70] sm:$0xff]
    %v136 = vld [vmem:[%s3 + $0x78] sm:$0xff]
    %v137 = vld [vmem:[%s3 + $0x80] sm:$0xff]
    %v138 = vld [vmem:[%s3 + $0x88] sm:$0xff]
    %v139 = vld [vmem:[%s3 + $0x90] sm:$0xff]
    %v140 = vld [vmem:[%s3 + $0x98] sm:$0xff]
    %v141 = vld [vmem:[%s3 + $0xa0] sm:$0xff]
    %v142 = vld [vmem:[%s3 + $0xa8] sm:$0xff]
    %v143 = vld [vmem:[%s3 + $0xb0] sm:$0xff]
    %v144 = vld [vmem:[%s3 + $0xb8] sm:$0xff]
    %v145 = vld [vmem:[%s3 + $0xc0] sm:$0xff]
    %v146 = vld [vmem:[%s3 + $0xc8] sm:$0xff]
    %v147 = vld [vmem:[%s3 + $0xd0] sm:$0xff]
    %v148 = vld [vmem:[%s3 + $0xd8] sm:$0xff]
    %v149 = vld [vmem:[%s3 + $0xe0] sm:$0xff]
    %v150 = vld [vmem:[%s3 + $0xe8] sm:$0xff]
    %v151 = vld [vmem:[%s3 + $0xf0] sm:$0xff]
    %v152 = vld [vmem:[%s3 + $0xf8] sm:$0xff]
    %v153 = vld [vmem:[#allocation2] sm:$0xff]
    %v154 = vpack.c.bf16 %v153, %v153
    %v155 = vld [vmem:[#allocation8] sm:$0xff]
    %v156 = vld [vmem:[#allocation8 + $0x8] sm:$0xff]
    %v157 = vld [vmem:[#allocation8 + $0x10] sm:$0xff]
    %v158 = vld [vmem:[#allocation8 + $0x18] sm:$0xff]
    %v159 = vld [vmem:[#allocation8 + $0x20] sm:$0xff]
    %v160 = vld [vmem:[#allocation8 + $0x28] sm:$0xff]
    %v161 = vld [vmem:[#allocation8 + $0x30] sm:$0xff]
    %v162 = vld [vmem:[#allocation8 + $0x38] sm:$0xff]
    %v163 = vld [vmem:[#allocation8 + $0x40] sm:$0xff]
    %v164 = vld [vmem:[#allocation8 + $0x48] sm:$0xff]
    %v165 = vld [vmem:[#allocation8 + $0x50] sm:$0xff]
    %v166 = vld [vmem:[#allocation8 + $0x58] sm:$0xff]
    %v167 = vld [vmem:[#allocation8 + $0x60] sm:$0xff]
    %v168 = vld [vmem:[#allocation8 + $0x68] sm:$0xff]
    %v169 = vld [vmem:[#allocation8 + $0x70] sm:$0xff]
    %v170 = vld [vmem:[#allocation8 + $0x78] sm:$0xff]
    %v171 = vld [vmem:[#allocation8 + $0x80] sm:$0xff]
    %v172 = vld [vmem:[#allocation8 + $0x88] sm:$0xff]
    %v173 = vld [vmem:[#allocation8 + $0x90] sm:$0xff]
    %v174 = vld [vmem:[#allocation8 + $0x98] sm:$0xff]
    %v175 = vld [vmem:[#allocation8 + $0xa0] sm:$0xff]
    %v176 = vld [vmem:[#allocation8 + $0xa8] sm:$0xff]
    %v177 = vld [vmem:[#allocation8 + $0xb0] sm:$0xff]
    %v178 = vld [vmem:[#allocation8 + $0xb8] sm:$0xff]
    %v179 = vld [vmem:[#allocation8 + $0xc0] sm:$0xff]
    %v180 = vld [vmem:[#allocation8 + $0xc8] sm:$0xff]
    %v181 = vld [vmem:[#allocation8 + $0xd0] sm:$0xff]
    %v182 = vld [vmem:[#allocation8 + $0xd8] sm:$0xff]
    %v183 = vld [vmem:[#allocation8 + $0xe0] sm:$0xff]
    %v184 = vld [vmem:[#allocation8 + $0xe8] sm:$0xff]
    %v185 = vld [vmem:[#allocation8 + $0xf0] sm:$0xff]
    %v186 = vld [vmem:[#allocation8 + $0xf8] sm:$0xff]
    %v219 = vunpack.c.l.b16 %v155
    %v220 = vunpack.c.h.b16 %v155
    %v221 = vunpack.c.l.b16 %v156
    %v222 = vunpack.c.h.b16 %v156
    %v223 = vunpack.c.l.b16 %v157
    %v224 = vunpack.c.h.b16 %v157
    %v225 = vunpack.c.l.b16 %v158
    %v226 = vunpack.c.h.b16 %v158
    %v227 = vunpack.c.l.b16 %v159
    %v228 = vunpack.c.h.b16 %v159
    %v229 = vunpack.c.l.b16 %v160
    %v230 = vunpack.c.h.b16 %v160
    %v231 = vunpack.c.l.b16 %v161
    %v232 = vunpack.c.h.b16 %v161
    %v233 = vunpack.c.l.b16 %v162
    %v234 = vunpack.c.h.b16 %v162
    %v235 = vunpack.c.l.b16 %v163
    %v236 = vunpack.c.h.b16 %v163
    %v237 = vunpack.c.l.b16 %v164
    %v238 = vunpack.c.h.b16 %v164
    %v239 = vunpack.c.l.b16 %v165
    %v240 = vunpack.c.h.b16 %v165
    %v241 = vunpack.c.l.b16 %v166
    %v242 = vunpack.c.h.b16 %v166
    %v243 = vunpack.c.l.b16 %v167
    %v244 = vunpack.c.h.b16 %v167
    %v245 = vunpack.c.l.b16 %v168
    %v246 = vunpack.c.h.b16 %v168
    %v247 = vunpack.c.l.b16 %v169
    %v248 = vunpack.c.h.b16 %v169
    %v249 = vunpack.c.l.b16 %v170
    %v250 = vunpack.c.h.b16 %v170
    %v251 = vunpack.c.l.b16 %v171
    %v252 = vunpack.c.h.b16 %v171
    %v253 = vunpack.c.l.b16 %v172
    %v254 = vunpack.c.h.b16 %v172
    %v255 = vunpack.c.l.b16 %v173
    %v256 = vunpack.c.h.b16 %v173
    %v257 = vunpack.c.l.b16 %v174
    %v258 = vunpack.c.h.b16 %v174
    %v259 = vunpack.c.l.b16 %v175
    %v260 = vunpack.c.h.b16 %v175
    %v261 = vunpack.c.l.b16 %v176
    %v262 = vunpack.c.h.b16 %v176
    %v263 = vunpack.c.l.b16 %v177
    %v264 = vunpack.c.h.b16 %v177
    %v265 = vunpack.c.l.b16 %v178
    %v266 = vunpack.c.h.b16 %v178
    %v267 = vunpack.c.l.b16 %v179
    %v268 = vunpack.c.h.b16 %v179
    %v269 = vunpack.c.l.b16 %v180
    %v270 = vunpack.c.h.b16 %v180
    %v271 = vunpack.c.l.b16 %v181
    %v272 = vunpack.c.h.b16 %v181
    %v273 = vunpack.c.l.b16 %v182
    %v274 = vunpack.c.h.b16 %v182
    %v275 = vunpack.c.l.b16 %v183
    %v276 = vunpack.c.h.b16 %v183
    %v277 = vunpack.c.l.b16 %v184
    %v278 = vunpack.c.h.b16 %v184
    %v279 = vunpack.c.l.b16 %v185
    %v280 = vunpack.c.h.b16 %v185
    %v281 = vunpack.c.l.b16 %v186
    %v282 = vunpack.c.h.b16 %v186
    %v283 = vpack.c.b16 %v223, %v219
    %v284 = vpack.c.b16 %v224, %v220
    %v285 = vpack.c.b16 %v225, %v221
    %v286 = vpack.c.b16 %v226, %v222
    %v287 = vpack.c.b16 %v231, %v227
    %v288 = vpack.c.b16 %v232, %v228
    %v289 = vpack.c.b16 %v233, %v229
    %v290 = vpack.c.b16 %v234, %v230
    %v291 = vpack.c.b16 %v239, %v235
    %v292 = vpack.c.b16 %v240, %v236
    %v293 = vpack.c.b16 %v241, %v237
    %v294 = vpack.c.b16 %v242, %v238
    %v295 = vpack.c.b16 %v247, %v243
    %v296 = vpack.c.b16 %v248, %v244
    %v297 = vpack.c.b16 %v249, %v245
    %v298 = vpack.c.b16 %v250, %v246
    %v299 = vpack.c.b16 %v255, %v251
    %v300 = vpack.c.b16 %v256, %v252
    %v301 = vpack.c.b16 %v257, %v253
    %v302 = vpack.c.b16 %v258, %v254
    %v303 = vpack.c.b16 %v263, %v259
    %v304 = vpack.c.b16 %v264, %v260
    %v305 = vpack.c.b16 %v265, %v261
    %v306 = vpack.c.b16 %v266, %v262
    %v307 = vpack.c.b16 %v271, %v267
    %v308 = vpack.c.b16 %v272, %v268
    %v309 = vpack.c.b16 %v273, %v269
    %v310 = vpack.c.b16 %v274, %v270
    %v311 = vpack.c.b16 %v279, %v275
    %v312 = vpack.c.b16 %v280, %v276
    %v313 = vpack.c.b16 %v281, %v277
    %v314 = vpack.c.b16 %v282, %v278
    %347 = vmatprep.subr.bf16.mxu0 %v284
    %348 = vmatpush1.bf16.msra.mxu0 %v283
    %349 = vmatprep.subr.bf16.mxu0 %v288
    %350 = vmatpush1.bf16.msra.mxu0 %v287
    %351 = vmatprep.subr.bf16.mxu0 %v292
    %352 = vmatpush1.bf16.msra.mxu0 %v291
    %353 = vmatprep.subr.bf16.mxu0 %v296
    %354 = vmatpush1.bf16.msra.mxu0 %v295
    %355 = vmatprep.subr.bf16.mxu0 %v300
    %356 = vmatpush1.bf16.msra.mxu0 %v299
    %357 = vmatprep.subr.bf16.mxu0 %v304
    %358 = vmatpush1.bf16.msra.mxu0 %v303
    %359 = vmatprep.subr.bf16.mxu0 %v308
    %360 = vmatpush1.bf16.msra.mxu0 %v307
    %361 = vmatprep.subr.bf16.mxu0 %v312
    %362 = vmatpush1.bf16.msra.mxu0 %v311
    %363 = vmatprep.subr.bf16.mxu0 0
    %364 = vmatpush1.bf16.msra.mxu0 0
    %365 = vmatprep.subr.bf16.mxu0 0
    %366 = vmatpush1.bf16.msra.mxu0 0
    %367 = vmatprep.subr.bf16.mxu0 0
    %368 = vmatpush1.bf16.msra.mxu0 0
    %369 = vmatprep.subr.bf16.mxu0 0
    %370 = vmatpush1.bf16.msra.mxu0 0
    %371 = vmatprep.subr.bf16.mxu0 0
    %372 = vmatpush1.bf16.msra.mxu0 0
    %373 = vmatprep.subr.bf16.mxu0 0
    %374 = vmatpush1.bf16.msra.mxu0 0
    %375 = vmatprep.subr.bf16.mxu0 0
    %376 = vmatpush1.bf16.msra.mxu0 0
    %377 = vmatprep.subr.bf16.mxu0 0
    %378 = vmatpush1.bf16.msra.mxu0 0
    %379 = vmatprep.mubr.bf16.mxu0 0
    %380 = vmatmul.mubr.bf16.gmra.mrb[0].mxu0 %v154
    %v381 = vpop.f32.mrb[0].mxu0
    %v382 = vadd.f32 0.0, %v381
    %v383 = vpop.f32.mrb[0].mxu0
    %v384 = vadd.f32 0.0, %v383
    %v385 = vpop.f32.mrb[0].mxu0
    %v386 = vpop.f32.mrb[0].mxu0
    %387 = vdwg.mxu0
    %388 = vmatprep.subr.bf16.mxu0 %v286
    %389 = vmatpush1.bf16.msra.mxu0 %v285
    %390 = vmatprep.subr.bf16.mxu0 %v290
    %391 = vmatpush1.bf16.msra.mxu0 %v289
    %392 = vmatprep.subr.bf16.mxu0 %v294
    %393 = vmatpush1.bf16.msra.mxu0 %v293
    %394 = vmatprep.subr.bf16.mxu0 %v298
    %395 = vmatpush1.bf16.msra.mxu0 %v297
    %396 = vmatprep.subr.bf16.mxu0 %v302
    %397 = vmatpush1.bf16.msra.mxu0 %v301
    %398 = vmatprep.subr.bf16.mxu0 %v306
    %399 = vmatpush1.bf16.msra.mxu0 %v305
    %400 = vmatprep.subr.bf16.mxu0 %v310
    %401 = vmatpush1.bf16.msra.mxu0 %v309
    %402 = vmatprep.subr.bf16.mxu0 %v314
    %403 = vmatpush1.bf16.msra.mxu0 %v313
    %404 = vmatprep.subr.bf16.mxu0 0
    %405 = vmatpush1.bf16.msra.mxu0 0
    %406 = vmatprep.subr.bf16.mxu0 0
    %407 = vmatpush1.bf16.msra.mxu0 0
    %408 = vmatprep.subr.bf16.mxu0 0
    %409 = vmatpush1.bf16.msra.mxu0 0
    %410 = vmatprep.subr.bf16.mxu0 0
    %411 = vmatpush1.bf16.msra.mxu0 0
    %412 = vmatprep.subr.bf16.mxu0 0
    %413 = vmatpush1.bf16.msra.mxu0 0
    %414 = vmatprep.subr.bf16.mxu0 0
    %415 = vmatpush1.bf16.msra.mxu0 0
    %416 = vmatprep.subr.bf16.mxu0 0
    %417 = vmatpush1.bf16.msra.mxu0 0
    %418 = vmatprep.subr.bf16.mxu0 0
    %419 = vmatpush1.bf16.msra.mxu0 0
    %420 = vmatprep.mubr.bf16.mxu0 0
    %421 = vmatmul.mubr.bf16.gmra.mrb[0].mxu0 %v154
    %v422 = vpop.f32.mrb[0].mxu0
    %v423 = vadd.f32 0.0, %v422
    %v424 = vpop.f32.mrb[0].mxu0
    %v425 = vadd.f32 0.0, %v424
    %v426 = vpop.f32.mrb[0].mxu0
    %v427 = vpop.f32.mrb[0].mxu0
    %428 = vdwg.mxu0
    %v461 = vunpack.c.l.b16 %v121
    %v462 = vunpack.c.h.b16 %v121
    %v463 = vunpack.c.l.b16 %v122
    %v464 = vunpack.c.h.b16 %v122
    %v465 = vunpack.c.l.b16 %v123
    %v466 = vunpack.c.h.b16 %v123
    %v467 = vunpack.c.l.b16 %v124
    %v468 = vunpack.c.h.b16 %v124
    %v469 = vunpack.c.l.b16 %v125
    %v470 = vunpack.c.h.b16 %v125
    %v471 = vunpack.c.l.b16 %v126
    %v472 = vunpack.c.h.b16 %v126
    %v473 = vunpack.c.l.b16 %v127
    %v474 = vunpack.c.h.b16 %v127
    %v475 = vunpack.c.l.b16 %v128
    %v476 = vunpack.c.h.b16 %v128
    %v477 = vunpack.c.l.b16 %v129
    %v478 = vunpack.c.h.b16 %v129
    %v479 = vunpack.c.l.b16 %v130
    %v480 = vunpack.c.h.b16 %v130
    %v481 = vunpack.c.l.b16 %v131
    %v482 = vunpack.c.h.b16 %v131
    %v483 = vunpack.c.l.b16 %v132
    %v484 = vunpack.c.h.b16 %v132
    %v485 = vunpack.c.l.b16 %v133
    %v486 = vunpack.c.h.b16 %v133
    %v487 = vunpack.c.l.b16 %v134
    %v488 = vunpack.c.h.b16 %v134
    %v489 = vunpack.c.l.b16 %v135
    %v490 = vunpack.c.h.b16 %v135
    %v491 = vunpack.c.l.b16 %v136
    %v492 = vunpack.c.h.b16 %v136
    %v493 = vunpack.c.l.b16 %v137
    %v494 = vunpack.c.h.b16 %v137
    %v495 = vunpack.c.l.b16 %v138
    %v496 = vunpack.c.h.b16 %v138
    %v497 = vunpack.c.l.b16 %v139
    %v498 = vunpack.c.h.b16 %v139
    %v499 = vunpack.c.l.b16 %v140
    %v500 = vunpack.c.h.b16 %v140
    %v501 = vunpack.c.l.b16 %v141
    %v502 = vunpack.c.h.b16 %v141
    %v503 = vunpack.c.l.b16 %v142
    %v504 = vunpack.c.h.b16 %v142
    %v505 = vunpack.c.l.b16 %v143
    %v506 = vunpack.c.h.b16 %v143
    %v507 = vunpack.c.l.b16 %v144
    %v508 = vunpack.c.h.b16 %v144
    %v509 = vunpack.c.l.b16 %v145
    %v510 = vunpack.c.h.b16 %v145
    %v511 = vunpack.c.l.b16 %v146
    %v512 = vunpack.c.h.b16 %v146
    %v513 = vunpack.c.l.b16 %v147
    %v514 = vunpack.c.h.b16 %v147
    %v515 = vunpack.c.l.b16 %v148
    %v516 = vunpack.c.h.b16 %v148
    %v517 = vunpack.c.l.b16 %v149
    %v518 = vunpack.c.h.b16 %v149
    %v519 = vunpack.c.l.b16 %v150
    %v520 = vunpack.c.h.b16 %v150
    %v521 = vunpack.c.l.b16 %v151
    %v522 = vunpack.c.h.b16 %v151
    %v523 = vunpack.c.l.b16 %v152
    %v524 = vunpack.c.h.b16 %v152
    %v525 = vpack.c.b16 %v465, %v461
    %v526 = vpack.c.b16 %v466, %v462
    %v527 = vpack.c.b16 %v467, %v463
    %v528 = vpack.c.b16 %v468, %v464
    %v529 = vpack.c.b16 %v473, %v469
    %v530 = vpack.c.b16 %v474, %v470
    %v531 = vpack.c.b16 %v475, %v471
    %v532 = vpack.c.b16 %v476, %v472
    %v533 = vpack.c.b16 %v481, %v477
    %v534 = vpack.c.b16 %v482, %v478
    %v535 = vpack.c.b16 %v483, %v479
    %v536 = vpack.c.b16 %v484, %v480
    %v537 = vpack.c.b16 %v489, %v485
    %v538 = vpack.c.b16 %v490, %v486
    %v539 = vpack.c.b16 %v491, %v487
    %v540 = vpack.c.b16 %v492, %v488
    %v541 = vpack.c.b16 %v497, %v493
    %v542 = vpack.c.b16 %v498, %v494
    %v543 = vpack.c.b16 %v499, %v495
    %v544 = vpack.c.b16 %v500, %v496
    %v545 = vpack.c.b16 %v505, %v501
    %v546 = vpack.c.b16 %v506, %v502
    %v547 = vpack.c.b16 %v507, %v503
    %v548 = vpack.c.b16 %v508, %v504
    %v549 = vpack.c.b16 %v513, %v509
    %v550 = vpack.c.b16 %v514, %v510
    %v551 = vpack.c.b16 %v515, %v511
    %v552 = vpack.c.b16 %v516, %v512
    %v553 = vpack.c.b16 %v521, %v517
    %v554 = vpack.c.b16 %v522, %v518
    %v555 = vpack.c.b16 %v523, %v519
    %v556 = vpack.c.b16 %v524, %v520
    %589 = vmatprep.subr.bf16.mxu0 %v526
    %590 = vmatpush1.bf16.msra.mxu0 %v525
    %591 = vmatprep.subr.bf16.mxu0 %v530
    %592 = vmatpush1.bf16.msra.mxu0 %v529
    %593 = vmatprep.subr.bf16.mxu0 %v534
    %594 = vmatpush1.bf16.msra.mxu0 %v533
    %595 = vmatprep.subr.bf16.mxu0 %v538
    %596 = vmatpush1.bf16.msra.mxu0 %v537
    %597 = vmatprep.subr.bf16.mxu0 %v542
    %598 = vmatpush1.bf16.msra.mxu0 %v541
    %599 = vmatprep.subr.bf16.mxu0 %v546
    %600 = vmatpush1.bf16.msra.mxu0 %v545
    %601 = vmatprep.subr.bf16.mxu0 %v550
    %602 = vmatpush1.bf16.msra.mxu0 %v549
    %603 = vmatprep.subr.bf16.mxu0 %v554
    %604 = vmatpush1.bf16.msra.mxu0 %v553
    %605 = vmatprep.subr.bf16.mxu0 0
    %606 = vmatpush1.bf16.msra.mxu0 0
    %607 = vmatprep.subr.bf16.mxu0 0
    %608 = vmatpush1.bf16.msra.mxu0 0
    %609 = vmatprep.subr.bf16.mxu0 0
    %610 = vmatpush1.bf16.msra.mxu0 0
    %611 = vmatprep.subr.bf16.mxu0 0
    %612 = vmatpush1.bf16.msra.mxu0 0
    %613 = vmatprep.subr.bf16.mxu0 0
    %614 = vmatpush1.bf16.msra.mxu0 0
    %615 = vmatprep.subr.bf16.mxu0 0
    %616 = vmatpush1.bf16.msra.mxu0 0
    %617 = vmatprep.subr.bf16.mxu0 0
    %618 = vmatpush1.bf16.msra.mxu0 0
    %619 = vmatprep.subr.bf16.mxu0 0
    %620 = vmatpush1.bf16.msra.mxu0 0
    %621 = vmatprep.mubr.bf16.mxu0 0
    %622 = vmatmul.mubr.bf16.gmra.mrb[0].mxu0 %v120
    %v623 = vpop.f32.mrb[0].mxu0
    %v624 = vadd.f32 %v382, %v623
    %v625 = vpop.f32.mrb[0].mxu0
    %v626 = vadd.f32 %v384, %v625
    %v627 = vpop.f32.mrb[0].mxu0
    %v628 = vpop.f32.mrb[0].mxu0
    %629 = vdwg.mxu0
    %630 = vmatprep.subr.bf16.mxu0 %v528
    %631 = vmatpush1.bf16.msra.mxu0 %v527
    %632 = vmatprep.subr.bf16.mxu0 %v532
    %633 = vmatpush1.bf16.msra.mxu0 %v531
    %634 = vmatprep.subr.bf16.mxu0 %v536
    %635 = vmatpush1.bf16.msra.mxu0 %v535
    %636 = vmatprep.subr.bf16.mxu0 %v540
    %637 = vmatpush1.bf16.msra.mxu0 %v539
    %638 = vmatprep.subr.bf16.mxu0 %v544
    %639 = vmatpush1.bf16.msra.mxu0 %v543
    %640 = vmatprep.subr.bf16.mxu0 %v548
    %641 = vmatpush1.bf16.msra.mxu0 %v547
    %642 = vmatprep.subr.bf16.mxu0 %v552
    %643 = vmatpush1.bf16.msra.mxu0 %v551
    %644 = vmatprep.subr.bf16.mxu0 %v556
    %645 = vmatpush1.bf16.msra.mxu0 %v555
    %646 = vmatprep.subr.bf16.mxu0 0
    %647 = vmatpush1.bf16.msra.mxu0 0
    %648 = vmatprep.subr.bf16.mxu0 0
    %649 = vmatpush1.bf16.msra.mxu0 0
    %650 = vmatprep.subr.bf16.mxu0 0
    %651 = vmatpush1.bf16.msra.mxu0 0
    %652 = vmatprep.subr.bf16.mxu0 0
    %653 = vmatpush1.bf16.msra.mxu0 0
    %654 = vmatprep.subr.bf16.mxu0 0
    %655 = vmatpush1.bf16.msra.mxu0 0
    %656 = vmatprep.subr.bf16.mxu0 0
    %657 = vmatpush1.bf16.msra.mxu0 0
    %658 = vmatprep.subr.bf16.mxu0 0
    %659 = vmatpush1.bf16.msra.mxu0 0
    %660 = vmatprep.subr.bf16.mxu0 0
    %661 = vmatpush1.bf16.msra.mxu0 0
    %662 = vmatprep.mubr.bf16.mxu0 0
    %663 = vmatmul.mubr.bf16.gmra.mrb[0].mxu0 %v120
    %v664 = vpop.f32.mrb[0].mxu0
    %v665 = vadd.f32 %v423, %v664
    %v666 = vpop.f32.mrb[0].mxu0
    %v667 = vadd.f32 %v425, %v666
    %v668 = vpop.f32.mrb[0].mxu0
    %v669 = vpop.f32.mrb[0].mxu0
    %670 = vdwg.mxu0
    %v671 = vadd.f32 %v624, %v109
    %v672 = vadd.f32 %v626, %v110
    %v673 = vadd.f32 %v665, %v111
    %v674 = vadd.f32 %v667, %v112
    %v675 = vxor.u32 %v671, 2147483648
    %v676 = vmul.f32 %v675, 1.442695
    %v677 = vpow.pop %v676
    %v678 = vadd.f32 %v677, 1.0
    %v679 = vrcp.pop %v678
    %v680 = vmul.f32 1.0, %v679
    %v681 = vxor.u32 %v672, 2147483648
    %v682 = vmul.f32 %v681, 1.442695
    %v683 = vpow.pop %v682
    %v684 = vadd.f32 %v683, 1.0
    %v685 = vrcp.pop %v684
    %v686 = vmul.f32 1.0, %v685
    %v687 = vtanh.pop %v673
    %v688 = vxor.u32 %v674, 2147483648
    %v689 = vmul.f32 %v688, 1.442695
    %v690 = vpow.pop %v689
    %v691 = vadd.f32 %v690, 1.0
    %v692 = vrcp.pop %v691
    %v693 = vmul.f32 1.0, %v692
    %v694 = vld [vmem:[#allocation3] sm:$0xff]
    %v695 = vmul.f32 %v686, %v694
    %v696 = vmul.f32 %v680, %v687
    %v697 = vadd.f32 %v695, %v696
    %698 = vst [vmem:[#allocation3] sm:$0xff] %v697
    %v699 = vtanh.pop %v697
    %v700 = vmul.f32 %v693, %v699
    %701 = vst [vmem:[#allocation2] sm:$0xff] %v700
    %s702 = scalar_lea.vmem %s1, 4
    %v703 = vld [vmem:[%s702] sm:$0xf]
    %v704 = vld [vmem:[%s3] sm:$0xff]
    %v705 = vld [vmem:[%s3 + $0x8] sm:$0xff]
    %v706 = vld [vmem:[%s3 + $0x10] sm:$0xff]
    %v707 = vld [vmem:[%s3 + $0x18] sm:$0xff]
    %v708 = vld [vmem:[%s3 + $0x20] sm:$0xff]
    %v709 = vld [vmem:[%s3 + $0x28] sm:$0xff]
    %v710 = vld [vmem:[%s3 + $0x30] sm:$0xff]
    %v711 = vld [vmem:[%s3 + $0x38] sm:$0xff]
    %v712 = vld [vmem:[%s3 + $0x40] sm:$0xff]
    %v713 = vld [vmem:[%s3 + $0x48] sm:$0xff]
    %v714 = vld [vmem:[%s3 + $0x50] sm:$0xff]
    %v715 = vld [vmem:[%s3 + $0x58] sm:$0xff]
    %v716 = vld [vmem:[%s3 + $0x60] sm:$0xff]
    %v717 = vld [vmem:[%s3 + $0x68] sm:$0xff]
    %v718 = vld [vmem:[%s3 + $0x70] sm:$0xff]
    %v719 = vld [vmem:[%s3 + $0x78] sm:$0xff]
    %v720 = vld [vmem:[%s3 + $0x80] sm:$0xff]
    %v721 = vld [vmem:[%s3 + $0x88] sm:$0xff]
    %v722 = vld [vmem:[%s3 + $0x90] sm:$0xff]
    %v723 = vld [vmem:[%s3 + $0x98] sm:$0xff]
    %v724 = vld [vmem:[%s3 + $0xa0] sm:$0xff]
    %v725 = vld [vmem:[%s3 + $0xa8] sm:$0xff]
    %v726 = vld [vmem:[%s3 + $0xb0] sm:$0xff]
    %v727 = vld [vmem:[%s3 + $0xb8] sm:$0xff]
    %v728 = vld [vmem:[%s3 + $0xc0] sm:$0xff]
    %v729 = vld [vmem:[%s3 + $0xc8] sm:$0xff]
    %v730 = vld [vmem:[%s3 + $0xd0] sm:$0xff]
    %v731 = vld [vmem:[%s3 + $0xd8] sm:$0xff]
    %v732 = vld [vmem:[%s3 + $0xe0] sm:$0xff]
    %v733 = vld [vmem:[%s3 + $0xe8] sm:$0xff]
    %v734 = vld [vmem:[%s3 + $0xf0] sm:$0xff]
    %v735 = vld [vmem:[%s3 + $0xf8] sm:$0xff]
    %v736 = vld [vmem:[#allocation2] sm:$0xff]
    %v737 = vpack.c.bf16 %v736, %v736
    %v738 = vld [vmem:[#allocation8] sm:$0xff]
    %v739 = vld [vmem:[#allocation8 + $0x8] sm:$0xff]
    %v740 = vld [vmem:[#allocation8 + $0x10] sm:$0xff]
    %v741 = vld [vmem:[#allocation8 + $0x18] sm:$0xff]
    %v742 = vld [vmem:[#allocation8 + $0x20] sm:$0xff]
    %v743 = vld [vmem:[#allocation8 + $0x28] sm:$0xff]
    %v744 = vld [vmem:[#allocation8 + $0x30] sm:$0xff]
    %v745 = vld [vmem:[#allocation8 + $0x38] sm:$0xff]
    %v746 = vld [vmem:[#allocation8 + $0x40] sm:$0xff]
    %v747 = vld [vmem:[#allocation8 + $0x48] sm:$0xff]
    %v748 = vld [vmem:[#allocation8 + $0x50] sm:$0xff]
    %v749 = vld [vmem:[#allocation8 + $0x58] sm:$0xff]
    %v750 = vld [vmem:[#allocation8 + $0x60] sm:$0xff]
    %v751 = vld [vmem:[#allocation8 + $0x68] sm:$0xff]
    %v752 = vld [vmem:[#allocation8 + $0x70] sm:$0xff]
    %v753 = vld [vmem:[#allocation8 + $0x78] sm:$0xff]
    %v754 = vld [vmem:[#allocation8 + $0x80] sm:$0xff]
    %v755 = vld [vmem:[#allocation8 + $0x88] sm:$0xff]
    %v756 = vld [vmem:[#allocation8 + $0x90] sm:$0xff]
    %v757 = vld [vmem:[#allocation8 + $0x98] sm:$0xff]
    %v758 = vld [vmem:[#allocation8 + $0xa0] sm:$0xff]
    %v759 = vld [vmem:[#allocation8 + $0xa8] sm:$0xff]
    %v760 = vld [vmem:[#allocation8 + $0xb0] sm:$0xff]
    %v761 = vld [vmem:[#allocation8 + $0xb8] sm:$0xff]
    %v762 = vld [vmem:[#allocation8 + $0xc0] sm:$0xff]
    %v763 = vld [vmem:[#allocation8 + $0xc8] sm:$0xff]
    %v764 = vld [vmem:[#allocation8 + $0xd0] sm:$0xff]
    %v765 = vld [vmem:[#allocation8 + $0xd8] sm:$0xff]
    %v766 = vld [vmem:[#allocation8 + $0xe0] sm:$0xff]
    %v767 = vld [vmem:[#allocation8 + $0xe8] sm:$0xff]
    %v768 = vld [vmem:[#allocation8 + $0xf0] sm:$0xff]
    %v769 = vld [vmem:[#allocation8 + $0xf8] sm:$0xff]
    %v802 = vunpack.c.l.b16 %v738
    %v803 = vunpack.c.h.b16 %v738
    %v804 = vunpack.c.l.b16 %v739
    %v805 = vunpack.c.h.b16 %v739
    %v806 = vunpack.c.l.b16 %v740
    %v807 = vunpack.c.h.b16 %v740
    %v808 = vunpack.c.l.b16 %v741
    %v809 = vunpack.c.h.b16 %v741
    %v810 = vunpack.c.l.b16 %v742
    %v811 = vunpack.c.h.b16 %v742
    %v812 = vunpack.c.l.b16 %v743
    %v813 = vunpack.c.h.b16 %v743
    %v814 = vunpack.c.l.b16 %v744
    %v815 = vunpack.c.h.b16 %v744
    %v816 = vunpack.c.l.b16 %v745
    %v817 = vunpack.c.h.b16 %v745
    %v818 = vunpack.c.l.b16 %v746
    %v819 = vunpack.c.h.b16 %v746
    %v820 = vunpack.c.l.b16 %v747
    %v821 = vunpack.c.h.b16 %v747
    %v822 = vunpack.c.l.b16 %v748
    %v823 = vunpack.c.h.b16 %v748
    %v824 = vunpack.c.l.b16 %v749
    %v825 = vunpack.c.h.b16 %v749
    %v826 = vunpack.c.l.b16 %v750
    %v827 = vunpack.c.h.b16 %v750
    %v828 = vunpack.c.l.b16 %v751
    %v829 = vunpack.c.h.b16 %v751
    %v830 = vunpack.c.l.b16 %v752
    %v831 = vunpack.c.h.b16 %v752
    %v832 = vunpack.c.l.b16 %v753
    %v833 = vunpack.c.h.b16 %v753
    %v834 = vunpack.c.l.b16 %v754
    %v835 = vunpack.c.h.b16 %v754
    %v836 = vunpack.c.l.b16 %v755
    %v837 = vunpack.c.h.b16 %v755
    %v838 = vunpack.c.l.b16 %v756
    %v839 = vunpack.c.h.b16 %v756
    %v840 = vunpack.c.l.b16 %v757
    %v841 = vunpack.c.h.b16 %v757
    %v842 = vunpack.c.l.b16 %v758
    %v843 = vunpack.c.h.b16 %v758
    %v844 = vunpack.c.l.b16 %v759
    %v845 = vunpack.c.h.b16 %v759
    %v846 = vunpack.c.l.b16 %v760
    %v847 = vunpack.c.h.b16 %v760
    %v848 = vunpack.c.l.b16 %v761
    %v849 = vunpack.c.h.b16 %v761
    %v850 = vunpack.c.l.b16 %v762
    %v851 = vunpack.c.h.b16 %v762
    %v852 = vunpack.c.l.b16 %v763
    %v853 = vunpack.c.h.b16 %v763
    %v854 = vunpack.c.l.b16 %v764
    %v855 = vunpack.c.h.b16 %v764
    %v856 = vunpack.c.l.b16 %v765
    %v857 = vunpack.c.h.b16 %v765
    %v858 = vunpack.c.l.b16 %v766
    %v859 = vunpack.c.h.b16 %v766
    %v860 = vunpack.c.l.b16 %v767
    %v861 = vunpack.c.h.b16 %v767
    %v862 = vunpack.c.l.b16 %v768
    %v863 = vunpack.c.h.b16 %v768
    %v864 = vunpack.c.l.b16 %v769
    %v865 = vunpack.c.h.b16 %v769
    %v866 = vpack.c.b16 %v806, %v802
    %v867 = vpack.c.b16 %v807, %v803
    %v868 = vpack.c.b16 %v808, %v804
    %v869 = vpack.c.b16 %v809, %v805
    %v870 = vpack.c.b16 %v814, %v810
    %v871 = vpack.c.b16 %v815, %v811
    %v872 = vpack.c.b16 %v816, %v812
    %v873 = vpack.c.b16 %v817, %v813
    %v874 = vpack.c.b16 %v822, %v818
    %v875 = vpack.c.b16 %v823, %v819
    %v876 = vpack.c.b16 %v824, %v820
    %v877 = vpack.c.b16 %v825, %v821
    %v878 = vpack.c.b16 %v830, %v826
    %v879 = vpack.c.b16 %v831, %v827
    %v880 = vpack.c.b16 %v832, %v828
    %v881 = vpack.c.b16 %v833, %v829
    %v882 = vpack.c.b16 %v838, %v834
    %v883 = vpack.c.b16 %v839, %v835
    %v884 = vpack.c.b16 %v840, %v836
    %v885 = vpack.c.b16 %v841, %v837
    %v886 = vpack.c.b16 %v846, %v842
    %v887 = vpack.c.b16 %v847, %v843
    %v888 = vpack.c.b16 %v848, %v844
    %v889 = vpack.c.b16 %v849, %v845
    %v890 = vpack.c.b16 %v854, %v850
    %v891 = vpack.c.b16 %v855, %v851
    %v892 = vpack.c.b16 %v856, %v852
    %v893 = vpack.c.b16 %v857, %v853
    %v894 = vpack.c.b16 %v862, %v858
    %v895 = vpack.c.b16 %v863, %v859
    %v896 = vpack.c.b16 %v864, %v860
    %v897 = vpack.c.b16 %v865, %v861
    %930 = vmatprep.subr.bf16.mxu0 %v867
    %931 = vmatpush1.bf16.msra.mxu0 %v866
    %932 = vmatprep.subr.bf16.mxu0 %v871
    %933 = vmatpush1.bf16.msra.mxu0 %v870
    %934 = vmatprep.subr.bf16.mxu0 %v875
    %935 = vmatpush1.bf16.msra.mxu0 %v874
    %936 = vmatprep.subr.bf16.mxu0 %v879
    %937 = vmatpush1.bf16.msra.mxu0 %v878
    %938 = vmatprep.subr.bf16.mxu0 %v883
    %939 = vmatpush1.bf16.msra.mxu0 %v882
    %940 = vmatprep.subr.bf16.mxu0 %v887
    %941 = vmatpush1.bf16.msra.mxu0 %v886
    %942 = vmatprep.subr.bf16.mxu0 %v891
    %943 = vmatpush1.bf16.msra.mxu0 %v890
    %944 = vmatprep.subr.bf16.mxu0 %v895
    %945 = vmatpush1.bf16.msra.mxu0 %v894
    %946 = vmatprep.subr.bf16.mxu0 0
    %947 = vmatpush1.bf16.msra.mxu0 0
    %948 = vmatprep.subr.bf16.mxu0 0
    %949 = vmatpush1.bf16.msra.mxu0 0
    %950 = vmatprep.subr.bf16.mxu0 0
    %951 = vmatpush1.bf16.msra.mxu0 0
    %952 = vmatprep.subr.bf16.mxu0 0
    %953 = vmatpush1.bf16.msra.mxu0 0
    %954 = vmatprep.subr.bf16.mxu0 0
    %955 = vmatpush1.bf16.msra.mxu0 0
    %956 = vmatprep.subr.bf16.mxu0 0
    %957 = vmatpush1.bf16.msra.mxu0 0
    %958 = vmatprep.subr.bf16.mxu0 0
    %959 = vmatpush1.bf16.msra.mxu0 0
    %960 = vmatprep.subr.bf16.mxu0 0
    %961 = vmatpush1.bf16.msra.mxu0 0
    %962 = vmatprep.mubr.bf16.mxu0 0
    %963 = vmatmul.mubr.bf16.gmra.mrb[0].mxu0 %v737
    %v964 = vpop.f32.mrb[0].mxu0
    %v965 = vadd.f32 0.0, %v964
    %v966 = vpop.f32.mrb[0].mxu0
    %v967 = vadd.f32 0.0, %v966
    %v968 = vpop.f32.mrb[0].mxu0
    %v969 = vpop.f32.mrb[0].mxu0
    %970 = vdwg.mxu0
    %971 = vmatprep.subr.bf16.mxu0 %v869
    %972 = vmatpush1.bf16.msra.mxu0 %v868
    %973 = vmatprep.subr.bf16.mxu0 %v873
    %974 = vmatpush1.bf16.msra.mxu0 %v872
    %975 = vmatprep.subr.bf16.mxu0 %v877
    %976 = vmatpush1.bf16.msra.mxu0 %v876
    %977 = vmatprep.subr.bf16.mxu0 %v881
    %978 = vmatpush1.bf16.msra.mxu0 %v880
    %979 = vmatprep.subr.bf16.mxu0 %v885
    %980 = vmatpush1.bf16.msra.mxu0 %v884
    %981 = vmatprep.subr.bf16.mxu0 %v889
    %982 = vmatpush1.bf16.msra.mxu0 %v888
    %983 = vmatprep.subr.bf16.mxu0 %v893
    %984 = vmatpush1.bf16.msra.mxu0 %v892
    %985 = vmatprep.subr.bf16.mxu0 %v897
    %986 = vmatpush1.bf16.msra.mxu0 %v896
    %987 = vmatprep.subr.bf16.mxu0 0
    %988 = vmatpush1.bf16.msra.mxu0 0
    %989 = vmatprep.subr.bf16.mxu0 0
    %990 = vmatpush1.bf16.msra.mxu0 0
    %991 = vmatprep.subr.bf16.mxu0 0
    %992 = vmatpush1.bf16.msra.mxu0 0
    %993 = vmatprep.subr.bf16.mxu0 0
    %994 = vmatpush1.bf16.msra.mxu0 0
    %995 = vmatprep.subr.bf16.mxu0 0
    %996 = vmatpush1.bf16.msra.mxu0 0
    %997 = vmatprep.subr.bf16.mxu0 0
    %998 = vmatpush1.bf16.msra.mxu0 0
    %999 = vmatprep.subr.bf16.mxu0 0
    %1000 = vmatpush1.bf16.msra.mxu0 0
    %1001 = vmatprep.subr.bf16.mxu0 0
    %1002 = vmatpush1.bf16.msra.mxu0 0
    %1003 = vmatprep.mubr.bf16.mxu0 0
    %1004 = vmatmul.mubr.bf16.gmra.mrb[0].mxu0 %v737
    %v1005 = vpop.f32.mrb[0].mxu0
    %v1006 = vadd.f32 0.0, %v1005
    %v1007 = vpop.f32.mrb[0].mxu0
    %v1008 = vadd.f32 0.0, %v1007
    %v1009 = vpop.f32.mrb[0].mxu0
    %v1010 = vpop.f32.mrb[0].mxu0
    %1011 = vdwg.mxu0
    %v1044 = vunpack.c.l.b16 %v704
    %v1045 = vunpack.c.h.b16 %v704
    %v1046 = vunpack.c.l.b16 %v705
    %v1047 = vunpack.c.h.b16 %v705
    %v1048 = vunpack.c.l.b16 %v706
    %v1049 = vunpack.c.h.b16 %v706
    %v1050 = vunpack.c.l.b16 %v707
    %v1051 = vunpack.c.h.b16 %v707
    %v1052 = vunpack.c.l.b16 %v708
    %v1053 = vunpack.c.h.b16 %v708
    %v1054 = vunpack.c.l.b16 %v709
    %v1055 = vunpack.c.h.b16 %v709
    %v1056 = vunpack.c.l.b16 %v710
    %v1057 = vunpack.c.h.b16 %v710
    %v1058 = vunpack.c.l.b16 %v711
    %v1059 = vunpack.c.h.b16 %v711
    %v1060 = vunpack.c.l.b16 %v712
    %v1061 = vunpack.c.h.b16 %v712
    %v1062 = vunpack.c.l.b16 %v713
    %v1063 = vunpack.c.h.b16 %v713
    %v1064 = vunpack.c.l.b16 %v714
    %v1065 = vunpack.c.h.b16 %v714
    %v1066 = vunpack.c.l.b16 %v715
    %v1067 = vunpack.c.h.b16 %v715
    %v1068 = vunpack.c.l.b16 %v716
    %v1069 = vunpack.c.h.b16 %v716
    %v1070 = vunpack.c.l.b16 %v717
    %v1071 = vunpack.c.h.b16 %v717
    %v1072 = vunpack.c.l.b16 %v718
    %v1073 = vunpack.c.h.b16 %v718
    %v1074 = vunpack.c.l.b16 %v719
    %v1075 = vunpack.c.h.b16 %v719
    %v1076 = vunpack.c.l.b16 %v720
    %v1077 = vunpack.c.h.b16 %v720
    %v1078 = vunpack.c.l.b16 %v721
    %v1079 = vunpack.c.h.b16 %v721
    %v1080 = vunpack.c.l.b16 %v722
    %v1081 = vunpack.c.h.b16 %v722
    %v1082 = vunpack.c.l.b16 %v723
    %v1083 = vunpack.c.h.b16 %v723
    %v1084 = vunpack.c.l.b16 %v724
    %v1085 = vunpack.c.h.b16 %v724
    %v1086 = vunpack.c.l.b16 %v725
    %v1087 = vunpack.c.h.b16 %v725
    %v1088 = vunpack.c.l.b16 %v726
    %v1089 = vunpack.c.h.b16 %v726
    %v1090 = vunpack.c.l.b16 %v727
    %v1091 = vunpack.c.h.b16 %v727
    %v1092 = vunpack.c.l.b16 %v728
    %v1093 = vunpack.c.h.b16 %v728
    %v1094 = vunpack.c.l.b16 %v729
    %v1095 = vunpack.c.h.b16 %v729
    %v1096 = vunpack.c.l.b16 %v730
    %v1097 = vunpack.c.h.b16 %v730
    %v1098 = vunpack.c.l.b16 %v731
    %v1099 = vunpack.c.h.b16 %v731
    %v1100 = vunpack.c.l.b16 %v732
    %v1101 = vunpack.c.h.b16 %v732
    %v1102 = vunpack.c.l.b16 %v733
    %v1103 = vunpack.c.h.b16 %v733
    %v1104 = vunpack.c.l.b16 %v734
    %v1105 = vunpack.c.h.b16 %v734
    %v1106 = vunpack.c.l.b16 %v735
    %v1107 = vunpack.c.h.b16 %v735
    %v1108 = vpack.c.b16 %v1048, %v1044
    %v1109 = vpack.c.b16 %v1049, %v1045
    %v1110 = vpack.c.b16 %v1050, %v1046
    %v1111 = vpack.c.b16 %v1051, %v1047
    %v1112 = vpack.c.b16 %v1056, %v1052
    %v1113 = vpack.c.b16 %v1057, %v1053
    %v1114 = vpack.c.b16 %v1058, %v1054
    %v1115 = vpack.c.b16 %v1059, %v1055
    %v1116 = vpack.c.b16 %v1064, %v1060
    %v1117 = vpack.c.b16 %v1065, %v1061
    %v1118 = vpack.c.b16 %v1066, %v1062
    %v1119 = vpack.c.b16 %v1067, %v1063
    %v1120 = vpack.c.b16 %v1072, %v1068
    %v1121 = vpack.c.b16 %v1073, %v1069
    %v1122 = vpack.c.b16 %v1074, %v1070
    %v1123 = vpack.c.b16 %v1075, %v1071
    %v1124 = vpack.c.b16 %v1080, %v1076
    %v1125 = vpack.c.b16 %v1081, %v1077
    %v1126 = vpack.c.b16 %v1082, %v1078
    %v1127 = vpack.c.b16 %v1083, %v1079
    %v1128 = vpack.c.b16 %v1088, %v1084
    %v1129 = vpack.c.b16 %v1089, %v1085
    %v1130 = vpack.c.b16 %v1090, %v1086
    %v1131 = vpack.c.b16 %v1091, %v1087
    %v1132 = vpack.c.b16 %v1096, %v1092
    %v1133 = vpack.c.b16 %v1097, %v1093
    %v1134 = vpack.c.b16 %v1098, %v1094
    %v1135 = vpack.c.b16 %v1099, %v1095
    %v1136 = vpack.c.b16 %v1104, %v1100
    %v1137 = vpack.c.b16 %v1105, %v1101
    %v1138 = vpack.c.b16 %v1106, %v1102
    %v1139 = vpack.c.b16 %v1107, %v1103
    %1172 = vmatprep.subr.bf16.mxu0 %v1109
    %1173 = vmatpush1.bf16.msra.mxu0 %v1108
    %1174 = vmatprep.subr.bf16.mxu0 %v1113
    %1175 = vmatpush1.bf16.msra.mxu0 %v1112
    %1176 = vmatprep.subr.bf16.mxu0 %v1117
    %1177 = vmatpush1.bf16.msra.mxu0 %v1116
    %1178 = vmatprep.subr.bf16.mxu0 %v1121
    %1179 = vmatpush1.bf16.msra.mxu0 %v1120
    %1180 = vmatprep.subr.bf16.mxu0 %v1125
    %1181 = vmatpush1.bf16.msra.mxu0 %v1124
    %1182 = vmatprep.subr.bf16.mxu0 %v1129
    %1183 = vmatpush1.bf16.msra.mxu0 %v1128
    %1184 = vmatprep.subr.bf16.mxu0 %v1133
    %1185 = vmatpush1.bf16.msra.mxu0 %v1132
    %1186 = vmatprep.subr.bf16.mxu0 %v1137
    %1187 = vmatpush1.bf16.msra.mxu0 %v1136
    %1188 = vmatprep.subr.bf16.mxu0 0
    %1189 = vmatpush1.bf16.msra.mxu0 0
    %1190 = vmatprep.subr.bf16.mxu0 0
    %1191 = vmatpush1.bf16.msra.mxu0 0
    %1192 = vmatprep.subr.bf16.mxu0 0
    %1193 = vmatpush1.bf16.msra.mxu0 0
    %1194 = vmatprep.subr.bf16.mxu0 0
    %1195 = vmatpush1.bf16.msra.mxu0 0
    %1196 = vmatprep.subr.bf16.mxu0 0
    %1197 = vmatpush1.bf16.msra.mxu0 0
    %1198 = vmatprep.subr.bf16.mxu0 0
    %1199 = vmatpush1.bf16.msra.mxu0 0
    %1200 = vmatprep.subr.bf16.mxu0 0
    %1201 = vmatpush1.bf16.msra.mxu0 0
    %1202 = vmatprep.subr.bf16.mxu0 0
    %1203 = vmatpush1.bf16.msra.mxu0 0
    %1204 = vmatprep.mubr.bf16.mxu0 0
    %1205 = vmatmul.mubr.bf16.gmra.mrb[0].mxu0 %v703
    %v1206 = vpop.f32.mrb[0].mxu0
    %v1207 = vadd.f32 %v965, %v1206
    %v1208 = vpop.f32.mrb[0].mxu0
    %v1209 = vadd.f32 %v967, %v1208
    %v1210 = vpop.f32.mrb[0].mxu0
    %v1211 = vpop.f32.mrb[0].mxu0
    %1212 = vdwg.mxu0
    %1213 = vmatprep.subr.bf16.mxu0 %v1111
    %1214 = vmatpush1.bf16.msra.mxu0 %v1110
    %1215 = vmatprep.subr.bf16.mxu0 %v1115
    %1216 = vmatpush1.bf16.msra.mxu0 %v1114
    %1217 = vmatprep.subr.bf16.mxu0 %v1119
    %1218 = vmatpush1.bf16.msra.mxu0 %v1118
    %1219 = vmatprep.subr.bf16.mxu0 %v1123
    %1220 = vmatpush1.bf16.msra.mxu0 %v1122
    %1221 = vmatprep.subr.bf16.mxu0 %v1127
    %1222 = vmatpush1.bf16.msra.mxu0 %v1126
    %1223 = vmatprep.subr.bf16.mxu0 %v1131
    %1224 = vmatpush1.bf16.msra.mxu0 %v1130
    %1225 = vmatprep.subr.bf16.mxu0 %v1135
    %1226 = vmatpush1.bf16.msra.mxu0 %v1134
    %1227 = vmatprep.subr.bf16.mxu0 %v1139
    %1228 = vmatpush1.bf16.msra.mxu0 %v1138
    %1229 = vmatprep.subr.bf16.mxu0 0
    %1230 = vmatpush1.bf16.msra.mxu0 0
    %1231 = vmatprep.subr.bf16.mxu0 0
    %1232 = vmatpush1.bf16.msra.mxu0 0
    %1233 = vmatprep.subr.bf16.mxu0 0
    %1234 = vmatpush1.bf16.msra.mxu0 0
    %1235 = vmatprep.subr.bf16.mxu0 0
    %1236 = vmatpush1.bf16.msra.mxu0 0
    %1237 = vmatprep.subr.bf16.mxu0 0
    %1238 = vmatpush1.bf16.msra.mxu0 0
    %1239 = vmatprep.subr.bf16.mxu0 0
    %1240 = vmatpush1.bf16.msra.mxu0 0
    %1241 = vmatprep.subr.bf16.mxu0 0
    %1242 = vmatpush1.bf16.msra.mxu0 0
    %1243 = vmatprep.subr.bf16.mxu0 0
    %1244 = vmatpush1.bf16.msra.mxu0 0
    %1245 = vmatprep.mubr.bf16.mxu0 0
    %1246 = vmatmul.mubr.bf16.gmra.mrb[0].mxu0 %v703
    %v1247 = vpop.f32.mrb[0].mxu0
    %v1248 = vadd.f32 %v1006, %v1247
    %v1249 = vpop.f32.mrb[0].mxu0
    %v1250 = vadd.f32 %v1008, %v1249
    %v1251 = vpop.f32.mrb[0].mxu0
    %v1252 = vpop.f32.mrb[0].mxu0
    %1253 = vdwg.mxu0
    %v1254 = vadd.f32 %v1207, %v109
    %v1255 = vadd.f32 %v1209, %v110
    %v1256 = vadd.f32 %v1248, %v111
    %v1257 = vadd.f32 %v1250, %v112
    %v1258 = vxor.u32 %v1254, 2147483648
    %v1259 = vmul.f32 %v1258, 1.442695
    %v1260 = vpow.pop %v1259
    %v1261 = vadd.f32 %v1260, 1.0
    %v1262 = vrcp.pop %v1261
    %v1263 = vmul.f32 1.0, %v1262
    %v1264 = vxor.u32 %v1255, 2147483648
    %v1265 = vmul.f32 %v1264, 1.442695
    %v1266 = vpow.pop %v1265
    %v1267 = vadd.f32 %v1266, 1.0
    %v1268 = vrcp.pop %v1267
    %v1269 = vmul.f32 1.0, %v1268
    %v1270 = vtanh.pop %v1256
    %v1271 = vxor.u32 %v1257, 2147483648
    %v1272 = vmul.f32 %v1271, 1.442695
    %v1273 = vpow.pop %v1272
    %v1274 = vadd.f32 %v1273, 1.0
    %v1275 = vrcp.pop %v1274
    %v1276 = vmul.f32 1.0, %v1275
    %v1277 = vld [vmem:[#allocation3] sm:$0xff]
    %v1278 = vmul.f32 %v1269, %v1277
    %v1279 = vmul.f32 %v1263, %v1270
    %v1280 = vadd.f32 %v1278, %v1279
    %1281 = vst [vmem:[#allocation3] sm:$0xff] %v1280
    %v1282 = vtanh.pop %v1280
    %v1283 = vmul.f32 %v1276, %v1282
    %1284 = vst [vmem:[#allocation2] sm:$0xff] %v1283
    %s1285 = scalar_lea.vmem %s1, 8
    %v1286 = vld [vmem:[%s1285] sm:$0xf]
    %v1287 = vld [vmem:[%s3] sm:$0xff]
    %v1288 = vld [vmem:[%s3 + $0x8] sm:$0xff]
    %v1289 = vld [vmem:[%s3 + $0x10] sm:$0xff]
    %v1290 = vld [vmem:[%s3 + $0x18] sm:$0xff]
    %v1291 = vld [vmem:[%s3 + $0x20] sm:$0xff]
    %v1292 = vld [vmem:[%s3 + $0x28] sm:$0xff]
    %v1293 = vld [vmem:[%s3 + $0x30] sm:$0xff]
    %v1294 = vld [vmem:[%s3 + $0x38] sm:$0xff]
    %v1295 = vld [vmem:[%s3 + $0x40] sm:$0xff]
    %v1296 = vld [vmem:[%s3 + $0x48] sm:$0xff]
    %v1297 = vld [vmem:[%s3 + $0x50] sm:$0xff]
    %v1298 = vld [vmem:[%s3 + $0x58] sm:$0xff]
    %v1299 = vld [vmem:[%s3 + $0x60] sm:$0xff]
    %v1300 = vld [vmem:[%s3 + $0x68] sm:$0xff]
    %v1301 = vld [vmem:[%s3 + $0x70] sm:$0xff]
    %v1302 = vld [vmem:[%s3 + $0x78] sm:$0xff]
    %v1303 = vld [vmem:[%s3 + $0x80] sm:$0xff]
    %v1304 = vld [vmem:[%s3 + $0x88] sm:$0xff]
    %v1305 = vld [vmem:[%s3 + $0x90] sm:$0xff]
    %v1306 = vld [vmem:[%s3 + $0x98] sm:$0xff]
    %v1307 = vld [vmem:[%s3 + $0xa0] sm:$0xff]
    %v1308 = vld [vmem:[%s3 + $0xa8] sm:$0xff]
    %v1309 = vld [vmem:[%s3 + $0xb0] sm:$0xff]
    %v1310 = vld [vmem:[%s3 + $0xb8] sm:$0xff]
    %v1311 = vld [vmem:[%s3 + $0xc0] sm:$0xff]
    %v1312 = vld [vmem:[%s3 + $0xc8] sm:$0xff]
    %v1313 = vld [vmem:[%s3 + $0xd0] sm:$0xff]
    %v1314 = vld [vmem:[%s3 + $0xd8] sm:$0xff]
    %v1315 = vld [vmem:[%s3 + $0xe0] sm:$0xff]
    %v1316 = vld [vmem:[%s3 + $0xe8] sm:$0xff]
    %v1317 = vld [vmem:[%s3 + $0xf0] sm:$0xff]
    %v1318 = vld [vmem:[%s3 + $0xf8] sm:$0xff]
    %v1319 = vld [vmem:[#allocation2] sm:$0xff]
    %v1320 = vpack.c.bf16 %v1319, %v1319
    %v1321 = vld [vmem:[#allocation8] sm:$0xff]
    %v1322 = vld [vmem:[#allocation8 + $0x8] sm:$0xff]
    %v1323 = vld [vmem:[#allocation8 + $0x10] sm:$0xff]
    %v1324 = vld [vmem:[#allocation8 + $0x18] sm:$0xff]
    %v1325 = vld [vmem:[#allocation8 + $0x20] sm:$0xff]
    %v1326 = vld [vmem:[#allocation8 + $0x28] sm:$0xff]
    %v1327 = vld [vmem:[#allocation8 + $0x30] sm:$0xff]
    %v1328 = vld [vmem:[#allocation8 + $0x38] sm:$0xff]
    %v1329 = vld [vmem:[#allocation8 + $0x40] sm:$0xff]
    %v1330 = vld [vmem:[#allocation8 + $0x48] sm:$0xff]
    %v1331 = vld [vmem:[#allocation8 + $0x50] sm:$0xff]
    %v1332 = vld [vmem:[#allocation8 + $0x58] sm:$0xff]
    %v1333 = vld [vmem:[#allocation8 + $0x60] sm:$0xff]
    %v1334 = vld [vmem:[#allocation8 + $0x68] sm:$0xff]
    %v1335 = vld [vmem:[#allocation8 + $0x70] sm:$0xff]
    %v1336 = vld [vmem:[#allocation8 + $0x78] sm:$0xff]
    %v1337 = vld [vmem:[#allocation8 + $0x80] sm:$0xff]
    %v1338 = vld [vmem:[#allocation8 + $0x88] sm:$0xff]
    %v1339 = vld [vmem:[#allocation8 + $0x90] sm:$0xff]
    %v1340 = vld [vmem:[#allocation8 + $0x98] sm:$0xff]
    %v1341 = vld [vmem:[#allocation8 + $0xa0] sm:$0xff]
    %v1342 = vld [vmem:[#allocation8 + $0xa8] sm:$0xff]
    %v1343 = vld [vmem:[#allocation8 + $0xb0] sm:$0xff]
    %v1344 = vld [vmem:[#allocation8 + $0xb8] sm:$0xff]
    %v1345 = vld [vmem:[#allocation8 + $0xc0] sm:$0xff]
    %v1346 = vld [vmem:[#allocation8 + $0xc8] sm:$0xff]
    %v1347 = vld [vmem:[#allocation8 + $0xd0] sm:$0xff]
    %v1348 = vld [vmem:[#allocation8 + $0xd8] sm:$0xff]
    %v1349 = vld [vmem:[#allocation8 + $0xe0] sm:$0xff]
    %v1350 = vld [vmem:[#allocation8 + $0xe8] sm:$0xff]
    %v1351 = vld [vmem:[#allocation8 + $0xf0] sm:$0xff]
    %v1352 = vld [vmem:[#allocation8 + $0xf8] sm:$0xff]
    %v1385 = vunpack.c.l.b16 %v1321
    %v1386 = vunpack.c.h.b16 %v1321
    %v1387 = vunpack.c.l.b16 %v1322
    %v1388 = vunpack.c.h.b16 %v1322
    %v1389 = vunpack.c.l.b16 %v1323
    %v1390 = vunpack.c.h.b16 %v1323
    %v1391 = vunpack.c.l.b16 %v1324
    %v1392 = vunpack.c.h.b16 %v1324
    %v1393 = vunpack.c.l.b16 %v1325
    %v1394 = vunpack.c.h.b16 %v1325
    %v1395 = vunpack.c.l.b16 %v1326
    %v1396 = vunpack.c.h.b16 %v1326
    %v1397 = vunpack.c.l.b16 %v1327
    %v1398 = vunpack.c.h.b16 %v1327
    %v1399 = vunpack.c.l.b16 %v1328
    %v1400 = vunpack.c.h.b16 %v1328
    %v1401 = vunpack.c.l.b16 %v1329
    %v1402 = vunpack.c.h.b16 %v1329
    %v1403 = vunpack.c.l.b16 %v1330
    %v1404 = vunpack.c.h.b16 %v1330
    %v1405 = vunpack.c.l.b16 %v1331
    %v1406 = vunpack.c.h.b16 %v1331
    %v1407 = vunpack.c.l.b16 %v1332
    %v1408 = vunpack.c.h.b16 %v1332
    %v1409 = vunpack.c.l.b16 %v1333
    %v1410 = vunpack.c.h.b16 %v1333
    %v1411 = vunpack.c.l.b16 %v1334
    %v1412 = vunpack.c.h.b16 %v1334
    %v1413 = vunpack.c.l.b16 %v1335
    %v1414 = vunpack.c.h.b16 %v1335
    %v1415 = vunpack.c.l.b16 %v1336
    %v1416 = vunpack.c.h.b16 %v1336
    %v1417 = vunpack.c.l.b16 %v1337
    %v1418 = vunpack.c.h.b16 %v1337
    %v1419 = vunpack.c.l.b16 %v1338
    %v1420 = vunpack.c.h.b16 %v1338
    %v1421 = vunpack.c.l.b16 %v1339
    %v1422 = vunpack.c.h.b16 %v1339
    %v1423 = vunpack.c.l.b16 %v1340
    %v1424 = vunpack.c.h.b16 %v1340
    %v1425 = vunpack.c.l.b16 %v1341
    %v1426 = vunpack.c.h.b16 %v1341
    %v1427 = vunpack.c.l.b16 %v1342
    %v1428 = vunpack.c.h.b16 %v1342
    %v1429 = vunpack.c.l.b16 %v1343
    %v1430 = vunpack.c.h.b16 %v1343
    %v1431 = vunpack.c.l.b16 %v1344
    %v1432 = vunpack.c.h.b16 %v1344
    %v1433 = vunpack.c.l.b16 %v1345
    %v1434 = vunpack.c.h.b16 %v1345
    %v1435 = vunpack.c.l.b16 %v1346
    %v1436 = vunpack.c.h.b16 %v1346
    %v1437 = vunpack.c.l.b16 %v1347
    %v1438 = vunpack.c.h.b16 %v1347
    %v1439 = vunpack.c.l.b16 %v1348
    %v1440 = vunpack.c.h.b16 %v1348
    %v1441 = vunpack.c.l.b16 %v1349
    %v1442 = vunpack.c.h.b16 %v1349
    %v1443 = vunpack.c.l.b16 %v1350
    %v1444 = vunpack.c.h.b16 %v1350
    %v1445 = vunpack.c.l.b16 %v1351
    %v1446 = vunpack.c.h.b16 %v1351
    %v1447 = vunpack.c.l.b16 %v1352
    %v1448 = vunpack.c.h.b16 %v1352
    %v1449 = vpack.c.b16 %v1389, %v1385
    %v1450 = vpack.c.b16 %v1390, %v1386
    %v1451 = vpack.c.b16 %v1391, %v1387
    %v1452 = vpack.c.b16 %v1392, %v1388
    %v1453 = vpack.c.b16 %v1397, %v1393
    %v1454 = vpack.c.b16 %v1398, %v1394
    %v1455 = vpack.c.b16 %v1399, %v1395
    %v1456 = vpack.c.b16 %v1400, %v1396
    %v1457 = vpack.c.b16 %v1405, %v1401
    %v1458 = vpack.c.b16 %v1406, %v1402
    %v1459 = vpack.c.b16 %v1407, %v1403
    %v1460 = vpack.c.b16 %v1408, %v1404
    %v1461 = vpack.c.b16 %v1413, %v1409
    %v1462 = vpack.c.b16 %v1414, %v1410
    %v1463 = vpack.c.b16 %v1415, %v1411
    %v1464 = vpack.c.b16 %v1416, %v1412
    %v1465 = vpack.c.b16 %v1421, %v1417
    %v1466 = vpack.c.b16 %v1422, %v1418
    %v1467 = vpack.c.b16 %v1423, %v1419
    %v1468 = vpack.c.b16 %v1424, %v1420
    %v1469 = vpack.c.b16 %v1429, %v1425
    %v1470 = vpack.c.b16 %v1430, %v1426
    %v1471 = vpack.c.b16 %v1431, %v1427
    %v1472 = vpack.c.b16 %v1432, %v1428
    %v1473 = vpack.c.b16 %v1437, %v1433
    %v1474 = vpack.c.b16 %v1438, %v1434
    %v1475 = vpack.c.b16 %v1439, %v1435
    %v1476 = vpack.c.b16 %v1440, %v1436
    %v1477 = vpack.c.b16 %v1445, %v1441
    %v1478 = vpack.c.b16 %v1446, %v1442
    %v1479 = vpack.c.b16 %v1447, %v1443
    %v1480 = vpack.c.b16 %v1448, %v1444
    %1513 = vmatprep.subr.bf16.mxu0 %v1450
    %1514 = vmatpush1.bf16.msra.mxu0 %v1449
    %1515 = vmatprep.subr.bf16.mxu0 %v1454
    %1516 = vmatpush1.bf16.msra.mxu0 %v1453
    %1517 = vmatprep.subr.bf16.mxu0 %v1458
    %1518 = vmatpush1.bf16.msra.mxu0 %v1457
    %1519 = vmatprep.subr.bf16.mxu0 %v1462
    %1520 = vmatpush1.bf16.msra.mxu0 %v1461
    %1521 = vmatprep.subr.bf16.mxu0 %v1466
    %1522 = vmatpush1.bf16.msra.mxu0 %v1465
    %1523 = vmatprep.subr.bf16.mxu0 %v1470
    %1524 = vmatpush1.bf16.msra.mxu0 %v1469
    %1525 = vmatprep.subr.bf16.mxu0 %v1474
    %1526 = vmatpush1.bf16.msra.mxu0 %v1473
    %1527 = vmatprep.subr.bf16.mxu0 %v1478
    %1528 = vmatpush1.bf16.msra.mxu0 %v1477
    %1529 = vmatprep.subr.bf16.mxu0 0
    %1530 = vmatpush1.bf16.msra.mxu0 0
    %1531 = vmatprep.subr.bf16.mxu0 0
    %1532 = vmatpush1.bf16.msra.mxu0 0
    %1533 = vmatprep.subr.bf16.mxu0 0
    %1534 = vmatpush1.bf16.msra.mxu0 0
    %1535 = vmatprep.subr.bf16.mxu0 0
    %1536 = vmatpush1.bf16.msra.mxu0 0
    %1537 = vmatprep.subr.bf16.mxu0 0
    %1538 = vmatpush1.bf16.msra.mxu0 0
    %1539 = vmatprep.subr.bf16.mxu0 0
    %1540 = vmatpush1.bf16.msra.mxu0 0
    %1541 = vmatprep.subr.bf16.mxu0 0
    %1542 = vmatpush1.bf16.msra.mxu0 0
    %1543 = vmatprep.subr.bf16.mxu0 0
    %1544 = vmatpush1.bf16.msra.mxu0 0
    %1545 = vmatprep.mubr.bf16.mxu0 0
    %1546 = vmatmul.mubr.bf16.gmra.mrb[0].mxu0 %v1320
    %v1547 = vpop.f32.mrb[0].mxu0
    %v1548 = vadd.f32 0.0, %v1547
    %v1549 = vpop.f32.mrb[0].mxu0
    %v1550 = vadd.f32 0.0, %v1549
    %v1551 = vpop.f32.mrb[0].mxu0
    %v1552 = vpop.f32.mrb[0].mxu0
    %1553 = vdwg.mxu0
    %1554 = vmatprep.subr.bf16.mxu0 %v1452
    %1555 = vmatpush1.bf16.msra.mxu0 %v1451
    %1556 = vmatprep.subr.bf16.mxu0 %v1456
    %1557 = vmatpush1.bf16.msra.mxu0 %v1455
    %1558 = vmatprep.subr.bf16.mxu0 %v1460
    %1559 = vmatpush1.bf16.msra.mxu0 %v1459
    %1560 = vmatprep.subr.bf16.mxu0 %v1464
    %1561 = vmatpush1.bf16.msra.mxu0 %v1463
    %1562 = vmatprep.subr.bf16.mxu0 %v1468
    %1563 = vmatpush1.bf16.msra.mxu0 %v1467
    %1564 = vmatprep.subr.bf16.mxu0 %v1472
    %1565 = vmatpush1.bf16.msra.mxu0 %v1471
    %1566 = vmatprep.subr.bf16.mxu0 %v1476
    %1567 = vmatpush1.bf16.msra.mxu0 %v1475
    %1568 = vmatprep.subr.bf16.mxu0 %v1480
    %1569 = vmatpush1.bf16.msra.mxu0 %v1479
    %1570 = vmatprep.subr.bf16.mxu0 0
    %1571 = vmatpush1.bf16.msra.mxu0 0
    %1572 = vmatprep.subr.bf16.mxu0 0
    %1573 = vmatpush1.bf16.msra.mxu0 0
    %1574 = vmatprep.subr.bf16.mxu0 0
    %1575 = vmatpush1.bf16.msra.mxu0 0
    %1576 = vmatprep.subr.bf16.mxu0 0
    %1577 = vmatpush1.bf16.msra.mxu0 0
    %1578 = vmatprep.subr.bf16.mxu0 0
    %1579 = vmatpush1.bf16.msra.mxu0 0
    %1580 = vmatprep.subr.bf16.mxu0 0
    %1581 = vmatpush1.bf16.msra.mxu0 0
    %1582 = vmatprep.subr.bf16.mxu0 0
    %1583 = vmatpush1.bf16.msra.mxu0 0
    %1584 = vmatprep.subr.bf16.mxu0 0
    %1585 = vmatpush1.bf16.msra.mxu0 0
    %1586 = vmatprep.mubr.bf16.mxu0 0
    %1587 = vmatmul.mubr.bf16.gmra.mrb[0].mxu0 %v1320
    %v1588 = vpop.f32.mrb[0].mxu0
    %v1589 = vadd.f32 0.0, %v1588
    %v1590 = vpop.f32.mrb[0].mxu0
    %v1591 = vadd.f32 0.0, %v1590
    %v1592 = vpop.f32.mrb[0].mxu0
    %v1593 = vpop.f32.mrb[0].mxu0
    %1594 = vdwg.mxu0
    %v1627 = vunpack.c.l.b16 %v1287
    %v1628 = vunpack.c.h.b16 %v1287
    %v1629 = vunpack.c.l.b16 %v1288
    %v1630 = vunpack.c.h.b16 %v1288
    %v1631 = vunpack.c.l.b16 %v1289
    %v1632 = vunpack.c.h.b16 %v1289
    %v1633 = vunpack.c.l.b16 %v1290
    %v1634 = vunpack.c.h.b16 %v1290
    %v1635 = vunpack.c.l.b16 %v1291
    %v1636 = vunpack.c.h.b16 %v1291
    %v1637 = vunpack.c.l.b16 %v1292
    %v1638 = vunpack.c.h.b16 %v1292
    %v1639 = vunpack.c.l.b16 %v1293
    %v1640 = vunpack.c.h.b16 %v1293
    %v1641 = vunpack.c.l.b16 %v1294
    %v1642 = vunpack.c.h.b16 %v1294
    %v1643 = vunpack.c.l.b16 %v1295
    %v1644 = vunpack.c.h.b16 %v1295
    %v1645 = vunpack.c.l.b16 %v1296
    %v1646 = vunpack.c.h.b16 %v1296
    %v1647 = vunpack.c.l.b16 %v1297
    %v1648 = vunpack.c.h.b16 %v1297
    %v1649 = vunpack.c.l.b16 %v1298
    %v1650 = vunpack.c.h.b16 %v1298
    %v1651 = vunpack.c.l.b16 %v1299
    %v1652 = vunpack.c.h.b16 %v1299
    %v1653 = vunpack.c.l.b16 %v1300
    %v1654 = vunpack.c.h.b16 %v1300
    %v1655 = vunpack.c.l.b16 %v1301
    %v1656 = vunpack.c.h.b16 %v1301
    %v1657 = vunpack.c.l.b16 %v1302
    %v1658 = vunpack.c.h.b16 %v1302
    %v1659 = vunpack.c.l.b16 %v1303
    %v1660 = vunpack.c.h.b16 %v1303
    %v1661 = vunpack.c.l.b16 %v1304
    %v1662 = vunpack.c.h.b16 %v1304
    %v1663 = vunpack.c.l.b16 %v1305
    %v1664 = vunpack.c.h.b16 %v1305
    %v1665 = vunpack.c.l.b16 %v1306
    %v1666 = vunpack.c.h.b16 %v1306
    %v1667 = vunpack.c.l.b16 %v1307
    %v1668 = vunpack.c.h.b16 %v1307
    %v1669 = vunpack.c.l.b16 %v1308
    %v1670 = vunpack.c.h.b16 %v1308
    %v1671 = vunpack.c.l.b16 %v1309
    %v1672 = vunpack.c.h.b16 %v1309
    %v1673 = vunpack.c.l.b16 %v1310
    %v1674 = vunpack.c.h.b16 %v1310
    %v1675 = vunpack.c.l.b16 %v1311
    %v1676 = vunpack.c.h.b16 %v1311
    %v1677 = vunpack.c.l.b16 %v1312
    %v1678 = vunpack.c.h.b16 %v1312
    %v1679 = vunpack.c.l.b16 %v1313
    %v1680 = vunpack.c.h.b16 %v1313
    %v1681 = vunpack.c.l.b16 %v1314
    %v1682 = vunpack.c.h.b16 %v1314
    %v1683 = vunpack.c.l.b16 %v1315
    %v1684 = vunpack.c.h.b16 %v1315
    %v1685 = vunpack.c.l.b16 %v1316
    %v1686 = vunpack.c.h.b16 %v1316
    %v1687 = vunpack.c.l.b16 %v1317
    %v1688 = vunpack.c.h.b16 %v1317
    %v1689 = vunpack.c.l.b16 %v1318
    %v1690 = vunpack.c.h.b16 %v1318
    %v1691 = vpack.c.b16 %v1631, %v1627
    %v1692 = vpack.c.b16 %v1632, %v1628
    %v1693 = vpack.c.b16 %v1633, %v1629
    %v1694 = vpack.c.b16 %v1634, %v1630
    %v1695 = vpack.c.b16 %v1639, %v1635
    %v1696 = vpack.c.b16 %v1640, %v1636
    %v1697 = vpack.c.b16 %v1641, %v1637
    %v1698 = vpack.c.b16 %v1642, %v1638
    %v1699 = vpack.c.b16 %v1647, %v1643
    %v1700 = vpack.c.b16 %v1648, %v1644
    %v1701 = vpack.c.b16 %v1649, %v1645
    %v1702 = vpack.c.b16 %v1650, %v1646
    %v1703 = vpack.c.b16 %v1655, %v1651
    %v1704 = vpack.c.b16 %v1656, %v1652
    %v1705 = vpack.c.b16 %v1657, %v1653
    %v1706 = vpack.c.b16 %v1658, %v1654
    %v1707 = vpack.c.b16 %v1663, %v1659
    %v1708 = vpack.c.b16 %v1664, %v1660
    %v1709 = vpack.c.b16 %v1665, %v1661
    %v1710 = vpack.c.b16 %v1666, %v1662
    %v1711 = vpack.c.b16 %v1671, %v1667
    %v1712 = vpack.c.b16 %v1672, %v1668
    %v1713 = vpack.c.b16 %v1673, %v1669
    %v1714 = vpack.c.b16 %v1674, %v1670
    %v1715 = vpack.c.b16 %v1679, %v1675
    %v1716 = vpack.c.b16 %v1680, %v1676
    %v1717 = vpack.c.b16 %v1681, %v1677
    %v1718 = vpack.c.b16 %v1682, %v1678
    %v1719 = vpack.c.b16 %v1687, %v1683
    %v1720 = vpack.c.b16 %v1688, %v1684
    %v1721 = vpack.c.b16 %v1689, %v1685
    %v1722 = vpack.c.b16 %v1690, %v1686
    %1755 = vmatprep.subr.bf16.mxu0 %v1692
    %1756 = vmatpush1.bf16.msra.mxu0 %v1691
    %1757 = vmatprep.subr.bf16.mxu0 %v1696
    %1758 = vmatpush1.bf16.msra.mxu0 %v1695
    %1759 = vmatprep.subr.bf16.mxu0 %v1700
    %1760 = vmatpush1.bf16.msra.mxu0 %v1699
    %1761 = vmatprep.subr.bf16.mxu0 %v1704
    %1762 = vmatpush1.bf16.msra.mxu0 %v1703
    %1763 = vmatprep.subr.bf16.mxu0 %v1708
    %1764 = vmatpush1.bf16.msra.mxu0 %v1707
    %1765 = vmatprep.subr.bf16.mxu0 %v1712
    %1766 = vmatpush1.bf16.msra.mxu0 %v1711
    %1767 = vmatprep.subr.bf16.mxu0 %v1716
    %1768 = vmatpush1.bf16.msra.mxu0 %v1715
    %1769 = vmatprep.subr.bf16.mxu0 %v1720
    %1770 = vmatpush1.bf16.msra.mxu0 %v1719
    %1771 = vmatprep.subr.bf16.mxu0 0
    %1772 = vmatpush1.bf16.msra.mxu0 0
    %1773 = vmatprep.subr.bf16.mxu0 0
    %1774 = vmatpush1.bf16.msra.mxu0 0
    %1775 = vmatprep.subr.bf16.mxu0 0
    %1776 = vmatpush1.bf16.msra.mxu0 0
    %1777 = vmatprep.subr.bf16.mxu0 0
    %1778 = vmatpush1.bf16.msra.mxu0 0
    %1779 = vmatprep.subr.bf16.mxu0 0
    %1780 = vmatpush1.bf16.msra.mxu0 0
    %1781 = vmatprep.subr.bf16.mxu0 0
    %1782 = vmatpush1.bf16.msra.mxu0 0
    %1783 = vmatprep.subr.bf16.mxu0 0
    %1784 = vmatpush1.bf16.msra.mxu0 0
    %1785 = vmatprep.subr.bf16.mxu0 0
    %1786 = vmatpush1.bf16.msra.mxu0 0
    %1787 = vmatprep.mubr.bf16.mxu0 0
    %1788 = vmatmul.mubr.bf16.gmra.mrb[0].mxu0 %v1286
    %v1789 = vpop.f32.mrb[0].mxu0
    %v1790 = vadd.f32 %v1548, %v1789
    %v1791 = vpop.f32.mrb[0].mxu0
    %v1792 = vadd.f32 %v1550, %v1791
    %v1793 = vpop.f32.mrb[0].mxu0
    %v1794 = vpop.f32.mrb[0].mxu0
    %1795 = vdwg.mxu0
    %1796 = vmatprep.subr.bf16.mxu0 %v1694
    %1797 = vmatpush1.bf16.msra.mxu0 %v1693
    %1798 = vmatprep.subr.bf16.mxu0 %v1698
    %1799 = vmatpush1.bf16.msra.mxu0 %v1697
    %1800 = vmatprep.subr.bf16.mxu0 %v1702
    %1801 = vmatpush1.bf16.msra.mxu0 %v1701
    %1802 = vmatprep.subr.bf16.mxu0 %v1706
    %1803 = vmatpush1.bf16.msra.mxu0 %v1705
    %1804 = vmatprep.subr.bf16.mxu0 %v1710
    %1805 = vmatpush1.bf16.msra.mxu0 %v1709
    %1806 = vmatprep.subr.bf16.mxu0 %v1714
    %1807 = vmatpush1.bf16.msra.mxu0 %v1713
    %1808 = vmatprep.subr.bf16.mxu0 %v1718
    %1809 = vmatpush1.bf16.msra.mxu0 %v1717
    %1810 = vmatprep.subr.bf16.mxu0 %v1722
    %1811 = vmatpush1.bf16.msra.mxu0 %v1721
    %1812 = vmatprep.subr.bf16.mxu0 0
    %1813 = vmatpush1.bf16.msra.mxu0 0
    %1814 = vmatprep.subr.bf16.mxu0 0
    %1815 = vmatpush1.bf16.msra.mxu0 0
    %1816 = vmatprep.subr.bf16.mxu0 0
    %1817 = vmatpush1.bf16.msra.mxu0 0
    %1818 = vmatprep.subr.bf16.mxu0 0
    %1819 = vmatpush1.bf16.msra.mxu0 0
    %1820 = vmatprep.subr.bf16.mxu0 0
    %1821 = vmatpush1.bf16.msra.mxu0 0
    %1822 = vmatprep.subr.bf16.mxu0 0
    %1823 = vmatpush1.bf16.msra.mxu0 0
    %1824 = vmatprep.subr.bf16.mxu0 0
    %1825 = vmatpush1.bf16.msra.mxu0 0
    %1826 = vmatprep.subr.bf16.mxu0 0
    %1827 = vmatpush1.bf16.msra.mxu0 0
    %1828 = vmatprep.mubr.bf16.mxu0 0
    %1829 = vmatmul.mubr.bf16.gmra.mrb[0].mxu0 %v1286
    %v1830 = vpop.f32.mrb[0].mxu0
    %v1831 = vadd.f32 %v1589, %v1830
    %v1832 = vpop.f32.mrb[0].mxu0
    %v1833 = vadd.f32 %v1591, %v1832
    %v1834 = vpop.f32.mrb[0].mxu0
    %v1835 = vpop.f32.mrb[0].mxu0
    %1836 = vdwg.mxu0
    %v1837 = vadd.f32 %v1790, %v109
    %v1838 = vadd.f32 %v1792, %v110
    %v1839 = vadd.f32 %v1831, %v111
    %v1840 = vadd.f32 %v1833, %v112
    %v1841 = vxor.u32 %v1837, 2147483648
    %v1842 = vmul.f32 %v1841, 1.442695
    %v1843 = vpow.pop %v1842
    %v1844 = vadd.f32 %v1843, 1.0
    %v1845 = vrcp.pop %v1844
    %v1846 = vmul.f32 1.0, %v1845
    %v1847 = vxor.u32 %v1838, 2147483648
    %v1848 = vmul.f32 %v1847, 1.442695
    %v1849 = vpow.pop %v1848
    %v1850 = vadd.f32 %v1849, 1.0
    %v1851 = vrcp.pop %v1850
    %v1852 = vmul.f32 1.0, %v1851
    %v1853 = vtanh.pop %v1839
    %v1854 = vxor.u32 %v1840, 2147483648
    %v1855 = vmul.f32 %v1854, 1.442695
    %v1856 = vpow.pop %v1855
    %v1857 = vadd.f32 %v1856, 1.0
    %v1858 = vrcp.pop %v1857
    %v1859 = vmul.f32 1.0, %v1858
    %v1860 = vld [vmem:[#allocation3] sm:$0xff]
    %v1861 = vmul.f32 %v1852, %v1860
    %v1862 = vmul.f32 %v1846, %v1853
    %v1863 = vadd.f32 %v1861, %v1862
    %1864 = vst [vmem:[#allocation3] sm:$0xff] %v1863
    %v1865 = vtanh.pop %v1863
    %v1866 = vmul.f32 %v1859, %v1865
    %1867 = vst [vmem:[#allocation2] sm:$0xff] %v1866
    %s1868 = scalar_lea.vmem %s1, 12
    %v1869 = vld [vmem:[%s1868] sm:$0xf]
    %v1870 = vld [vmem:[%s3] sm:$0xff]
    %v1871 = vld [vmem:[%s3 + $0x8] sm:$0xff]
    %v1872 = vld [vmem:[%s3 + $0x10] sm:$0xff]
    %v1873 = vld [vmem:[%s3 + $0x18] sm:$0xff]
    %v1874 = vld [vmem:[%s3 + $0x20] sm:$0xff]
    %v1875 = vld [vmem:[%s3 + $0x28] sm:$0xff]
    %v1876 = vld [vmem:[%s3 + $0x30] sm:$0xff]
    %v1877 = vld [vmem:[%s3 + $0x38] sm:$0xff]
    %v1878 = vld [vmem:[%s3 + $0x40] sm:$0xff]
    %v1879 = vld [vmem:[%s3 + $0x48] sm:$0xff]
    %v1880 = vld [vmem:[%s3 + $0x50] sm:$0xff]
    %v1881 = vld [vmem:[%s3 + $0x58] sm:$0xff]
    %v1882 = vld [vmem:[%s3 + $0x60] sm:$0xff]
    %v1883 = vld [vmem:[%s3 + $0x68] sm:$0xff]
    %v1884 = vld [vmem:[%s3 + $0x70] sm:$0xff]
    %v1885 = vld [vmem:[%s3 + $0x78] sm:$0xff]
    %v1886 = vld [vmem:[%s3 + $0x80] sm:$0xff]
    %v1887 = vld [vmem:[%s3 + $0x88] sm:$0xff]
    %v1888 = vld [vmem:[%s3 + $0x90] sm:$0xff]
    %v1889 = vld [vmem:[%s3 + $0x98] sm:$0xff]
    %v1890 = vld [vmem:[%s3 + $0xa0] sm:$0xff]
    %v1891 = vld [vmem:[%s3 + $0xa8] sm:$0xff]
    %v1892 = vld [vmem:[%s3 + $0xb0] sm:$0xff]
    %v1893 = vld [vmem:[%s3 + $0xb8] sm:$0xff]
    %v1894 = vld [vmem:[%s3 + $0xc0] sm:$0xff]
    %v1895 = vld [vmem:[%s3 + $0xc8] sm:$0xff]
    %v1896 = vld [vmem:[%s3 + $0xd0] sm:$0xff]
    %v1897 = vld [vmem:[%s3 + $0xd8] sm:$0xff]
    %v1898 = vld [vmem:[%s3 + $0xe0] sm:$0xff]
    %v1899 = vld [vmem:[%s3 + $0xe8] sm:$0xff]
    %v1900 = vld [vmem:[%s3 + $0xf0] sm:$0xff]
    %v1901 = vld [vmem:[%s3 + $0xf8] sm:$0xff]
    %v1902 = vld [vmem:[#allocation2] sm:$0xff]
    %v1903 = vpack.c.bf16 %v1902, %v1902
    %v1904 = vld [vmem:[#allocation8] sm:$0xff]
    %v1905 = vld [vmem:[#allocation8 + $0x8] sm:$0xff]
    %v1906 = vld [vmem:[#allocation8 + $0x10] sm:$0xff]
    %v1907 = vld [vmem:[#allocation8 + $0x18] sm:$0xff]
    %v1908 = vld [vmem:[#allocation8 + $0x20] sm:$0xff]
    %v1909 = vld [vmem:[#allocation8 + $0x28] sm:$0xff]
    %v1910 = vld [vmem:[#allocation8 + $0x30] sm:$0xff]
    %v1911 = vld [vmem:[#allocation8 + $0x38] sm:$0xff]
    %v1912 = vld [vmem:[#allocation8 + $0x40] sm:$0xff]
    %v1913 = vld [vmem:[#allocation8 + $0x48] sm:$0xff]
    %v1914 = vld [vmem:[#allocation8 + $0x50] sm:$0xff]
    %v1915 = vld [vmem:[#allocation8 + $0x58] sm:$0xff]
    %v1916 = vld [vmem:[#allocation8 + $0x60] sm:$0xff]
    %v1917 = vld [vmem:[#allocation8 + $0x68] sm:$0xff]
    %v1918 = vld [vmem:[#allocation8 + $0x70] sm:$0xff]
    %v1919 = vld [vmem:[#allocation8 + $0x78] sm:$0xff]
    %v1920 = vld [vmem:[#allocation8 + $0x80] sm:$0xff]
    %v1921 = vld [vmem:[#allocation8 + $0x88] sm:$0xff]
    %v1922 = vld [vmem:[#allocation8 + $0x90] sm:$0xff]
    %v1923 = vld [vmem:[#allocation8 + $0x98] sm:$0xff]
    %v1924 = vld [vmem:[#allocation8 + $0xa0] sm:$0xff]
    %v1925 = vld [vmem:[#allocation8 + $0xa8] sm:$0xff]
    %v1926 = vld [vmem:[#allocation8 + $0xb0] sm:$0xff]
    %v1927 = vld [vmem:[#allocation8 + $0xb8] sm:$0xff]
    %v1928 = vld [vmem:[#allocation8 + $0xc0] sm:$0xff]
    %v1929 = vld [vmem:[#allocation8 + $0xc8] sm:$0xff]
    %v1930 = vld [vmem:[#allocation8 + $0xd0] sm:$0xff]
    %v1931 = vld [vmem:[#allocation8 + $0xd8] sm:$0xff]
    %v1932 = vld [vmem:[#allocation8 + $0xe0] sm:$0xff]
    %v1933 = vld [vmem:[#allocation8 + $0xe8] sm:$0xff]
    %v1934 = vld [vmem:[#allocation8 + $0xf0] sm:$0xff]
    %v1935 = vld [vmem:[#allocation8 + $0xf8] sm:$0xff]
    %v1968 = vunpack.c.l.b16 %v1904
    %v1969 = vunpack.c.h.b16 %v1904
    %v1970 = vunpack.c.l.b16 %v1905
    %v1971 = vunpack.c.h.b16 %v1905
    %v1972 = vunpack.c.l.b16 %v1906
    %v1973 = vunpack.c.h.b16 %v1906
    %v1974 = vunpack.c.l.b16 %v1907
    %v1975 = vunpack.c.h.b16 %v1907
    %v1976 = vunpack.c.l.b16 %v1908
    %v1977 = vunpack.c.h.b16 %v1908
    %v1978 = vunpack.c.l.b16 %v1909
    %v1979 = vunpack.c.h.b16 %v1909
    %v1980 = vunpack.c.l.b16 %v1910
    %v1981 = vunpack.c.h.b16 %v1910
    %v1982 = vunpack.c.l.b16 %v1911
    %v1983 = vunpack.c.h.b16 %v1911
    %v1984 = vunpack.c.l.b16 %v1912
    %v1985 = vunpack.c.h.b16 %v1912
    %v1986 = vunpack.c.l.b16 %v1913
    %v1987 = vunpack.c.h.b16 %v1913
    %v1988 = vunpack.c.l.b16 %v1914
    %v1989 = vunpack.c.h.b16 %v1914
    %v1990 = vunpack.c.l.b16 %v1915
    %v1991 = vunpack.c.h.b16 %v1915
    %v1992 = vunpack.c.l.b16 %v1916
    %v1993 = vunpack.c.h.b16 %v1916
    %v1994 = vunpack.c.l.b16 %v1917
    %v1995 = vunpack.c.h.b16 %v1917
    %v1996 = vunpack.c.l.b16 %v1918
    %v1997 = vunpack.c.h.b16 %v1918
    %v1998 = vunpack.c.l.b16 %v1919
    %v1999 = vunpack.c.h.b16 %v1919
    %v2000 = vunpack.c.l.b16 %v1920
    %v2001 = vunpack.c.h.b16 %v1920
    %v2002 = vunpack.c.l.b16 %v1921
    %v2003 = vunpack.c.h.b16 %v1921
    %v2004 = vunpack.c.l.b16 %v1922
    %v2005 = vunpack.c.h.b16 %v1922
    %v2006 = vunpack.c.l.b16 %v1923
    %v2007 = vunpack.c.h.b16 %v1923
    %v2008 = vunpack.c.l.b16 %v1924
    %v2009 = vunpack.c.h.b16 %v1924
    %v2010 = vunpack.c.l.b16 %v1925
    %v2011 = vunpack.c.h.b16 %v1925
    %v2012 = vunpack.c.l.b16 %v1926
    %v2013 = vunpack.c.h.b16 %v1926
    %v2014 = vunpack.c.l.b16 %v1927
    %v2015 = vunpack.c.h.b16 %v1927
    %v2016 = vunpack.c.l.b16 %v1928
    %v2017 = vunpack.c.h.b16 %v1928
    %v2018 = vunpack.c.l.b16 %v1929
    %v2019 = vunpack.c.h.b16 %v1929
    %v2020 = vunpack.c.l.b16 %v1930
    %v2021 = vunpack.c.h.b16 %v1930
    %v2022 = vunpack.c.l.b16 %v1931
    %v2023 = vunpack.c.h.b16 %v1931
    %v2024 = vunpack.c.l.b16 %v1932
    %v2025 = vunpack.c.h.b16 %v1932
    %v2026 = vunpack.c.l.b16 %v1933
    %v2027 = vunpack.c.h.b16 %v1933
    %v2028 = vunpack.c.l.b16 %v1934
    %v2029 = vunpack.c.h.b16 %v1934
    %v2030 = vunpack.c.l.b16 %v1935
    %v2031 = vunpack.c.h.b16 %v1935
    %v2032 = vpack.c.b16 %v1972, %v1968
    %v2033 = vpack.c.b16 %v1973, %v1969
    %v2034 = vpack.c.b16 %v1974, %v1970
    %v2035 = vpack.c.b16 %v1975, %v1971
    %v2036 = vpack.c.b16 %v1980, %v1976
    %v2037 = vpack.c.b16 %v1981, %v1977
    %v2038 = vpack.c.b16 %v1982, %v1978
    %v2039 = vpack.c.b16 %v1983, %v1979
    %v2040 = vpack.c.b16 %v1988, %v1984
    %v2041 = vpack.c.b16 %v1989, %v1985
    %v2042 = vpack.c.b16 %v1990, %v1986
    %v2043 = vpack.c.b16 %v1991, %v1987
    %v2044 = vpack.c.b16 %v1996, %v1992
    %v2045 = vpack.c.b16 %v1997, %v1993
    %v2046 = vpack.c.b16 %v1998, %v1994
    %v2047 = vpack.c.b16 %v1999, %v1995
    %v2048 = vpack.c.b16 %v2004, %v2000
    %v2049 = vpack.c.b16 %v2005, %v2001
    %v2050 = vpack.c.b16 %v2006, %v2002
    %v2051 = vpack.c.b16 %v2007, %v2003
    %v2052 = vpack.c.b16 %v2012, %v2008
    %v2053 = vpack.c.b16 %v2013, %v2009
    %v2054 = vpack.c.b16 %v2014, %v2010
    %v2055 = vpack.c.b16 %v2015, %v2011
    %v2056 = vpack.c.b16 %v2020, %v2016
    %v2057 = vpack.c.b16 %v2021, %v2017
    %v2058 = vpack.c.b16 %v2022, %v2018
    %v2059 = vpack.c.b16 %v2023, %v2019
    %v2060 = vpack.c.b16 %v2028, %v2024
    %v2061 = vpack.c.b16 %v2029, %v2025
    %v2062 = vpack.c.b16 %v2030, %v2026
    %v2063 = vpack.c.b16 %v2031, %v2027
    %2096 = vmatprep.subr.bf16.mxu0 %v2033
    %2097 = vmatpush1.bf16.msra.mxu0 %v2032
    %2098 = vmatprep.subr.bf16.mxu0 %v2037
    %2099 = vmatpush1.bf16.msra.mxu0 %v2036
    %2100 = vmatprep.subr.bf16.mxu0 %v2041
    %2101 = vmatpush1.bf16.msra.mxu0 %v2040
    %2102 = vmatprep.subr.bf16.mxu0 %v2045
    %2103 = vmatpush1.bf16.msra.mxu0 %v2044
    %2104 = vmatprep.subr.bf16.mxu0 %v2049
    %2105 = vmatpush1.bf16.msra.mxu0 %v2048
    %2106 = vmatprep.subr.bf16.mxu0 %v2053
    %2107 = vmatpush1.bf16.msra.mxu0 %v2052
    %2108 = vmatprep.subr.bf16.mxu0 %v2057
    %2109 = vmatpush1.bf16.msra.mxu0 %v2056
    %2110 = vmatprep.subr.bf16.mxu0 %v2061
    %2111 = vmatpush1.bf16.msra.mxu0 %v2060
    %2112 = vmatprep.subr.bf16.mxu0 0
    %2113 = vmatpush1.bf16.msra.mxu0 0
    %2114 = vmatprep.subr.bf16.mxu0 0
    %2115 = vmatpush1.bf16.msra.mxu0 0
    %2116 = vmatprep.subr.bf16.mxu0 0
    %2117 = vmatpush1.bf16.msra.mxu0 0
    %2118 = vmatprep.subr.bf16.mxu0 0
    %2119 = vmatpush1.bf16.msra.mxu0 0
    %2120 = vmatprep.subr.bf16.mxu0 0
    %2121 = vmatpush1.bf16.msra.mxu0 0
    %2122 = vmatprep.subr.bf16.mxu0 0
    %2123 = vmatpush1.bf16.msra.mxu0 0
    %2124 = vmatprep.subr.bf16.mxu0 0
    %2125 = vmatpush1.bf16.msra.mxu0 0
    %2126 = vmatprep.subr.bf16.mxu0 0
    %2127 = vmatpush1.bf16.msra.mxu0 0
    %2128 = vmatprep.mubr.bf16.mxu0 0
    %2129 = vmatmul.mubr.bf16.gmra.mrb[0].mxu0 %v1903
    %v2130 = vpop.f32.mrb[0].mxu0
    %v2131 = vadd.f32 0.0, %v2130
    %v2132 = vpop.f32.mrb[0].mxu0
    %v2133 = vadd.f32 0.0, %v2132
    %v2134 = vpop.f32.mrb[0].mxu0
    %v2135 = vpop.f32.mrb[0].mxu0
    %2136 = vdwg.mxu0
    %2137 = vmatprep.subr.bf16.mxu0 %v2035
    %2138 = vmatpush1.bf16.msra.mxu0 %v2034
    %2139 = vmatprep.subr.bf16.mxu0 %v2039
    %2140 = vmatpush1.bf16.msra.mxu0 %v2038
    %2141 = vmatprep.subr.bf16.mxu0 %v2043
    %2142 = vmatpush1.bf16.msra.mxu0 %v2042
    %2143 = vmatprep.subr.bf16.mxu0 %v2047
    %2144 = vmatpush1.bf16.msra.mxu0 %v2046
    %2145 = vmatprep.subr.bf16.mxu0 %v2051
    %2146 = vmatpush1.bf16.msra.mxu0 %v2050
    %2147 = vmatprep.subr.bf16.mxu0 %v2055
    %2148 = vmatpush1.bf16.msra.mxu0 %v2054
    %2149 = vmatprep.subr.bf16.mxu0 %v2059
    %2150 = vmatpush1.bf16.msra.mxu0 %v2058
    %2151 = vmatprep.subr.bf16.mxu0 %v2063
    %2152 = vmatpush1.bf16.msra.mxu0 %v2062
    %2153 = vmatprep.subr.bf16.mxu0 0
    %2154 = vmatpush1.bf16.msra.mxu0 0
    %2155 = vmatprep.subr.bf16.mxu0 0
    %2156 = vmatpush1.bf16.msra.mxu0 0
    %2157 = vmatprep.subr.bf16.mxu0 0
    %2158 = vmatpush1.bf16.msra.mxu0 0
    %2159 = vmatprep.subr.bf16.mxu0 0
    %2160 = vmatpush1.bf16.msra.mxu0 0
    %2161 = vmatprep.subr.bf16.mxu0 0
    %2162 = vmatpush1.bf16.msra.mxu0 0
    %2163 = vmatprep.subr.bf16.mxu0 0
    %2164 = vmatpush1.bf16.msra.mxu0 0
    %2165 = vmatprep.subr.bf16.mxu0 0
    %2166 = vmatpush1.bf16.msra.mxu0 0
    %2167 = vmatprep.subr.bf16.mxu0 0
    %2168 = vmatpush1.bf16.msra.mxu0 0
    %2169 = vmatprep.mubr.bf16.mxu0 0
    %2170 = vmatmul.mubr.bf16.gmra.mrb[0].mxu0 %v1903
    %v2171 = vpop.f32.mrb[0].mxu0
    %v2172 = vadd.f32 0.0, %v2171
    %v2173 = vpop.f32.mrb[0].mxu0
    %v2174 = vadd.f32 0.0, %v2173
    %v2175 = vpop.f32.mrb[0].mxu0
    %v2176 = vpop.f32.mrb[0].mxu0
    %2177 = vdwg.mxu0
    %v2210 = vunpack.c.l.b16 %v1870
    %v2211 = vunpack.c.h.b16 %v1870
    %v2212 = vunpack.c.l.b16 %v1871
    %v2213 = vunpack.c.h.b16 %v1871
    %v2214 = vunpack.c.l.b16 %v1872
    %v2215 = vunpack.c.h.b16 %v1872
    %v2216 = vunpack.c.l.b16 %v1873
    %v2217 = vunpack.c.h.b16 %v1873
    %v2218 = vunpack.c.l.b16 %v1874
    %v2219 = vunpack.c.h.b16 %v1874
    %v2220 = vunpack.c.l.b16 %v1875
    %v2221 = vunpack.c.h.b16 %v1875
    %v2222 = vunpack.c.l.b16 %v1876
    %v2223 = vunpack.c.h.b16 %v1876
    %v2224 = vunpack.c.l.b16 %v1877
    %v2225 = vunpack.c.h.b16 %v1877
    %v2226 = vunpack.c.l.b16 %v1878
    %v2227 = vunpack.c.h.b16 %v1878
    %v2228 = vunpack.c.l.b16 %v1879
    %v2229 = vunpack.c.h.b16 %v1879
    %v2230 = vunpack.c.l.b16 %v1880
    %v2231 = vunpack.c.h.b16 %v1880
    %v2232 = vunpack.c.l.b16 %v1881
    %v2233 = vunpack.c.h.b16 %v1881
    %v2234 = vunpack.c.l.b16 %v1882
    %v2235 = vunpack.c.h.b16 %v1882
    %v2236 = vunpack.c.l.b16 %v1883
    %v2237 = vunpack.c.h.b16 %v1883
    %v2238 = vunpack.c.l.b16 %v1884
    %v2239 = vunpack.c.h.b16 %v1884
    %v2240 = vunpack.c.l.b16 %v1885
    %v2241 = vunpack.c.h.b16 %v1885
    %v2242 = vunpack.c.l.b16 %v1886
    %v2243 = vunpack.c.h.b16 %v1886
    %v2244 = vunpack.c.l.b16 %v1887
    %v2245 = vunpack.c.h.b16 %v1887
    %v2246 = vunpack.c.l.b16 %v1888
    %v2247 = vunpack.c.h.b16 %v1888
    %v2248 = vunpack.c.l.b16 %v1889
    %v2249 = vunpack.c.h.b16 %v1889
    %v2250 = vunpack.c.l.b16 %v1890
    %v2251 = vunpack.c.h.b16 %v1890
    %v2252 = vunpack.c.l.b16 %v1891
    %v2253 = vunpack.c.h.b16 %v1891
    %v2254 = vunpack.c.l.b16 %v1892
    %v2255 = vunpack.c.h.b16 %v1892
    %v2256 = vunpack.c.l.b16 %v1893
    %v2257 = vunpack.c.h.b16 %v1893
    %v2258 = vunpack.c.l.b16 %v1894
    %v2259 = vunpack.c.h.b16 %v1894
    %v2260 = vunpack.c.l.b16 %v1895
    %v2261 = vunpack.c.h.b16 %v1895
    %v2262 = vunpack.c.l.b16 %v1896
    %v2263 = vunpack.c.h.b16 %v1896
    %v2264 = vunpack.c.l.b16 %v1897
    %v2265 = vunpack.c.h.b16 %v1897
    %v2266 = vunpack.c.l.b16 %v1898
    %v2267 = vunpack.c.h.b16 %v1898
    %v2268 = vunpack.c.l.b16 %v1899
    %v2269 = vunpack.c.h.b16 %v1899
    %v2270 = vunpack.c.l.b16 %v1900
    %v2271 = vunpack.c.h.b16 %v1900
    %v2272 = vunpack.c.l.b16 %v1901
    %v2273 = vunpack.c.h.b16 %v1901
    %v2274 = vpack.c.b16 %v2214, %v2210
    %v2275 = vpack.c.b16 %v2215, %v2211
    %v2276 = vpack.c.b16 %v2216, %v2212
    %v2277 = vpack.c.b16 %v2217, %v2213
    %v2278 = vpack.c.b16 %v2222, %v2218
    %v2279 = vpack.c.b16 %v2223, %v2219
    %v2280 = vpack.c.b16 %v2224, %v2220
    %v2281 = vpack.c.b16 %v2225, %v2221
    %v2282 = vpack.c.b16 %v2230, %v2226
    %v2283 = vpack.c.b16 %v2231, %v2227
    %v2284 = vpack.c.b16 %v2232, %v2228
    %v2285 = vpack.c.b16 %v2233, %v2229
    %v2286 = vpack.c.b16 %v2238, %v2234
    %v2287 = vpack.c.b16 %v2239, %v2235
    %v2288 = vpack.c.b16 %v2240, %v2236
    %v2289 = vpack.c.b16 %v2241, %v2237
    %v2290 = vpack.c.b16 %v2246, %v2242
    %v2291 = vpack.c.b16 %v2247, %v2243
    %v2292 = vpack.c.b16 %v2248, %v2244
    %v2293 = vpack.c.b16 %v2249, %v2245
    %v2294 = vpack.c.b16 %v2254, %v2250
    %v2295 = vpack.c.b16 %v2255, %v2251
    %v2296 = vpack.c.b16 %v2256, %v2252
    %v2297 = vpack.c.b16 %v2257, %v2253
    %v2298 = vpack.c.b16 %v2262, %v2258
    %v2299 = vpack.c.b16 %v2263, %v2259
    %v2300 = vpack.c.b16 %v2264, %v2260
    %v2301 = vpack.c.b16 %v2265, %v2261
    %v2302 = vpack.c.b16 %v2270, %v2266
    %v2303 = vpack.c.b16 %v2271, %v2267
    %v2304 = vpack.c.b16 %v2272, %v2268
    %v2305 = vpack.c.b16 %v2273, %v2269
    %2338 = vmatprep.subr.bf16.mxu0 %v2275
    %2339 = vmatpush1.bf16.msra.mxu0 %v2274
    %2340 = vmatprep.subr.bf16.mxu0 %v2279
    %2341 = vmatpush1.bf16.msra.mxu0 %v2278
    %2342 = vmatprep.subr.bf16.mxu0 %v2283
    %2343 = vmatpush1.bf16.msra.mxu0 %v2282
    %2344 = vmatprep.subr.bf16.mxu0 %v2287
    %2345 = vmatpush1.bf16.msra.mxu0 %v2286
    %2346 = vmatprep.subr.bf16.mxu0 %v2291
    %2347 = vmatpush1.bf16.msra.mxu0 %v2290
    %2348 = vmatprep.subr.bf16.mxu0 %v2295
    %2349 = vmatpush1.bf16.msra.mxu0 %v2294
    %2350 = vmatprep.subr.bf16.mxu0 %v2299
    %2351 = vmatpush1.bf16.msra.mxu0 %v2298
    %2352 = vmatprep.subr.bf16.mxu0 %v2303
    %2353 = vmatpush1.bf16.msra.mxu0 %v2302
    %2354 = vmatprep.subr.bf16.mxu0 0
    %2355 = vmatpush1.bf16.msra.mxu0 0
    %2356 = vmatprep.subr.bf16.mxu0 0
    %2357 = vmatpush1.bf16.msra.mxu0 0
    %2358 = vmatprep.subr.bf16.mxu0 0
    %2359 = vmatpush1.bf16.msra.mxu0 0
    %2360 = vmatprep.subr.bf16.mxu0 0
    %2361 = vmatpush1.bf16.msra.mxu0 0
    %2362 = vmatprep.subr.bf16.mxu0 0
    %2363 = vmatpush1.bf16.msra.mxu0 0
    %2364 = vmatprep.subr.bf16.mxu0 0
    %2365 = vmatpush1.bf16.msra.mxu0 0
    %2366 = vmatprep.subr.bf16.mxu0 0
    %2367 = vmatpush1.bf16.msra.mxu0 0
    %2368 = vmatprep.subr.bf16.mxu0 0
    %2369 = vmatpush1.bf16.msra.mxu0 0
    %2370 = vmatprep.mubr.bf16.mxu0 0
    %2371 = vmatmul.mubr.bf16.gmra.mrb[0].mxu0 %v1869
    %v2372 = vpop.f32.mrb[0].mxu0
    %v2373 = vadd.f32 %v2131, %v2372
    %v2374 = vpop.f32.mrb[0].mxu0
    %v2375 = vadd.f32 %v2133, %v2374
    %v2376 = vpop.f32.mrb[0].mxu0
    %v2377 = vpop.f32.mrb[0].mxu0
    %2378 = vdwg.mxu0
    %2379 = vmatprep.subr.bf16.mxu0 %v2277
    %2380 = vmatpush1.bf16.msra.mxu0 %v2276
    %2381 = vmatprep.subr.bf16.mxu0 %v2281
    %2382 = vmatpush1.bf16.msra.mxu0 %v2280
    %2383 = vmatprep.subr.bf16.mxu0 %v2285
    %2384 = vmatpush1.bf16.msra.mxu0 %v2284
    %2385 = vmatprep.subr.bf16.mxu0 %v2289
    %2386 = vmatpush1.bf16.msra.mxu0 %v2288
    %2387 = vmatprep.subr.bf16.mxu0 %v2293
    %2388 = vmatpush1.bf16.msra.mxu0 %v2292
    %2389 = vmatprep.subr.bf16.mxu0 %v2297
    %2390 = vmatpush1.bf16.msra.mxu0 %v2296
    %2391 = vmatprep.subr.bf16.mxu0 %v2301
    %2392 = vmatpush1.bf16.msra.mxu0 %v2300
    %2393 = vmatprep.subr.bf16.mxu0 %v2305
    %2394 = vmatpush1.bf16.msra.mxu0 %v2304
    %2395 = vmatprep.subr.bf16.mxu0 0
    %2396 = vmatpush1.bf16.msra.mxu0 0
    %2397 = vmatprep.subr.bf16.mxu0 0
    %2398 = vmatpush1.bf16.msra.mxu0 0
    %2399 = vmatprep.subr.bf16.mxu0 0
    %2400 = vmatpush1.bf16.msra.mxu0 0
    %2401 = vmatprep.subr.bf16.mxu0 0
    %2402 = vmatpush1.bf16.msra.mxu0 0
    %2403 = vmatprep.subr.bf16.mxu0 0
    %2404 = vmatpush1.bf16.msra.mxu0 0
    %2405 = vmatprep.subr.bf16.mxu0 0
    %2406 = vmatpush1.bf16.msra.mxu0 0
    %2407 = vmatprep.subr.bf16.mxu0 0
    %2408 = vmatpush1.bf16.msra.mxu0 0
    %2409 = vmatprep.subr.bf16.mxu0 0
    %2410 = vmatpush1.bf16.msra.mxu0 0
    %2411 = vmatprep.mubr.bf16.mxu0 0
    %2412 = vmatmul.mubr.bf16.gmra.mrb[0].mxu0 %v1869
    %v2413 = vpop.f32.mrb[0].mxu0
    %v2414 = vadd.f32 %v2172, %v2413
    %v2415 = vpop.f32.mrb[0].mxu0
    %v2416 = vadd.f32 %v2174, %v2415
    %v2417 = vpop.f32.mrb[0].mxu0
    %v2418 = vpop.f32.mrb[0].mxu0
    %2419 = vdwg.mxu0
    %v2420 = vadd.f32 %v2373, %v109
    %v2421 = vadd.f32 %v2375, %v110
    %v2422 = vadd.f32 %v2414, %v111
    %v2423 = vadd.f32 %v2416, %v112
    %v2424 = vxor.u32 %v2420, 2147483648
    %v2425 = vmul.f32 %v2424, 1.442695
    %v2426 = vpow.pop %v2425
    %v2427 = vadd.f32 %v2426, 1.0
    %v2428 = vrcp.pop %v2427
    %v2429 = vmul.f32 1.0, %v2428
    %v2430 = vxor.u32 %v2421, 2147483648
    %v2431 = vmul.f32 %v2430, 1.442695
    %v2432 = vpow.pop %v2431
    %v2433 = vadd.f32 %v2432, 1.0
    %v2434 = vrcp.pop %v2433
    %v2435 = vmul.f32 1.0, %v2434
    %v2436 = vtanh.pop %v2422
    %v2437 = vxor.u32 %v2423, 2147483648
    %v2438 = vmul.f32 %v2437, 1.442695
    %v2439 = vpow.pop %v2438
    %v2440 = vadd.f32 %v2439, 1.0
    %v2441 = vrcp.pop %v2440
    %v2442 = vmul.f32 1.0, %v2441
    %v2443 = vld [vmem:[#allocation3] sm:$0xff]
    %v2444 = vmul.f32 %v2435, %v2443
    %v2445 = vmul.f32 %v2429, %v2436
    %v2446 = vadd.f32 %v2444, %v2445
    %2447 = vst [vmem:[#allocation3] sm:$0xff] %v2446
    %v2448 = vtanh.pop %v2446
    %v2449 = vmul.f32 %v2442, %v2448
    %2450 = vst [vmem:[#allocation2] sm:$0xff] %v2449
    %s2451 = scalar_lea.vmem %s1, 16
    %v2452 = vld [vmem:[%s2451] sm:$0xf]
    %v2453 = vld [vmem:[%s3] sm:$0xff]
    %v2454 = vld [vmem:[%s3 + $0x8] sm:$0xff]
    %v2455 = vld [vmem:[%s3 + $0x10] sm:$0xff]
    %v2456 = vld [vmem:[%s3 + $0x18] sm:$0xff]
    %v2457 = vld [vmem:[%s3 + $0x20] sm:$0xff]
    %v2458 = vld [vmem:[%s3 + $0x28] sm:$0xff]
    %v2459 = vld [vmem:[%s3 + $0x30] sm:$0xff]
    %v2460 = vld [vmem:[%s3 + $0x38] sm:$0xff]
    %v2461 = vld [vmem:[%s3 + $0x40] sm:$0xff]
    %v2462 = vld [vmem:[%s3 + $0x48] sm:$0xff]
    %v2463 = vld [vmem:[%s3 + $0x50] sm:$0xff]
    %v2464 = vld [vmem:[%s3 + $0x58] sm:$0xff]
    %v2465 = vld [vmem:[%s3 + $0x60] sm:$0xff]
    %v2466 = vld [vmem:[%s3 + $0x68] sm:$0xff]
    %v2467 = vld [vmem:[%s3 + $0x70] sm:$0xff]
    %v2468 = vld [vmem:[%s3 + $0x78] sm:$0xff]
    %v2469 = vld [vmem:[%s3 + $0x80] sm:$0xff]
    %v2470 = vld [vmem:[%s3 + $0x88] sm:$0xff]
    %v2471 = vld [vmem:[%s3 + $0x90] sm:$0xff]
    %v2472 = vld [vmem:[%s3 + $0x98] sm:$0xff]
    %v2473 = vld [vmem:[%s3 + $0xa0] sm:$0xff]
    %v2474 = vld [vmem:[%s3 + $0xa8] sm:$0xff]
    %v2475 = vld [vmem:[%s3 + $0xb0] sm:$0xff]
    %v2476 = vld [vmem:[%s3 + $0xb8] sm:$0xff]
    %v2477 = vld [vmem:[%s3 + $0xc0] sm:$0xff]
    %v2478 = vld [vmem:[%s3 + $0xc8] sm:$0xff]
    %v2479 = vld [vmem:[%s3 + $0xd0] sm:$0xff]
    %v2480 = vld [vmem:[%s3 + $0xd8] sm:$0xff]
    %v2481 = vld [vmem:[%s3 + $0xe0] sm:$0xff]
    %v2482 = vld [vmem:[%s3 + $0xe8] sm:$0xff]
    %v2483 = vld [vmem:[%s3 + $0xf0] sm:$0xff]
    %v2484 = vld [vmem:[%s3 + $0xf8] sm:$0xff]
    %v2485 = vld [vmem:[#allocation2] sm:$0xff]
    %v2486 = vpack.c.bf16 %v2485, %v2485
    %v2487 = vld [vmem:[#allocation8] sm:$0xff]
    %v2488 = vld [vmem:[#allocation8 + $0x8] sm:$0xff]
    %v2489 = vld [vmem:[#allocation8 + $0x10] sm:$0xff]
    %v2490 = vld [vmem:[#allocation8 + $0x18] sm:$0xff]
    %v2491 = vld [vmem:[#allocation8 + $0x20] sm:$0xff]
    %v2492 = vld [vmem:[#allocation8 + $0x28] sm:$0xff]
    %v2493 = vld [vmem:[#allocation8 + $0x30] sm:$0xff]
    %v2494 = vld [vmem:[#allocation8 + $0x38] sm:$0xff]
    %v2495 = vld [vmem:[#allocation8 + $0x40] sm:$0xff]
    %v2496 = vld [vmem:[#allocation8 + $0x48] sm:$0xff]
    %v2497 = vld [vmem:[#allocation8 + $0x50] sm:$0xff]
    %v2498 = vld [vmem:[#allocation8 + $0x58] sm:$0xff]
    %v2499 = vld [vmem:[#allocation8 + $0x60] sm:$0xff]
    %v2500 = vld [vmem:[#allocation8 + $0x68] sm:$0xff]
    %v2501 = vld [vmem:[#allocation8 + $0x70] sm:$0xff]
    %v2502 = vld [vmem:[#allocation8 + $0x78] sm:$0xff]
    %v2503 = vld [vmem:[#allocation8 + $0x80] sm:$0xff]
    %v2504 = vld [vmem:[#allocation8 + $0x88] sm:$0xff]
    %v2505 = vld [vmem:[#allocation8 + $0x90] sm:$0xff]
    %v2506 = vld [vmem:[#allocation8 + $0x98] sm:$0xff]
    %v2507 = vld [vmem:[#allocation8 + $0xa0] sm:$0xff]
    %v2508 = vld [vmem:[#allocation8 + $0xa8] sm:$0xff]
    %v2509 = vld [vmem:[#allocation8 + $0xb0] sm:$0xff]
    %v2510 = vld [vmem:[#allocation8 + $0xb8] sm:$0xff]
    %v2511 = vld [vmem:[#allocation8 + $0xc0] sm:$0xff]
    %v2512 = vld [vmem:[#allocation8 + $0xc8] sm:$0xff]
    %v2513 = vld [vmem:[#allocation8 + $0xd0] sm:$0xff]
    %v2514 = vld [vmem:[#allocation8 + $0xd8] sm:$0xff]
    %v2515 = vld [vmem:[#allocation8 + $0xe0] sm:$0xff]
    %v2516 = vld [vmem:[#allocation8 + $0xe8] sm:$0xff]
    %v2517 = vld [vmem:[#allocation8 + $0xf0] sm:$0xff]
    %v2518 = vld [vmem:[#allocation8 + $0xf8] sm:$0xff]
    %v2551 = vunpack.c.l.b16 %v2487
    %v2552 = vunpack.c.h.b16 %v2487
    %v2553 = vunpack.c.l.b16 %v2488
    %v2554 = vunpack.c.h.b16 %v2488
    %v2555 = vunpack.c.l.b16 %v2489
    %v2556 = vunpack.c.h.b16 %v2489
    %v2557 = vunpack.c.l.b16 %v2490
    %v2558 = vunpack.c.h.b16 %v2490
    %v2559 = vunpack.c.l.b16 %v2491
    %v2560 = vunpack.c.h.b16 %v2491
    %v2561 = vunpack.c.l.b16 %v2492
    %v2562 = vunpack.c.h.b16 %v2492
    %v2563 = vunpack.c.l.b16 %v2493
    %v2564 = vunpack.c.h.b16 %v2493
    %v2565 = vunpack.c.l.b16 %v2494
    %v2566 = vunpack.c.h.b16 %v2494
    %v2567 = vunpack.c.l.b16 %v2495
    %v2568 = vunpack.c.h.b16 %v2495
    %v2569 = vunpack.c.l.b16 %v2496
    %v2570 = vunpack.c.h.b16 %v2496
    %v2571 = vunpack.c.l.b16 %v2497
    %v2572 = vunpack.c.h.b16 %v2497
    %v2573 = vunpack.c.l.b16 %v2498
    %v2574 = vunpack.c.h.b16 %v2498
    %v2575 = vunpack.c.l.b16 %v2499
    %v2576 = vunpack.c.h.b16 %v2499
    %v2577 = vunpack.c.l.b16 %v2500
    %v2578 = vunpack.c.h.b16 %v2500
    %v2579 = vunpack.c.l.b16 %v2501
    %v2580 = vunpack.c.h.b16 %v2501
    %v2581 = vunpack.c.l.b16 %v2502
    %v2582 = vunpack.c.h.b16 %v2502
    %v2583 = vunpack.c.l.b16 %v2503
    %v2584 = vunpack.c.h.b16 %v2503
    %v2585 = vunpack.c.l.b16 %v2504
    %v2586 = vunpack.c.h.b16 %v2504
    %v2587 = vunpack.c.l.b16 %v2505
    %v2588 = vunpack.c.h.b16 %v2505
    %v2589 = vunpack.c.l.b16 %v2506
    %v2590 = vunpack.c.h.b16 %v2506
    %v2591 = vunpack.c.l.b16 %v2507
    %v2592 = vunpack.c.h.b16 %v2507
    %v2593 = vunpack.c.l.b16 %v2508
    %v2594 = vunpack.c.h.b16 %v2508
    %v2595 = vunpack.c.l.b16 %v2509
    %v2596 = vunpack.c.h.b16 %v2509
    %v2597 = vunpack.c.l.b16 %v2510
    %v2598 = vunpack.c.h.b16 %v2510
    %v2599 = vunpack.c.l.b16 %v2511
    %v2600 = vunpack.c.h.b16 %v2511
    %v2601 = vunpack.c.l.b16 %v2512
    %v2602 = vunpack.c.h.b16 %v2512
    %v2603 = vunpack.c.l.b16 %v2513
    %v2604 = vunpack.c.h.b16 %v2513
    %v2605 = vunpack.c.l.b16 %v2514
    %v2606 = vunpack.c.h.b16 %v2514
    %v2607 = vunpack.c.l.b16 %v2515
    %v2608 = vunpack.c.h.b16 %v2515
    %v2609 = vunpack.c.l.b16 %v2516
    %v2610 = vunpack.c.h.b16 %v2516
    %v2611 = vunpack.c.l.b16 %v2517
    %v2612 = vunpack.c.h.b16 %v2517
    %v2613 = vunpack.c.l.b16 %v2518
    %v2614 = vunpack.c.h.b16 %v2518
    %v2615 = vpack.c.b16 %v2555, %v2551
    %v2616 = vpack.c.b16 %v2556, %v2552
    %v2617 = vpack.c.b16 %v2557, %v2553
    %v2618 = vpack.c.b16 %v2558, %v2554
    %v2619 = vpack.c.b16 %v2563, %v2559
    %v2620 = vpack.c.b16 %v2564, %v2560
    %v2621 = vpack.c.b16 %v2565, %v2561
    %v2622 = vpack.c.b16 %v2566, %v2562
    %v2623 = vpack.c.b16 %v2571, %v2567
    %v2624 = vpack.c.b16 %v2572, %v2568
    %v2625 = vpack.c.b16 %v2573, %v2569
    %v2626 = vpack.c.b16 %v2574, %v2570
    %v2627 = vpack.c.b16 %v2579, %v2575
    %v2628 = vpack.c.b16 %v2580, %v2576
    %v2629 = vpack.c.b16 %v2581, %v2577
    %v2630 = vpack.c.b16 %v2582, %v2578
    %v2631 = vpack.c.b16 %v2587, %v2583
    %v2632 = vpack.c.b16 %v2588, %v2584
    %v2633 = vpack.c.b16 %v2589, %v2585
    %v2634 = vpack.c.b16 %v2590, %v2586
    %v2635 = vpack.c.b16 %v2595, %v2591
    %v2636 = vpack.c.b16 %v2596, %v2592
    %v2637 = vpack.c.b16 %v2597, %v2593
    %v2638 = vpack.c.b16 %v2598, %v2594
    %v2639 = vpack.c.b16 %v2603, %v2599
    %v2640 = vpack.c.b16 %v2604, %v2600
    %v2641 = vpack.c.b16 %v2605, %v2601
    %v2642 = vpack.c.b16 %v2606, %v2602
    %v2643 = vpack.c.b16 %v2611, %v2607
    %v2644 = vpack.c.b16 %v2612, %v2608
    %v2645 = vpack.c.b16 %v2613, %v2609
    %v2646 = vpack.c.b16 %v2614, %v2610
    %2679 = vmatprep.subr.bf16.mxu0 %v2616
    %2680 = vmatpush1.bf16.msra.mxu0 %v2615
    %2681 = vmatprep.subr.bf16.mxu0 %v2620
    %2682 = vmatpush1.bf16.msra.mxu0 %v2619
    %2683 = vmatprep.subr.bf16.mxu0 %v2624
    %2684 = vmatpush1.bf16.msra.mxu0 %v2623
    %2685 = vmatprep.subr.bf16.mxu0 %v2628
    %2686 = vmatpush1.bf16.msra.mxu0 %v2627
    %2687 = vmatprep.subr.bf16.mxu0 %v2632
    %2688 = vmatpush1.bf16.msra.mxu0 %v2631
    %2689 = vmatprep.subr.bf16.mxu0 %v2636
    %2690 = vmatpush1.bf16.msra.mxu0 %v2635
    %2691 = vmatprep.subr.bf16.mxu0 %v2640
    %2692 = vmatpush1.bf16.msra.mxu0 %v2639
    %2693 = vmatprep.subr.bf16.mxu0 %v2644
    %2694 = vmatpush1.bf16.msra.mxu0 %v2643
    %2695 = vmatprep.subr.bf16.mxu0 0
    %2696 = vmatpush1.bf16.msra.mxu0 0
    %2697 = vmatprep.subr.bf16.mxu0 0
    %2698 = vmatpush1.bf16.msra.mxu0 0
    %2699 = vmatprep.subr.bf16.mxu0 0
    %2700 = vmatpush1.bf16.msra.mxu0 0
    %2701 = vmatprep.subr.bf16.mxu0 0
    %2702 = vmatpush1.bf16.msra.mxu0 0
    %2703 = vmatprep.subr.bf16.mxu0 0
    %2704 = vmatpush1.bf16.msra.mxu0 0
    %2705 = vmatprep.subr.bf16.mxu0 0
    %2706 = vmatpush1.bf16.msra.mxu0 0
    %2707 = vmatprep.subr.bf16.mxu0 0
    %2708 = vmatpush1.bf16.msra.mxu0 0
    %2709 = vmatprep.subr.bf16.mxu0 0
    %2710 = vmatpush1.bf16.msra.mxu0 0
    %2711 = vmatprep.mubr.bf16.mxu0 0
    %2712 = vmatmul.mubr.bf16.gmra.mrb[0].mxu0 %v2486
    %v2713 = vpop.f32.mrb[0].mxu0
    %v2714 = vadd.f32 0.0, %v2713
    %v2715 = vpop.f32.mrb[0].mxu0
    %v2716 = vadd.f32 0.0, %v2715
    %v2717 = vpop.f32.mrb[0].mxu0
    %v2718 = vpop.f32.mrb[0].mxu0
    %2719 = vdwg.mxu0
    %2720 = vmatprep.subr.bf16.mxu0 %v2618
    %2721 = vmatpush1.bf16.msra.mxu0 %v2617
    %2722 = vmatprep.subr.bf16.mxu0 %v2622
    %2723 = vmatpush1.bf16.msra.mxu0 %v2621
    %2724 = vmatprep.subr.bf16.mxu0 %v2626
    %2725 = vmatpush1.bf16.msra.mxu0 %v2625
    %2726 = vmatprep.subr.bf16.mxu0 %v2630
    %2727 = vmatpush1.bf16.msra.mxu0 %v2629
    %2728 = vmatprep.subr.bf16.mxu0 %v2634
    %2729 = vmatpush1.bf16.msra.mxu0 %v2633
    %2730 = vmatprep.subr.bf16.mxu0 %v2638
    %2731 = vmatpush1.bf16.msra.mxu0 %v2637
    %2732 = vmatprep.subr.bf16.mxu0 %v2642
    %2733 = vmatpush1.bf16.msra.mxu0 %v2641
    %2734 = vmatprep.subr.bf16.mxu0 %v2646
    %2735 = vmatpush1.bf16.msra.mxu0 %v2645
    %2736 = vmatprep.subr.bf16.mxu0 0
    %2737 = vmatpush1.bf16.msra.mxu0 0
    %2738 = vmatprep.subr.bf16.mxu0 0
    %2739 = vmatpush1.bf16.msra.mxu0 0
    %2740 = vmatprep.subr.bf16.mxu0 0
    %2741 = vmatpush1.bf16.msra.mxu0 0
    %2742 = vmatprep.subr.bf16.mxu0 0
    %2743 = vmatpush1.bf16.msra.mxu0 0
    %2744 = vmatprep.subr.bf16.mxu0 0
    %2745 = vmatpush1.bf16.msra.mxu0 0
    %2746 = vmatprep.subr.bf16.mxu0 0
    %2747 = vmatpush1.bf16.msra.mxu0 0
    %2748 = vmatprep.subr.bf16.mxu0 0
    %2749 = vmatpush1.bf16.msra.mxu0 0
    %2750 = vmatprep.subr.bf16.mxu0 0
    %2751 = vmatpush1.bf16.msra.mxu0 0
    %2752 = vmatprep.mubr.bf16.mxu0 0
    %2753 = vmatmul.mubr.bf16.gmra.mrb[0].mxu0 %v2486
    %v2754 = vpop.f32.mrb[0].mxu0
    %v2755 = vadd.f32 0.0, %v2754
    %v2756 = vpop.f32.mrb[0].mxu0
    %v2757 = vadd.f32 0.0, %v2756
    %v2758 = vpop.f32.mrb[0].mxu0
    %v2759 = vpop.f32.mrb[0].mxu0
    %2760 = vdwg.mxu0
    %v2793 = vunpack.c.l.b16 %v2453
    %v2794 = vunpack.c.h.b16 %v2453
    %v2795 = vunpack.c.l.b16 %v2454
    %v2796 = vunpack.c.h.b16 %v2454
    %v2797 = vunpack.c.l.b16 %v2455
    %v2798 = vunpack.c.h.b16 %v2455
    %v2799 = vunpack.c.l.b16 %v2456
    %v2800 = vunpack.c.h.b16 %v2456
    %v2801 = vunpack.c.l.b16 %v2457
    %v2802 = vunpack.c.h.b16 %v2457
    %v2803 = vunpack.c.l.b16 %v2458
    %v2804 = vunpack.c.h.b16 %v2458
    %v2805 = vunpack.c.l.b16 %v2459
    %v2806 = vunpack.c.h.b16 %v2459
    %v2807 = vunpack.c.l.b16 %v2460
    %v2808 = vunpack.c.h.b16 %v2460
    %v2809 = vunpack.c.l.b16 %v2461
    %v2810 = vunpack.c.h.b16 %v2461
    %v2811 = vunpack.c.l.b16 %v2462
    %v2812 = vunpack.c.h.b16 %v2462
    %v2813 = vunpack.c.l.b16 %v2463
    %v2814 = vunpack.c.h.b16 %v2463
    %v2815 = vunpack.c.l.b16 %v2464
    %v2816 = vunpack.c.h.b16 %v2464
    %v2817 = vunpack.c.l.b16 %v2465
    %v2818 = vunpack.c.h.b16 %v2465
    %v2819 = vunpack.c.l.b16 %v2466
    %v2820 = vunpack.c.h.b16 %v2466
    %v2821 = vunpack.c.l.b16 %v2467
    %v2822 = vunpack.c.h.b16 %v2467
    %v2823 = vunpack.c.l.b16 %v2468
    %v2824 = vunpack.c.h.b16 %v2468
    %v2825 = vunpack.c.l.b16 %v2469
    %v2826 = vunpack.c.h.b16 %v2469
    %v2827 = vunpack.c.l.b16 %v2470
    %v2828 = vunpack.c.h.b16 %v2470
    %v2829 = vunpack.c.l.b16 %v2471
    %v2830 = vunpack.c.h.b16 %v2471
    %v2831 = vunpack.c.l.b16 %v2472
    %v2832 = vunpack.c.h.b16 %v2472
    %v2833 = vunpack.c.l.b16 %v2473
    %v2834 = vunpack.c.h.b16 %v2473
    %v2835 = vunpack.c.l.b16 %v2474
    %v2836 = vunpack.c.h.b16 %v2474
    %v2837 = vunpack.c.l.b16 %v2475
    %v2838 = vunpack.c.h.b16 %v2475
    %v2839 = vunpack.c.l.b16 %v2476
    %v2840 = vunpack.c.h.b16 %v2476
    %v2841 = vunpack.c.l.b16 %v2477
    %v2842 = vunpack.c.h.b16 %v2477
    %v2843 = vunpack.c.l.b16 %v2478
    %v2844 = vunpack.c.h.b16 %v2478
    %v2845 = vunpack.c.l.b16 %v2479
    %v2846 = vunpack.c.h.b16 %v2479
    %v2847 = vunpack.c.l.b16 %v2480
    %v2848 = vunpack.c.h.b16 %v2480
    %v2849 = vunpack.c.l.b16 %v2481
    %v2850 = vunpack.c.h.b16 %v2481
    %v2851 = vunpack.c.l.b16 %v2482
    %v2852 = vunpack.c.h.b16 %v2482
    %v2853 = vunpack.c.l.b16 %v2483
    %v2854 = vunpack.c.h.b16 %v2483
    %v2855 = vunpack.c.l.b16 %v2484
    %v2856 = vunpack.c.h.b16 %v2484
    %v2857 = vpack.c.b16 %v2797, %v2793
    %v2858 = vpack.c.b16 %v2798, %v2794
    %v2859 = vpack.c.b16 %v2799, %v2795
    %v2860 = vpack.c.b16 %v2800, %v2796
    %v2861 = vpack.c.b16 %v2805, %v2801
    %v2862 = vpack.c.b16 %v2806, %v2802
    %v2863 = vpack.c.b16 %v2807, %v2803
    %v2864 = vpack.c.b16 %v2808, %v2804
    %v2865 = vpack.c.b16 %v2813, %v2809
    %v2866 = vpack.c.b16 %v2814, %v2810
    %v2867 = vpack.c.b16 %v2815, %v2811
    %v2868 = vpack.c.b16 %v2816, %v2812
    %v2869 = vpack.c.b16 %v2821, %v2817
    %v2870 = vpack.c.b16 %v2822, %v2818
    %v2871 = vpack.c.b16 %v2823, %v2819
    %v2872 = vpack.c.b16 %v2824, %v2820
    %v2873 = vpack.c.b16 %v2829, %v2825
    %v2874 = vpack.c.b16 %v2830, %v2826
    %v2875 = vpack.c.b16 %v2831, %v2827
    %v2876 = vpack.c.b16 %v2832, %v2828
    %v2877 = vpack.c.b16 %v2837, %v2833
    %v2878 = vpack.c.b16 %v2838, %v2834
    %v2879 = vpack.c.b16 %v2839, %v2835
    %v2880 = vpack.c.b16 %v2840, %v2836
    %v2881 = vpack.c.b16 %v2845, %v2841
    %v2882 = vpack.c.b16 %v2846, %v2842
    %v2883 = vpack.c.b16 %v2847, %v2843
    %v2884 = vpack.c.b16 %v2848, %v2844
    %v2885 = vpack.c.b16 %v2853, %v2849
    %v2886 = vpack.c.b16 %v2854, %v2850
    %v2887 = vpack.c.b16 %v2855, %v2851
    %v2888 = vpack.c.b16 %v2856, %v2852
    %2921 = vmatprep.subr.bf16.mxu0 %v2858
    %2922 = vmatpush1.bf16.msra.mxu0 %v2857
    %2923 = vmatprep.subr.bf16.mxu0 %v2862
    %2924 = vmatpush1.bf16.msra.mxu0 %v2861
    %2925 = vmatprep.subr.bf16.mxu0 %v2866
    %2926 = vmatpush1.bf16.msra.mxu0 %v2865
    %2927 = vmatprep.subr.bf16.mxu0 %v2870
    %2928 = vmatpush1.bf16.msra.mxu0 %v2869
    %2929 = vmatprep.subr.bf16.mxu0 %v2874
    %2930 = vmatpush1.bf16.msra.mxu0 %v2873
    %2931 = vmatprep.subr.bf16.mxu0 %v2878
    %2932 = vmatpush1.bf16.msra.mxu0 %v2877
    %2933 = vmatprep.subr.bf16.mxu0 %v2882
    %2934 = vmatpush1.bf16.msra.mxu0 %v2881
    %2935 = vmatprep.subr.bf16.mxu0 %v2886
    %2936 = vmatpush1.bf16.msra.mxu0 %v2885
    %2937 = vmatprep.subr.bf16.mxu0 0
    %2938 = vmatpush1.bf16.msra.mxu0 0
    %2939 = vmatprep.subr.bf16.mxu0 0
    %2940 = vmatpush1.bf16.msra.mxu0 0
    %2941 = vmatprep.subr.bf16.mxu0 0
    %2942 = vmatpush1.bf16.msra.mxu0 0
    %2943 = vmatprep.subr.bf16.mxu0 0
    %2944 = vmatpush1.bf16.msra.mxu0 0
    %2945 = vmatprep.subr.bf16.mxu0 0
    %2946 = vmatpush1.bf16.msra.mxu0 0
    %2947 = vmatprep.subr.bf16.mxu0 0
    %2948 = vmatpush1.bf16.msra.mxu0 0
    %2949 = vmatprep.subr.bf16.mxu0 0
    %2950 = vmatpush1.bf16.msra.mxu0 0
    %2951 = vmatprep.subr.bf16.mxu0 0
    %2952 = vmatpush1.bf16.msra.mxu0 0
    %2953 = vmatprep.mubr.bf16.mxu0 0
    %2954 = vmatmul.mubr.bf16.gmra.mrb[0].mxu0 %v2452
    %v2955 = vpop.f32.mrb[0].mxu0
    %v2956 = vadd.f32 %v2714, %v2955
    %v2957 = vpop.f32.mrb[0].mxu0
    %v2958 = vadd.f32 %v2716, %v2957
    %v2959 = vpop.f32.mrb[0].mxu0
    %v2960 = vpop.f32.mrb[0].mxu0
    %2961 = vdwg.mxu0
    %2962 = vmatprep.subr.bf16.mxu0 %v2860
    %2963 = vmatpush1.bf16.msra.mxu0 %v2859
    %2964 = vmatprep.subr.bf16.mxu0 %v2864
    %2965 = vmatpush1.bf16.msra.mxu0 %v2863
    %2966 = vmatprep.subr.bf16.mxu0 %v2868
    %2967 = vmatpush1.bf16.msra.mxu0 %v2867
    %2968 = vmatprep.subr.bf16.mxu0 %v2872
    %2969 = vmatpush1.bf16.msra.mxu0 %v2871
    %2970 = vmatprep.subr.bf16.mxu0 %v2876
    %2971 = vmatpush1.bf16.msra.mxu0 %v2875
    %2972 = vmatprep.subr.bf16.mxu0 %v2880
    %2973 = vmatpush1.bf16.msra.mxu0 %v2879
    %2974 = vmatprep.subr.bf16.mxu0 %v2884
    %2975 = vmatpush1.bf16.msra.mxu0 %v2883
    %2976 = vmatprep.subr.bf16.mxu0 %v2888
    %2977 = vmatpush1.bf16.msra.mxu0 %v2887
    %2978 = vmatprep.subr.bf16.mxu0 0
    %2979 = vmatpush1.bf16.msra.mxu0 0
    %2980 = vmatprep.subr.bf16.mxu0 0
    %2981 = vmatpush1.bf16.msra.mxu0 0
    %2982 = vmatprep.subr.bf16.mxu0 0
    %2983 = vmatpush1.bf16.msra.mxu0 0
    %2984 = vmatprep.subr.bf16.mxu0 0
    %2985 = vmatpush1.bf16.msra.mxu0 0
    %2986 = vmatprep.subr.bf16.mxu0 0
    %2987 = vmatpush1.bf16.msra.mxu0 0
    %2988 = vmatprep.subr.bf16.mxu0 0
    %2989 = vmatpush1.bf16.msra.mxu0 0
    %2990 = vmatprep.subr.bf16.mxu0 0
    %2991 = vmatpush1.bf16.msra.mxu0 0
    %2992 = vmatprep.subr.bf16.mxu0 0
    %2993 = vmatpush1.bf16.msra.mxu0 0
    %2994 = vmatprep.mubr.bf16.mxu0 0
    %2995 = vmatmul.mubr.bf16.gmra.mrb[0].mxu0 %v2452
    %v2996 = vpop.f32.mrb[0].mxu0
    %v2997 = vadd.f32 %v2755, %v2996
    %v2998 = vpop.f32.mrb[0].mxu0
    %v2999 = vadd.f32 %v2757, %v2998
    %v3000 = vpop.f32.mrb[0].mxu0
    %v3001 = vpop.f32.mrb[0].mxu0
    %3002 = vdwg.mxu0
    %v3003 = vadd.f32 %v2956, %v109
    %v3004 = vadd.f32 %v2958, %v110
    %v3005 = vadd.f32 %v2997, %v111
    %v3006 = vadd.f32 %v2999, %v112
    %v3007 = vxor.u32 %v3003, 2147483648
    %v3008 = vmul.f32 %v3007, 1.442695
    %v3009 = vpow.pop %v3008
    %v3010 = vadd.f32 %v3009, 1.0
    %v3011 = vrcp.pop %v3010
    %v3012 = vmul.f32 1.0, %v3011
    %v3013 = vxor.u32 %v3004, 2147483648
    %v3014 = vmul.f32 %v3013, 1.442695
    %v3015 = vpow.pop %v3014
    %v3016 = vadd.f32 %v3015, 1.0
    %v3017 = vrcp.pop %v3016
    %v3018 = vmul.f32 1.0, %v3017
    %v3019 = vtanh.pop %v3005
    %v3020 = vxor.u32 %v3006, 2147483648
    %v3021 = vmul.f32 %v3020, 1.442695
    %v3022 = vpow.pop %v3021
    %v3023 = vadd.f32 %v3022, 1.0
    %v3024 = vrcp.pop %v3023
    %v3025 = vmul.f32 1.0, %v3024
    %v3026 = vld [vmem:[#allocation3] sm:$0xff]
    %v3027 = vmul.f32 %v3018, %v3026
    %v3028 = vmul.f32 %v3012, %v3019
    %v3029 = vadd.f32 %v3027, %v3028
    %3030 = vst [vmem:[#allocation3] sm:$0xff] %v3029
    %v3031 = vtanh.pop %v3029
    %v3032 = vmul.f32 %v3025, %v3031
    %3033 = vst [vmem:[#allocation2] sm:$0xff] %v3032
    %s3034 = scalar_lea.vmem %s1, 20
    %v3035 = vld [vmem:[%s3034] sm:$0xf]
    %v3036 = vld [vmem:[%s3] sm:$0xff]
    %v3037 = vld [vmem:[%s3 + $0x8] sm:$0xff]
    %v3038 = vld [vmem:[%s3 + $0x10] sm:$0xff]
    %v3039 = vld [vmem:[%s3 + $0x18] sm:$0xff]
    %v3040 = vld [vmem:[%s3 + $0x20] sm:$0xff]
    %v3041 = vld [vmem:[%s3 + $0x28] sm:$0xff]
    %v3042 = vld [vmem:[%s3 + $0x30] sm:$0xff]
    %v3043 = vld [vmem:[%s3 + $0x38] sm:$0xff]
    %v3044 = vld [vmem:[%s3 + $0x40] sm:$0xff]
    %v3045 = vld [vmem:[%s3 + $0x48] sm:$0xff]
    %v3046 = vld [vmem:[%s3 + $0x50] sm:$0xff]
    %v3047 = vld [vmem:[%s3 + $0x58] sm:$0xff]
    %v3048 = vld [vmem:[%s3 + $0x60] sm:$0xff]
    %v3049 = vld [vmem:[%s3 + $0x68] sm:$0xff]
    %v3050 = vld [vmem:[%s3 + $0x70] sm:$0xff]
    %v3051 = vld [vmem:[%s3 + $0x78] sm:$0xff]
    %v3052 = vld [vmem:[%s3 + $0x80] sm:$0xff]
    %v3053 = vld [vmem:[%s3 + $0x88] sm:$0xff]
    %v3054 = vld [vmem:[%s3 + $0x90] sm:$0xff]
    %v3055 = vld [vmem:[%s3 + $0x98] sm:$0xff]
    %v3056 = vld [vmem:[%s3 + $0xa0] sm:$0xff]
    %v3057 = vld [vmem:[%s3 + $0xa8] sm:$0xff]
    %v3058 = vld [vmem:[%s3 + $0xb0] sm:$0xff]
    %v3059 = vld [vmem:[%s3 + $0xb8] sm:$0xff]
    %v3060 = vld [vmem:[%s3 + $0xc0] sm:$0xff]
    %v3061 = vld [vmem:[%s3 + $0xc8] sm:$0xff]
    %v3062 = vld [vmem:[%s3 + $0xd0] sm:$0xff]
    %v3063 = vld [vmem:[%s3 + $0xd8] sm:$0xff]
    %v3064 = vld [vmem:[%s3 + $0xe0] sm:$0xff]
    %v3065 = vld [vmem:[%s3 + $0xe8] sm:$0xff]
    %v3066 = vld [vmem:[%s3 + $0xf0] sm:$0xff]
    %v3067 = vld [vmem:[%s3 + $0xf8] sm:$0xff]
    %v3068 = vld [vmem:[#allocation2] sm:$0xff]
    %v3069 = vpack.c.bf16 %v3068, %v3068
    %v3070 = vld [vmem:[#allocation8] sm:$0xff]
    %v3071 = vld [vmem:[#allocation8 + $0x8] sm:$0xff]
    %v3072 = vld [vmem:[#allocation8 + $0x10] sm:$0xff]
    %v3073 = vld [vmem:[#allocation8 + $0x18] sm:$0xff]
    %v3074 = vld [vmem:[#allocation8 + $0x20] sm:$0xff]
    %v3075 = vld [vmem:[#allocation8 + $0x28] sm:$0xff]
    %v3076 = vld [vmem:[#allocation8 + $0x30] sm:$0xff]
    %v3077 = vld [vmem:[#allocation8 + $0x38] sm:$0xff]
    %v3078 = vld [vmem:[#allocation8 + $0x40] sm:$0xff]
    %v3079 = vld [vmem:[#allocation8 + $0x48] sm:$0xff]
    %v3080 = vld [vmem:[#allocation8 + $0x50] sm:$0xff]
    %v3081 = vld [vmem:[#allocation8 + $0x58] sm:$0xff]
    %v3082 = vld [vmem:[#allocation8 + $0x60] sm:$0xff]
    %v3083 = vld [vmem:[#allocation8 + $0x68] sm:$0xff]
    %v3084 = vld [vmem:[#allocation8 + $0x70] sm:$0xff]
    %v3085 = vld [vmem:[#allocation8 + $0x78] sm:$0xff]
    %v3086 = vld [vmem:[#allocation8 + $0x80] sm:$0xff]
    %v3087 = vld [vmem:[#allocation8 + $0x88] sm:$0xff]
    %v3088 = vld [vmem:[#allocation8 + $0x90] sm:$0xff]
    %v3089 = vld [vmem:[#allocation8 + $0x98] sm:$0xff]
    %v3090 = vld [vmem:[#allocation8 + $0xa0] sm:$0xff]
    %v3091 = vld [vmem:[#allocation8 + $0xa8] sm:$0xff]
    %v3092 = vld [vmem:[#allocation8 + $0xb0] sm:$0xff]
    %v3093 = vld [vmem:[#allocation8 + $0xb8] sm:$0xff]
    %v3094 = vld [vmem:[#allocation8 + $0xc0] sm:$0xff]
    %v3095 = vld [vmem:[#allocation8 + $0xc8] sm:$0xff]
    %v3096 = vld [vmem:[#allocation8 + $0xd0] sm:$0xff]
    %v3097 = vld [vmem:[#allocation8 + $0xd8] sm:$0xff]
    %v3098 = vld [vmem:[#allocation8 + $0xe0] sm:$0xff]
    %v3099 = vld [vmem:[#allocation8 + $0xe8] sm:$0xff]
    %v3100 = vld [vmem:[#allocation8 + $0xf0] sm:$0xff]
    %v3101 = vld [vmem:[#allocation8 + $0xf8] sm:$0xff]
    %v3134 = vunpack.c.l.b16 %v3070
    %v3135 = vunpack.c.h.b16 %v3070
    %v3136 = vunpack.c.l.b16 %v3071
    %v3137 = vunpack.c.h.b16 %v3071
    %v3138 = vunpack.c.l.b16 %v3072
    %v3139 = vunpack.c.h.b16 %v3072
    %v3140 = vunpack.c.l.b16 %v3073
    %v3141 = vunpack.c.h.b16 %v3073
    %v3142 = vunpack.c.l.b16 %v3074
    %v3143 = vunpack.c.h.b16 %v3074
    %v3144 = vunpack.c.l.b16 %v3075
    %v3145 = vunpack.c.h.b16 %v3075
    %v3146 = vunpack.c.l.b16 %v3076
    %v3147 = vunpack.c.h.b16 %v3076
    %v3148 = vunpack.c.l.b16 %v3077
    %v3149 = vunpack.c.h.b16 %v3077
    %v3150 = vunpack.c.l.b16 %v3078
    %v3151 = vunpack.c.h.b16 %v3078
    %v3152 = vunpack.c.l.b16 %v3079
    %v3153 = vunpack.c.h.b16 %v3079
    %v3154 = vunpack.c.l.b16 %v3080
    %v3155 = vunpack.c.h.b16 %v3080
    %v3156 = vunpack.c.l.b16 %v3081
    %v3157 = vunpack.c.h.b16 %v3081
    %v3158 = vunpack.c.l.b16 %v3082
    %v3159 = vunpack.c.h.b16 %v3082
    %v3160 = vunpack.c.l.b16 %v3083
    %v3161 = vunpack.c.h.b16 %v3083
    %v3162 = vunpack.c.l.b16 %v3084
    %v3163 = vunpack.c.h.b16 %v3084
    %v3164 = vunpack.c.l.b16 %v3085
    %v3165 = vunpack.c.h.b16 %v3085
    %v3166 = vunpack.c.l.b16 %v3086
    %v3167 = vunpack.c.h.b16 %v3086
    %v3168 = vunpack.c.l.b16 %v3087
    %v3169 = vunpack.c.h.b16 %v3087
    %v3170 = vunpack.c.l.b16 %v3088
    %v3171 = vunpack.c.h.b16 %v3088
    %v3172 = vunpack.c.l.b16 %v3089
    %v3173 = vunpack.c.h.b16 %v3089
    %v3174 = vunpack.c.l.b16 %v3090
    %v3175 = vunpack.c.h.b16 %v3090
    %v3176 = vunpack.c.l.b16 %v3091
    %v3177 = vunpack.c.h.b16 %v3091
    %v3178 = vunpack.c.l.b16 %v3092
    %v3179 = vunpack.c.h.b16 %v3092
    %v3180 = vunpack.c.l.b16 %v3093
    %v3181 = vunpack.c.h.b16 %v3093
    %v3182 = vunpack.c.l.b16 %v3094
    %v3183 = vunpack.c.h.b16 %v3094
    %v3184 = vunpack.c.l.b16 %v3095
    %v3185 = vunpack.c.h.b16 %v3095
    %v3186 = vunpack.c.l.b16 %v3096
    %v3187 = vunpack.c.h.b16 %v3096
    %v3188 = vunpack.c.l.b16 %v3097
    %v3189 = vunpack.c.h.b16 %v3097
    %v3190 = vunpack.c.l.b16 %v3098
    %v3191 = vunpack.c.h.b16 %v3098
    %v3192 = vunpack.c.l.b16 %v3099
    %v3193 = vunpack.c.h.b16 %v3099
    %v3194 = vunpack.c.l.b16 %v3100
    %v3195 = vunpack.c.h.b16 %v3100
    %v3196 = vunpack.c.l.b16 %v3101
    %v3197 = vunpack.c.h.b16 %v3101
    %v3198 = vpack.c.b16 %v3138, %v3134
    %v3199 = vpack.c.b16 %v3139, %v3135
    %v3200 = vpack.c.b16 %v3140, %v3136
    %v3201 = vpack.c.b16 %v3141, %v3137
    %v3202 = vpack.c.b16 %v3146, %v3142
    %v3203 = vpack.c.b16 %v3147, %v3143
    %v3204 = vpack.c.b16 %v3148, %v3144
    %v3205 = vpack.c.b16 %v3149, %v3145
    %v3206 = vpack.c.b16 %v3154, %v3150
    %v3207 = vpack.c.b16 %v3155, %v3151
    %v3208 = vpack.c.b16 %v3156, %v3152
    %v3209 = vpack.c.b16 %v3157, %v3153
    %v3210 = vpack.c.b16 %v3162, %v3158
    %v3211 = vpack.c.b16 %v3163, %v3159
    %v3212 = vpack.c.b16 %v3164, %v3160
    %v3213 = vpack.c.b16 %v3165, %v3161
    %v3214 = vpack.c.b16 %v3170, %v3166
    %v3215 = vpack.c.b16 %v3171, %v3167
    %v3216 = vpack.c.b16 %v3172, %v3168
    %v3217 = vpack.c.b16 %v3173, %v3169
    %v3218 = vpack.c.b16 %v3178, %v3174
    %v3219 = vpack.c.b16 %v3179, %v3175
    %v3220 = vpack.c.b16 %v3180, %v3176
    %v3221 = vpack.c.b16 %v3181, %v3177
    %v3222 = vpack.c.b16 %v3186, %v3182
    %v3223 = vpack.c.b16 %v3187, %v3183
    %v3224 = vpack.c.b16 %v3188, %v3184
    %v3225 = vpack.c.b16 %v3189, %v3185
    %v3226 = vpack.c.b16 %v3194, %v3190
    %v3227 = vpack.c.b16 %v3195, %v3191
    %v3228 = vpack.c.b16 %v3196, %v3192
    %v3229 = vpack.c.b16 %v3197, %v3193
    %3262 = vmatprep.subr.bf16.mxu0 %v3199
    %3263 = vmatpush1.bf16.msra.mxu0 %v3198
    %3264 = vmatprep.subr.bf16.mxu0 %v3203
    %3265 = vmatpush1.bf16.msra.mxu0 %v3202
    %3266 = vmatprep.subr.bf16.mxu0 %v3207
    %3267 = vmatpush1.bf16.msra.mxu0 %v3206
    %3268 = vmatprep.subr.bf16.mxu0 %v3211
    %3269 = vmatpush1.bf16.msra.mxu0 %v3210
    %3270 = vmatprep.subr.bf16.mxu0 %v3215
    %3271 = vmatpush1.bf16.msra.mxu0 %v3214
    %3272 = vmatprep.subr.bf16.mxu0 %v3219
    %3273 = vmatpush1.bf16.msra.mxu0 %v3218
    %3274 = vmatprep.subr.bf16.mxu0 %v3223
    %3275 = vmatpush1.bf16.msra.mxu0 %v3222
    %3276 = vmatprep.subr.bf16.mxu0 %v3227
    %3277 = vmatpush1.bf16.msra.mxu0 %v3226
    %3278 = vmatprep.subr.bf16.mxu0 0
    %3279 = vmatpush1.bf16.msra.mxu0 0
    %3280 = vmatprep.subr.bf16.mxu0 0
    %3281 = vmatpush1.bf16.msra.mxu0 0
    %3282 = vmatprep.subr.bf16.mxu0 0
    %3283 = vmatpush1.bf16.msra.mxu0 0
    %3284 = vmatprep.subr.bf16.mxu0 0
    %3285 = vmatpush1.bf16.msra.mxu0 0
    %3286 = vmatprep.subr.bf16.mxu0 0
    %3287 = vmatpush1.bf16.msra.mxu0 0
    %3288 = vmatprep.subr.bf16.mxu0 0
    %3289 = vmatpush1.bf16.msra.mxu0 0
    %3290 = vmatprep.subr.bf16.mxu0 0
    %3291 = vmatpush1.bf16.msra.mxu0 0
    %3292 = vmatprep.subr.bf16.mxu0 0
    %3293 = vmatpush1.bf16.msra.mxu0 0
    %3294 = vmatprep.mubr.bf16.mxu0 0
    %3295 = vmatmul.mubr.bf16.gmra.mrb[0].mxu0 %v3069
    %v3296 = vpop.f32.mrb[0].mxu0
    %v3297 = vadd.f32 0.0, %v3296
    %v3298 = vpop.f32.mrb[0].mxu0
    %v3299 = vadd.f32 0.0, %v3298
    %v3300 = vpop.f32.mrb[0].mxu0
    %v3301 = vpop.f32.mrb[0].mxu0
    %3302 = vdwg.mxu0
    %3303 = vmatprep.subr.bf16.mxu0 %v3201
    %3304 = vmatpush1.bf16.msra.mxu0 %v3200
    %3305 = vmatprep.subr.bf16.mxu0 %v3205
    %3306 = vmatpush1.bf16.msra.mxu0 %v3204
    %3307 = vmatprep.subr.bf16.mxu0 %v3209
    %3308 = vmatpush1.bf16.msra.mxu0 %v3208
    %3309 = vmatprep.subr.bf16.mxu0 %v3213
    %3310 = vmatpush1.bf16.msra.mxu0 %v3212
    %3311 = vmatprep.subr.bf16.mxu0 %v3217
    %3312 = vmatpush1.bf16.msra.mxu0 %v3216
    %3313 = vmatprep.subr.bf16.mxu0 %v3221
    %3314 = vmatpush1.bf16.msra.mxu0 %v3220
    %3315 = vmatprep.subr.bf16.mxu0 %v3225
    %3316 = vmatpush1.bf16.msra.mxu0 %v3224
    %3317 = vmatprep.subr.bf16.mxu0 %v3229
    %3318 = vmatpush1.bf16.msra.mxu0 %v3228
    %3319 = vmatprep.subr.bf16.mxu0 0
    %3320 = vmatpush1.bf16.msra.mxu0 0
    %3321 = vmatprep.subr.bf16.mxu0 0
    %3322 = vmatpush1.bf16.msra.mxu0 0
    %3323 = vmatprep.subr.bf16.mxu0 0
    %3324 = vmatpush1.bf16.msra.mxu0 0
    %3325 = vmatprep.subr.bf16.mxu0 0
    %3326 = vmatpush1.bf16.msra.mxu0 0
    %3327 = vmatprep.subr.bf16.mxu0 0
    %3328 = vmatpush1.bf16.msra.mxu0 0
    %3329 = vmatprep.subr.bf16.mxu0 0
    %3330 = vmatpush1.bf16.msra.mxu0 0
    %3331 = vmatprep.subr.bf16.mxu0 0
    %3332 = vmatpush1.bf16.msra.mxu0 0
    %3333 = vmatprep.subr.bf16.mxu0 0
    %3334 = vmatpush1.bf16.msra.mxu0 0
    %3335 = vmatprep.mubr.bf16.mxu0 0
    %3336 = vmatmul.mubr.bf16.gmra.mrb[0].mxu0 %v3069
    %v3337 = vpop.f32.mrb[0].mxu0
    %v3338 = vadd.f32 0.0, %v3337
    %v3339 = vpop.f32.mrb[0].mxu0
    %v3340 = vadd.f32 0.0, %v3339
    %v3341 = vpop.f32.mrb[0].mxu0
    %v3342 = vpop.f32.mrb[0].mxu0
    %3343 = vdwg.mxu0
    %v3376 = vunpack.c.l.b16 %v3036
    %v3377 = vunpack.c.h.b16 %v3036
    %v3378 = vunpack.c.l.b16 %v3037
    %v3379 = vunpack.c.h.b16 %v3037
    %v3380 = vunpack.c.l.b16 %v3038
    %v3381 = vunpack.c.h.b16 %v3038
    %v3382 = vunpack.c.l.b16 %v3039
    %v3383 = vunpack.c.h.b16 %v3039
    %v3384 = vunpack.c.l.b16 %v3040
    %v3385 = vunpack.c.h.b16 %v3040
    %v3386 = vunpack.c.l.b16 %v3041
    %v3387 = vunpack.c.h.b16 %v3041
    %v3388 = vunpack.c.l.b16 %v3042
    %v3389 = vunpack.c.h.b16 %v3042
    %v3390 = vunpack.c.l.b16 %v3043
    %v3391 = vunpack.c.h.b16 %v3043
    %v3392 = vunpack.c.l.b16 %v3044
    %v3393 = vunpack.c.h.b16 %v3044
    %v3394 = vunpack.c.l.b16 %v3045
    %v3395 = vunpack.c.h.b16 %v3045
    %v3396 = vunpack.c.l.b16 %v3046
    %v3397 = vunpack.c.h.b16 %v3046
    %v3398 = vunpack.c.l.b16 %v3047
    %v3399 = vunpack.c.h.b16 %v3047
    %v3400 = vunpack.c.l.b16 %v3048
    %v3401 = vunpack.c.h.b16 %v3048
    %v3402 = vunpack.c.l.b16 %v3049
    %v3403 = vunpack.c.h.b16 %v3049
    %v3404 = vunpack.c.l.b16 %v3050
    %v3405 = vunpack.c.h.b16 %v3050
    %v3406 = vunpack.c.l.b16 %v3051
    %v3407 = vunpack.c.h.b16 %v3051
    %v3408 = vunpack.c.l.b16 %v3052
    %v3409 = vunpack.c.h.b16 %v3052
    %v3410 = vunpack.c.l.b16 %v3053
    %v3411 = vunpack.c.h.b16 %v3053
    %v3412 = vunpack.c.l.b16 %v3054
    %v3413 = vunpack.c.h.b16 %v3054
    %v3414 = vunpack.c.l.b16 %v3055
    %v3415 = vunpack.c.h.b16 %v3055
    %v3416 = vunpack.c.l.b16 %v3056
    %v3417 = vunpack.c.h.b16 %v3056
    %v3418 = vunpack.c.l.b16 %v3057
    %v3419 = vunpack.c.h.b16 %v3057
    %v3420 = vunpack.c.l.b16 %v3058
    %v3421 = vunpack.c.h.b16 %v3058
    %v3422 = vunpack.c.l.b16 %v3059
    %v3423 = vunpack.c.h.b16 %v3059
    %v3424 = vunpack.c.l.b16 %v3060
    %v3425 = vunpack.c.h.b16 %v3060
    %v3426 = vunpack.c.l.b16 %v3061
    %v3427 = vunpack.c.h.b16 %v3061
    %v3428 = vunpack.c.l.b16 %v3062
    %v3429 = vunpack.c.h.b16 %v3062
    %v3430 = vunpack.c.l.b16 %v3063
    %v3431 = vunpack.c.h.b16 %v3063
    %v3432 = vunpack.c.l.b16 %v3064
    %v3433 = vunpack.c.h.b16 %v3064
    %v3434 = vunpack.c.l.b16 %v3065
    %v3435 = vunpack.c.h.b16 %v3065
    %v3436 = vunpack.c.l.b16 %v3066
    %v3437 = vunpack.c.h.b16 %v3066
    %v3438 = vunpack.c.l.b16 %v3067
    %v3439 = vunpack.c.h.b16 %v3067
    %v3440 = vpack.c.b16 %v3380, %v3376
    %v3441 = vpack.c.b16 %v3381, %v3377
    %v3442 = vpack.c.b16 %v3382, %v3378
    %v3443 = vpack.c.b16 %v3383, %v3379
    %v3444 = vpack.c.b16 %v3388, %v3384
    %v3445 = vpack.c.b16 %v3389, %v3385
    %v3446 = vpack.c.b16 %v3390, %v3386
    %v3447 = vpack.c.b16 %v3391, %v3387
    %v3448 = vpack.c.b16 %v3396, %v3392
    %v3449 = vpack.c.b16 %v3397, %v3393
    %v3450 = vpack.c.b16 %v3398, %v3394
    %v3451 = vpack.c.b16 %v3399, %v3395
    %v3452 = vpack.c.b16 %v3404, %v3400
    %v3453 = vpack.c.b16 %v3405, %v3401
    %v3454 = vpack.c.b16 %v3406, %v3402
    %v3455 = vpack.c.b16 %v3407, %v3403
    %v3456 = vpack.c.b16 %v3412, %v3408
    %v3457 = vpack.c.b16 %v3413, %v3409
    %v3458 = vpack.c.b16 %v3414, %v3410
    %v3459 = vpack.c.b16 %v3415, %v3411
    %v3460 = vpack.c.b16 %v3420, %v3416
    %v3461 = vpack.c.b16 %v3421, %v3417
    %v3462 = vpack.c.b16 %v3422, %v3418
    %v3463 = vpack.c.b16 %v3423, %v3419
    %v3464 = vpack.c.b16 %v3428, %v3424
    %v3465 = vpack.c.b16 %v3429, %v3425
    %v3466 = vpack.c.b16 %v3430, %v3426
    %v3467 = vpack.c.b16 %v3431, %v3427
    %v3468 = vpack.c.b16 %v3436, %v3432
    %v3469 = vpack.c.b16 %v3437, %v3433
    %v3470 = vpack.c.b16 %v3438, %v3434
    %v3471 = vpack.c.b16 %v3439, %v3435
    %3504 = vmatprep.subr.bf16.mxu0 %v3441
    %3505 = vmatpush1.bf16.msra.mxu0 %v3440
    %3506 = vmatprep.subr.bf16.mxu0 %v3445
    %3507 = vmatpush1.bf16.msra.mxu0 %v3444
    %3508 = vmatprep.subr.bf16.mxu0 %v3449
    %3509 = vmatpush1.bf16.msra.mxu0 %v3448
    %3510 = vmatprep.subr.bf16.mxu0 %v3453
    %3511 = vmatpush1.bf16.msra.mxu0 %v3452
    %3512 = vmatprep.subr.bf16.mxu0 %v3457
    %3513 = vmatpush1.bf16.msra.mxu0 %v3456
    %3514 = vmatprep.subr.bf16.mxu0 %v3461
    %3515 = vmatpush1.bf16.msra.mxu0 %v3460
    %3516 = vmatprep.subr.bf16.mxu0 %v3465
    %3517 = vmatpush1.bf16.msra.mxu0 %v3464
    %3518 = vmatprep.subr.bf16.mxu0 %v3469
    %3519 = vmatpush1.bf16.msra.mxu0 %v3468
    %3520 = vmatprep.subr.bf16.mxu0 0
    %3521 = vmatpush1.bf16.msra.mxu0 0
    %3522 = vmatprep.subr.bf16.mxu0 0
    %3523 = vmatpush1.bf16.msra.mxu0 0
    %3524 = vmatprep.subr.bf16.mxu0 0
    %3525 = vmatpush1.bf16.msra.mxu0 0
    %3526 = vmatprep.subr.bf16.mxu0 0
    %3527 = vmatpush1.bf16.msra.mxu0 0
    %3528 = vmatprep.subr.bf16.mxu0 0
    %3529 = vmatpush1.bf16.msra.mxu0 0
    %3530 = vmatprep.subr.bf16.mxu0 0
    %3531 = vmatpush1.bf16.msra.mxu0 0
    %3532 = vmatprep.subr.bf16.mxu0 0
    %3533 = vmatpush1.bf16.msra.mxu0 0
    %3534 = vmatprep.subr.bf16.mxu0 0
    %3535 = vmatpush1.bf16.msra.mxu0 0
    %3536 = vmatprep.mubr.bf16.mxu0 0
    %3537 = vmatmul.mubr.bf16.gmra.mrb[0].mxu0 %v3035
    %v3538 = vpop.f32.mrb[0].mxu0
    %v3539 = vadd.f32 %v3297, %v3538
    %v3540 = vpop.f32.mrb[0].mxu0
    %v3541 = vadd.f32 %v3299, %v3540
    %v3542 = vpop.f32.mrb[0].mxu0
    %v3543 = vpop.f32.mrb[0].mxu0
    %3544 = vdwg.mxu0
    %3545 = vmatprep.subr.bf16.mxu0 %v3443
    %3546 = vmatpush1.bf16.msra.mxu0 %v3442
    %3547 = vmatprep.subr.bf16.mxu0 %v3447
    %3548 = vmatpush1.bf16.msra.mxu0 %v3446
    %3549 = vmatprep.subr.bf16.mxu0 %v3451
    %3550 = vmatpush1.bf16.msra.mxu0 %v3450
    %3551 = vmatprep.subr.bf16.mxu0 %v3455
    %3552 = vmatpush1.bf16.msra.mxu0 %v3454
    %3553 = vmatprep.subr.bf16.mxu0 %v3459
    %3554 = vmatpush1.bf16.msra.mxu0 %v3458
    %3555 = vmatprep.subr.bf16.mxu0 %v3463
    %3556 = vmatpush1.bf16.msra.mxu0 %v3462
    %3557 = vmatprep.subr.bf16.mxu0 %v3467
    %3558 = vmatpush1.bf16.msra.mxu0 %v3466
    %3559 = vmatprep.subr.bf16.mxu0 %v3471
    %3560 = vmatpush1.bf16.msra.mxu0 %v3470
    %3561 = vmatprep.subr.bf16.mxu0 0
    %3562 = vmatpush1.bf16.msra.mxu0 0
    %3563 = vmatprep.subr.bf16.mxu0 0
    %3564 = vmatpush1.bf16.msra.mxu0 0
    %3565 = vmatprep.subr.bf16.mxu0 0
    %3566 = vmatpush1.bf16.msra.mxu0 0
    %3567 = vmatprep.subr.bf16.mxu0 0
    %3568 = vmatpush1.bf16.msra.mxu0 0
    %3569 = vmatprep.subr.bf16.mxu0 0
    %3570 = vmatpush1.bf16.msra.mxu0 0
    %3571 = vmatprep.subr.bf16.mxu0 0
    %3572 = vmatpush1.bf16.msra.mxu0 0
    %3573 = vmatprep.subr.bf16.mxu0 0
    %3574 = vmatpush1.bf16.msra.mxu0 0
    %3575 = vmatprep.subr.bf16.mxu0 0
    %3576 = vmatpush1.bf16.msra.mxu0 0
    %3577 = vmatprep.mubr.bf16.mxu0 0
    %3578 = vmatmul.mubr.bf16.gmra.mrb[0].mxu0 %v3035
    %v3579 = vpop.f32.mrb[0].mxu0
    %v3580 = vadd.f32 %v3338, %v3579
    %v3581 = vpop.f32.mrb[0].mxu0
    %v3582 = vadd.f32 %v3340, %v3581
    %v3583 = vpop.f32.mrb[0].mxu0
    %v3584 = vpop.f32.mrb[0].mxu0
    %3585 = vdwg.mxu0
    %v3586 = vadd.f32 %v3539, %v109
    %v3587 = vadd.f32 %v3541, %v110
    %v3588 = vadd.f32 %v3580, %v111
    %v3589 = vadd.f32 %v3582, %v112
    %v3590 = vxor.u32 %v3586, 2147483648
    %v3591 = vmul.f32 %v3590, 1.442695
    %v3592 = vpow.pop %v3591
    %v3593 = vadd.f32 %v3592, 1.0
    %v3594 = vrcp.pop %v3593
    %v3595 = vmul.f32 1.0, %v3594
    %v3596 = vxor.u32 %v3587, 2147483648
    %v3597 = vmul.f32 %v3596, 1.442695
    %v3598 = vpow.pop %v3597
    %v3599 = vadd.f32 %v3598, 1.0
    %v3600 = vrcp.pop %v3599
    %v3601 = vmul.f32 1.0, %v3600
    %v3602 = vtanh.pop %v3588
    %v3603 = vxor.u32 %v3589, 2147483648
    %v3604 = vmul.f32 %v3603, 1.442695
    %v3605 = vpow.pop %v3604
    %v3606 = vadd.f32 %v3605, 1.0
    %v3607 = vrcp.pop %v3606
    %v3608 = vmul.f32 1.0, %v3607
    %v3609 = vld [vmem:[#allocation3] sm:$0xff]
    %v3610 = vmul.f32 %v3601, %v3609
    %v3611 = vmul.f32 %v3595, %v3602
    %v3612 = vadd.f32 %v3610, %v3611
    %3613 = vst [vmem:[#allocation3] sm:$0xff] %v3612
    %v3614 = vtanh.pop %v3612
    %v3615 = vmul.f32 %v3608, %v3614
    %3616 = vst [vmem:[#allocation2] sm:$0xff] %v3615
    %s3617 = scalar_lea.vmem %s1, 24
    %v3618 = vld [vmem:[%s3617] sm:$0xf]
    %v3619 = vld [vmem:[%s3] sm:$0xff]
    %v3620 = vld [vmem:[%s3 + $0x8] sm:$0xff]
    %v3621 = vld [vmem:[%s3 + $0x10] sm:$0xff]
    %v3622 = vld [vmem:[%s3 + $0x18] sm:$0xff]
    %v3623 = vld [vmem:[%s3 + $0x20] sm:$0xff]
    %v3624 = vld [vmem:[%s3 + $0x28] sm:$0xff]
    %v3625 = vld [vmem:[%s3 + $0x30] sm:$0xff]
    %v3626 = vld [vmem:[%s3 + $0x38] sm:$0xff]
    %v3627 = vld [vmem:[%s3 + $0x40] sm:$0xff]
    %v3628 = vld [vmem:[%s3 + $0x48] sm:$0xff]
    %v3629 = vld [vmem:[%s3 + $0x50] sm:$0xff]
    %v3630 = vld [vmem:[%s3 + $0x58] sm:$0xff]
    %v3631 = vld [vmem:[%s3 + $0x60] sm:$0xff]
    %v3632 = vld [vmem:[%s3 + $0x68] sm:$0xff]
    %v3633 = vld [vmem:[%s3 + $0x70] sm:$0xff]
    %v3634 = vld [vmem:[%s3 + $0x78] sm:$0xff]
    %v3635 = vld [vmem:[%s3 + $0x80] sm:$0xff]
    %v3636 = vld [vmem:[%s3 + $0x88] sm:$0xff]
    %v3637 = vld [vmem:[%s3 + $0x90] sm:$0xff]
    %v3638 = vld [vmem:[%s3 + $0x98] sm:$0xff]
    %v3639 = vld [vmem:[%s3 + $0xa0] sm:$0xff]
    %v3640 = vld [vmem:[%s3 + $0xa8] sm:$0xff]
    %v3641 = vld [vmem:[%s3 + $0xb0] sm:$0xff]
    %v3642 = vld [vmem:[%s3 + $0xb8] sm:$0xff]
    %v3643 = vld [vmem:[%s3 + $0xc0] sm:$0xff]
    %v3644 = vld [vmem:[%s3 + $0xc8] sm:$0xff]
    %v3645 = vld [vmem:[%s3 + $0xd0] sm:$0xff]
    %v3646 = vld [vmem:[%s3 + $0xd8] sm:$0xff]
    %v3647 = vld [vmem:[%s3 + $0xe0] sm:$0xff]
    %v3648 = vld [vmem:[%s3 + $0xe8] sm:$0xff]
    %v3649 = vld [vmem:[%s3 + $0xf0] sm:$0xff]
    %v3650 = vld [vmem:[%s3 + $0xf8] sm:$0xff]
    %v3651 = vld [vmem:[#allocation2] sm:$0xff]
    %v3652 = vpack.c.bf16 %v3651, %v3651
    %v3653 = vld [vmem:[#allocation8] sm:$0xff]
    %v3654 = vld [vmem:[#allocation8 + $0x8] sm:$0xff]
    %v3655 = vld [vmem:[#allocation8 + $0x10] sm:$0xff]
    %v3656 = vld [vmem:[#allocation8 + $0x18] sm:$0xff]
    %v3657 = vld [vmem:[#allocation8 + $0x20] sm:$0xff]
    %v3658 = vld [vmem:[#allocation8 + $0x28] sm:$0xff]
    %v3659 = vld [vmem:[#allocation8 + $0x30] sm:$0xff]
    %v3660 = vld [vmem:[#allocation8 + $0x38] sm:$0xff]
    %v3661 = vld [vmem:[#allocation8 + $0x40] sm:$0xff]
    %v3662 = vld [vmem:[#allocation8 + $0x48] sm:$0xff]
    %v3663 = vld [vmem:[#allocation8 + $0x50] sm:$0xff]
    %v3664 = vld [vmem:[#allocation8 + $0x58] sm:$0xff]
    %v3665 = vld [vmem:[#allocation8 + $0x60] sm:$0xff]
    %v3666 = vld [vmem:[#allocation8 + $0x68] sm:$0xff]
    %v3667 = vld [vmem:[#allocation8 + $0x70] sm:$0xff]
    %v3668 = vld [vmem:[#allocation8 + $0x78] sm:$0xff]
    %v3669 = vld [vmem:[#allocation8 + $0x80] sm:$0xff]
    %v3670 = vld [vmem:[#allocation8 + $0x88] sm:$0xff]
    %v3671 = vld [vmem:[#allocation8 + $0x90] sm:$0xff]
    %v3672 = vld [vmem:[#allocation8 + $0x98] sm:$0xff]
    %v3673 = vld [vmem:[#allocation8 + $0xa0] sm:$0xff]
    %v3674 = vld [vmem:[#allocation8 + $0xa8] sm:$0xff]
    %v3675 = vld [vmem:[#allocation8 + $0xb0] sm:$0xff]
    %v3676 = vld [vmem:[#allocation8 + $0xb8] sm:$0xff]
    %v3677 = vld [vmem:[#allocation8 + $0xc0] sm:$0xff]
    %v3678 = vld [vmem:[#allocation8 + $0xc8] sm:$0xff]
    %v3679 = vld [vmem:[#allocation8 + $0xd0] sm:$0xff]
    %v3680 = vld [vmem:[#allocation8 + $0xd8] sm:$0xff]
    %v3681 = vld [vmem:[#allocation8 + $0xe0] sm:$0xff]
    %v3682 = vld [vmem:[#allocation8 + $0xe8] sm:$0xff]
    %v3683 = vld [vmem:[#allocation8 + $0xf0] sm:$0xff]
    %v3684 = vld [vmem:[#allocation8 + $0xf8] sm:$0xff]
    %v3717 = vunpack.c.l.b16 %v3653
    %v3718 = vunpack.c.h.b16 %v3653
    %v3719 = vunpack.c.l.b16 %v3654
    %v3720 = vunpack.c.h.b16 %v3654
    %v3721 = vunpack.c.l.b16 %v3655
    %v3722 = vunpack.c.h.b16 %v3655
    %v3723 = vunpack.c.l.b16 %v3656
    %v3724 = vunpack.c.h.b16 %v3656
    %v3725 = vunpack.c.l.b16 %v3657
    %v3726 = vunpack.c.h.b16 %v3657
    %v3727 = vunpack.c.l.b16 %v3658
    %v3728 = vunpack.c.h.b16 %v3658
    %v3729 = vunpack.c.l.b16 %v3659
    %v3730 = vunpack.c.h.b16 %v3659
    %v3731 = vunpack.c.l.b16 %v3660
    %v3732 = vunpack.c.h.b16 %v3660
    %v3733 = vunpack.c.l.b16 %v3661
    %v3734 = vunpack.c.h.b16 %v3661
    %v3735 = vunpack.c.l.b16 %v3662
    %v3736 = vunpack.c.h.b16 %v3662
    %v3737 = vunpack.c.l.b16 %v3663
    %v3738 = vunpack.c.h.b16 %v3663
    %v3739 = vunpack.c.l.b16 %v3664
    %v3740 = vunpack.c.h.b16 %v3664
    %v3741 = vunpack.c.l.b16 %v3665
    %v3742 = vunpack.c.h.b16 %v3665
    %v3743 = vunpack.c.l.b16 %v3666
    %v3744 = vunpack.c.h.b16 %v3666
    %v3745 = vunpack.c.l.b16 %v3667
    %v3746 = vunpack.c.h.b16 %v3667
    %v3747 = vunpack.c.l.b16 %v3668
    %v3748 = vunpack.c.h.b16 %v3668
    %v3749 = vunpack.c.l.b16 %v3669
    %v3750 = vunpack.c.h.b16 %v3669
    %v3751 = vunpack.c.l.b16 %v3670
    %v3752 = vunpack.c.h.b16 %v3670
    %v3753 = vunpack.c.l.b16 %v3671
    %v3754 = vunpack.c.h.b16 %v3671
    %v3755 = vunpack.c.l.b16 %v3672
    %v3756 = vunpack.c.h.b16 %v3672
    %v3757 = vunpack.c.l.b16 %v3673
    %v3758 = vunpack.c.h.b16 %v3673
    %v3759 = vunpack.c.l.b16 %v3674
    %v3760 = vunpack.c.h.b16 %v3674
    %v3761 = vunpack.c.l.b16 %v3675
    %v3762 = vunpack.c.h.b16 %v3675
    %v3763 = vunpack.c.l.b16 %v3676
    %v3764 = vunpack.c.h.b16 %v3676
    %v3765 = vunpack.c.l.b16 %v3677
    %v3766 = vunpack.c.h.b16 %v3677
    %v3767 = vunpack.c.l.b16 %v3678
    %v3768 = vunpack.c.h.b16 %v3678
    %v3769 = vunpack.c.l.b16 %v3679
    %v3770 = vunpack.c.h.b16 %v3679
    %v3771 = vunpack.c.l.b16 %v3680
    %v3772 = vunpack.c.h.b16 %v3680
    %v3773 = vunpack.c.l.b16 %v3681
    %v3774 = vunpack.c.h.b16 %v3681
    %v3775 = vunpack.c.l.b16 %v3682
    %v3776 = vunpack.c.h.b16 %v3682
    %v3777 = vunpack.c.l.b16 %v3683
    %v3778 = vunpack.c.h.b16 %v3683
    %v3779 = vunpack.c.l.b16 %v3684
    %v3780 = vunpack.c.h.b16 %v3684
    %v3781 = vpack.c.b16 %v3721, %v3717
    %v3782 = vpack.c.b16 %v3722, %v3718
    %v3783 = vpack.c.b16 %v3723, %v3719
    %v3784 = vpack.c.b16 %v3724, %v3720
    %v3785 = vpack.c.b16 %v3729, %v3725
    %v3786 = vpack.c.b16 %v3730, %v3726
    %v3787 = vpack.c.b16 %v3731, %v3727
    %v3788 = vpack.c.b16 %v3732, %v3728
    %v3789 = vpack.c.b16 %v3737, %v3733
    %v3790 = vpack.c.b16 %v3738, %v3734
    %v3791 = vpack.c.b16 %v3739, %v3735
    %v3792 = vpack.c.b16 %v3740, %v3736
    %v3793 = vpack.c.b16 %v3745, %v3741
    %v3794 = vpack.c.b16 %v3746, %v3742
    %v3795 = vpack.c.b16 %v3747, %v3743
    %v3796 = vpack.c.b16 %v3748, %v3744
    %v3797 = vpack.c.b16 %v3753, %v3749
    %v3798 = vpack.c.b16 %v3754, %v3750
    %v3799 = vpack.c.b16 %v3755, %v3751
    %v3800 = vpack.c.b16 %v3756, %v3752
    %v3801 = vpack.c.b16 %v3761, %v3757
    %v3802 = vpack.c.b16 %v3762, %v3758
    %v3803 = vpack.c.b16 %v3763, %v3759
    %v3804 = vpack.c.b16 %v3764, %v3760
    %v3805 = vpack.c.b16 %v3769, %v3765
    %v3806 = vpack.c.b16 %v3770, %v3766
    %v3807 = vpack.c.b16 %v3771, %v3767
    %v3808 = vpack.c.b16 %v3772, %v3768
    %v3809 = vpack.c.b16 %v3777, %v3773
    %v3810 = vpack.c.b16 %v3778, %v3774
    %v3811 = vpack.c.b16 %v3779, %v3775
    %v3812 = vpack.c.b16 %v3780, %v3776
    %3845 = vmatprep.subr.bf16.mxu0 %v3782
    %3846 = vmatpush1.bf16.msra.mxu0 %v3781
    %3847 = vmatprep.subr.bf16.mxu0 %v3786
    %3848 = vmatpush1.bf16.msra.mxu0 %v3785
    %3849 = vmatprep.subr.bf16.mxu0 %v3790
    %3850 = vmatpush1.bf16.msra.mxu0 %v3789
    %3851 = vmatprep.subr.bf16.mxu0 %v3794
    %3852 = vmatpush1.bf16.msra.mxu0 %v3793
    %3853 = vmatprep.subr.bf16.mxu0 %v3798
    %3854 = vmatpush1.bf16.msra.mxu0 %v3797
    %3855 = vmatprep.subr.bf16.mxu0 %v3802
    %3856 = vmatpush1.bf16.msra.mxu0 %v3801
    %3857 = vmatprep.subr.bf16.mxu0 %v3806
    %3858 = vmatpush1.bf16.msra.mxu0 %v3805
    %3859 = vmatprep.subr.bf16.mxu0 %v3810
    %3860 = vmatpush1.bf16.msra.mxu0 %v3809
    %3861 = vmatprep.subr.bf16.mxu0 0
    %3862 = vmatpush1.bf16.msra.mxu0 0
    %3863 = vmatprep.subr.bf16.mxu0 0
    %3864 = vmatpush1.bf16.msra.mxu0 0
    %3865 = vmatprep.subr.bf16.mxu0 0
    %3866 = vmatpush1.bf16.msra.mxu0 0
    %3867 = vmatprep.subr.bf16.mxu0 0
    %3868 = vmatpush1.bf16.msra.mxu0 0
    %3869 = vmatprep.subr.bf16.mxu0 0
    %3870 = vmatpush1.bf16.msra.mxu0 0
    %3871 = vmatprep.subr.bf16.mxu0 0
    %3872 = vmatpush1.bf16.msra.mxu0 0
    %3873 = vmatprep.subr.bf16.mxu0 0
    %3874 = vmatpush1.bf16.msra.mxu0 0
    %3875 = vmatprep.subr.bf16.mxu0 0
    %3876 = vmatpush1.bf16.msra.mxu0 0
    %3877 = vmatprep.mubr.bf16.mxu0 0
    %3878 = vmatmul.mubr.bf16.gmra.mrb[0].mxu0 %v3652
    %v3879 = vpop.f32.mrb[0].mxu0
    %v3880 = vadd.f32 0.0, %v3879
    %v3881 = vpop.f32.mrb[0].mxu0
    %v3882 = vadd.f32 0.0, %v3881
    %v3883 = vpop.f32.mrb[0].mxu0
    %v3884 = vpop.f32.mrb[0].mxu0
    %3885 = vdwg.mxu0
    %3886 = vmatprep.subr.bf16.mxu0 %v3784
    %3887 = vmatpush1.bf16.msra.mxu0 %v3783
    %3888 = vmatprep.subr.bf16.mxu0 %v3788
    %3889 = vmatpush1.bf16.msra.mxu0 %v3787
    %3890 = vmatprep.subr.bf16.mxu0 %v3792
    %3891 = vmatpush1.bf16.msra.mxu0 %v3791
    %3892 = vmatprep.subr.bf16.mxu0 %v3796
    %3893 = vmatpush1.bf16.msra.mxu0 %v3795
    %3894 = vmatprep.subr.bf16.mxu0 %v3800
    %3895 = vmatpush1.bf16.msra.mxu0 %v3799
    %3896 = vmatprep.subr.bf16.mxu0 %v3804
    %3897 = vmatpush1.bf16.msra.mxu0 %v3803
    %3898 = vmatprep.subr.bf16.mxu0 %v3808
    %3899 = vmatpush1.bf16.msra.mxu0 %v3807
    %3900 = vmatprep.subr.bf16.mxu0 %v3812
    %3901 = vmatpush1.bf16.msra.mxu0 %v3811
    %3902 = vmatprep.subr.bf16.mxu0 0
    %3903 = vmatpush1.bf16.msra.mxu0 0
    %3904 = vmatprep.subr.bf16.mxu0 0
    %3905 = vmatpush1.bf16.msra.mxu0 0
    %3906 = vmatprep.subr.bf16.mxu0 0
    %3907 = vmatpush1.bf16.msra.mxu0 0
    %3908 = vmatprep.subr.bf16.mxu0 0
    %3909 = vmatpush1.bf16.msra.mxu0 0
    %3910 = vmatprep.subr.bf16.mxu0 0
    %3911 = vmatpush1.bf16.msra.mxu0 0
    %3912 = vmatprep.subr.bf16.mxu0 0
    %3913 = vmatpush1.bf16.msra.mxu0 0
    %3914 = vmatprep.subr.bf16.mxu0 0
    %3915 = vmatpush1.bf16.msra.mxu0 0
    %3916 = vmatprep.subr.bf16.mxu0 0
    %3917 = vmatpush1.bf16.msra.mxu0 0
    %3918 = vmatprep.mubr.bf16.mxu0 0
    %3919 = vmatmul.mubr.bf16.gmra.mrb[0].mxu0 %v3652
    %v3920 = vpop.f32.mrb[0].mxu0
    %v3921 = vadd.f32 0.0, %v3920
    %v3922 = vpop.f32.mrb[0].mxu0
    %v3923 = vadd.f32 0.0, %v3922
    %v3924 = vpop.f32.mrb[0].mxu0
    %v3925 = vpop.f32.mrb[0].mxu0
    %3926 = vdwg.mxu0
    %v3959 = vunpack.c.l.b16 %v3619
    %v3960 = vunpack.c.h.b16 %v3619
    %v3961 = vunpack.c.l.b16 %v3620
    %v3962 = vunpack.c.h.b16 %v3620
    %v3963 = vunpack.c.l.b16 %v3621
    %v3964 = vunpack.c.h.b16 %v3621
    %v3965 = vunpack.c.l.b16 %v3622
    %v3966 = vunpack.c.h.b16 %v3622
    %v3967 = vunpack.c.l.b16 %v3623
    %v3968 = vunpack.c.h.b16 %v3623
    %v3969 = vunpack.c.l.b16 %v3624
    %v3970 = vunpack.c.h.b16 %v3624
    %v3971 = vunpack.c.l.b16 %v3625
    %v3972 = vunpack.c.h.b16 %v3625
    %v3973 = vunpack.c.l.b16 %v3626
    %v3974 = vunpack.c.h.b16 %v3626
    %v3975 = vunpack.c.l.b16 %v3627
    %v3976 = vunpack.c.h.b16 %v3627
    %v3977 = vunpack.c.l.b16 %v3628
    %v3978 = vunpack.c.h.b16 %v3628
    %v3979 = vunpack.c.l.b16 %v3629
    %v3980 = vunpack.c.h.b16 %v3629
    %v3981 = vunpack.c.l.b16 %v3630
    %v3982 = vunpack.c.h.b16 %v3630
    %v3983 = vunpack.c.l.b16 %v3631
    %v3984 = vunpack.c.h.b16 %v3631
    %v3985 = vunpack.c.l.b16 %v3632
    %v3986 = vunpack.c.h.b16 %v3632
    %v3987 = vunpack.c.l.b16 %v3633
    %v3988 = vunpack.c.h.b16 %v3633
    %v3989 = vunpack.c.l.b16 %v3634
    %v3990 = vunpack.c.h.b16 %v3634
    %v3991 = vunpack.c.l.b16 %v3635
    %v3992 = vunpack.c.h.b16 %v3635
    %v3993 = vunpack.c.l.b16 %v3636
    %v3994 = vunpack.c.h.b16 %v3636
    %v3995 = vunpack.c.l.b16 %v3637
    %v3996 = vunpack.c.h.b16 %v3637
    %v3997 = vunpack.c.l.b16 %v3638
    %v3998 = vunpack.c.h.b16 %v3638
    %v3999 = vunpack.c.l.b16 %v3639
    %v4000 = vunpack.c.h.b16 %v3639
    %v4001 = vunpack.c.l.b16 %v3640
    %v4002 = vunpack.c.h.b16 %v3640
    %v4003 = vunpack.c.l.b16 %v3641
    %v4004 = vunpack.c.h.b16 %v3641
    %v4005 = vunpack.c.l.b16 %v3642
    %v4006 = vunpack.c.h.b16 %v3642
    %v4007 = vunpack.c.l.b16 %v3643
    %v4008 = vunpack.c.h.b16 %v3643
    %v4009 = vunpack.c.l.b16 %v3644
    %v4010 = vunpack.c.h.b16 %v3644
    %v4011 = vunpack.c.l.b16 %v3645
    %v4012 = vunpack.c.h.b16 %v3645
    %v4013 = vunpack.c.l.b16 %v3646
    %v4014 = vunpack.c.h.b16 %v3646
    %v4015 = vunpack.c.l.b16 %v3647
    %v4016 = vunpack.c.h.b16 %v3647
    %v4017 = vunpack.c.l.b16 %v3648
    %v4018 = vunpack.c.h.b16 %v3648
    %v4019 = vunpack.c.l.b16 %v3649
    %v4020 = vunpack.c.h.b16 %v3649
    %v4021 = vunpack.c.l.b16 %v3650
    %v4022 = vunpack.c.h.b16 %v3650
    %v4023 = vpack.c.b16 %v3963, %v3959
    %v4024 = vpack.c.b16 %v3964, %v3960
    %v4025 = vpack.c.b16 %v3965, %v3961
    %v4026 = vpack.c.b16 %v3966, %v3962
    %v4027 = vpack.c.b16 %v3971, %v3967
    %v4028 = vpack.c.b16 %v3972, %v3968
    %v4029 = vpack.c.b16 %v3973, %v3969
    %v4030 = vpack.c.b16 %v3974, %v3970
    %v4031 = vpack.c.b16 %v3979, %v3975
    %v4032 = vpack.c.b16 %v3980, %v3976
    %v4033 = vpack.c.b16 %v3981, %v3977
    %v4034 = vpack.c.b16 %v3982, %v3978
    %v4035 = vpack.c.b16 %v3987, %v3983
    %v4036 = vpack.c.b16 %v3988, %v3984
    %v4037 = vpack.c.b16 %v3989, %v3985
    %v4038 = vpack.c.b16 %v3990, %v3986
    %v4039 = vpack.c.b16 %v3995, %v3991
    %v4040 = vpack.c.b16 %v3996, %v3992
    %v4041 = vpack.c.b16 %v3997, %v3993
    %v4042 = vpack.c.b16 %v3998, %v3994
    %v4043 = vpack.c.b16 %v4003, %v3999
    %v4044 = vpack.c.b16 %v4004, %v4000
    %v4045 = vpack.c.b16 %v4005, %v4001
    %v4046 = vpack.c.b16 %v4006, %v4002
    %v4047 = vpack.c.b16 %v4011, %v4007
    %v4048 = vpack.c.b16 %v4012, %v4008
    %v4049 = vpack.c.b16 %v4013, %v4009
    %v4050 = vpack.c.b16 %v4014, %v4010
    %v4051 = vpack.c.b16 %v4019, %v4015
    %v4052 = vpack.c.b16 %v4020, %v4016
    %v4053 = vpack.c.b16 %v4021, %v4017
    %v4054 = vpack.c.b16 %v4022, %v4018
    %4087 = vmatprep.subr.bf16.mxu0 %v4024
    %4088 = vmatpush1.bf16.msra.mxu0 %v4023
    %4089 = vmatprep.subr.bf16.mxu0 %v4028
    %4090 = vmatpush1.bf16.msra.mxu0 %v4027
    %4091 = vmatprep.subr.bf16.mxu0 %v4032
    %4092 = vmatpush1.bf16.msra.mxu0 %v4031
    %4093 = vmatprep.subr.bf16.mxu0 %v4036
    %4094 = vmatpush1.bf16.msra.mxu0 %v4035
    %4095 = vmatprep.subr.bf16.mxu0 %v4040
    %4096 = vmatpush1.bf16.msra.mxu0 %v4039
    %4097 = vmatprep.subr.bf16.mxu0 %v4044
    %4098 = vmatpush1.bf16.msra.mxu0 %v4043
    %4099 = vmatprep.subr.bf16.mxu0 %v4048
    %4100 = vmatpush1.bf16.msra.mxu0 %v4047
    %4101 = vmatprep.subr.bf16.mxu0 %v4052
    %4102 = vmatpush1.bf16.msra.mxu0 %v4051
    %4103 = vmatprep.subr.bf16.mxu0 0
    %4104 = vmatpush1.bf16.msra.mxu0 0
    %4105 = vmatprep.subr.bf16.mxu0 0
    %4106 = vmatpush1.bf16.msra.mxu0 0
    %4107 = vmatprep.subr.bf16.mxu0 0
    %4108 = vmatpush1.bf16.msra.mxu0 0
    %4109 = vmatprep.subr.bf16.mxu0 0
    %4110 = vmatpush1.bf16.msra.mxu0 0
    %4111 = vmatprep.subr.bf16.mxu0 0
    %4112 = vmatpush1.bf16.msra.mxu0 0
    %4113 = vmatprep.subr.bf16.mxu0 0
    %4114 = vmatpush1.bf16.msra.mxu0 0
    %4115 = vmatprep.subr.bf16.mxu0 0
    %4116 = vmatpush1.bf16.msra.mxu0 0
    %4117 = vmatprep.subr.bf16.mxu0 0
    %4118 = vmatpush1.bf16.msra.mxu0 0
    %4119 = vmatprep.mubr.bf16.mxu0 0
    %4120 = vmatmul.mubr.bf16.gmra.mrb[0].mxu0 %v3618
    %v4121 = vpop.f32.mrb[0].mxu0
    %v4122 = vadd.f32 %v3880, %v4121
    %v4123 = vpop.f32.mrb[0].mxu0
    %v4124 = vadd.f32 %v3882, %v4123
    %v4125 = vpop.f32.mrb[0].mxu0
    %v4126 = vpop.f32.mrb[0].mxu0
    %4127 = vdwg.mxu0
    %4128 = vmatprep.subr.bf16.mxu0 %v4026
    %4129 = vmatpush1.bf16.msra.mxu0 %v4025
    %4130 = vmatprep.subr.bf16.mxu0 %v4030
    %4131 = vmatpush1.bf16.msra.mxu0 %v4029
    %4132 = vmatprep.subr.bf16.mxu0 %v4034
    %4133 = vmatpush1.bf16.msra.mxu0 %v4033
    %4134 = vmatprep.subr.bf16.mxu0 %v4038
    %4135 = vmatpush1.bf16.msra.mxu0 %v4037
    %4136 = vmatprep.subr.bf16.mxu0 %v4042
    %4137 = vmatpush1.bf16.msra.mxu0 %v4041
    %4138 = vmatprep.subr.bf16.mxu0 %v4046
    %4139 = vmatpush1.bf16.msra.mxu0 %v4045
    %4140 = vmatprep.subr.bf16.mxu0 %v4050
    %4141 = vmatpush1.bf16.msra.mxu0 %v4049
    %4142 = vmatprep.subr.bf16.mxu0 %v4054
    %4143 = vmatpush1.bf16.msra.mxu0 %v4053
    %4144 = vmatprep.subr.bf16.mxu0 0
    %4145 = vmatpush1.bf16.msra.mxu0 0
    %4146 = vmatprep.subr.bf16.mxu0 0
    %4147 = vmatpush1.bf16.msra.mxu0 0
    %4148 = vmatprep.subr.bf16.mxu0 0
    %4149 = vmatpush1.bf16.msra.mxu0 0
    %4150 = vmatprep.subr.bf16.mxu0 0
    %4151 = vmatpush1.bf16.msra.mxu0 0
    %4152 = vmatprep.subr.bf16.mxu0 0
    %4153 = vmatpush1.bf16.msra.mxu0 0
    %4154 = vmatprep.subr.bf16.mxu0 0
    %4155 = vmatpush1.bf16.msra.mxu0 0
    %4156 = vmatprep.subr.bf16.mxu0 0
    %4157 = vmatpush1.bf16.msra.mxu0 0
    %4158 = vmatprep.subr.bf16.mxu0 0
    %4159 = vmatpush1.bf16.msra.mxu0 0
    %4160 = vmatprep.mubr.bf16.mxu0 0
    %4161 = vmatmul.mubr.bf16.gmra.mrb[0].mxu0 %v3618
    %v4162 = vpop.f32.mrb[0].mxu0
    %v4163 = vadd.f32 %v3921, %v4162
    %v4164 = vpop.f32.mrb[0].mxu0
    %v4165 = vadd.f32 %v3923, %v4164
    %v4166 = vpop.f32.mrb[0].mxu0
    %v4167 = vpop.f32.mrb[0].mxu0
    %4168 = vdwg.mxu0
    %v4169 = vadd.f32 %v4122, %v109
    %v4170 = vadd.f32 %v4124, %v110
    %v4171 = vadd.f32 %v4163, %v111
    %v4172 = vadd.f32 %v4165, %v112
    %v4173 = vxor.u32 %v4169, 2147483648
    %v4174 = vmul.f32 %v4173, 1.442695
    %v4175 = vpow.pop %v4174
    %v4176 = vadd.f32 %v4175, 1.0
    %v4177 = vrcp.pop %v4176
    %v4178 = vmul.f32 1.0, %v4177
    %v4179 = vxor.u32 %v4170, 2147483648
    %v4180 = vmul.f32 %v4179, 1.442695
    %v4181 = vpow.pop %v4180
    %v4182 = vadd.f32 %v4181, 1.0
    %v4183 = vrcp.pop %v4182
    %v4184 = vmul.f32 1.0, %v4183
    %v4185 = vtanh.pop %v4171
    %v4186 = vxor.u32 %v4172, 2147483648
    %v4187 = vmul.f32 %v4186, 1.442695
    %v4188 = vpow.pop %v4187
    %v4189 = vadd.f32 %v4188, 1.0
    %v4190 = vrcp.pop %v4189
    %v4191 = vmul.f32 1.0, %v4190
    %v4192 = vld [vmem:[#allocation3] sm:$0xff]
    %v4193 = vmul.f32 %v4184, %v4192
    %v4194 = vmul.f32 %v4178, %v4185
    %v4195 = vadd.f32 %v4193, %v4194
    %4196 = vst [vmem:[#allocation3] sm:$0xff] %v4195
    %v4197 = vtanh.pop %v4195
    %v4198 = vmul.f32 %v4191, %v4197
    %4199 = vst [vmem:[#allocation2] sm:$0xff] %v4198
    %s4200 = scalar_lea.vmem %s1, 28
    %v4201 = vld [vmem:[%s4200] sm:$0xf]
    %v4202 = vld [vmem:[%s3] sm:$0xff]
    %v4203 = vld [vmem:[%s3 + $0x8] sm:$0xff]
    %v4204 = vld [vmem:[%s3 + $0x10] sm:$0xff]
    %v4205 = vld [vmem:[%s3 + $0x18] sm:$0xff]
    %v4206 = vld [vmem:[%s3 + $0x20] sm:$0xff]
    %v4207 = vld [vmem:[%s3 + $0x28] sm:$0xff]
    %v4208 = vld [vmem:[%s3 + $0x30] sm:$0xff]
    %v4209 = vld [vmem:[%s3 + $0x38] sm:$0xff]
    %v4210 = vld [vmem:[%s3 + $0x40] sm:$0xff]
    %v4211 = vld [vmem:[%s3 + $0x48] sm:$0xff]
    %v4212 = vld [vmem:[%s3 + $0x50] sm:$0xff]
    %v4213 = vld [vmem:[%s3 + $0x58] sm:$0xff]
    %v4214 = vld [vmem:[%s3 + $0x60] sm:$0xff]
    %v4215 = vld [vmem:[%s3 + $0x68] sm:$0xff]
    %v4216 = vld [vmem:[%s3 + $0x70] sm:$0xff]
    %v4217 = vld [vmem:[%s3 + $0x78] sm:$0xff]
    %v4218 = vld [vmem:[%s3 + $0x80] sm:$0xff]
    %v4219 = vld [vmem:[%s3 + $0x88] sm:$0xff]
    %v4220 = vld [vmem:[%s3 + $0x90] sm:$0xff]
    %v4221 = vld [vmem:[%s3 + $0x98] sm:$0xff]
    %v4222 = vld [vmem:[%s3 + $0xa0] sm:$0xff]
    %v4223 = vld [vmem:[%s3 + $0xa8] sm:$0xff]
    %v4224 = vld [vmem:[%s3 + $0xb0] sm:$0xff]
    %v4225 = vld [vmem:[%s3 + $0xb8] sm:$0xff]
    %v4226 = vld [vmem:[%s3 + $0xc0] sm:$0xff]
    %v4227 = vld [vmem:[%s3 + $0xc8] sm:$0xff]
    %v4228 = vld [vmem:[%s3 + $0xd0] sm:$0xff]
    %v4229 = vld [vmem:[%s3 + $0xd8] sm:$0xff]
    %v4230 = vld [vmem:[%s3 + $0xe0] sm:$0xff]
    %v4231 = vld [vmem:[%s3 + $0xe8] sm:$0xff]
    %v4232 = vld [vmem:[%s3 + $0xf0] sm:$0xff]
    %v4233 = vld [vmem:[%s3 + $0xf8] sm:$0xff]
    %v4234 = vld [vmem:[#allocation2] sm:$0xff]
    %v4235 = vpack.c.bf16 %v4234, %v4234
    %v4236 = vld [vmem:[#allocation8] sm:$0xff]
    %v4237 = vld [vmem:[#allocation8 + $0x8] sm:$0xff]
    %v4238 = vld [vmem:[#allocation8 + $0x10] sm:$0xff]
    %v4239 = vld [vmem:[#allocation8 + $0x18] sm:$0xff]
    %v4240 = vld [vmem:[#allocation8 + $0x20] sm:$0xff]
    %v4241 = vld [vmem:[#allocation8 + $0x28] sm:$0xff]
    %v4242 = vld [vmem:[#allocation8 + $0x30] sm:$0xff]
    %v4243 = vld [vmem:[#allocation8 + $0x38] sm:$0xff]
    %v4244 = vld [vmem:[#allocation8 + $0x40] sm:$0xff]
    %v4245 = vld [vmem:[#allocation8 + $0x48] sm:$0xff]
    %v4246 = vld [vmem:[#allocation8 + $0x50] sm:$0xff]
    %v4247 = vld [vmem:[#allocation8 + $0x58] sm:$0xff]
    %v4248 = vld [vmem:[#allocation8 + $0x60] sm:$0xff]
    %v4249 = vld [vmem:[#allocation8 + $0x68] sm:$0xff]
    %v4250 = vld [vmem:[#allocation8 + $0x70] sm:$0xff]
    %v4251 = vld [vmem:[#allocation8 + $0x78] sm:$0xff]
    %v4252 = vld [vmem:[#allocation8 + $0x80] sm:$0xff]
    %v4253 = vld [vmem:[#allocation8 + $0x88] sm:$0xff]
    %v4254 = vld [vmem:[#allocation8 + $0x90] sm:$0xff]
    %v4255 = vld [vmem:[#allocation8 + $0x98] sm:$0xff]
    %v4256 = vld [vmem:[#allocation8 + $0xa0] sm:$0xff]
    %v4257 = vld [vmem:[#allocation8 + $0xa8] sm:$0xff]
    %v4258 = vld [vmem:[#allocation8 + $0xb0] sm:$0xff]
    %v4259 = vld [vmem:[#allocation8 + $0xb8] sm:$0xff]
    %v4260 = vld [vmem:[#allocation8 + $0xc0] sm:$0xff]
    %v4261 = vld [vmem:[#allocation8 + $0xc8] sm:$0xff]
    %v4262 = vld [vmem:[#allocation8 + $0xd0] sm:$0xff]
    %v4263 = vld [vmem:[#allocation8 + $0xd8] sm:$0xff]
    %v4264 = vld [vmem:[#allocation8 + $0xe0] sm:$0xff]
    %v4265 = vld [vmem:[#allocation8 + $0xe8] sm:$0xff]
    %v4266 = vld [vmem:[#allocation8 + $0xf0] sm:$0xff]
    %v4267 = vld [vmem:[#allocation8 + $0xf8] sm:$0xff]
    %v4300 = vunpack.c.l.b16 %v4236
    %v4301 = vunpack.c.h.b16 %v4236
    %v4302 = vunpack.c.l.b16 %v4237
    %v4303 = vunpack.c.h.b16 %v4237
    %v4304 = vunpack.c.l.b16 %v4238
    %v4305 = vunpack.c.h.b16 %v4238
    %v4306 = vunpack.c.l.b16 %v4239
    %v4307 = vunpack.c.h.b16 %v4239
    %v4308 = vunpack.c.l.b16 %v4240
    %v4309 = vunpack.c.h.b16 %v4240
    %v4310 = vunpack.c.l.b16 %v4241
    %v4311 = vunpack.c.h.b16 %v4241
    %v4312 = vunpack.c.l.b16 %v4242
    %v4313 = vunpack.c.h.b16 %v4242
    %v4314 = vunpack.c.l.b16 %v4243
    %v4315 = vunpack.c.h.b16 %v4243
    %v4316 = vunpack.c.l.b16 %v4244
    %v4317 = vunpack.c.h.b16 %v4244
    %v4318 = vunpack.c.l.b16 %v4245
    %v4319 = vunpack.c.h.b16 %v4245
    %v4320 = vunpack.c.l.b16 %v4246
    %v4321 = vunpack.c.h.b16 %v4246
    %v4322 = vunpack.c.l.b16 %v4247
    %v4323 = vunpack.c.h.b16 %v4247
    %v4324 = vunpack.c.l.b16 %v4248
    %v4325 = vunpack.c.h.b16 %v4248
    %v4326 = vunpack.c.l.b16 %v4249
    %v4327 = vunpack.c.h.b16 %v4249
    %v4328 = vunpack.c.l.b16 %v4250
    %v4329 = vunpack.c.h.b16 %v4250
    %v4330 = vunpack.c.l.b16 %v4251
    %v4331 = vunpack.c.h.b16 %v4251
    %v4332 = vunpack.c.l.b16 %v4252
    %v4333 = vunpack.c.h.b16 %v4252
    %v4334 = vunpack.c.l.b16 %v4253
    %v4335 = vunpack.c.h.b16 %v4253
    %v4336 = vunpack.c.l.b16 %v4254
    %v4337 = vunpack.c.h.b16 %v4254
    %v4338 = vunpack.c.l.b16 %v4255
    %v4339 = vunpack.c.h.b16 %v4255
    %v4340 = vunpack.c.l.b16 %v4256
    %v4341 = vunpack.c.h.b16 %v4256
    %v4342 = vunpack.c.l.b16 %v4257
    %v4343 = vunpack.c.h.b16 %v4257
    %v4344 = vunpack.c.l.b16 %v4258
    %v4345 = vunpack.c.h.b16 %v4258
    %v4346 = vunpack.c.l.b16 %v4259
    %v4347 = vunpack.c.h.b16 %v4259
    %v4348 = vunpack.c.l.b16 %v4260
    %v4349 = vunpack.c.h.b16 %v4260
    %v4350 = vunpack.c.l.b16 %v4261
    %v4351 = vunpack.c.h.b16 %v4261
    %v4352 = vunpack.c.l.b16 %v4262
    %v4353 = vunpack.c.h.b16 %v4262
    %v4354 = vunpack.c.l.b16 %v4263
    %v4355 = vunpack.c.h.b16 %v4263
    %v4356 = vunpack.c.l.b16 %v4264
    %v4357 = vunpack.c.h.b16 %v4264
    %v4358 = vunpack.c.l.b16 %v4265
    %v4359 = vunpack.c.h.b16 %v4265
    %v4360 = vunpack.c.l.b16 %v4266
    %v4361 = vunpack.c.h.b16 %v4266
    %v4362 = vunpack.c.l.b16 %v4267
    %v4363 = vunpack.c.h.b16 %v4267
    %v4364 = vpack.c.b16 %v4304, %v4300
    %v4365 = vpack.c.b16 %v4305, %v4301
    %v4366 = vpack.c.b16 %v4306, %v4302
    %v4367 = vpack.c.b16 %v4307, %v4303
    %v4368 = vpack.c.b16 %v4312, %v4308
    %v4369 = vpack.c.b16 %v4313, %v4309
    %v4370 = vpack.c.b16 %v4314, %v4310
    %v4371 = vpack.c.b16 %v4315, %v4311
    %v4372 = vpack.c.b16 %v4320, %v4316
    %v4373 = vpack.c.b16 %v4321, %v4317
    %v4374 = vpack.c.b16 %v4322, %v4318
    %v4375 = vpack.c.b16 %v4323, %v4319
    %v4376 = vpack.c.b16 %v4328, %v4324
    %v4377 = vpack.c.b16 %v4329, %v4325
    %v4378 = vpack.c.b16 %v4330, %v4326
    %v4379 = vpack.c.b16 %v4331, %v4327
    %v4380 = vpack.c.b16 %v4336, %v4332
    %v4381 = vpack.c.b16 %v4337, %v4333
    %v4382 = vpack.c.b16 %v4338, %v4334
    %v4383 = vpack.c.b16 %v4339, %v4335
    %v4384 = vpack.c.b16 %v4344, %v4340
    %v4385 = vpack.c.b16 %v4345, %v4341
    %v4386 = vpack.c.b16 %v4346, %v4342
    %v4387 = vpack.c.b16 %v4347, %v4343
    %v4388 = vpack.c.b16 %v4352, %v4348
    %v4389 = vpack.c.b16 %v4353, %v4349
    %v4390 = vpack.c.b16 %v4354, %v4350
    %v4391 = vpack.c.b16 %v4355, %v4351
    %v4392 = vpack.c.b16 %v4360, %v4356
    %v4393 = vpack.c.b16 %v4361, %v4357
    %v4394 = vpack.c.b16 %v4362, %v4358
    %v4395 = vpack.c.b16 %v4363, %v4359
    %4428 = vmatprep.subr.bf16.mxu0 %v4365
    %4429 = vmatpush1.bf16.msra.mxu0 %v4364
    %4430 = vmatprep.subr.bf16.mxu0 %v4369
    %4431 = vmatpush1.bf16.msra.mxu0 %v4368
    %4432 = vmatprep.subr.bf16.mxu0 %v4373
    %4433 = vmatpush1.bf16.msra.mxu0 %v4372
    %4434 = vmatprep.subr.bf16.mxu0 %v4377
    %4435 = vmatpush1.bf16.msra.mxu0 %v4376
    %4436 = vmatprep.subr.bf16.mxu0 %v4381
    %4437 = vmatpush1.bf16.msra.mxu0 %v4380
    %4438 = vmatprep.subr.bf16.mxu0 %v4385
    %4439 = vmatpush1.bf16.msra.mxu0 %v4384
    %4440 = vmatprep.subr.bf16.mxu0 %v4389
    %4441 = vmatpush1.bf16.msra.mxu0 %v4388
    %4442 = vmatprep.subr.bf16.mxu0 %v4393
    %4443 = vmatpush1.bf16.msra.mxu0 %v4392
    %4444 = vmatprep.subr.bf16.mxu0 0
    %4445 = vmatpush1.bf16.msra.mxu0 0
    %4446 = vmatprep.subr.bf16.mxu0 0
    %4447 = vmatpush1.bf16.msra.mxu0 0
    %4448 = vmatprep.subr.bf16.mxu0 0
    %4449 = vmatpush1.bf16.msra.mxu0 0
    %4450 = vmatprep.subr.bf16.mxu0 0
    %4451 = vmatpush1.bf16.msra.mxu0 0
    %4452 = vmatprep.subr.bf16.mxu0 0
    %4453 = vmatpush1.bf16.msra.mxu0 0
    %4454 = vmatprep.subr.bf16.mxu0 0
    %4455 = vmatpush1.bf16.msra.mxu0 0
    %4456 = vmatprep.subr.bf16.mxu0 0
    %4457 = vmatpush1.bf16.msra.mxu0 0
    %4458 = vmatprep.subr.bf16.mxu0 0
    %4459 = vmatpush1.bf16.msra.mxu0 0
    %4460 = vmatprep.mubr.bf16.mxu0 0
    %4461 = vmatmul.mubr.bf16.gmra.mrb[0].mxu0 %v4235
    %v4462 = vpop.f32.mrb[0].mxu0
    %v4463 = vadd.f32 0.0, %v4462
    %v4464 = vpop.f32.mrb[0].mxu0
    %v4465 = vadd.f32 0.0, %v4464
    %v4466 = vpop.f32.mrb[0].mxu0
    %v4467 = vpop.f32.mrb[0].mxu0
    %4468 = vdwg.mxu0
    %4469 = vmatprep.subr.bf16.mxu0 %v4367
    %4470 = vmatpush1.bf16.msra.mxu0 %v4366
    %4471 = vmatprep.subr.bf16.mxu0 %v4371
    %4472 = vmatpush1.bf16.msra.mxu0 %v4370
    %4473 = vmatprep.subr.bf16.mxu0 %v4375
    %4474 = vmatpush1.bf16.msra.mxu0 %v4374
    %4475 = vmatprep.subr.bf16.mxu0 %v4379
    %4476 = vmatpush1.bf16.msra.mxu0 %v4378
    %4477 = vmatprep.subr.bf16.mxu0 %v4383
    %4478 = vmatpush1.bf16.msra.mxu0 %v4382
    %4479 = vmatprep.subr.bf16.mxu0 %v4387
    %4480 = vmatpush1.bf16.msra.mxu0 %v4386
    %4481 = vmatprep.subr.bf16.mxu0 %v4391
    %4482 = vmatpush1.bf16.msra.mxu0 %v4390
    %4483 = vmatprep.subr.bf16.mxu0 %v4395
    %4484 = vmatpush1.bf16.msra.mxu0 %v4394
    %4485 = vmatprep.subr.bf16.mxu0 0
    %4486 = vmatpush1.bf16.msra.mxu0 0
    %4487 = vmatprep.subr.bf16.mxu0 0
    %4488 = vmatpush1.bf16.msra.mxu0 0
    %4489 = vmatprep.subr.bf16.mxu0 0
    %4490 = vmatpush1.bf16.msra.mxu0 0
    %4491 = vmatprep.subr.bf16.mxu0 0
    %4492 = vmatpush1.bf16.msra.mxu0 0
    %4493 = vmatprep.subr.bf16.mxu0 0
    %4494 = vmatpush1.bf16.msra.mxu0 0
    %4495 = vmatprep.subr.bf16.mxu0 0
    %4496 = vmatpush1.bf16.msra.mxu0 0
    %4497 = vmatprep.subr.bf16.mxu0 0
    %4498 = vmatpush1.bf16.msra.mxu0 0
    %4499 = vmatprep.subr.bf16.mxu0 0
    %4500 = vmatpush1.bf16.msra.mxu0 0
    %4501 = vmatprep.mubr.bf16.mxu0 0
    %4502 = vmatmul.mubr.bf16.gmra.mrb[0].mxu0 %v4235
    %v4503 = vpop.f32.mrb[0].mxu0
    %v4504 = vadd.f32 0.0, %v4503
    %v4505 = vpop.f32.mrb[0].mxu0
    %v4506 = vadd.f32 0.0, %v4505
    %v4507 = vpop.f32.mrb[0].mxu0
    %v4508 = vpop.f32.mrb[0].mxu0
    %4509 = vdwg.mxu0
    %v4542 = vunpack.c.l.b16 %v4202
    %v4543 = vunpack.c.h.b16 %v4202
    %v4544 = vunpack.c.l.b16 %v4203
    %v4545 = vunpack.c.h.b16 %v4203
    %v4546 = vunpack.c.l.b16 %v4204
    %v4547 = vunpack.c.h.b16 %v4204
    %v4548 = vunpack.c.l.b16 %v4205
    %v4549 = vunpack.c.h.b16 %v4205
    %v4550 = vunpack.c.l.b16 %v4206
    %v4551 = vunpack.c.h.b16 %v4206
    %v4552 = vunpack.c.l.b16 %v4207
    %v4553 = vunpack.c.h.b16 %v4207
    %v4554 = vunpack.c.l.b16 %v4208
    %v4555 = vunpack.c.h.b16 %v4208
    %v4556 = vunpack.c.l.b16 %v4209
    %v4557 = vunpack.c.h.b16 %v4209
    %v4558 = vunpack.c.l.b16 %v4210
    %v4559 = vunpack.c.h.b16 %v4210
    %v4560 = vunpack.c.l.b16 %v4211
    %v4561 = vunpack.c.h.b16 %v4211
    %v4562 = vunpack.c.l.b16 %v4212
    %v4563 = vunpack.c.h.b16 %v4212
    %v4564 = vunpack.c.l.b16 %v4213
    %v4565 = vunpack.c.h.b16 %v4213
    %v4566 = vunpack.c.l.b16 %v4214
    %v4567 = vunpack.c.h.b16 %v4214
    %v4568 = vunpack.c.l.b16 %v4215
    %v4569 = vunpack.c.h.b16 %v4215
    %v4570 = vunpack.c.l.b16 %v4216
    %v4571 = vunpack.c.h.b16 %v4216
    %v4572 = vunpack.c.l.b16 %v4217
    %v4573 = vunpack.c.h.b16 %v4217
    %v4574 = vunpack.c.l.b16 %v4218
    %v4575 = vunpack.c.h.b16 %v4218
    %v4576 = vunpack.c.l.b16 %v4219
    %v4577 = vunpack.c.h.b16 %v4219
    %v4578 = vunpack.c.l.b16 %v4220
    %v4579 = vunpack.c.h.b16 %v4220
    %v4580 = vunpack.c.l.b16 %v4221
    %v4581 = vunpack.c.h.b16 %v4221
    %v4582 = vunpack.c.l.b16 %v4222
    %v4583 = vunpack.c.h.b16 %v4222
    %v4584 = vunpack.c.l.b16 %v4223
    %v4585 = vunpack.c.h.b16 %v4223
    %v4586 = vunpack.c.l.b16 %v4224
    %v4587 = vunpack.c.h.b16 %v4224
    %v4588 = vunpack.c.l.b16 %v4225
    %v4589 = vunpack.c.h.b16 %v4225
    %v4590 = vunpack.c.l.b16 %v4226
    %v4591 = vunpack.c.h.b16 %v4226
    %v4592 = vunpack.c.l.b16 %v4227
    %v4593 = vunpack.c.h.b16 %v4227
    %v4594 = vunpack.c.l.b16 %v4228
    %v4595 = vunpack.c.h.b16 %v4228
    %v4596 = vunpack.c.l.b16 %v4229
    %v4597 = vunpack.c.h.b16 %v4229
    %v4598 = vunpack.c.l.b16 %v4230
    %v4599 = vunpack.c.h.b16 %v4230
    %v4600 = vunpack.c.l.b16 %v4231
    %v4601 = vunpack.c.h.b16 %v4231
    %v4602 = vunpack.c.l.b16 %v4232
    %v4603 = vunpack.c.h.b16 %v4232
    %v4604 = vunpack.c.l.b16 %v4233
    %v4605 = vunpack.c.h.b16 %v4233
    %v4606 = vpack.c.b16 %v4546, %v4542
    %v4607 = vpack.c.b16 %v4547, %v4543
    %v4608 = vpack.c.b16 %v4548, %v4544
    %v4609 = vpack.c.b16 %v4549, %v4545
    %v4610 = vpack.c.b16 %v4554, %v4550
    %v4611 = vpack.c.b16 %v4555, %v4551
    %v4612 = vpack.c.b16 %v4556, %v4552
    %v4613 = vpack.c.b16 %v4557, %v4553
    %v4614 = vpack.c.b16 %v4562, %v4558
    %v4615 = vpack.c.b16 %v4563, %v4559
    %v4616 = vpack.c.b16 %v4564, %v4560
    %v4617 = vpack.c.b16 %v4565, %v4561
    %v4618 = vpack.c.b16 %v4570, %v4566
    %v4619 = vpack.c.b16 %v4571, %v4567
    %v4620 = vpack.c.b16 %v4572, %v4568
    %v4621 = vpack.c.b16 %v4573, %v4569
    %v4622 = vpack.c.b16 %v4578, %v4574
    %v4623 = vpack.c.b16 %v4579, %v4575
    %v4624 = vpack.c.b16 %v4580, %v4576
    %v4625 = vpack.c.b16 %v4581, %v4577
    %v4626 = vpack.c.b16 %v4586, %v4582
    %v4627 = vpack.c.b16 %v4587, %v4583
    %v4628 = vpack.c.b16 %v4588, %v4584
    %v4629 = vpack.c.b16 %v4589, %v4585
    %v4630 = vpack.c.b16 %v4594, %v4590
    %v4631 = vpack.c.b16 %v4595, %v4591
    %v4632 = vpack.c.b16 %v4596, %v4592
    %v4633 = vpack.c.b16 %v4597, %v4593
    %v4634 = vpack.c.b16 %v4602, %v4598
    %v4635 = vpack.c.b16 %v4603, %v4599
    %v4636 = vpack.c.b16 %v4604, %v4600
    %v4637 = vpack.c.b16 %v4605, %v4601
    %4670 = vmatprep.subr.bf16.mxu0 %v4607
    %4671 = vmatpush1.bf16.msra.mxu0 %v4606
    %4672 = vmatprep.subr.bf16.mxu0 %v4611
    %4673 = vmatpush1.bf16.msra.mxu0 %v4610
    %4674 = vmatprep.subr.bf16.mxu0 %v4615
    %4675 = vmatpush1.bf16.msra.mxu0 %v4614
    %4676 = vmatprep.subr.bf16.mxu0 %v4619
    %4677 = vmatpush1.bf16.msra.mxu0 %v4618
    %4678 = vmatprep.subr.bf16.mxu0 %v4623
    %4679 = vmatpush1.bf16.msra.mxu0 %v4622
    %4680 = vmatprep.subr.bf16.mxu0 %v4627
    %4681 = vmatpush1.bf16.msra.mxu0 %v4626
    %4682 = vmatprep.subr.bf16.mxu0 %v4631
    %4683 = vmatpush1.bf16.msra.mxu0 %v4630
    %4684 = vmatprep.subr.bf16.mxu0 %v4635
    %4685 = vmatpush1.bf16.msra.mxu0 %v4634
    %4686 = vmatprep.subr.bf16.mxu0 0
    %4687 = vmatpush1.bf16.msra.mxu0 0
    %4688 = vmatprep.subr.bf16.mxu0 0
    %4689 = vmatpush1.bf16.msra.mxu0 0
    %4690 = vmatprep.subr.bf16.mxu0 0
    %4691 = vmatpush1.bf16.msra.mxu0 0
    %4692 = vmatprep.subr.bf16.mxu0 0
    %4693 = vmatpush1.bf16.msra.mxu0 0
    %4694 = vmatprep.subr.bf16.mxu0 0
    %4695 = vmatpush1.bf16.msra.mxu0 0
    %4696 = vmatprep.subr.bf16.mxu0 0
    %4697 = vmatpush1.bf16.msra.mxu0 0
    %4698 = vmatprep.subr.bf16.mxu0 0
    %4699 = vmatpush1.bf16.msra.mxu0 0
    %4700 = vmatprep.subr.bf16.mxu0 0
    %4701 = vmatpush1.bf16.msra.mxu0 0
    %4702 = vmatprep.mubr.bf16.mxu0 0
    %4703 = vmatmul.mubr.bf16.gmra.mrb[0].mxu0 %v4201
    %v4704 = vpop.f32.mrb[0].mxu0
    %v4705 = vadd.f32 %v4463, %v4704
    %v4706 = vpop.f32.mrb[0].mxu0
    %v4707 = vadd.f32 %v4465, %v4706
    %v4708 = vpop.f32.mrb[0].mxu0
    %v4709 = vpop.f32.mrb[0].mxu0
    %4710 = vdwg.mxu0
    %4711 = vmatprep.subr.bf16.mxu0 %v4609
    %4712 = vmatpush1.bf16.msra.mxu0 %v4608
    %4713 = vmatprep.subr.bf16.mxu0 %v4613
    %4714 = vmatpush1.bf16.msra.mxu0 %v4612
    %4715 = vmatprep.subr.bf16.mxu0 %v4617
    %4716 = vmatpush1.bf16.msra.mxu0 %v4616
    %4717 = vmatprep.subr.bf16.mxu0 %v4621
    %4718 = vmatpush1.bf16.msra.mxu0 %v4620
    %4719 = vmatprep.subr.bf16.mxu0 %v4625
    %4720 = vmatpush1.bf16.msra.mxu0 %v4624
    %4721 = vmatprep.subr.bf16.mxu0 %v4629
    %4722 = vmatpush1.bf16.msra.mxu0 %v4628
    %4723 = vmatprep.subr.bf16.mxu0 %v4633
    %4724 = vmatpush1.bf16.msra.mxu0 %v4632
    %4725 = vmatprep.subr.bf16.mxu0 %v4637
    %4726 = vmatpush1.bf16.msra.mxu0 %v4636
    %4727 = vmatprep.subr.bf16.mxu0 0
    %4728 = vmatpush1.bf16.msra.mxu0 0
    %4729 = vmatprep.subr.bf16.mxu0 0
    %4730 = vmatpush1.bf16.msra.mxu0 0
    %4731 = vmatprep.subr.bf16.mxu0 0
    %4732 = vmatpush1.bf16.msra.mxu0 0
    %4733 = vmatprep.subr.bf16.mxu0 0
    %4734 = vmatpush1.bf16.msra.mxu0 0
    %4735 = vmatprep.subr.bf16.mxu0 0
    %4736 = vmatpush1.bf16.msra.mxu0 0
    %4737 = vmatprep.subr.bf16.mxu0 0
    %4738 = vmatpush1.bf16.msra.mxu0 0
    %4739 = vmatprep.subr.bf16.mxu0 0
    %4740 = vmatpush1.bf16.msra.mxu0 0
    %4741 = vmatprep.subr.bf16.mxu0 0
    %4742 = vmatpush1.bf16.msra.mxu0 0
    %4743 = vmatprep.mubr.bf16.mxu0 0
    %4744 = vmatmul.mubr.bf16.gmra.mrb[0].mxu0 %v4201
    %v4745 = vpop.f32.mrb[0].mxu0
    %v4746 = vadd.f32 %v4504, %v4745
    %v4747 = vpop.f32.mrb[0].mxu0
    %v4748 = vadd.f32 %v4506, %v4747
    %v4749 = vpop.f32.mrb[0].mxu0
    %v4750 = vpop.f32.mrb[0].mxu0
    %4751 = vdwg.mxu0
    %v4752 = vadd.f32 %v4705, %v109
    %v4753 = vadd.f32 %v4707, %v110
    %v4754 = vadd.f32 %v4746, %v111
    %v4755 = vadd.f32 %v4748, %v112
    %v4756 = vxor.u32 %v4752, 2147483648
    %v4757 = vmul.f32 %v4756, 1.442695
    %v4758 = vpow.pop %v4757
    %v4759 = vadd.f32 %v4758, 1.0
    %v4760 = vrcp.pop %v4759
    %v4761 = vmul.f32 1.0, %v4760
    %v4762 = vxor.u32 %v4753, 2147483648
    %v4763 = vmul.f32 %v4762, 1.442695
    %v4764 = vpow.pop %v4763
    %v4765 = vadd.f32 %v4764, 1.0
    %v4766 = vrcp.pop %v4765
    %v4767 = vmul.f32 1.0, %v4766
    %v4768 = vtanh.pop %v4754
    %v4769 = vxor.u32 %v4755, 2147483648
    %v4770 = vmul.f32 %v4769, 1.442695
    %v4771 = vpow.pop %v4770
    %v4772 = vadd.f32 %v4771, 1.0
    %v4773 = vrcp.pop %v4772
    %v4774 = vmul.f32 1.0, %v4773
    %v4775 = vld [vmem:[#allocation3] sm:$0xff]
    %v4776 = vmul.f32 %v4767, %v4775
    %v4777 = vmul.f32 %v4761, %v4768
    %v4778 = vadd.f32 %v4776, %v4777
    %4779 = vst [vmem:[#allocation3] sm:$0xff] %v4778
    %v4780 = vtanh.pop %v4778
    %v4781 = vmul.f32 %v4774, %v4780
    %4782 = vst [vmem:[#allocation2] sm:$0xff] %v4781
    %4783 = vst [vmem:[%s11] sm:$0xff] 0.0
    %v4784 = vld [vmem:[%s2] sm:$0xf]
    %4785 = vst [vmem:[#allocation4] sm:$0xf] %v4784
    %v4786 = vld [vmem:[#allocation4] sm:$0xf]
    %v4787 = vld [vmem:[#allocation9] sm:$0xff]
    %v4788 = vld [vmem:[#allocation9 + $0x8] sm:$0xff]
    %v4789 = vld [vmem:[#allocation9 + $0x10] sm:$0xff]
    %v4790 = vld [vmem:[#allocation9 + $0x18] sm:$0xff]
    %v4791 = vld [vmem:[#allocation9 + $0x20] sm:$0xff]
    %v4792 = vld [vmem:[#allocation9 + $0x28] sm:$0xff]
    %v4793 = vld [vmem:[#allocation9 + $0x30] sm:$0xff]
    %v4794 = vld [vmem:[#allocation9 + $0x38] sm:$0xff]
    %v4795 = vld [vmem:[#allocation9 + $0x40] sm:$0xff]
    %v4796 = vld [vmem:[#allocation9 + $0x48] sm:$0xff]
    %v4797 = vld [vmem:[#allocation9 + $0x50] sm:$0xff]
    %v4798 = vld [vmem:[#allocation9 + $0x58] sm:$0xff]
    %v4799 = vld [vmem:[#allocation9 + $0x60] sm:$0xff]
    %v4800 = vld [vmem:[#allocation9 + $0x68] sm:$0xff]
    %v4801 = vld [vmem:[#allocation9 + $0x70] sm:$0xff]
    %v4802 = vld [vmem:[#allocation9 + $0x78] sm:$0xff]
    %v4803 = vld [vmem:[#allocation9 + $0x80] sm:$0xff]
    %v4804 = vld [vmem:[#allocation9 + $0x88] sm:$0xff]
    %v4805 = vld [vmem:[#allocation9 + $0x90] sm:$0xff]
    %v4806 = vld [vmem:[#allocation9 + $0x98] sm:$0xff]
    %v4807 = vld [vmem:[#allocation9 + $0xa0] sm:$0xff]
    %v4808 = vld [vmem:[#allocation9 + $0xa8] sm:$0xff]
    %v4809 = vld [vmem:[#allocation9 + $0xb0] sm:$0xff]
    %v4810 = vld [vmem:[#allocation9 + $0xb8] sm:$0xff]
    %v4811 = vld [vmem:[#allocation9 + $0xc0] sm:$0xff]
    %v4812 = vld [vmem:[#allocation9 + $0xc8] sm:$0xff]
    %v4813 = vld [vmem:[#allocation9 + $0xd0] sm:$0xff]
    %v4814 = vld [vmem:[#allocation9 + $0xd8] sm:$0xff]
    %v4815 = vld [vmem:[#allocation9 + $0xe0] sm:$0xff]
    %v4816 = vld [vmem:[#allocation9 + $0xe8] sm:$0xff]
    %v4817 = vld [vmem:[#allocation9 + $0xf0] sm:$0xff]
    %v4818 = vld [vmem:[#allocation9 + $0xf8] sm:$0xff]
    %v4819 = vld [vmem:[#allocation2] sm:$0xff]
    %v4820 = vpack.c.bf16 %v4819, %v4819
    %v4821 = vld [vmem:[#allocation11] sm:$0xff]
    %v4822 = vld [vmem:[#allocation11 + $0x8] sm:$0xff]
    %v4823 = vld [vmem:[#allocation11 + $0x10] sm:$0xff]
    %v4824 = vld [vmem:[#allocation11 + $0x18] sm:$0xff]
    %v4825 = vld [vmem:[#allocation11 + $0x20] sm:$0xff]
    %v4826 = vld [vmem:[#allocation11 + $0x28] sm:$0xff]
    %v4827 = vld [vmem:[#allocation11 + $0x30] sm:$0xff]
    %v4828 = vld [vmem:[#allocation11 + $0x38] sm:$0xff]
    %v4829 = vld [vmem:[#allocation11 + $0x40] sm:$0xff]
    %v4830 = vld [vmem:[#allocation11 + $0x48] sm:$0xff]
    %v4831 = vld [vmem:[#allocation11 + $0x50] sm:$0xff]
    %v4832 = vld [vmem:[#allocation11 + $0x58] sm:$0xff]
    %v4833 = vld [vmem:[#allocation11 + $0x60] sm:$0xff]
    %v4834 = vld [vmem:[#allocation11 + $0x68] sm:$0xff]
    %v4835 = vld [vmem:[#allocation11 + $0x70] sm:$0xff]
    %v4836 = vld [vmem:[#allocation11 + $0x78] sm:$0xff]
    %v4837 = vld [vmem:[#allocation11 + $0x80] sm:$0xff]
    %v4838 = vld [vmem:[#allocation11 + $0x88] sm:$0xff]
    %v4839 = vld [vmem:[#allocation11 + $0x90] sm:$0xff]
    %v4840 = vld [vmem:[#allocation11 + $0x98] sm:$0xff]
    %v4841 = vld [vmem:[#allocation11 + $0xa0] sm:$0xff]
    %v4842 = vld [vmem:[#allocation11 + $0xa8] sm:$0xff]
    %v4843 = vld [vmem:[#allocation11 + $0xb0] sm:$0xff]
    %v4844 = vld [vmem:[#allocation11 + $0xb8] sm:$0xff]
    %v4845 = vld [vmem:[#allocation11 + $0xc0] sm:$0xff]
    %v4846 = vld [vmem:[#allocation11 + $0xc8] sm:$0xff]
    %v4847 = vld [vmem:[#allocation11 + $0xd0] sm:$0xff]
    %v4848 = vld [vmem:[#allocation11 + $0xd8] sm:$0xff]
    %v4849 = vld [vmem:[#allocation11 + $0xe0] sm:$0xff]
    %v4850 = vld [vmem:[#allocation11 + $0xe8] sm:$0xff]
    %v4851 = vld [vmem:[#allocation11 + $0xf0] sm:$0xff]
    %v4852 = vld [vmem:[#allocation11 + $0xf8] sm:$0xff]
    %v4885 = vunpack.c.l.b16 %v4821
    %v4886 = vunpack.c.h.b16 %v4821
    %v4887 = vunpack.c.l.b16 %v4822
    %v4888 = vunpack.c.h.b16 %v4822
    %v4889 = vunpack.c.l.b16 %v4823
    %v4890 = vunpack.c.h.b16 %v4823
    %v4891 = vunpack.c.l.b16 %v4824
    %v4892 = vunpack.c.h.b16 %v4824
    %v4893 = vunpack.c.l.b16 %v4825
    %v4894 = vunpack.c.h.b16 %v4825
    %v4895 = vunpack.c.l.b16 %v4826
    %v4896 = vunpack.c.h.b16 %v4826
    %v4897 = vunpack.c.l.b16 %v4827
    %v4898 = vunpack.c.h.b16 %v4827
    %v4899 = vunpack.c.l.b16 %v4828
    %v4900 = vunpack.c.h.b16 %v4828
    %v4901 = vunpack.c.l.b16 %v4829
    %v4902 = vunpack.c.h.b16 %v4829
    %v4903 = vunpack.c.l.b16 %v4830
    %v4904 = vunpack.c.h.b16 %v4830
    %v4905 = vunpack.c.l.b16 %v4831
    %v4906 = vunpack.c.h.b16 %v4831
    %v4907 = vunpack.c.l.b16 %v4832
    %v4908 = vunpack.c.h.b16 %v4832
    %v4909 = vunpack.c.l.b16 %v4833
    %v4910 = vunpack.c.h.b16 %v4833
    %v4911 = vunpack.c.l.b16 %v4834
    %v4912 = vunpack.c.h.b16 %v4834
    %v4913 = vunpack.c.l.b16 %v4835
    %v4914 = vunpack.c.h.b16 %v4835
    %v4915 = vunpack.c.l.b16 %v4836
    %v4916 = vunpack.c.h.b16 %v4836
    %v4917 = vunpack.c.l.b16 %v4837
    %v4918 = vunpack.c.h.b16 %v4837
    %v4919 = vunpack.c.l.b16 %v4838
    %v4920 = vunpack.c.h.b16 %v4838
    %v4921 = vunpack.c.l.b16 %v4839
    %v4922 = vunpack.c.h.b16 %v4839
    %v4923 = vunpack.c.l.b16 %v4840
    %v4924 = vunpack.c.h.b16 %v4840
    %v4925 = vunpack.c.l.b16 %v4841
    %v4926 = vunpack.c.h.b16 %v4841
    %v4927 = vunpack.c.l.b16 %v4842
    %v4928 = vunpack.c.h.b16 %v4842
    %v4929 = vunpack.c.l.b16 %v4843
    %v4930 = vunpack.c.h.b16 %v4843
    %v4931 = vunpack.c.l.b16 %v4844
    %v4932 = vunpack.c.h.b16 %v4844
    %v4933 = vunpack.c.l.b16 %v4845
    %v4934 = vunpack.c.h.b16 %v4845
    %v4935 = vunpack.c.l.b16 %v4846
    %v4936 = vunpack.c.h.b16 %v4846
    %v4937 = vunpack.c.l.b16 %v4847
    %v4938 = vunpack.c.h.b16 %v4847
    %v4939 = vunpack.c.l.b16 %v4848
    %v4940 = vunpack.c.h.b16 %v4848
    %v4941 = vunpack.c.l.b16 %v4849
    %v4942 = vunpack.c.h.b16 %v4849
    %v4943 = vunpack.c.l.b16 %v4850
    %v4944 = vunpack.c.h.b16 %v4850
    %v4945 = vunpack.c.l.b16 %v4851
    %v4946 = vunpack.c.h.b16 %v4851
    %v4947 = vunpack.c.l.b16 %v4852
    %v4948 = vunpack.c.h.b16 %v4852
    %v4949 = vpack.c.b16 %v4889, %v4885
    %v4950 = vpack.c.b16 %v4890, %v4886
    %v4951 = vpack.c.b16 %v4891, %v4887
    %v4952 = vpack.c.b16 %v4892, %v4888
    %v4953 = vpack.c.b16 %v4897, %v4893
    %v4954 = vpack.c.b16 %v4898, %v4894
    %v4955 = vpack.c.b16 %v4899, %v4895
    %v4956 = vpack.c.b16 %v4900, %v4896
    %v4957 = vpack.c.b16 %v4905, %v4901
    %v4958 = vpack.c.b16 %v4906, %v4902
    %v4959 = vpack.c.b16 %v4907, %v4903
    %v4960 = vpack.c.b16 %v4908, %v4904
    %v4961 = vpack.c.b16 %v4913, %v4909
    %v4962 = vpack.c.b16 %v4914, %v4910
    %v4963 = vpack.c.b16 %v4915, %v4911
    %v4964 = vpack.c.b16 %v4916, %v4912
    %v4965 = vpack.c.b16 %v4921, %v4917
    %v4966 = vpack.c.b16 %v4922, %v4918
    %v4967 = vpack.c.b16 %v4923, %v4919
    %v4968 = vpack.c.b16 %v4924, %v4920
    %v4969 = vpack.c.b16 %v4929, %v4925
    %v4970 = vpack.c.b16 %v4930, %v4926
    %v4971 = vpack.c.b16 %v4931, %v4927
    %v4972 = vpack.c.b16 %v4932, %v4928
    %v4973 = vpack.c.b16 %v4937, %v4933
    %v4974 = vpack.c.b16 %v4938, %v4934
    %v4975 = vpack.c.b16 %v4939, %v4935
    %v4976 = vpack.c.b16 %v4940, %v4936
    %v4977 = vpack.c.b16 %v4945, %v4941
    %v4978 = vpack.c.b16 %v4946, %v4942
    %v4979 = vpack.c.b16 %v4947, %v4943
    %v4980 = vpack.c.b16 %v4948, %v4944
    %5013 = vmatprep.subr.bf16.mxu0 %v4950
    %5014 = vmatpush1.bf16.msra.mxu0 %v4949
    %5015 = vmatprep.subr.bf16.mxu0 %v4954
    %5016 = vmatpush1.bf16.msra.mxu0 %v4953
    %5017 = vmatprep.subr.bf16.mxu0 %v4958
    %5018 = vmatpush1.bf16.msra.mxu0 %v4957
    %5019 = vmatprep.subr.bf16.mxu0 %v4962
    %5020 = vmatpush1.bf16.msra.mxu0 %v4961
    %5021 = vmatprep.subr.bf16.mxu0 %v4966
    %5022 = vmatpush1.bf16.msra.mxu0 %v4965
    %5023 = vmatprep.subr.bf16.mxu0 %v4970
    %5024 = vmatpush1.bf16.msra.mxu0 %v4969
    %5025 = vmatprep.subr.bf16.mxu0 %v4974
    %5026 = vmatpush1.bf16.msra.mxu0 %v4973
    %5027 = vmatprep.subr.bf16.mxu0 %v4978
    %5028 = vmatpush1.bf16.msra.mxu0 %v4977
    %5029 = vmatprep.subr.bf16.mxu0 0
    %5030 = vmatpush1.bf16.msra.mxu0 0
    %5031 = vmatprep.subr.bf16.mxu0 0
    %5032 = vmatpush1.bf16.msra.mxu0 0
    %5033 = vmatprep.subr.bf16.mxu0 0
    %5034 = vmatpush1.bf16.msra.mxu0 0
    %5035 = vmatprep.subr.bf16.mxu0 0
    %5036 = vmatpush1.bf16.msra.mxu0 0
    %5037 = vmatprep.subr.bf16.mxu0 0
    %5038 = vmatpush1.bf16.msra.mxu0 0
    %5039 = vmatprep.subr.bf16.mxu0 0
    %5040 = vmatpush1.bf16.msra.mxu0 0
    %5041 = vmatprep.subr.bf16.mxu0 0
    %5042 = vmatpush1.bf16.msra.mxu0 0
    %5043 = vmatprep.subr.bf16.mxu0 0
    %5044 = vmatpush1.bf16.msra.mxu0 0
    %5045 = vmatprep.mubr.bf16.mxu0 0
    %5046 = vmatmul.mubr.bf16.gmra.mrb[0].mxu0 %v4820
    %v5047 = vpop.f32.mrb[0].mxu0
    %v5048 = vadd.f32 0.0, %v5047
    %v5049 = vpop.f32.mrb[0].mxu0
    %v5050 = vadd.f32 0.0, %v5049
    %v5051 = vpop.f32.mrb[0].mxu0
    %v5052 = vpop.f32.mrb[0].mxu0
    %5053 = vdwg.mxu0
    %5054 = vmatprep.subr.bf16.mxu0 %v4952
    %5055 = vmatpush1.bf16.msra.mxu0 %v4951
    %5056 = vmatprep.subr.bf16.mxu0 %v4956
    %5057 = vmatpush1.bf16.msra.mxu0 %v4955
    %5058 = vmatprep.subr.bf16.mxu0 %v4960
    %5059 = vmatpush1.bf16.msra.mxu0 %v4959
    %5060 = vmatprep.subr.bf16.mxu0 %v4964
    %5061 = vmatpush1.bf16.msra.mxu0 %v4963
    %5062 = vmatprep.subr.bf16.mxu0 %v4968
    %5063 = vmatpush1.bf16.msra.mxu0 %v4967
    %5064 = vmatprep.subr.bf16.mxu0 %v4972
    %5065 = vmatpush1.bf16.msra.mxu0 %v4971
    %5066 = vmatprep.subr.bf16.mxu0 %v4976
    %5067 = vmatpush1.bf16.msra.mxu0 %v4975
    %5068 = vmatprep.subr.bf16.mxu0 %v4980
    %5069 = vmatpush1.bf16.msra.mxu0 %v4979
    %5070 = vmatprep.subr.bf16.mxu0 0
    %5071 = vmatpush1.bf16.msra.mxu0 0
    %5072 = vmatprep.subr.bf16.mxu0 0
    %5073 = vmatpush1.bf16.msra.mxu0 0
    %5074 = vmatprep.subr.bf16.mxu0 0
    %5075 = vmatpush1.bf16.msra.mxu0 0
    %5076 = vmatprep.subr.bf16.mxu0 0
    %5077 = vmatpush1.bf16.msra.mxu0 0
    %5078 = vmatprep.subr.bf16.mxu0 0
    %5079 = vmatpush1.bf16.msra.mxu0 0
    %5080 = vmatprep.subr.bf16.mxu0 0
    %5081 = vmatpush1.bf16.msra.mxu0 0
    %5082 = vmatprep.subr.bf16.mxu0 0
    %5083 = vmatpush1.bf16.msra.mxu0 0
    %5084 = vmatprep.subr.bf16.mxu0 0
    %5085 = vmatpush1.bf16.msra.mxu0 0
    %5086 = vmatprep.mubr.bf16.mxu0 0
    %5087 = vmatmul.mubr.bf16.gmra.mrb[0].mxu0 %v4820
    %v5088 = vpop.f32.mrb[0].mxu0
    %v5089 = vadd.f32 0.0, %v5088
    %v5090 = vpop.f32.mrb[0].mxu0
    %v5091 = vadd.f32 0.0, %v5090
    %v5092 = vpop.f32.mrb[0].mxu0
    %v5093 = vpop.f32.mrb[0].mxu0
    %5094 = vdwg.mxu0
    %v5127 = vunpack.c.l.b16 %v4787
    %v5128 = vunpack.c.h.b16 %v4787
    %v5129 = vunpack.c.l.b16 %v4788
    %v5130 = vunpack.c.h.b16 %v4788
    %v5131 = vunpack.c.l.b16 %v4789
    %v5132 = vunpack.c.h.b16 %v4789
    %v5133 = vunpack.c.l.b16 %v4790
    %v5134 = vunpack.c.h.b16 %v4790
    %v5135 = vunpack.c.l.b16 %v4791
    %v5136 = vunpack.c.h.b16 %v4791
    %v5137 = vunpack.c.l.b16 %v4792
    %v5138 = vunpack.c.h.b16 %v4792
    %v5139 = vunpack.c.l.b16 %v4793
    %v5140 = vunpack.c.h.b16 %v4793
    %v5141 = vunpack.c.l.b16 %v4794
    %v5142 = vunpack.c.h.b16 %v4794
    %v5143 = vunpack.c.l.b16 %v4795
    %v5144 = vunpack.c.h.b16 %v4795
    %v5145 = vunpack.c.l.b16 %v4796
    %v5146 = vunpack.c.h.b16 %v4796
    %v5147 = vunpack.c.l.b16 %v4797
    %v5148 = vunpack.c.h.b16 %v4797
    %v5149 = vunpack.c.l.b16 %v4798
    %v5150 = vunpack.c.h.b16 %v4798
    %v5151 = vunpack.c.l.b16 %v4799
    %v5152 = vunpack.c.h.b16 %v4799
    %v5153 = vunpack.c.l.b16 %v4800
    %v5154 = vunpack.c.h.b16 %v4800
    %v5155 = vunpack.c.l.b16 %v4801
    %v5156 = vunpack.c.h.b16 %v4801
    %v5157 = vunpack.c.l.b16 %v4802
    %v5158 = vunpack.c.h.b16 %v4802
    %v5159 = vunpack.c.l.b16 %v4803
    %v5160 = vunpack.c.h.b16 %v4803
    %v5161 = vunpack.c.l.b16 %v4804
    %v5162 = vunpack.c.h.b16 %v4804
    %v5163 = vunpack.c.l.b16 %v4805
    %v5164 = vunpack.c.h.b16 %v4805
    %v5165 = vunpack.c.l.b16 %v4806
    %v5166 = vunpack.c.h.b16 %v4806
    %v5167 = vunpack.c.l.b16 %v4807
    %v5168 = vunpack.c.h.b16 %v4807
    %v5169 = vunpack.c.l.b16 %v4808
    %v5170 = vunpack.c.h.b16 %v4808
    %v5171 = vunpack.c.l.b16 %v4809
    %v5172 = vunpack.c.h.b16 %v4809
    %v5173 = vunpack.c.l.b16 %v4810
    %v5174 = vunpack.c.h.b16 %v4810
    %v5175 = vunpack.c.l.b16 %v4811
    %v5176 = vunpack.c.h.b16 %v4811
    %v5177 = vunpack.c.l.b16 %v4812
    %v5178 = vunpack.c.h.b16 %v4812
    %v5179 = vunpack.c.l.b16 %v4813
    %v5180 = vunpack.c.h.b16 %v4813
    %v5181 = vunpack.c.l.b16 %v4814
    %v5182 = vunpack.c.h.b16 %v4814
    %v5183 = vunpack.c.l.b16 %v4815
    %v5184 = vunpack.c.h.b16 %v4815
    %v5185 = vunpack.c.l.b16 %v4816
    %v5186 = vunpack.c.h.b16 %v4816
    %v5187 = vunpack.c.l.b16 %v4817
    %v5188 = vunpack.c.h.b16 %v4817
    %v5189 = vunpack.c.l.b16 %v4818
    %v5190 = vunpack.c.h.b16 %v4818
    %v5191 = vpack.c.b16 %v5131, %v5127
    %v5192 = vpack.c.b16 %v5132, %v5128
    %v5193 = vpack.c.b16 %v5133, %v5129
    %v5194 = vpack.c.b16 %v5134, %v5130
    %v5195 = vpack.c.b16 %v5139, %v5135
    %v5196 = vpack.c.b16 %v5140, %v5136
    %v5197 = vpack.c.b16 %v5141, %v5137
    %v5198 = vpack.c.b16 %v5142, %v5138
    %v5199 = vpack.c.b16 %v5147, %v5143
    %v5200 = vpack.c.b16 %v5148, %v5144
    %v5201 = vpack.c.b16 %v5149, %v5145
    %v5202 = vpack.c.b16 %v5150, %v5146
    %v5203 = vpack.c.b16 %v5155, %v5151
    %v5204 = vpack.c.b16 %v5156, %v5152
    %v5205 = vpack.c.b16 %v5157, %v5153
    %v5206 = vpack.c.b16 %v5158, %v5154
    %v5207 = vpack.c.b16 %v5163, %v5159
    %v5208 = vpack.c.b16 %v5164, %v5160
    %v5209 = vpack.c.b16 %v5165, %v5161
    %v5210 = vpack.c.b16 %v5166, %v5162
    %v5211 = vpack.c.b16 %v5171, %v5167
    %v5212 = vpack.c.b16 %v5172, %v5168
    %v5213 = vpack.c.b16 %v5173, %v5169
    %v5214 = vpack.c.b16 %v5174, %v5170
    %v5215 = vpack.c.b16 %v5179, %v5175
    %v5216 = vpack.c.b16 %v5180, %v5176
    %v5217 = vpack.c.b16 %v5181, %v5177
    %v5218 = vpack.c.b16 %v5182, %v5178
    %v5219 = vpack.c.b16 %v5187, %v5183
    %v5220 = vpack.c.b16 %v5188, %v5184
    %v5221 = vpack.c.b16 %v5189, %v5185
    %v5222 = vpack.c.b16 %v5190, %v5186
    %5255 = vmatprep.subr.bf16.mxu0 %v5192
    %5256 = vmatpush1.bf16.msra.mxu0 %v5191
    %5257 = vmatprep.subr.bf16.mxu0 %v5196
    %5258 = vmatpush1.bf16.msra.mxu0 %v5195
    %5259 = vmatprep.subr.bf16.mxu0 %v5200
    %5260 = vmatpush1.bf16.msra.mxu0 %v5199
    %5261 = vmatprep.subr.bf16.mxu0 %v5204
    %5262 = vmatpush1.bf16.msra.mxu0 %v5203
    %5263 = vmatprep.subr.bf16.mxu0 %v5208
    %5264 = vmatpush1.bf16.msra.mxu0 %v5207
    %5265 = vmatprep.subr.bf16.mxu0 %v5212
    %5266 = vmatpush1.bf16.msra.mxu0 %v5211
    %5267 = vmatprep.subr.bf16.mxu0 %v5216
    %5268 = vmatpush1.bf16.msra.mxu0 %v5215
    %5269 = vmatprep.subr.bf16.mxu0 %v5220
    %5270 = vmatpush1.bf16.msra.mxu0 %v5219
    %5271 = vmatprep.subr.bf16.mxu0 0
    %5272 = vmatpush1.bf16.msra.mxu0 0
    %5273 = vmatprep.subr.bf16.mxu0 0
    %5274 = vmatpush1.bf16.msra.mxu0 0
    %5275 = vmatprep.subr.bf16.mxu0 0
    %5276 = vmatpush1.bf16.msra.mxu0 0
    %5277 = vmatprep.subr.bf16.mxu0 0
    %5278 = vmatpush1.bf16.msra.mxu0 0
    %5279 = vmatprep.subr.bf16.mxu0 0
    %5280 = vmatpush1.bf16.msra.mxu0 0
    %5281 = vmatprep.subr.bf16.mxu0 0
    %5282 = vmatpush1.bf16.msra.mxu0 0
    %5283 = vmatprep.subr.bf16.mxu0 0
    %5284 = vmatpush1.bf16.msra.mxu0 0
    %5285 = vmatprep.subr.bf16.mxu0 0
    %5286 = vmatpush1.bf16.msra.mxu0 0
    %5287 = vmatprep.mubr.bf16.mxu0 0
    %5288 = vmatmul.mubr.bf16.gmra.mrb[0].mxu0 %v4786
    %v5289 = vpop.f32.mrb[0].mxu0
    %v5290 = vadd.f32 %v5048, %v5289
    %v5291 = vpop.f32.mrb[0].mxu0
    %v5292 = vadd.f32 %v5050, %v5291
    %v5293 = vpop.f32.mrb[0].mxu0
    %v5294 = vpop.f32.mrb[0].mxu0
    %5295 = vdwg.mxu0
    %5296 = vmatprep.subr.bf16.mxu0 %v5194
    %5297 = vmatpush1.bf16.msra.mxu0 %v5193
    %5298 = vmatprep.subr.bf16.mxu0 %v5198
    %5299 = vmatpush1.bf16.msra.mxu0 %v5197
    %5300 = vmatprep.subr.bf16.mxu0 %v5202
    %5301 = vmatpush1.bf16.msra.mxu0 %v5201
    %5302 = vmatprep.subr.bf16.mxu0 %v5206
    %5303 = vmatpush1.bf16.msra.mxu0 %v5205
    %5304 = vmatprep.subr.bf16.mxu0 %v5210
    %5305 = vmatpush1.bf16.msra.mxu0 %v5209
    %5306 = vmatprep.subr.bf16.mxu0 %v5214
    %5307 = vmatpush1.bf16.msra.mxu0 %v5213
    %5308 = vmatprep.subr.bf16.mxu0 %v5218
    %5309 = vmatpush1.bf16.msra.mxu0 %v5217
    %5310 = vmatprep.subr.bf16.mxu0 %v5222
    %5311 = vmatpush1.bf16.msra.mxu0 %v5221
    %5312 = vmatprep.subr.bf16.mxu0 0
    %5313 = vmatpush1.bf16.msra.mxu0 0
    %5314 = vmatprep.subr.bf16.mxu0 0
    %5315 = vmatpush1.bf16.msra.mxu0 0
    %5316 = vmatprep.subr.bf16.mxu0 0
    %5317 = vmatpush1.bf16.msra.mxu0 0
    %5318 = vmatprep.subr.bf16.mxu0 0
    %5319 = vmatpush1.bf16.msra.mxu0 0
    %5320 = vmatprep.subr.bf16.mxu0 0
    %5321 = vmatpush1.bf16.msra.mxu0 0
    %5322 = vmatprep.subr.bf16.mxu0 0
    %5323 = vmatpush1.bf16.msra.mxu0 0
    %5324 = vmatprep.subr.bf16.mxu0 0
    %5325 = vmatpush1.bf16.msra.mxu0 0
    %5326 = vmatprep.subr.bf16.mxu0 0
    %5327 = vmatpush1.bf16.msra.mxu0 0
    %5328 = vmatprep.mubr.bf16.mxu0 0
    %5329 = vmatmul.mubr.bf16.gmra.mrb[0].mxu0 %v4786
    %v5330 = vpop.f32.mrb[0].mxu0
    %v5331 = vadd.f32 %v5089, %v5330
    %v5332 = vpop.f32.mrb[0].mxu0
    %v5333 = vadd.f32 %v5091, %v5332
    %v5334 = vpop.f32.mrb[0].mxu0
    %v5335 = vpop.f32.mrb[0].mxu0
    %5336 = vdwg.mxu0
    %v5337 = vadd.f32 %v5290, %v113
    %v5338 = vadd.f32 %v5292, %v114
    %v5339 = vadd.f32 %v5331, %v115
    %v5340 = vadd.f32 %v5333, %v116
    %v5341 = vxor.u32 %v5337, 2147483648
    %v5342 = vmul.f32 %v5341, 1.442695
    %v5343 = vpow.pop %v5342
    %v5344 = vadd.f32 %v5343, 1.0
    %v5345 = vrcp.pop %v5344
    %v5346 = vmul.f32 1.0, %v5345
    %v5347 = vxor.u32 %v5338, 2147483648
    %v5348 = vmul.f32 %v5347, 1.442695
    %v5349 = vpow.pop %v5348
    %v5350 = vadd.f32 %v5349, 1.0
    %v5351 = vrcp.pop %v5350
    %v5352 = vmul.f32 1.0, %v5351
    %v5353 = vtanh.pop %v5339
    %v5354 = vxor.u32 %v5340, 2147483648
    %v5355 = vmul.f32 %v5354, 1.442695
    %v5356 = vpow.pop %v5355
    %v5357 = vadd.f32 %v5356, 1.0
    %v5358 = vrcp.pop %v5357
    %v5359 = vmul.f32 1.0, %v5358
    %v5360 = vld [vmem:[#allocation3] sm:$0xff]
    %v5361 = vmul.f32 %v5352, %v5360
    %v5362 = vmul.f32 %v5346, %v5353
    %v5363 = vadd.f32 %v5361, %v5362
    %5364 = vst [vmem:[#allocation3] sm:$0xff] %v5363
    %v5365 = vtanh.pop %v5363
    %v5366 = vmul.f32 %v5359, %v5365
    %5367 = vst [vmem:[#allocation2] sm:$0xff] %v5366
    %v5368 = vld [vmem:[#allocation2] sm:$0xff]
    %v5369 = vpack.c.bf16 %v5368, %v5368
    %v5370 = vld [vmem:[#allocation12] sm:$0xf]
    %v5371 = vld [vmem:[#allocation12 + $0x4] sm:$0xf]
    %v5372 = vld [vmem:[#allocation12 + $0x8] sm:$0xf]
    %v5373 = vld [vmem:[#allocation12 + $0xc] sm:$0xf]
    %v5374 = vld [vmem:[#allocation12 + $0x10] sm:$0xf]
    %v5375 = vld [vmem:[#allocation12 + $0x14] sm:$0xf]
    %v5376 = vld [vmem:[#allocation12 + $0x18] sm:$0xf]
    %v5377 = vld [vmem:[#allocation12 + $0x1c] sm:$0xf]
    %v5378 = vld [vmem:[#allocation12 + $0x20] sm:$0xf]
    %v5379 = vld [vmem:[#allocation12 + $0x24] sm:$0xf]
    %v5380 = vld [vmem:[#allocation12 + $0x28] sm:$0xf]
    %v5381 = vld [vmem:[#allocation12 + $0x2c] sm:$0xf]
    %v5382 = vld [vmem:[#allocation12 + $0x30] sm:$0xf]
    %v5383 = vld [vmem:[#allocation12 + $0x34] sm:$0xf]
    %v5384 = vld [vmem:[#allocation12 + $0x38] sm:$0xf]
    %v5385 = vld [vmem:[#allocation12 + $0x3c] sm:$0xf]
    %v5402 = vunpack.c.l.b16 %v5370
    %v5403 = vunpack.c.l.b16 %v5371
    %v5404 = vunpack.c.l.b16 %v5372
    %v5405 = vunpack.c.l.b16 %v5373
    %v5406 = vunpack.c.l.b16 %v5374
    %v5407 = vunpack.c.l.b16 %v5375
    %v5408 = vunpack.c.l.b16 %v5376
    %v5409 = vunpack.c.l.b16 %v5377
    %v5410 = vunpack.c.l.b16 %v5378
    %v5411 = vunpack.c.l.b16 %v5379
    %v5412 = vunpack.c.l.b16 %v5380
    %v5413 = vunpack.c.l.b16 %v5381
    %v5414 = vunpack.c.l.b16 %v5382
    %v5415 = vunpack.c.l.b16 %v5383
    %v5416 = vunpack.c.l.b16 %v5384
    %v5417 = vunpack.c.l.b16 %v5385
    %v5418 = vpack.c.b16 %v5403, %v5402
    %v5419 = vpack.c.b16 %v5405, %v5404
    %v5420 = vpack.c.b16 %v5407, %v5406
    %v5421 = vpack.c.b16 %v5409, %v5408
    %v5422 = vpack.c.b16 %v5411, %v5410
    %v5423 = vpack.c.b16 %v5413, %v5412
    %v5424 = vpack.c.b16 %v5415, %v5414
    %v5425 = vpack.c.b16 %v5417, %v5416
    %5434 = vmatprep.subr.bf16.mxu0 0
    %5435 = vmatpush1.bf16.msra.mxu0 %v5418
    %5436 = vmatprep.subr.bf16.mxu0 0
    %5437 = vmatpush1.bf16.msra.mxu0 %v5419
    %5438 = vmatprep.subr.bf16.mxu0 0
    %5439 = vmatpush1.bf16.msra.mxu0 %v5420
    %5440 = vmatprep.subr.bf16.mxu0 0
    %5441 = vmatpush1.bf16.msra.mxu0 %v5421
    %5442 = vmatprep.subr.bf16.mxu0 0
    %5443 = vmatpush1.bf16.msra.mxu0 %v5422
    %5444 = vmatprep.subr.bf16.mxu0 0
    %5445 = vmatpush1.bf16.msra.mxu0 %v5423
    %5446 = vmatprep.subr.bf16.mxu0 0
    %5447 = vmatpush1.bf16.msra.mxu0 %v5424
    %5448 = vmatprep.subr.bf16.mxu0 0
    %5449 = vmatpush1.bf16.msra.mxu0 %v5425
    %5450 = vmatprep.subr.bf16.mxu0 0
    %5451 = vmatpush1.bf16.msra.mxu0 0
    %5452 = vmatprep.subr.bf16.mxu0 0
    %5453 = vmatpush1.bf16.msra.mxu0 0
    %5454 = vmatprep.subr.bf16.mxu0 0
    %5455 = vmatpush1.bf16.msra.mxu0 0
    %5456 = vmatprep.subr.bf16.mxu0 0
    %5457 = vmatpush1.bf16.msra.mxu0 0
    %5458 = vmatprep.subr.bf16.mxu0 0
    %5459 = vmatpush1.bf16.msra.mxu0 0
    %5460 = vmatprep.subr.bf16.mxu0 0
    %5461 = vmatpush1.bf16.msra.mxu0 0
    %5462 = vmatprep.subr.bf16.mxu0 0
    %5463 = vmatpush1.bf16.msra.mxu0 0
    %5464 = vmatprep.subr.bf16.mxu0 0
    %5465 = vmatpush1.bf16.msra.mxu0 0
    %5466 = vmatprep.mubr.bf16.mxu0 0
    %5467 = vmatmul.mubr.bf16.gmra.mrb[0].mxu0 %v5369
    %v5468 = vpop.f32.mrb[0].mxu0
    %v5469 = vadd.f32 %v117, %v5468
    %v5470 = vpop.f32.mrb[0].mxu0
    %v5471 = vpop.f32.mrb[0].mxu0
    %v5472 = vpop.f32.mrb[0].mxu0
    %5473 = vdwg.mxu0
    %s5474 = scalar_lea.vmem %s11, 8
    %5475 = vst [vmem:[%s5474] sm:$0xff] %v5469
    %5476 = vmax.xlane.f32.xlu0 %v5469
    %v5477 = vpop.xlane.xlu0 %5476
    %vm5478 = vcmp.ge.f32.partialorder %v5469, %v5477
    %v5479 = vsel %vm5478, %v119, 128
    %v5480 = vand.u32 %v5479, 65535
    %v5481 = vshra.s32 %v5479, 16
    %v5482 = vcvt.s32.f32 %v5480
    %v5483 = vcvt.s32.f32 %v5481
    %5484 = vmin.xlane.f32.xlu0 %v5483
    %v5485 = vpop.xlane.xlu0 %5484
    %vm5486 = vcmp.eq.f32.partialorder %v5483, %v5485
    %v5487 = vsel %vm5486, %v5482, inf
    %5488 = vmin.xlane.f32.xlu0 %v5487
    %v5489 = vpop.xlane.xlu0 %5488
    %v5490 = vcvt.f32.s32 %v5489
    %v5491 = vcvt.f32.s32 %v5485
    %v5492 = vshll.u32 %v5491, 16
    %v5493 = vadd.s32 %v5492, %v5490
    %vm5494 = vcmp.eq.s32.totalorder %v119, %v5493
    %v5495 = vsel %vm5494, 1, 0
    %v5496 = vcvt.s32.f32 %v5495
    %v5497 = vpack.c.bf16 %v5496, %v5496
    %s5498 = sld [smem:[#allocation5 + $0x1]]
    %p5499 = scmp.gt.s32.totalorder %s5498, 0
    %s5500 = scalar_lea.vmem %s2, 4
    %v5501 = vld [vmem:[%s5500] sm:$0xf]
    %s5502 = scalar_select %p5499, 1, 0
    %v5503 = vstv %s5502
    %vm5504 = vcmp.eq.s32.totalorder %v5503, 1
    %v5505 = vsel %vm5504, %v5501, %v5497
    %5506 = vst [vmem:[#allocation4] sm:$0xf] %v5505
    %v5507 = vld [vmem:[#allocation4] sm:$0xf]
    %v5508 = vld [vmem:[#allocation9] sm:$0xff]
    %v5509 = vld [vmem:[#allocation9 + $0x8] sm:$0xff]
    %v5510 = vld [vmem:[#allocation9 + $0x10] sm:$0xff]
    %v5511 = vld [vmem:[#allocation9 + $0x18] sm:$0xff]
    %v5512 = vld [vmem:[#allocation9 + $0x20] sm:$0xff]
    %v5513 = vld [vmem:[#allocation9 + $0x28] sm:$0xff]
    %v5514 = vld [vmem:[#allocation9 + $0x30] sm:$0xff]
    %v5515 = vld [vmem:[#allocation9 + $0x38] sm:$0xff]
    %v5516 = vld [vmem:[#allocation9 + $0x40] sm:$0xff]
    %v5517 = vld [vmem:[#allocation9 + $0x48] sm:$0xff]
    %v5518 = vld [vmem:[#allocation9 + $0x50] sm:$0xff]
    %v5519 = vld [vmem:[#allocation9 + $0x58] sm:$0xff]
    %v5520 = vld [vmem:[#allocation9 + $0x60] sm:$0xff]
    %v5521 = vld [vmem:[#allocation9 + $0x68] sm:$0xff]
    %v5522 = vld [vmem:[#allocation9 + $0x70] sm:$0xff]
    %v5523 = vld [vmem:[#allocation9 + $0x78] sm:$0xff]
    %v5524 = vld [vmem:[#allocation9 + $0x80] sm:$0xff]
    %v5525 = vld [vmem:[#allocation9 + $0x88] sm:$0xff]
    %v5526 = vld [vmem:[#allocation9 + $0x90] sm:$0xff]
    %v5527 = vld [vmem:[#allocation9 + $0x98] sm:$0xff]
    %v5528 = vld [vmem:[#allocation9 + $0xa0] sm:$0xff]
    %v5529 = vld [vmem:[#allocation9 + $0xa8] sm:$0xff]
    %v5530 = vld [vmem:[#allocation9 + $0xb0] sm:$0xff]
    %v5531 = vld [vmem:[#allocation9 + $0xb8] sm:$0xff]
    %v5532 = vld [vmem:[#allocation9 + $0xc0] sm:$0xff]
    %v5533 = vld [vmem:[#allocation9 + $0xc8] sm:$0xff]
    %v5534 = vld [vmem:[#allocation9 + $0xd0] sm:$0xff]
    %v5535 = vld [vmem:[#allocation9 + $0xd8] sm:$0xff]
    %v5536 = vld [vmem:[#allocation9 + $0xe0] sm:$0xff]
    %v5537 = vld [vmem:[#allocation9 + $0xe8] sm:$0xff]
    %v5538 = vld [vmem:[#allocation9 + $0xf0] sm:$0xff]
    %v5539 = vld [vmem:[#allocation9 + $0xf8] sm:$0xff]
    %v5540 = vld [vmem:[#allocation2] sm:$0xff]
    %v5541 = vpack.c.bf16 %v5540, %v5540
    %v5542 = vld [vmem:[#allocation11] sm:$0xff]
    %v5543 = vld [vmem:[#allocation11 + $0x8] sm:$0xff]
    %v5544 = vld [vmem:[#allocation11 + $0x10] sm:$0xff]
    %v5545 = vld [vmem:[#allocation11 + $0x18] sm:$0xff]
    %v5546 = vld [vmem:[#allocation11 + $0x20] sm:$0xff]
    %v5547 = vld [vmem:[#allocation11 + $0x28] sm:$0xff]
    %v5548 = vld [vmem:[#allocation11 + $0x30] sm:$0xff]
    %v5549 = vld [vmem:[#allocation11 + $0x38] sm:$0xff]
    %v5550 = vld [vmem:[#allocation11 + $0x40] sm:$0xff]
    %v5551 = vld [vmem:[#allocation11 + $0x48] sm:$0xff]
    %v5552 = vld [vmem:[#allocation11 + $0x50] sm:$0xff]
    %v5553 = vld [vmem:[#allocation11 + $0x58] sm:$0xff]
    %v5554 = vld [vmem:[#allocation11 + $0x60] sm:$0xff]
    %v5555 = vld [vmem:[#allocation11 + $0x68] sm:$0xff]
    %v5556 = vld [vmem:[#allocation11 + $0x70] sm:$0xff]
    %v5557 = vld [vmem:[#allocation11 + $0x78] sm:$0xff]
    %v5558 = vld [vmem:[#allocation11 + $0x80] sm:$0xff]
    %v5559 = vld [vmem:[#allocation11 + $0x88] sm:$0xff]
    %v5560 = vld [vmem:[#allocation11 + $0x90] sm:$0xff]
    %v5561 = vld [vmem:[#allocation11 + $0x98] sm:$0xff]
    %v5562 = vld [vmem:[#allocation11 + $0xa0] sm:$0xff]
    %v5563 = vld [vmem:[#allocation11 + $0xa8] sm:$0xff]
    %v5564 = vld [vmem:[#allocation11 + $0xb0] sm:$0xff]
    %v5565 = vld [vmem:[#allocation11 + $0xb8] sm:$0xff]
    %v5566 = vld [vmem:[#allocation11 + $0xc0] sm:$0xff]
    %v5567 = vld [vmem:[#allocation11 + $0xc8] sm:$0xff]
    %v5568 = vld [vmem:[#allocation11 + $0xd0] sm:$0xff]
    %v5569 = vld [vmem:[#allocation11 + $0xd8] sm:$0xff]
    %v5570 = vld [vmem:[#allocation11 + $0xe0] sm:$0xff]
    %v5571 = vld [vmem:[#allocation11 + $0xe8] sm:$0xff]
    %v5572 = vld [vmem:[#allocation11 + $0xf0] sm:$0xff]
    %v5573 = vld [vmem:[#allocation11 + $0xf8] sm:$0xff]
    %v5606 = vunpack.c.l.b16 %v5542
    %v5607 = vunpack.c.h.b16 %v5542
    %v5608 = vunpack.c.l.b16 %v5543
    %v5609 = vunpack.c.h.b16 %v5543
    %v5610 = vunpack.c.l.b16 %v5544
    %v5611 = vunpack.c.h.b16 %v5544
    %v5612 = vunpack.c.l.b16 %v5545
    %v5613 = vunpack.c.h.b16 %v5545
    %v5614 = vunpack.c.l.b16 %v5546
    %v5615 = vunpack.c.h.b16 %v5546
    %v5616 = vunpack.c.l.b16 %v5547
    %v5617 = vunpack.c.h.b16 %v5547
    %v5618 = vunpack.c.l.b16 %v5548
    %v5619 = vunpack.c.h.b16 %v5548
    %v5620 = vunpack.c.l.b16 %v5549
    %v5621 = vunpack.c.h.b16 %v5549
    %v5622 = vunpack.c.l.b16 %v5550
    %v5623 = vunpack.c.h.b16 %v5550
    %v5624 = vunpack.c.l.b16 %v5551
    %v5625 = vunpack.c.h.b16 %v5551
    %v5626 = vunpack.c.l.b16 %v5552
    %v5627 = vunpack.c.h.b16 %v5552
    %v5628 = vunpack.c.l.b16 %v5553
    %v5629 = vunpack.c.h.b16 %v5553
    %v5630 = vunpack.c.l.b16 %v5554
    %v5631 = vunpack.c.h.b16 %v5554
    %v5632 = vunpack.c.l.b16 %v5555
    %v5633 = vunpack.c.h.b16 %v5555
    %v5634 = vunpack.c.l.b16 %v5556
    %v5635 = vunpack.c.h.b16 %v5556
    %v5636 = vunpack.c.l.b16 %v5557
    %v5637 = vunpack.c.h.b16 %v5557
    %v5638 = vunpack.c.l.b16 %v5558
    %v5639 = vunpack.c.h.b16 %v5558
    %v5640 = vunpack.c.l.b16 %v5559
    %v5641 = vunpack.c.h.b16 %v5559
    %v5642 = vunpack.c.l.b16 %v5560
    %v5643 = vunpack.c.h.b16 %v5560
    %v5644 = vunpack.c.l.b16 %v5561
    %v5645 = vunpack.c.h.b16 %v5561
    %v5646 = vunpack.c.l.b16 %v5562
    %v5647 = vunpack.c.h.b16 %v5562
    %v5648 = vunpack.c.l.b16 %v5563
    %v5649 = vunpack.c.h.b16 %v5563
    %v5650 = vunpack.c.l.b16 %v5564
    %v5651 = vunpack.c.h.b16 %v5564
    %v5652 = vunpack.c.l.b16 %v5565
    %v5653 = vunpack.c.h.b16 %v5565
    %v5654 = vunpack.c.l.b16 %v5566
    %v5655 = vunpack.c.h.b16 %v5566
    %v5656 = vunpack.c.l.b16 %v5567
    %v5657 = vunpack.c.h.b16 %v5567
    %v5658 = vunpack.c.l.b16 %v5568
    %v5659 = vunpack.c.h.b16 %v5568
    %v5660 = vunpack.c.l.b16 %v5569
    %v5661 = vunpack.c.h.b16 %v5569
    %v5662 = vunpack.c.l.b16 %v5570
    %v5663 = vunpack.c.h.b16 %v5570
    %v5664 = vunpack.c.l.b16 %v5571
    %v5665 = vunpack.c.h.b16 %v5571
    %v5666 = vunpack.c.l.b16 %v5572
    %v5667 = vunpack.c.h.b16 %v5572
    %v5668 = vunpack.c.l.b16 %v5573
    %v5669 = vunpack.c.h.b16 %v5573
    %v5670 = vpack.c.b16 %v5610, %v5606
    %v5671 = vpack.c.b16 %v5611, %v5607
    %v5672 = vpack.c.b16 %v5612, %v5608
    %v5673 = vpack.c.b16 %v5613, %v5609
    %v5674 = vpack.c.b16 %v5618, %v5614
    %v5675 = vpack.c.b16 %v5619, %v5615
    %v5676 = vpack.c.b16 %v5620, %v5616
    %v5677 = vpack.c.b16 %v5621, %v5617
    %v5678 = vpack.c.b16 %v5626, %v5622
    %v5679 = vpack.c.b16 %v5627, %v5623
    %v5680 = vpack.c.b16 %v5628, %v5624
    %v5681 = vpack.c.b16 %v5629, %v5625
    %v5682 = vpack.c.b16 %v5634, %v5630
    %v5683 = vpack.c.b16 %v5635, %v5631
    %v5684 = vpack.c.b16 %v5636, %v5632
    %v5685 = vpack.c.b16 %v5637, %v5633
    %v5686 = vpack.c.b16 %v5642, %v5638
    %v5687 = vpack.c.b16 %v5643, %v5639
    %v5688 = vpack.c.b16 %v5644, %v5640
    %v5689 = vpack.c.b16 %v5645, %v5641
    %v5690 = vpack.c.b16 %v5650, %v5646
    %v5691 = vpack.c.b16 %v5651, %v5647
    %v5692 = vpack.c.b16 %v5652, %v5648
    %v5693 = vpack.c.b16 %v5653, %v5649
    %v5694 = vpack.c.b16 %v5658, %v5654
    %v5695 = vpack.c.b16 %v5659, %v5655
    %v5696 = vpack.c.b16 %v5660, %v5656
    %v5697 = vpack.c.b16 %v5661, %v5657
    %v5698 = vpack.c.b16 %v5666, %v5662
    %v5699 = vpack.c.b16 %v5667, %v5663
    %v5700 = vpack.c.b16 %v5668, %v5664
    %v5701 = vpack.c.b16 %v5669, %v5665
    %5734 = vmatprep.subr.bf16.mxu0 %v5671
    %5735 = vmatpush1.bf16.msra.mxu0 %v5670
    %5736 = vmatprep.subr.bf16.mxu0 %v5675
    %5737 = vmatpush1.bf16.msra.mxu0 %v5674
    %5738 = vmatprep.subr.bf16.mxu0 %v5679
    %5739 = vmatpush1.bf16.msra.mxu0 %v5678
    %5740 = vmatprep.subr.bf16.mxu0 %v5683
    %5741 = vmatpush1.bf16.msra.mxu0 %v5682
    %5742 = vmatprep.subr.bf16.mxu0 %v5687
    %5743 = vmatpush1.bf16.msra.mxu0 %v5686
    %5744 = vmatprep.subr.bf16.mxu0 %v5691
    %5745 = vmatpush1.bf16.msra.mxu0 %v5690
    %5746 = vmatprep.subr.bf16.mxu0 %v5695
    %5747 = vmatpush1.bf16.msra.mxu0 %v5694
    %5748 = vmatprep.subr.bf16.mxu0 %v5699
    %5749 = vmatpush1.bf16.msra.mxu0 %v5698
    %5750 = vmatprep.subr.bf16.mxu0 0
    %5751 = vmatpush1.bf16.msra.mxu0 0
    %5752 = vmatprep.subr.bf16.mxu0 0
    %5753 = vmatpush1.bf16.msra.mxu0 0
    %5754 = vmatprep.subr.bf16.mxu0 0
    %5755 = vmatpush1.bf16.msra.mxu0 0
    %5756 = vmatprep.subr.bf16.mxu0 0
    %5757 = vmatpush1.bf16.msra.mxu0 0
    %5758 = vmatprep.subr.bf16.mxu0 0
    %5759 = vmatpush1.bf16.msra.mxu0 0
    %5760 = vmatprep.subr.bf16.mxu0 0
    %5761 = vmatpush1.bf16.msra.mxu0 0
    %5762 = vmatprep.subr.bf16.mxu0 0
    %5763 = vmatpush1.bf16.msra.mxu0 0
    %5764 = vmatprep.subr.bf16.mxu0 0
    %5765 = vmatpush1.bf16.msra.mxu0 0
    %5766 = vmatprep.mubr.bf16.mxu0 0
    %5767 = vmatmul.mubr.bf16.gmra.mrb[0].mxu0 %v5541
    %v5768 = vpop.f32.mrb[0].mxu0
    %v5769 = vadd.f32 0.0, %v5768
    %v5770 = vpop.f32.mrb[0].mxu0
    %v5771 = vadd.f32 0.0, %v5770
    %v5772 = vpop.f32.mrb[0].mxu0
    %v5773 = vpop.f32.mrb[0].mxu0
    %5774 = vdwg.mxu0
    %5775 = vmatprep.subr.bf16.mxu0 %v5673
    %5776 = vmatpush1.bf16.msra.mxu0 %v5672
    %5777 = vmatprep.subr.bf16.mxu0 %v5677
    %5778 = vmatpush1.bf16.msra.mxu0 %v5676
    %5779 = vmatprep.subr.bf16.mxu0 %v5681
    %5780 = vmatpush1.bf16.msra.mxu0 %v5680
    %5781 = vmatprep.subr.bf16.mxu0 %v5685
    %5782 = vmatpush1.bf16.msra.mxu0 %v5684
    %5783 = vmatprep.subr.bf16.mxu0 %v5689
    %5784 = vmatpush1.bf16.msra.mxu0 %v5688
    %5785 = vmatprep.subr.bf16.mxu0 %v5693
    %5786 = vmatpush1.bf16.msra.mxu0 %v5692
    %5787 = vmatprep.subr.bf16.mxu0 %v5697
    %5788 = vmatpush1.bf16.msra.mxu0 %v5696
    %5789 = vmatprep.subr.bf16.mxu0 %v5701
    %5790 = vmatpush1.bf16.msra.mxu0 %v5700
    %5791 = vmatprep.subr.bf16.mxu0 0
    %5792 = vmatpush1.bf16.msra.mxu0 0
    %5793 = vmatprep.subr.bf16.mxu0 0
    %5794 = vmatpush1.bf16.msra.mxu0 0
    %5795 = vmatprep.subr.bf16.mxu0 0
    %5796 = vmatpush1.bf16.msra.mxu0 0
    %5797 = vmatprep.subr.bf16.mxu0 0
    %5798 = vmatpush1.bf16.msra.mxu0 0
    %5799 = vmatprep.subr.bf16.mxu0 0
    %5800 = vmatpush1.bf16.msra.mxu0 0
    %5801 = vmatprep.subr.bf16.mxu0 0
    %5802 = vmatpush1.bf16.msra.mxu0 0
    %5803 = vmatprep.subr.bf16.mxu0 0
    %5804 = vmatpush1.bf16.msra.mxu0 0
    %5805 = vmatprep.subr.bf16.mxu0 0
    %5806 = vmatpush1.bf16.msra.mxu0 0
    %5807 = vmatprep.mubr.bf16.mxu0 0
    %5808 = vmatmul.mubr.bf16.gmra.mrb[0].mxu0 %v5541
    %v5809 = vpop.f32.mrb[0].mxu0
    %v5810 = vadd.f32 0.0, %v5809
    %v5811 = vpop.f32.mrb[0].mxu0
    %v5812 = vadd.f32 0.0, %v5811
    %v5813 = vpop.f32.mrb[0].mxu0
    %v5814 = vpop.f32.mrb[0].mxu0
    %5815 = vdwg.mxu0
    %v5848 = vunpack.c.l.b16 %v5508
    %v5849 = vunpack.c.h.b16 %v5508
    %v5850 = vunpack.c.l.b16 %v5509
    %v5851 = vunpack.c.h.b16 %v5509
    %v5852 = vunpack.c.l.b16 %v5510
    %v5853 = vunpack.c.h.b16 %v5510
    %v5854 = vunpack.c.l.b16 %v5511
    %v5855 = vunpack.c.h.b16 %v5511
    %v5856 = vunpack.c.l.b16 %v5512
    %v5857 = vunpack.c.h.b16 %v5512
    %v5858 = vunpack.c.l.b16 %v5513
    %v5859 = vunpack.c.h.b16 %v5513
    %v5860 = vunpack.c.l.b16 %v5514
    %v5861 = vunpack.c.h.b16 %v5514
    %v5862 = vunpack.c.l.b16 %v5515
    %v5863 = vunpack.c.h.b16 %v5515
    %v5864 = vunpack.c.l.b16 %v5516
    %v5865 = vunpack.c.h.b16 %v5516
    %v5866 = vunpack.c.l.b16 %v5517
    %v5867 = vunpack.c.h.b16 %v5517
    %v5868 = vunpack.c.l.b16 %v5518
    %v5869 = vunpack.c.h.b16 %v5518
    %v5870 = vunpack.c.l.b16 %v5519
    %v5871 = vunpack.c.h.b16 %v5519
    %v5872 = vunpack.c.l.b16 %v5520
    %v5873 = vunpack.c.h.b16 %v5520
    %v5874 = vunpack.c.l.b16 %v5521
    %v5875 = vunpack.c.h.b16 %v5521
    %v5876 = vunpack.c.l.b16 %v5522
    %v5877 = vunpack.c.h.b16 %v5522
    %v5878 = vunpack.c.l.b16 %v5523
    %v5879 = vunpack.c.h.b16 %v5523
    %v5880 = vunpack.c.l.b16 %v5524
    %v5881 = vunpack.c.h.b16 %v5524
    %v5882 = vunpack.c.l.b16 %v5525
    %v5883 = vunpack.c.h.b16 %v5525
    %v5884 = vunpack.c.l.b16 %v5526
    %v5885 = vunpack.c.h.b16 %v5526
    %v5886 = vunpack.c.l.b16 %v5527
    %v5887 = vunpack.c.h.b16 %v5527
    %v5888 = vunpack.c.l.b16 %v5528
    %v5889 = vunpack.c.h.b16 %v5528
    %v5890 = vunpack.c.l.b16 %v5529
    %v5891 = vunpack.c.h.b16 %v5529
    %v5892 = vunpack.c.l.b16 %v5530
    %v5893 = vunpack.c.h.b16 %v5530
    %v5894 = vunpack.c.l.b16 %v5531
    %v5895 = vunpack.c.h.b16 %v5531
    %v5896 = vunpack.c.l.b16 %v5532
    %v5897 = vunpack.c.h.b16 %v5532
    %v5898 = vunpack.c.l.b16 %v5533
    %v5899 = vunpack.c.h.b16 %v5533
    %v5900 = vunpack.c.l.b16 %v5534
    %v5901 = vunpack.c.h.b16 %v5534
    %v5902 = vunpack.c.l.b16 %v5535
    %v5903 = vunpack.c.h.b16 %v5535
    %v5904 = vunpack.c.l.b16 %v5536
    %v5905 = vunpack.c.h.b16 %v5536
    %v5906 = vunpack.c.l.b16 %v5537
    %v5907 = vunpack.c.h.b16 %v5537
    %v5908 = vunpack.c.l.b16 %v5538
    %v5909 = vunpack.c.h.b16 %v5538
    %v5910 = vunpack.c.l.b16 %v5539
    %v5911 = vunpack.c.h.b16 %v5539
    %v5912 = vpack.c.b16 %v5852, %v5848
    %v5913 = vpack.c.b16 %v5853, %v5849
    %v5914 = vpack.c.b16 %v5854, %v5850
    %v5915 = vpack.c.b16 %v5855, %v5851
    %v5916 = vpack.c.b16 %v5860, %v5856
    %v5917 = vpack.c.b16 %v5861, %v5857
    %v5918 = vpack.c.b16 %v5862, %v5858
    %v5919 = vpack.c.b16 %v5863, %v5859
    %v5920 = vpack.c.b16 %v5868, %v5864
    %v5921 = vpack.c.b16 %v5869, %v5865
    %v5922 = vpack.c.b16 %v5870, %v5866
    %v5923 = vpack.c.b16 %v5871, %v5867
    %v5924 = vpack.c.b16 %v5876, %v5872
    %v5925 = vpack.c.b16 %v5877, %v5873
    %v5926 = vpack.c.b16 %v5878, %v5874
    %v5927 = vpack.c.b16 %v5879, %v5875
    %v5928 = vpack.c.b16 %v5884, %v5880
    %v5929 = vpack.c.b16 %v5885, %v5881
    %v5930 = vpack.c.b16 %v5886, %v5882
    %v5931 = vpack.c.b16 %v5887, %v5883
    %v5932 = vpack.c.b16 %v5892, %v5888
    %v5933 = vpack.c.b16 %v5893, %v5889
    %v5934 = vpack.c.b16 %v5894, %v5890
    %v5935 = vpack.c.b16 %v5895, %v5891
    %v5936 = vpack.c.b16 %v5900, %v5896
    %v5937 = vpack.c.b16 %v5901, %v5897
    %v5938 = vpack.c.b16 %v5902, %v5898
    %v5939 = vpack.c.b16 %v5903, %v5899
    %v5940 = vpack.c.b16 %v5908, %v5904
    %v5941 = vpack.c.b16 %v5909, %v5905
    %v5942 = vpack.c.b16 %v5910, %v5906
    %v5943 = vpack.c.b16 %v5911, %v5907
    %5976 = vmatprep.subr.bf16.mxu0 %v5913
    %5977 = vmatpush1.bf16.msra.mxu0 %v5912
    %5978 = vmatprep.subr.bf16.mxu0 %v5917
    %5979 = vmatpush1.bf16.msra.mxu0 %v5916
    %5980 = vmatprep.subr.bf16.mxu0 %v5921
    %5981 = vmatpush1.bf16.msra.mxu0 %v5920
    %5982 = vmatprep.subr.bf16.mxu0 %v5925
    %5983 = vmatpush1.bf16.msra.mxu0 %v5924
    %5984 = vmatprep.subr.bf16.mxu0 %v5929
    %5985 = vmatpush1.bf16.msra.mxu0 %v5928
    %5986 = vmatprep.subr.bf16.mxu0 %v5933
    %5987 = vmatpush1.bf16.msra.mxu0 %v5932
    %5988 = vmatprep.subr.bf16.mxu0 %v5937
    %5989 = vmatpush1.bf16.msra.mxu0 %v5936
    %5990 = vmatprep.subr.bf16.mxu0 %v5941
    %5991 = vmatpush1.bf16.msra.mxu0 %v5940
    %5992 = vmatprep.subr.bf16.mxu0 0
    %5993 = vmatpush1.bf16.msra.mxu0 0
    %5994 = vmatprep.subr.bf16.mxu0 0
    %5995 = vmatpush1.bf16.msra.mxu0 0
    %5996 = vmatprep.subr.bf16.mxu0 0
    %5997 = vmatpush1.bf16.msra.mxu0 0
    %5998 = vmatprep.subr.bf16.mxu0 0
    %5999 = vmatpush1.bf16.msra.mxu0 0
    %6000 = vmatprep.subr.bf16.mxu0 0
    %6001 = vmatpush1.bf16.msra.mxu0 0
    %6002 = vmatprep.subr.bf16.mxu0 0
    %6003 = vmatpush1.bf16.msra.mxu0 0
    %6004 = vmatprep.subr.bf16.mxu0 0
    %6005 = vmatpush1.bf16.msra.mxu0 0
    %6006 = vmatprep.subr.bf16.mxu0 0
    %6007 = vmatpush1.bf16.msra.mxu0 0
    %6008 = vmatprep.mubr.bf16.mxu0 0
    %6009 = vmatmul.mubr.bf16.gmra.mrb[0].mxu0 %v5507
    %v6010 = vpop.f32.mrb[0].mxu0
    %v6011 = vadd.f32 %v5769, %v6010
    %v6012 = vpop.f32.mrb[0].mxu0
    %v6013 = vadd.f32 %v5771, %v6012
    %v6014 = vpop.f32.mrb[0].mxu0
    %v6015 = vpop.f32.mrb[0].mxu0
    %6016 = vdwg.mxu0
    %6017 = vmatprep.subr.bf16.mxu0 %v5915
    %6018 = vmatpush1.bf16.msra.mxu0 %v5914
    %6019 = vmatprep.subr.bf16.mxu0 %v5919
    %6020 = vmatpush1.bf16.msra.mxu0 %v5918
    %6021 = vmatprep.subr.bf16.mxu0 %v5923
    %6022 = vmatpush1.bf16.msra.mxu0 %v5922
    %6023 = vmatprep.subr.bf16.mxu0 %v5927
    %6024 = vmatpush1.bf16.msra.mxu0 %v5926
    %6025 = vmatprep.subr.bf16.mxu0 %v5931
    %6026 = vmatpush1.bf16.msra.mxu0 %v5930
    %6027 = vmatprep.subr.bf16.mxu0 %v5935
    %6028 = vmatpush1.bf16.msra.mxu0 %v5934
    %6029 = vmatprep.subr.bf16.mxu0 %v5939
    %6030 = vmatpush1.bf16.msra.mxu0 %v5938
    %6031 = vmatprep.subr.bf16.mxu0 %v5943
    %6032 = vmatpush1.bf16.msra.mxu0 %v5942
    %6033 = vmatprep.subr.bf16.mxu0 0
    %6034 = vmatpush1.bf16.msra.mxu0 0
    %6035 = vmatprep.subr.bf16.mxu0 0
    %6036 = vmatpush1.bf16.msra.mxu0 0
    %6037 = vmatprep.subr.bf16.mxu0 0
    %6038 = vmatpush1.bf16.msra.mxu0 0
    %6039 = vmatprep.subr.bf16.mxu0 0
    %6040 = vmatpush1.bf16.msra.mxu0 0
    %6041 = vmatprep.subr.bf16.mxu0 0
    %6042 = vmatpush1.bf16.msra.mxu0 0
    %6043 = vmatprep.subr.bf16.mxu0 0
    %6044 = vmatpush1.bf16.msra.mxu0 0
    %6045 = vmatprep.subr.bf16.mxu0 0
    %6046 = vmatpush1.bf16.msra.mxu0 0
    %6047 = vmatprep.subr.bf16.mxu0 0
    %6048 = vmatpush1.bf16.msra.mxu0 0
    %6049 = vmatprep.mubr.bf16.mxu0 0
    %6050 = vmatmul.mubr.bf16.gmra.mrb[0].mxu0 %v5507
    %v6051 = vpop.f32.mrb[0].mxu0
    %v6052 = vadd.f32 %v5810, %v6051
    %v6053 = vpop.f32.mrb[0].mxu0
    %v6054 = vadd.f32 %v5812, %v6053
    %v6055 = vpop.f32.mrb[0].mxu0
    %v6056 = vpop.f32.mrb[0].mxu0
    %6057 = vdwg.mxu0
    %v6058 = vadd.f32 %v6011, %v113
    %v6059 = vadd.f32 %v6013, %v114
    %v6060 = vadd.f32 %v6052, %v115
    %v6061 = vadd.f32 %v6054, %v116
    %v6062 = vxor.u32 %v6058, 2147483648
    %v6063 = vmul.f32 %v6062, 1.442695
    %v6064 = vpow.pop %v6063
    %v6065 = vadd.f32 %v6064, 1.0
    %v6066 = vrcp.pop %v6065
    %v6067 = vmul.f32 1.0, %v6066
    %v6068 = vxor.u32 %v6059, 2147483648
    %v6069 = vmul.f32 %v6068, 1.442695
    %v6070 = vpow.pop %v6069
    %v6071 = vadd.f32 %v6070, 1.0
    %v6072 = vrcp.pop %v6071
    %v6073 = vmul.f32 1.0, %v6072
    %v6074 = vtanh.pop %v6060
    %v6075 = vxor.u32 %v6061, 2147483648
    %v6076 = vmul.f32 %v6075, 1.442695
    %v6077 = vpow.pop %v6076
    %v6078 = vadd.f32 %v6077, 1.0
    %v6079 = vrcp.pop %v6078
    %v6080 = vmul.f32 1.0, %v6079
    %v6081 = vld [vmem:[#allocation3] sm:$0xff]
    %v6082 = vmul.f32 %v6073, %v6081
    %v6083 = vmul.f32 %v6067, %v6074
    %v6084 = vadd.f32 %v6082, %v6083
    %6085 = vst [vmem:[#allocation3] sm:$0xff] %v6084
    %v6086 = vtanh.pop %v6084
    %v6087 = vmul.f32 %v6080, %v6086
    %6088 = vst [vmem:[#allocation2] sm:$0xff] %v6087
    %v6089 = vld [vmem:[#allocation2] sm:$0xff]
    %v6090 = vpack.c.bf16 %v6089, %v6089
    %v6091 = vld [vmem:[#allocation12] sm:$0xf]
    %v6092 = vld [vmem:[#allocation12 + $0x4] sm:$0xf]
    %v6093 = vld [vmem:[#allocation12 + $0x8] sm:$0xf]
    %v6094 = vld [vmem:[#allocation12 + $0xc] sm:$0xf]
    %v6095 = vld [vmem:[#allocation12 + $0x10] sm:$0xf]
    %v6096 = vld [vmem:[#allocation12 + $0x14] sm:$0xf]
    %v6097 = vld [vmem:[#allocation12 + $0x18] sm:$0xf]
    %v6098 = vld [vmem:[#allocation12 + $0x1c] sm:$0xf]
    %v6099 = vld [vmem:[#allocation12 + $0x20] sm:$0xf]
    %v6100 = vld [vmem:[#allocation12 + $0x24] sm:$0xf]
    %v6101 = vld [vmem:[#allocation12 + $0x28] sm:$0xf]
    %v6102 = vld [vmem:[#allocation12 + $0x2c] sm:$0xf]
    %v6103 = vld [vmem:[#allocation12 + $0x30] sm:$0xf]
    %v6104 = vld [vmem:[#allocation12 + $0x34] sm:$0xf]
    %v6105 = vld [vmem:[#allocation12 + $0x38] sm:$0xf]
    %v6106 = vld [vmem:[#allocation12 + $0x3c] sm:$0xf]
    %v6123 = vunpack.c.l.b16 %v6091
    %v6124 = vunpack.c.l.b16 %v6092
    %v6125 = vunpack.c.l.b16 %v6093
    %v6126 = vunpack.c.l.b16 %v6094
    %v6127 = vunpack.c.l.b16 %v6095
    %v6128 = vunpack.c.l.b16 %v6096
    %v6129 = vunpack.c.l.b16 %v6097
    %v6130 = vunpack.c.l.b16 %v6098
    %v6131 = vunpack.c.l.b16 %v6099
    %v6132 = vunpack.c.l.b16 %v6100
    %v6133 = vunpack.c.l.b16 %v6101
    %v6134 = vunpack.c.l.b16 %v6102
    %v6135 = vunpack.c.l.b16 %v6103
    %v6136 = vunpack.c.l.b16 %v6104
    %v6137 = vunpack.c.l.b16 %v6105
    %v6138 = vunpack.c.l.b16 %v6106
    %v6139 = vpack.c.b16 %v6124, %v6123
    %v6140 = vpack.c.b16 %v6126, %v6125
    %v6141 = vpack.c.b16 %v6128, %v6127
    %v6142 = vpack.c.b16 %v6130, %v6129
    %v6143 = vpack.c.b16 %v6132, %v6131
    %v6144 = vpack.c.b16 %v6134, %v6133
    %v6145 = vpack.c.b16 %v6136, %v6135
    %v6146 = vpack.c.b16 %v6138, %v6137
    %6155 = vmatprep.subr.bf16.mxu0 0
    %6156 = vmatpush1.bf16.msra.mxu0 %v6139
    %6157 = vmatprep.subr.bf16.mxu0 0
    %6158 = vmatpush1.bf16.msra.mxu0 %v6140
    %6159 = vmatprep.subr.bf16.mxu0 0
    %6160 = vmatpush1.bf16.msra.mxu0 %v6141
    %6161 = vmatprep.subr.bf16.mxu0 0
    %6162 = vmatpush1.bf16.msra.mxu0 %v6142
    %6163 = vmatprep.subr.bf16.mxu0 0
    %6164 = vmatpush1.bf16.msra.mxu0 %v6143
    %6165 = vmatprep.subr.bf16.mxu0 0
    %6166 = vmatpush1.bf16.msra.mxu0 %v6144
    %6167 = vmatprep.subr.bf16.mxu0 0
    %6168 = vmatpush1.bf16.msra.mxu0 %v6145
    %6169 = vmatprep.subr.bf16.mxu0 0
    %6170 = vmatpush1.bf16.msra.mxu0 %v6146
    %6171 = vmatprep.subr.bf16.mxu0 0
    %6172 = vmatpush1.bf16.msra.mxu0 0
    %6173 = vmatprep.subr.bf16.mxu0 0
    %6174 = vmatpush1.bf16.msra.mxu0 0
    %6175 = vmatprep.subr.bf16.mxu0 0
    %6176 = vmatpush1.bf16.msra.mxu0 0
    %6177 = vmatprep.subr.bf16.mxu0 0
    %6178 = vmatpush1.bf16.msra.mxu0 0
    %6179 = vmatprep.subr.bf16.mxu0 0
    %6180 = vmatpush1.bf16.msra.mxu0 0
    %6181 = vmatprep.subr.bf16.mxu0 0
    %6182 = vmatpush1.bf16.msra.mxu0 0
    %6183 = vmatprep.subr.bf16.mxu0 0
    %6184 = vmatpush1.bf16.msra.mxu0 0
    %6185 = vmatprep.subr.bf16.mxu0 0
    %6186 = vmatpush1.bf16.msra.mxu0 0
    %6187 = vmatprep.mubr.bf16.mxu0 0
    %6188 = vmatmul.mubr.bf16.gmra.mrb[0].mxu0 %v6090
    %v6189 = vpop.f32.mrb[0].mxu0
    %v6190 = vadd.f32 %v117, %v6189
    %v6191 = vpop.f32.mrb[0].mxu0
    %v6192 = vpop.f32.mrb[0].mxu0
    %v6193 = vpop.f32.mrb[0].mxu0
    %6194 = vdwg.mxu0
    %s6195 = scalar_lea.vmem %s11, 16
    %6196 = vst [vmem:[%s6195] sm:$0xff] %v6190
    %6197 = vmax.xlane.f32.xlu0 %v6190
    %v6198 = vpop.xlane.xlu0 %6197
    %vm6199 = vcmp.ge.f32.partialorder %v6190, %v6198
    %v6200 = vsel %vm6199, %v119, 128
    %v6201 = vand.u32 %v6200, 65535
    %v6202 = vshra.s32 %v6200, 16
    %v6203 = vcvt.s32.f32 %v6201
    %v6204 = vcvt.s32.f32 %v6202
    %6205 = vmin.xlane.f32.xlu0 %v6204
    %v6206 = vpop.xlane.xlu0 %6205
    %vm6207 = vcmp.eq.f32.partialorder %v6204, %v6206
    %v6208 = vsel %vm6207, %v6203, inf
    %6209 = vmin.xlane.f32.xlu0 %v6208
    %v6210 = vpop.xlane.xlu0 %6209
    %v6211 = vcvt.f32.s32 %v6210
    %v6212 = vcvt.f32.s32 %v6206
    %v6213 = vshll.u32 %v6212, 16
    %v6214 = vadd.s32 %v6213, %v6211
    %vm6215 = vcmp.eq.s32.totalorder %v119, %v6214
    %v6216 = vsel %vm6215, 1, 0
    %v6217 = vcvt.s32.f32 %v6216
    %v6218 = vpack.c.bf16 %v6217, %v6217
    %s6219 = sld [smem:[#allocation5 + $0x2]]
    %p6220 = scmp.gt.s32.totalorder %s6219, 0
    %s6221 = scalar_lea.vmem %s2, 8
    %v6222 = vld [vmem:[%s6221] sm:$0xf]
    %s6223 = scalar_select %p6220, 1, 0
    %v6224 = vstv %s6223
    %vm6225 = vcmp.eq.s32.totalorder %v6224, 1
    %v6226 = vsel %vm6225, %v6222, %v6218
    %6227 = vst [vmem:[#allocation4] sm:$0xf] %v6226
    %v6228 = vld [vmem:[#allocation4] sm:$0xf]
    %v6229 = vld [vmem:[#allocation9] sm:$0xff]
    %v6230 = vld [vmem:[#allocation9 + $0x8] sm:$0xff]
    %v6231 = vld [vmem:[#allocation9 + $0x10] sm:$0xff]
    %v6232 = vld [vmem:[#allocation9 + $0x18] sm:$0xff]
    %v6233 = vld [vmem:[#allocation9 + $0x20] sm:$0xff]
    %v6234 = vld [vmem:[#allocation9 + $0x28] sm:$0xff]
    %v6235 = vld [vmem:[#allocation9 + $0x30] sm:$0xff]
    %v6236 = vld [vmem:[#allocation9 + $0x38] sm:$0xff]
    %v6237 = vld [vmem:[#allocation9 + $0x40] sm:$0xff]
    %v6238 = vld [vmem:[#allocation9 + $0x48] sm:$0xff]
    %v6239 = vld [vmem:[#allocation9 + $0x50] sm:$0xff]
    %v6240 = vld [vmem:[#allocation9 + $0x58] sm:$0xff]
    %v6241 = vld [vmem:[#allocation9 + $0x60] sm:$0xff]
    %v6242 = vld [vmem:[#allocation9 + $0x68] sm:$0xff]
    %v6243 = vld [vmem:[#allocation9 + $0x70] sm:$0xff]
    %v6244 = vld [vmem:[#allocation9 + $0x78] sm:$0xff]
    %v6245 = vld [vmem:[#allocation9 + $0x80] sm:$0xff]
    %v6246 = vld [vmem:[#allocation9 + $0x88] sm:$0xff]
    %v6247 = vld [vmem:[#allocation9 + $0x90] sm:$0xff]
    %v6248 = vld [vmem:[#allocation9 + $0x98] sm:$0xff]
    %v6249 = vld [vmem:[#allocation9 + $0xa0] sm:$0xff]
    %v6250 = vld [vmem:[#allocation9 + $0xa8] sm:$0xff]
    %v6251 = vld [vmem:[#allocation9 + $0xb0] sm:$0xff]
    %v6252 = vld [vmem:[#allocation9 + $0xb8] sm:$0xff]
    %v6253 = vld [vmem:[#allocation9 + $0xc0] sm:$0xff]
    %v6254 = vld [vmem:[#allocation9 + $0xc8] sm:$0xff]
    %v6255 = vld [vmem:[#allocation9 + $0xd0] sm:$0xff]
    %v6256 = vld [vmem:[#allocation9 + $0xd8] sm:$0xff]
    %v6257 = vld [vmem:[#allocation9 + $0xe0] sm:$0xff]
    %v6258 = vld [vmem:[#allocation9 + $0xe8] sm:$0xff]
    %v6259 = vld [vmem:[#allocation9 + $0xf0] sm:$0xff]
    %v6260 = vld [vmem:[#allocation9 + $0xf8] sm:$0xff]
    %v6261 = vld [vmem:[#allocation2] sm:$0xff]
    %v6262 = vpack.c.bf16 %v6261, %v6261
    %v6263 = vld [vmem:[#allocation11] sm:$0xff]
    %v6264 = vld [vmem:[#allocation11 + $0x8] sm:$0xff]
    %v6265 = vld [vmem:[#allocation11 + $0x10] sm:$0xff]
    %v6266 = vld [vmem:[#allocation11 + $0x18] sm:$0xff]
    %v6267 = vld [vmem:[#allocation11 + $0x20] sm:$0xff]
    %v6268 = vld [vmem:[#allocation11 + $0x28] sm:$0xff]
    %v6269 = vld [vmem:[#allocation11 + $0x30] sm:$0xff]
    %v6270 = vld [vmem:[#allocation11 + $0x38] sm:$0xff]
    %v6271 = vld [vmem:[#allocation11 + $0x40] sm:$0xff]
    %v6272 = vld [vmem:[#allocation11 + $0x48] sm:$0xff]
    %v6273 = vld [vmem:[#allocation11 + $0x50] sm:$0xff]
    %v6274 = vld [vmem:[#allocation11 + $0x58] sm:$0xff]
    %v6275 = vld [vmem:[#allocation11 + $0x60] sm:$0xff]
    %v6276 = vld [vmem:[#allocation11 + $0x68] sm:$0xff]
    %v6277 = vld [vmem:[#allocation11 + $0x70] sm:$0xff]
    %v6278 = vld [vmem:[#allocation11 + $0x78] sm:$0xff]
    %v6279 = vld [vmem:[#allocation11 + $0x80] sm:$0xff]
    %v6280 = vld [vmem:[#allocation11 + $0x88] sm:$0xff]
    %v6281 = vld [vmem:[#allocation11 + $0x90] sm:$0xff]
    %v6282 = vld [vmem:[#allocation11 + $0x98] sm:$0xff]
    %v6283 = vld [vmem:[#allocation11 + $0xa0] sm:$0xff]
    %v6284 = vld [vmem:[#allocation11 + $0xa8] sm:$0xff]
    %v6285 = vld [vmem:[#allocation11 + $0xb0] sm:$0xff]
    %v6286 = vld [vmem:[#allocation11 + $0xb8] sm:$0xff]
    %v6287 = vld [vmem:[#allocation11 + $0xc0] sm:$0xff]
    %v6288 = vld [vmem:[#allocation11 + $0xc8] sm:$0xff]
    %v6289 = vld [vmem:[#allocation11 + $0xd0] sm:$0xff]
    %v6290 = vld [vmem:[#allocation11 + $0xd8] sm:$0xff]
    %v6291 = vld [vmem:[#allocation11 + $0xe0] sm:$0xff]
    %v6292 = vld [vmem:[#allocation11 + $0xe8] sm:$0xff]
    %v6293 = vld [vmem:[#allocation11 + $0xf0] sm:$0xff]
    %v6294 = vld [vmem:[#allocation11 + $0xf8] sm:$0xff]
    %v6327 = vunpack.c.l.b16 %v6263
    %v6328 = vunpack.c.h.b16 %v6263
    %v6329 = vunpack.c.l.b16 %v6264
    %v6330 = vunpack.c.h.b16 %v6264
    %v6331 = vunpack.c.l.b16 %v6265
    %v6332 = vunpack.c.h.b16 %v6265
    %v6333 = vunpack.c.l.b16 %v6266
    %v6334 = vunpack.c.h.b16 %v6266
    %v6335 = vunpack.c.l.b16 %v6267
    %v6336 = vunpack.c.h.b16 %v6267
    %v6337 = vunpack.c.l.b16 %v6268
    %v6338 = vunpack.c.h.b16 %v6268
    %v6339 = vunpack.c.l.b16 %v6269
    %v6340 = vunpack.c.h.b16 %v6269
    %v6341 = vunpack.c.l.b16 %v6270
    %v6342 = vunpack.c.h.b16 %v6270
    %v6343 = vunpack.c.l.b16 %v6271
    %v6344 = vunpack.c.h.b16 %v6271
    %v6345 = vunpack.c.l.b16 %v6272
    %v6346 = vunpack.c.h.b16 %v6272
    %v6347 = vunpack.c.l.b16 %v6273
    %v6348 = vunpack.c.h.b16 %v6273
    %v6349 = vunpack.c.l.b16 %v6274
    %v6350 = vunpack.c.h.b16 %v6274
    %v6351 = vunpack.c.l.b16 %v6275
    %v6352 = vunpack.c.h.b16 %v6275
    %v6353 = vunpack.c.l.b16 %v6276
    %v6354 = vunpack.c.h.b16 %v6276
    %v6355 = vunpack.c.l.b16 %v6277
    %v6356 = vunpack.c.h.b16 %v6277
    %v6357 = vunpack.c.l.b16 %v6278
    %v6358 = vunpack.c.h.b16 %v6278
    %v6359 = vunpack.c.l.b16 %v6279
    %v6360 = vunpack.c.h.b16 %v6279
    %v6361 = vunpack.c.l.b16 %v6280
    %v6362 = vunpack.c.h.b16 %v6280
    %v6363 = vunpack.c.l.b16 %v6281
    %v6364 = vunpack.c.h.b16 %v6281
    %v6365 = vunpack.c.l.b16 %v6282
    %v6366 = vunpack.c.h.b16 %v6282
    %v6367 = vunpack.c.l.b16 %v6283
    %v6368 = vunpack.c.h.b16 %v6283
    %v6369 = vunpack.c.l.b16 %v6284
    %v6370 = vunpack.c.h.b16 %v6284
    %v6371 = vunpack.c.l.b16 %v6285
    %v6372 = vunpack.c.h.b16 %v6285
    %v6373 = vunpack.c.l.b16 %v6286
    %v6374 = vunpack.c.h.b16 %v6286
    %v6375 = vunpack.c.l.b16 %v6287
    %v6376 = vunpack.c.h.b16 %v6287
    %v6377 = vunpack.c.l.b16 %v6288
    %v6378 = vunpack.c.h.b16 %v6288
    %v6379 = vunpack.c.l.b16 %v6289
    %v6380 = vunpack.c.h.b16 %v6289
    %v6381 = vunpack.c.l.b16 %v6290
    %v6382 = vunpack.c.h.b16 %v6290
    %v6383 = vunpack.c.l.b16 %v6291
    %v6384 = vunpack.c.h.b16 %v6291
    %v6385 = vunpack.c.l.b16 %v6292
    %v6386 = vunpack.c.h.b16 %v6292
    %v6387 = vunpack.c.l.b16 %v6293
    %v6388 = vunpack.c.h.b16 %v6293
    %v6389 = vunpack.c.l.b16 %v6294
    %v6390 = vunpack.c.h.b16 %v6294
    %v6391 = vpack.c.b16 %v6331, %v6327
    %v6392 = vpack.c.b16 %v6332, %v6328
    %v6393 = vpack.c.b16 %v6333, %v6329
    %v6394 = vpack.c.b16 %v6334, %v6330
    %v6395 = vpack.c.b16 %v6339, %v6335
    %v6396 = vpack.c.b16 %v6340, %v6336
    %v6397 = vpack.c.b16 %v6341, %v6337
    %v6398 = vpack.c.b16 %v6342, %v6338
    %v6399 = vpack.c.b16 %v6347, %v6343
    %v6400 = vpack.c.b16 %v6348, %v6344
    %v6401 = vpack.c.b16 %v6349, %v6345
    %v6402 = vpack.c.b16 %v6350, %v6346
    %v6403 = vpack.c.b16 %v6355, %v6351
    %v6404 = vpack.c.b16 %v6356, %v6352
    %v6405 = vpack.c.b16 %v6357, %v6353
    %v6406 = vpack.c.b16 %v6358, %v6354
    %v6407 = vpack.c.b16 %v6363, %v6359
    %v6408 = vpack.c.b16 %v6364, %v6360
    %v6409 = vpack.c.b16 %v6365, %v6361
    %v6410 = vpack.c.b16 %v6366, %v6362
    %v6411 = vpack.c.b16 %v6371, %v6367
    %v6412 = vpack.c.b16 %v6372, %v6368
    %v6413 = vpack.c.b16 %v6373, %v6369
    %v6414 = vpack.c.b16 %v6374, %v6370
    %v6415 = vpack.c.b16 %v6379, %v6375
    %v6416 = vpack.c.b16 %v6380, %v6376
    %v6417 = vpack.c.b16 %v6381, %v6377
    %v6418 = vpack.c.b16 %v6382, %v6378
    %v6419 = vpack.c.b16 %v6387, %v6383
    %v6420 = vpack.c.b16 %v6388, %v6384
    %v6421 = vpack.c.b16 %v6389, %v6385
    %v6422 = vpack.c.b16 %v6390, %v6386
    %6455 = vmatprep.subr.bf16.mxu0 %v6392
    %6456 = vmatpush1.bf16.msra.mxu0 %v6391
    %6457 = vmatprep.subr.bf16.mxu0 %v6396
    %6458 = vmatpush1.bf16.msra.mxu0 %v6395
    %6459 = vmatprep.subr.bf16.mxu0 %v6400
    %6460 = vmatpush1.bf16.msra.mxu0 %v6399
    %6461 = vmatprep.subr.bf16.mxu0 %v6404
    %6462 = vmatpush1.bf16.msra.mxu0 %v6403
    %6463 = vmatprep.subr.bf16.mxu0 %v6408
    %6464 = vmatpush1.bf16.msra.mxu0 %v6407
    %6465 = vmatprep.subr.bf16.mxu0 %v6412
    %6466 = vmatpush1.bf16.msra.mxu0 %v6411
    %6467 = vmatprep.subr.bf16.mxu0 %v6416
    %6468 = vmatpush1.bf16.msra.mxu0 %v6415
    %6469 = vmatprep.subr.bf16.mxu0 %v6420
    %6470 = vmatpush1.bf16.msra.mxu0 %v6419
    %6471 = vmatprep.subr.bf16.mxu0 0
    %6472 = vmatpush1.bf16.msra.mxu0 0
    %6473 = vmatprep.subr.bf16.mxu0 0
    %6474 = vmatpush1.bf16.msra.mxu0 0
    %6475 = vmatprep.subr.bf16.mxu0 0
    %6476 = vmatpush1.bf16.msra.mxu0 0
    %6477 = vmatprep.subr.bf16.mxu0 0
    %6478 = vmatpush1.bf16.msra.mxu0 0
    %6479 = vmatprep.subr.bf16.mxu0 0
    %6480 = vmatpush1.bf16.msra.mxu0 0
    %6481 = vmatprep.subr.bf16.mxu0 0
    %6482 = vmatpush1.bf16.msra.mxu0 0
    %6483 = vmatprep.subr.bf16.mxu0 0
    %6484 = vmatpush1.bf16.msra.mxu0 0
    %6485 = vmatprep.subr.bf16.mxu0 0
    %6486 = vmatpush1.bf16.msra.mxu0 0
    %6487 = vmatprep.mubr.bf16.mxu0 0
    %6488 = vmatmul.mubr.bf16.gmra.mrb[0].mxu0 %v6262
    %v6489 = vpop.f32.mrb[0].mxu0
    %v6490 = vadd.f32 0.0, %v6489
    %v6491 = vpop.f32.mrb[0].mxu0
    %v6492 = vadd.f32 0.0, %v6491
    %v6493 = vpop.f32.mrb[0].mxu0
    %v6494 = vpop.f32.mrb[0].mxu0
    %6495 = vdwg.mxu0
    %6496 = vmatprep.subr.bf16.mxu0 %v6394
    %6497 = vmatpush1.bf16.msra.mxu0 %v6393
    %6498 = vmatprep.subr.bf16.mxu0 %v6398
    %6499 = vmatpush1.bf16.msra.mxu0 %v6397
    %6500 = vmatprep.subr.bf16.mxu0 %v6402
    %6501 = vmatpush1.bf16.msra.mxu0 %v6401
    %6502 = vmatprep.subr.bf16.mxu0 %v6406
    %6503 = vmatpush1.bf16.msra.mxu0 %v6405
    %6504 = vmatprep.subr.bf16.mxu0 %v6410
    %6505 = vmatpush1.bf16.msra.mxu0 %v6409
    %6506 = vmatprep.subr.bf16.mxu0 %v6414
    %6507 = vmatpush1.bf16.msra.mxu0 %v6413
    %6508 = vmatprep.subr.bf16.mxu0 %v6418
    %6509 = vmatpush1.bf16.msra.mxu0 %v6417
    %6510 = vmatprep.subr.bf16.mxu0 %v6422
    %6511 = vmatpush1.bf16.msra.mxu0 %v6421
    %6512 = vmatprep.subr.bf16.mxu0 0
    %6513 = vmatpush1.bf16.msra.mxu0 0
    %6514 = vmatprep.subr.bf16.mxu0 0
    %6515 = vmatpush1.bf16.msra.mxu0 0
    %6516 = vmatprep.subr.bf16.mxu0 0
    %6517 = vmatpush1.bf16.msra.mxu0 0
    %6518 = vmatprep.subr.bf16.mxu0 0
    %6519 = vmatpush1.bf16.msra.mxu0 0
    %6520 = vmatprep.subr.bf16.mxu0 0
    %6521 = vmatpush1.bf16.msra.mxu0 0
    %6522 = vmatprep.subr.bf16.mxu0 0
    %6523 = vmatpush1.bf16.msra.mxu0 0
    %6524 = vmatprep.subr.bf16.mxu0 0
    %6525 = vmatpush1.bf16.msra.mxu0 0
    %6526 = vmatprep.subr.bf16.mxu0 0
    %6527 = vmatpush1.bf16.msra.mxu0 0
    %6528 = vmatprep.mubr.bf16.mxu0 0
    %6529 = vmatmul.mubr.bf16.gmra.mrb[0].mxu0 %v6262
    %v6530 = vpop.f32.mrb[0].mxu0
    %v6531 = vadd.f32 0.0, %v6530
    %v6532 = vpop.f32.mrb[0].mxu0
    %v6533 = vadd.f32 0.0, %v6532
    %v6534 = vpop.f32.mrb[0].mxu0
    %v6535 = vpop.f32.mrb[0].mxu0
    %6536 = vdwg.mxu0
    %v6569 = vunpack.c.l.b16 %v6229
    %v6570 = vunpack.c.h.b16 %v6229
    %v6571 = vunpack.c.l.b16 %v6230
    %v6572 = vunpack.c.h.b16 %v6230
    %v6573 = vunpack.c.l.b16 %v6231
    %v6574 = vunpack.c.h.b16 %v6231
    %v6575 = vunpack.c.l.b16 %v6232
    %v6576 = vunpack.c.h.b16 %v6232
    %v6577 = vunpack.c.l.b16 %v6233
    %v6578 = vunpack.c.h.b16 %v6233
    %v6579 = vunpack.c.l.b16 %v6234
    %v6580 = vunpack.c.h.b16 %v6234
    %v6581 = vunpack.c.l.b16 %v6235
    %v6582 = vunpack.c.h.b16 %v6235
    %v6583 = vunpack.c.l.b16 %v6236
    %v6584 = vunpack.c.h.b16 %v6236
    %v6585 = vunpack.c.l.b16 %v6237
    %v6586 = vunpack.c.h.b16 %v6237
    %v6587 = vunpack.c.l.b16 %v6238
    %v6588 = vunpack.c.h.b16 %v6238
    %v6589 = vunpack.c.l.b16 %v6239
    %v6590 = vunpack.c.h.b16 %v6239
    %v6591 = vunpack.c.l.b16 %v6240
    %v6592 = vunpack.c.h.b16 %v6240
    %v6593 = vunpack.c.l.b16 %v6241
    %v6594 = vunpack.c.h.b16 %v6241
    %v6595 = vunpack.c.l.b16 %v6242
    %v6596 = vunpack.c.h.b16 %v6242
    %v6597 = vunpack.c.l.b16 %v6243
    %v6598 = vunpack.c.h.b16 %v6243
    %v6599 = vunpack.c.l.b16 %v6244
    %v6600 = vunpack.c.h.b16 %v6244
    %v6601 = vunpack.c.l.b16 %v6245
    %v6602 = vunpack.c.h.b16 %v6245
    %v6603 = vunpack.c.l.b16 %v6246
    %v6604 = vunpack.c.h.b16 %v6246
    %v6605 = vunpack.c.l.b16 %v6247
    %v6606 = vunpack.c.h.b16 %v6247
    %v6607 = vunpack.c.l.b16 %v6248
    %v6608 = vunpack.c.h.b16 %v6248
    %v6609 = vunpack.c.l.b16 %v6249
    %v6610 = vunpack.c.h.b16 %v6249
    %v6611 = vunpack.c.l.b16 %v6250
    %v6612 = vunpack.c.h.b16 %v6250
    %v6613 = vunpack.c.l.b16 %v6251
    %v6614 = vunpack.c.h.b16 %v6251
    %v6615 = vunpack.c.l.b16 %v6252
    %v6616 = vunpack.c.h.b16 %v6252
    %v6617 = vunpack.c.l.b16 %v6253
    %v6618 = vunpack.c.h.b16 %v6253
    %v6619 = vunpack.c.l.b16 %v6254
    %v6620 = vunpack.c.h.b16 %v6254
    %v6621 = vunpack.c.l.b16 %v6255
    %v6622 = vunpack.c.h.b16 %v6255
    %v6623 = vunpack.c.l.b16 %v6256
    %v6624 = vunpack.c.h.b16 %v6256
    %v6625 = vunpack.c.l.b16 %v6257
    %v6626 = vunpack.c.h.b16 %v6257
    %v6627 = vunpack.c.l.b16 %v6258
    %v6628 = vunpack.c.h.b16 %v6258
    %v6629 = vunpack.c.l.b16 %v6259
    %v6630 = vunpack.c.h.b16 %v6259
    %v6631 = vunpack.c.l.b16 %v6260
    %v6632 = vunpack.c.h.b16 %v6260
    %v6633 = vpack.c.b16 %v6573, %v6569
    %v6634 = vpack.c.b16 %v6574, %v6570
    %v6635 = vpack.c.b16 %v6575, %v6571
    %v6636 = vpack.c.b16 %v6576, %v6572
    %v6637 = vpack.c.b16 %v6581, %v6577
    %v6638 = vpack.c.b16 %v6582, %v6578
    %v6639 = vpack.c.b16 %v6583, %v6579
    %v6640 = vpack.c.b16 %v6584, %v6580
    %v6641 = vpack.c.b16 %v6589, %v6585
    %v6642 = vpack.c.b16 %v6590, %v6586
    %v6643 = vpack.c.b16 %v6591, %v6587
    %v6644 = vpack.c.b16 %v6592, %v6588
    %v6645 = vpack.c.b16 %v6597, %v6593
    %v6646 = vpack.c.b16 %v6598, %v6594
    %v6647 = vpack.c.b16 %v6599, %v6595
    %v6648 = vpack.c.b16 %v6600, %v6596
    %v6649 = vpack.c.b16 %v6605, %v6601
    %v6650 = vpack.c.b16 %v6606, %v6602
    %v6651 = vpack.c.b16 %v6607, %v6603
    %v6652 = vpack.c.b16 %v6608, %v6604
    %v6653 = vpack.c.b16 %v6613, %v6609
    %v6654 = vpack.c.b16 %v6614, %v6610
    %v6655 = vpack.c.b16 %v6615, %v6611
    %v6656 = vpack.c.b16 %v6616, %v6612
    %v6657 = vpack.c.b16 %v6621, %v6617
    %v6658 = vpack.c.b16 %v6622, %v6618
    %v6659 = vpack.c.b16 %v6623, %v6619
    %v6660 = vpack.c.b16 %v6624, %v6620
    %v6661 = vpack.c.b16 %v6629, %v6625
    %v6662 = vpack.c.b16 %v6630, %v6626
    %v6663 = vpack.c.b16 %v6631, %v6627
    %v6664 = vpack.c.b16 %v6632, %v6628
    %6697 = vmatprep.subr.bf16.mxu0 %v6634
    %6698 = vmatpush1.bf16.msra.mxu0 %v6633
    %6699 = vmatprep.subr.bf16.mxu0 %v6638
    %6700 = vmatpush1.bf16.msra.mxu0 %v6637
    %6701 = vmatprep.subr.bf16.mxu0 %v6642
    %6702 = vmatpush1.bf16.msra.mxu0 %v6641
    %6703 = vmatprep.subr.bf16.mxu0 %v6646
    %6704 = vmatpush1.bf16.msra.mxu0 %v6645
    %6705 = vmatprep.subr.bf16.mxu0 %v6650
    %6706 = vmatpush1.bf16.msra.mxu0 %v6649
    %6707 = vmatprep.subr.bf16.mxu0 %v6654
    %6708 = vmatpush1.bf16.msra.mxu0 %v6653
    %6709 = vmatprep.subr.bf16.mxu0 %v6658
    %6710 = vmatpush1.bf16.msra.mxu0 %v6657
    %6711 = vmatprep.subr.bf16.mxu0 %v6662
    %6712 = vmatpush1.bf16.msra.mxu0 %v6661
    %6713 = vmatprep.subr.bf16.mxu0 0
    %6714 = vmatpush1.bf16.msra.mxu0 0
    %6715 = vmatprep.subr.bf16.mxu0 0
    %6716 = vmatpush1.bf16.msra.mxu0 0
    %6717 = vmatprep.subr.bf16.mxu0 0
    %6718 = vmatpush1.bf16.msra.mxu0 0
    %6719 = vmatprep.subr.bf16.mxu0 0
    %6720 = vmatpush1.bf16.msra.mxu0 0
    %6721 = vmatprep.subr.bf16.mxu0 0
    %6722 = vmatpush1.bf16.msra.mxu0 0
    %6723 = vmatprep.subr.bf16.mxu0 0
    %6724 = vmatpush1.bf16.msra.mxu0 0
    %6725 = vmatprep.subr.bf16.mxu0 0
    %6726 = vmatpush1.bf16.msra.mxu0 0
    %6727 = vmatprep.subr.bf16.mxu0 0
    %6728 = vmatpush1.bf16.msra.mxu0 0
    %6729 = vmatprep.mubr.bf16.mxu0 0
    %6730 = vmatmul.mubr.bf16.gmra.mrb[0].mxu0 %v6228
    %v6731 = vpop.f32.mrb[0].mxu0
    %v6732 = vadd.f32 %v6490, %v6731
    %v6733 = vpop.f32.mrb[0].mxu0
    %v6734 = vadd.f32 %v6492, %v6733
    %v6735 = vpop.f32.mrb[0].mxu0
    %v6736 = vpop.f32.mrb[0].mxu0
    %6737 = vdwg.mxu0
    %6738 = vmatprep.subr.bf16.mxu0 %v6636
    %6739 = vmatpush1.bf16.msra.mxu0 %v6635
    %6740 = vmatprep.subr.bf16.mxu0 %v6640
    %6741 = vmatpush1.bf16.msra.mxu0 %v6639
    %6742 = vmatprep.subr.bf16.mxu0 %v6644
    %6743 = vmatpush1.bf16.msra.mxu0 %v6643
    %6744 = vmatprep.subr.bf16.mxu0 %v6648
    %6745 = vmatpush1.bf16.msra.mxu0 %v6647
    %6746 = vmatprep.subr.bf16.mxu0 %v6652
    %6747 = vmatpush1.bf16.msra.mxu0 %v6651
    %6748 = vmatprep.subr.bf16.mxu0 %v6656
    %6749 = vmatpush1.bf16.msra.mxu0 %v6655
    %6750 = vmatprep.subr.bf16.mxu0 %v6660
    %6751 = vmatpush1.bf16.msra.mxu0 %v6659
    %6752 = vmatprep.subr.bf16.mxu0 %v6664
    %6753 = vmatpush1.bf16.msra.mxu0 %v6663
    %6754 = vmatprep.subr.bf16.mxu0 0
    %6755 = vmatpush1.bf16.msra.mxu0 0
    %6756 = vmatprep.subr.bf16.mxu0 0
    %6757 = vmatpush1.bf16.msra.mxu0 0
    %6758 = vmatprep.subr.bf16.mxu0 0
    %6759 = vmatpush1.bf16.msra.mxu0 0
    %6760 = vmatprep.subr.bf16.mxu0 0
    %6761 = vmatpush1.bf16.msra.mxu0 0
    %6762 = vmatprep.subr.bf16.mxu0 0
    %6763 = vmatpush1.bf16.msra.mxu0 0
    %6764 = vmatprep.subr.bf16.mxu0 0
    %6765 = vmatpush1.bf16.msra.mxu0 0
    %6766 = vmatprep.subr.bf16.mxu0 0
    %6767 = vmatpush1.bf16.msra.mxu0 0
    %6768 = vmatprep.subr.bf16.mxu0 0
    %6769 = vmatpush1.bf16.msra.mxu0 0
    %6770 = vmatprep.mubr.bf16.mxu0 0
    %6771 = vmatmul.mubr.bf16.gmra.mrb[0].mxu0 %v6228
    %v6772 = vpop.f32.mrb[0].mxu0
    %v6773 = vadd.f32 %v6531, %v6772
    %v6774 = vpop.f32.mrb[0].mxu0
    %v6775 = vadd.f32 %v6533, %v6774
    %v6776 = vpop.f32.mrb[0].mxu0
    %v6777 = vpop.f32.mrb[0].mxu0
    %6778 = vdwg.mxu0
    %v6779 = vadd.f32 %v6732, %v113
    %v6780 = vadd.f32 %v6734, %v114
    %v6781 = vadd.f32 %v6773, %v115
    %v6782 = vadd.f32 %v6775, %v116
    %v6783 = vxor.u32 %v6779, 2147483648
    %v6784 = vmul.f32 %v6783, 1.442695
    %v6785 = vpow.pop %v6784
    %v6786 = vadd.f32 %v6785, 1.0
    %v6787 = vrcp.pop %v6786
    %v6788 = vmul.f32 1.0, %v6787
    %v6789 = vxor.u32 %v6780, 2147483648
    %v6790 = vmul.f32 %v6789, 1.442695
    %v6791 = vpow.pop %v6790
    %v6792 = vadd.f32 %v6791, 1.0
    %v6793 = vrcp.pop %v6792
    %v6794 = vmul.f32 1.0, %v6793
    %v6795 = vtanh.pop %v6781
    %v6796 = vxor.u32 %v6782, 2147483648
    %v6797 = vmul.f32 %v6796, 1.442695
    %v6798 = vpow.pop %v6797
    %v6799 = vadd.f32 %v6798, 1.0
    %v6800 = vrcp.pop %v6799
    %v6801 = vmul.f32 1.0, %v6800
    %v6802 = vld [vmem:[#allocation3] sm:$0xff]
    %v6803 = vmul.f32 %v6794, %v6802
    %v6804 = vmul.f32 %v6788, %v6795
    %v6805 = vadd.f32 %v6803, %v6804
    %6806 = vst [vmem:[#allocation3] sm:$0xff] %v6805
    %v6807 = vtanh.pop %v6805
    %v6808 = vmul.f32 %v6801, %v6807
    %6809 = vst [vmem:[#allocation2] sm:$0xff] %v6808
    %v6810 = vld [vmem:[#allocation2] sm:$0xff]
    %v6811 = vpack.c.bf16 %v6810, %v6810
    %v6812 = vld [vmem:[#allocation12] sm:$0xf]
    %v6813 = vld [vmem:[#allocation12 + $0x4] sm:$0xf]
    %v6814 = vld [vmem:[#allocation12 + $0x8] sm:$0xf]
    %v6815 = vld [vmem:[#allocation12 + $0xc] sm:$0xf]
    %v6816 = vld [vmem:[#allocation12 + $0x10] sm:$0xf]
    %v6817 = vld [vmem:[#allocation12 + $0x14] sm:$0xf]
    %v6818 = vld [vmem:[#allocation12 + $0x18] sm:$0xf]
    %v6819 = vld [vmem:[#allocation12 + $0x1c] sm:$0xf]
    %v6820 = vld [vmem:[#allocation12 + $0x20] sm:$0xf]
    %v6821 = vld [vmem:[#allocation12 + $0x24] sm:$0xf]
    %v6822 = vld [vmem:[#allocation12 + $0x28] sm:$0xf]
    %v6823 = vld [vmem:[#allocation12 + $0x2c] sm:$0xf]
    %v6824 = vld [vmem:[#allocation12 + $0x30] sm:$0xf]
    %v6825 = vld [vmem:[#allocation12 + $0x34] sm:$0xf]
    %v6826 = vld [vmem:[#allocation12 + $0x38] sm:$0xf]
    %v6827 = vld [vmem:[#allocation12 + $0x3c] sm:$0xf]
    %v6844 = vunpack.c.l.b16 %v6812
    %v6845 = vunpack.c.l.b16 %v6813
    %v6846 = vunpack.c.l.b16 %v6814
    %v6847 = vunpack.c.l.b16 %v6815
    %v6848 = vunpack.c.l.b16 %v6816
    %v6849 = vunpack.c.l.b16 %v6817
    %v6850 = vunpack.c.l.b16 %v6818
    %v6851 = vunpack.c.l.b16 %v6819
    %v6852 = vunpack.c.l.b16 %v6820
    %v6853 = vunpack.c.l.b16 %v6821
    %v6854 = vunpack.c.l.b16 %v6822
    %v6855 = vunpack.c.l.b16 %v6823
    %v6856 = vunpack.c.l.b16 %v6824
    %v6857 = vunpack.c.l.b16 %v6825
    %v6858 = vunpack.c.l.b16 %v6826
    %v6859 = vunpack.c.l.b16 %v6827
    %v6860 = vpack.c.b16 %v6845, %v6844
    %v6861 = vpack.c.b16 %v6847, %v6846
    %v6862 = vpack.c.b16 %v6849, %v6848
    %v6863 = vpack.c.b16 %v6851, %v6850
    %v6864 = vpack.c.b16 %v6853, %v6852
    %v6865 = vpack.c.b16 %v6855, %v6854
    %v6866 = vpack.c.b16 %v6857, %v6856
    %v6867 = vpack.c.b16 %v6859, %v6858
    %6876 = vmatprep.subr.bf16.mxu0 0
    %6877 = vmatpush1.bf16.msra.mxu0 %v6860
    %6878 = vmatprep.subr.bf16.mxu0 0
    %6879 = vmatpush1.bf16.msra.mxu0 %v6861
    %6880 = vmatprep.subr.bf16.mxu0 0
    %6881 = vmatpush1.bf16.msra.mxu0 %v6862
    %6882 = vmatprep.subr.bf16.mxu0 0
    %6883 = vmatpush1.bf16.msra.mxu0 %v6863
    %6884 = vmatprep.subr.bf16.mxu0 0
    %6885 = vmatpush1.bf16.msra.mxu0 %v6864
    %6886 = vmatprep.subr.bf16.mxu0 0
    %6887 = vmatpush1.bf16.msra.mxu0 %v6865
    %6888 = vmatprep.subr.bf16.mxu0 0
    %6889 = vmatpush1.bf16.msra.mxu0 %v6866
    %6890 = vmatprep.subr.bf16.mxu0 0
    %6891 = vmatpush1.bf16.msra.mxu0 %v6867
    %6892 = vmatprep.subr.bf16.mxu0 0
    %6893 = vmatpush1.bf16.msra.mxu0 0
    %6894 = vmatprep.subr.bf16.mxu0 0
    %6895 = vmatpush1.bf16.msra.mxu0 0
    %6896 = vmatprep.subr.bf16.mxu0 0
    %6897 = vmatpush1.bf16.msra.mxu0 0
    %6898 = vmatprep.subr.bf16.mxu0 0
    %6899 = vmatpush1.bf16.msra.mxu0 0
    %6900 = vmatprep.subr.bf16.mxu0 0
    %6901 = vmatpush1.bf16.msra.mxu0 0
    %6902 = vmatprep.subr.bf16.mxu0 0
    %6903 = vmatpush1.bf16.msra.mxu0 0
    %6904 = vmatprep.subr.bf16.mxu0 0
    %6905 = vmatpush1.bf16.msra.mxu0 0
    %6906 = vmatprep.subr.bf16.mxu0 0
    %6907 = vmatpush1.bf16.msra.mxu0 0
    %6908 = vmatprep.mubr.bf16.mxu0 0
    %6909 = vmatmul.mubr.bf16.gmra.mrb[0].mxu0 %v6811
    %v6910 = vpop.f32.mrb[0].mxu0
    %v6911 = vadd.f32 %v117, %v6910
    %v6912 = vpop.f32.mrb[0].mxu0
    %v6913 = vpop.f32.mrb[0].mxu0
    %v6914 = vpop.f32.mrb[0].mxu0
    %6915 = vdwg.mxu0
    %s6916 = scalar_lea.vmem %s11, 24
    %6917 = vst [vmem:[%s6916] sm:$0xff] %v6911
    %6918 = vmax.xlane.f32.xlu0 %v6911
    %v6919 = vpop.xlane.xlu0 %6918
    %vm6920 = vcmp.ge.f32.partialorder %v6911, %v6919
    %v6921 = vsel %vm6920, %v119, 128
    %v6922 = vand.u32 %v6921, 65535
    %v6923 = vshra.s32 %v6921, 16
    %v6924 = vcvt.s32.f32 %v6922
    %v6925 = vcvt.s32.f32 %v6923
    %6926 = vmin.xlane.f32.xlu0 %v6925
    %v6927 = vpop.xlane.xlu0 %6926
    %vm6928 = vcmp.eq.f32.partialorder %v6925, %v6927
    %v6929 = vsel %vm6928, %v6924, inf
    %6930 = vmin.xlane.f32.xlu0 %v6929
    %v6931 = vpop.xlane.xlu0 %6930
    %v6932 = vcvt.f32.s32 %v6931
    %v6933 = vcvt.f32.s32 %v6927
    %v6934 = vshll.u32 %v6933, 16
    %v6935 = vadd.s32 %v6934, %v6932
    %vm6936 = vcmp.eq.s32.totalorder %v119, %v6935
    %v6937 = vsel %vm6936, 1, 0
    %v6938 = vcvt.s32.f32 %v6937
    %v6939 = vpack.c.bf16 %v6938, %v6938
    %s6940 = sld [smem:[#allocation5 + $0x3]]
    %p6941 = scmp.gt.s32.totalorder %s6940, 0
    %s6942 = scalar_lea.vmem %s2, 12
    %v6943 = vld [vmem:[%s6942] sm:$0xf]
    %s6944 = scalar_select %p6941, 1, 0
    %v6945 = vstv %s6944
    %vm6946 = vcmp.eq.s32.totalorder %v6945, 1
    %v6947 = vsel %vm6946, %v6943, %v6939
    %6948 = vst [vmem:[#allocation4] sm:$0xf] %v6947
    %v6949 = vld [vmem:[#allocation4] sm:$0xf]
    %v6950 = vld [vmem:[#allocation9] sm:$0xff]
    %v6951 = vld [vmem:[#allocation9 + $0x8] sm:$0xff]
    %v6952 = vld [vmem:[#allocation9 + $0x10] sm:$0xff]
    %v6953 = vld [vmem:[#allocation9 + $0x18] sm:$0xff]
    %v6954 = vld [vmem:[#allocation9 + $0x20] sm:$0xff]
    %v6955 = vld [vmem:[#allocation9 + $0x28] sm:$0xff]
    %v6956 = vld [vmem:[#allocation9 + $0x30] sm:$0xff]
    %v6957 = vld [vmem:[#allocation9 + $0x38] sm:$0xff]
    %v6958 = vld [vmem:[#allocation9 + $0x40] sm:$0xff]
    %v6959 = vld [vmem:[#allocation9 + $0x48] sm:$0xff]
    %v6960 = vld [vmem:[#allocation9 + $0x50] sm:$0xff]
    %v6961 = vld [vmem:[#allocation9 + $0x58] sm:$0xff]
    %v6962 = vld [vmem:[#allocation9 + $0x60] sm:$0xff]
    %v6963 = vld [vmem:[#allocation9 + $0x68] sm:$0xff]
    %v6964 = vld [vmem:[#allocation9 + $0x70] sm:$0xff]
    %v6965 = vld [vmem:[#allocation9 + $0x78] sm:$0xff]
    %v6966 = vld [vmem:[#allocation9 + $0x80] sm:$0xff]
    %v6967 = vld [vmem:[#allocation9 + $0x88] sm:$0xff]
    %v6968 = vld [vmem:[#allocation9 + $0x90] sm:$0xff]
    %v6969 = vld [vmem:[#allocation9 + $0x98] sm:$0xff]
    %v6970 = vld [vmem:[#allocation9 + $0xa0] sm:$0xff]
    %v6971 = vld [vmem:[#allocation9 + $0xa8] sm:$0xff]
    %v6972 = vld [vmem:[#allocation9 + $0xb0] sm:$0xff]
    %v6973 = vld [vmem:[#allocation9 + $0xb8] sm:$0xff]
    %v6974 = vld [vmem:[#allocation9 + $0xc0] sm:$0xff]
    %v6975 = vld [vmem:[#allocation9 + $0xc8] sm:$0xff]
    %v6976 = vld [vmem:[#allocation9 + $0xd0] sm:$0xff]
    %v6977 = vld [vmem:[#allocation9 + $0xd8] sm:$0xff]
    %v6978 = vld [vmem:[#allocation9 + $0xe0] sm:$0xff]
    %v6979 = vld [vmem:[#allocation9 + $0xe8] sm:$0xff]
    %v6980 = vld [vmem:[#allocation9 + $0xf0] sm:$0xff]
    %v6981 = vld [vmem:[#allocation9 + $0xf8] sm:$0xff]
    %v6982 = vld [vmem:[#allocation2] sm:$0xff]
    %v6983 = vpack.c.bf16 %v6982, %v6982
    %v6984 = vld [vmem:[#allocation11] sm:$0xff]
    %v6985 = vld [vmem:[#allocation11 + $0x8] sm:$0xff]
    %v6986 = vld [vmem:[#allocation11 + $0x10] sm:$0xff]
    %v6987 = vld [vmem:[#allocation11 + $0x18] sm:$0xff]
    %v6988 = vld [vmem:[#allocation11 + $0x20] sm:$0xff]
    %v6989 = vld [vmem:[#allocation11 + $0x28] sm:$0xff]
    %v6990 = vld [vmem:[#allocation11 + $0x30] sm:$0xff]
    %v6991 = vld [vmem:[#allocation11 + $0x38] sm:$0xff]
    %v6992 = vld [vmem:[#allocation11 + $0x40] sm:$0xff]
    %v6993 = vld [vmem:[#allocation11 + $0x48] sm:$0xff]
    %v6994 = vld [vmem:[#allocation11 + $0x50] sm:$0xff]
    %v6995 = vld [vmem:[#allocation11 + $0x58] sm:$0xff]
    %v6996 = vld [vmem:[#allocation11 + $0x60] sm:$0xff]
    %v6997 = vld [vmem:[#allocation11 + $0x68] sm:$0xff]
    %v6998 = vld [vmem:[#allocation11 + $0x70] sm:$0xff]
    %v6999 = vld [vmem:[#allocation11 + $0x78] sm:$0xff]
    %v7000 = vld [vmem:[#allocation11 + $0x80] sm:$0xff]
    %v7001 = vld [vmem:[#allocation11 + $0x88] sm:$0xff]
    %v7002 = vld [vmem:[#allocation11 + $0x90] sm:$0xff]
    %v7003 = vld [vmem:[#allocation11 + $0x98] sm:$0xff]
    %v7004 = vld [vmem:[#allocation11 + $0xa0] sm:$0xff]
    %v7005 = vld [vmem:[#allocation11 + $0xa8] sm:$0xff]
    %v7006 = vld [vmem:[#allocation11 + $0xb0] sm:$0xff]
    %v7007 = vld [vmem:[#allocation11 + $0xb8] sm:$0xff]
    %v7008 = vld [vmem:[#allocation11 + $0xc0] sm:$0xff]
    %v7009 = vld [vmem:[#allocation11 + $0xc8] sm:$0xff]
    %v7010 = vld [vmem:[#allocation11 + $0xd0] sm:$0xff]
    %v7011 = vld [vmem:[#allocation11 + $0xd8] sm:$0xff]
    %v7012 = vld [vmem:[#allocation11 + $0xe0] sm:$0xff]
    %v7013 = vld [vmem:[#allocation11 + $0xe8] sm:$0xff]
    %v7014 = vld [vmem:[#allocation11 + $0xf0] sm:$0xff]
    %v7015 = vld [vmem:[#allocation11 + $0xf8] sm:$0xff]
    %v7048 = vunpack.c.l.b16 %v6984
    %v7049 = vunpack.c.h.b16 %v6984
    %v7050 = vunpack.c.l.b16 %v6985
    %v7051 = vunpack.c.h.b16 %v6985
    %v7052 = vunpack.c.l.b16 %v6986
    %v7053 = vunpack.c.h.b16 %v6986
    %v7054 = vunpack.c.l.b16 %v6987
    %v7055 = vunpack.c.h.b16 %v6987
    %v7056 = vunpack.c.l.b16 %v6988
    %v7057 = vunpack.c.h.b16 %v6988
    %v7058 = vunpack.c.l.b16 %v6989
    %v7059 = vunpack.c.h.b16 %v6989
    %v7060 = vunpack.c.l.b16 %v6990
    %v7061 = vunpack.c.h.b16 %v6990
    %v7062 = vunpack.c.l.b16 %v6991
    %v7063 = vunpack.c.h.b16 %v6991
    %v7064 = vunpack.c.l.b16 %v6992
    %v7065 = vunpack.c.h.b16 %v6992
    %v7066 = vunpack.c.l.b16 %v6993
    %v7067 = vunpack.c.h.b16 %v6993
    %v7068 = vunpack.c.l.b16 %v6994
    %v7069 = vunpack.c.h.b16 %v6994
    %v7070 = vunpack.c.l.b16 %v6995
    %v7071 = vunpack.c.h.b16 %v6995
    %v7072 = vunpack.c.l.b16 %v6996
    %v7073 = vunpack.c.h.b16 %v6996
    %v7074 = vunpack.c.l.b16 %v6997
    %v7075 = vunpack.c.h.b16 %v6997
    %v7076 = vunpack.c.l.b16 %v6998
    %v7077 = vunpack.c.h.b16 %v6998
    %v7078 = vunpack.c.l.b16 %v6999
    %v7079 = vunpack.c.h.b16 %v6999
    %v7080 = vunpack.c.l.b16 %v7000
    %v7081 = vunpack.c.h.b16 %v7000
    %v7082 = vunpack.c.l.b16 %v7001
    %v7083 = vunpack.c.h.b16 %v7001
    %v7084 = vunpack.c.l.b16 %v7002
    %v7085 = vunpack.c.h.b16 %v7002
    %v7086 = vunpack.c.l.b16 %v7003
    %v7087 = vunpack.c.h.b16 %v7003
    %v7088 = vunpack.c.l.b16 %v7004
    %v7089 = vunpack.c.h.b16 %v7004
    %v7090 = vunpack.c.l.b16 %v7005
    %v7091 = vunpack.c.h.b16 %v7005
    %v7092 = vunpack.c.l.b16 %v7006
    %v7093 = vunpack.c.h.b16 %v7006
    %v7094 = vunpack.c.l.b16 %v7007
    %v7095 = vunpack.c.h.b16 %v7007
    %v7096 = vunpack.c.l.b16 %v7008
    %v7097 = vunpack.c.h.b16 %v7008
    %v7098 = vunpack.c.l.b16 %v7009
    %v7099 = vunpack.c.h.b16 %v7009
    %v7100 = vunpack.c.l.b16 %v7010
    %v7101 = vunpack.c.h.b16 %v7010
    %v7102 = vunpack.c.l.b16 %v7011
    %v7103 = vunpack.c.h.b16 %v7011
    %v7104 = vunpack.c.l.b16 %v7012
    %v7105 = vunpack.c.h.b16 %v7012
    %v7106 = vunpack.c.l.b16 %v7013
    %v7107 = vunpack.c.h.b16 %v7013
    %v7108 = vunpack.c.l.b16 %v7014
    %v7109 = vunpack.c.h.b16 %v7014
    %v7110 = vunpack.c.l.b16 %v7015
    %v7111 = vunpack.c.h.b16 %v7015
    %v7112 = vpack.c.b16 %v7052, %v7048
    %v7113 = vpack.c.b16 %v7053, %v7049
    %v7114 = vpack.c.b16 %v7054, %v7050
    %v7115 = vpack.c.b16 %v7055, %v7051
    %v7116 = vpack.c.b16 %v7060, %v7056
    %v7117 = vpack.c.b16 %v7061, %v7057
    %v7118 = vpack.c.b16 %v7062, %v7058
    %v7119 = vpack.c.b16 %v7063, %v7059
    %v7120 = vpack.c.b16 %v7068, %v7064
    %v7121 = vpack.c.b16 %v7069, %v7065
    %v7122 = vpack.c.b16 %v7070, %v7066
    %v7123 = vpack.c.b16 %v7071, %v7067
    %v7124 = vpack.c.b16 %v7076, %v7072
    %v7125 = vpack.c.b16 %v7077, %v7073
    %v7126 = vpack.c.b16 %v7078, %v7074
    %v7127 = vpack.c.b16 %v7079, %v7075
    %v7128 = vpack.c.b16 %v7084, %v7080
    %v7129 = vpack.c.b16 %v7085, %v7081
    %v7130 = vpack.c.b16 %v7086, %v7082
    %v7131 = vpack.c.b16 %v7087, %v7083
    %v7132 = vpack.c.b16 %v7092, %v7088
    %v7133 = vpack.c.b16 %v7093, %v7089
    %v7134 = vpack.c.b16 %v7094, %v7090
    %v7135 = vpack.c.b16 %v7095, %v7091
    %v7136 = vpack.c.b16 %v7100, %v7096
    %v7137 = vpack.c.b16 %v7101, %v7097
    %v7138 = vpack.c.b16 %v7102, %v7098
    %v7139 = vpack.c.b16 %v7103, %v7099
    %v7140 = vpack.c.b16 %v7108, %v7104
    %v7141 = vpack.c.b16 %v7109, %v7105
    %v7142 = vpack.c.b16 %v7110, %v7106
    %v7143 = vpack.c.b16 %v7111, %v7107
    %7176 = vmatprep.subr.bf16.mxu0 %v7113
    %7177 = vmatpush1.bf16.msra.mxu0 %v7112
    %7178 = vmatprep.subr.bf16.mxu0 %v7117
    %7179 = vmatpush1.bf16.msra.mxu0 %v7116
    %7180 = vmatprep.subr.bf16.mxu0 %v7121
    %7181 = vmatpush1.bf16.msra.mxu0 %v7120
    %7182 = vmatprep.subr.bf16.mxu0 %v7125
    %7183 = vmatpush1.bf16.msra.mxu0 %v7124
    %7184 = vmatprep.subr.bf16.mxu0 %v7129
    %7185 = vmatpush1.bf16.msra.mxu0 %v7128
    %7186 = vmatprep.subr.bf16.mxu0 %v7133
    %7187 = vmatpush1.bf16.msra.mxu0 %v7132
    %7188 = vmatprep.subr.bf16.mxu0 %v7137
    %7189 = vmatpush1.bf16.msra.mxu0 %v7136
    %7190 = vmatprep.subr.bf16.mxu0 %v7141
    %7191 = vmatpush1.bf16.msra.mxu0 %v7140
    %7192 = vmatprep.subr.bf16.mxu0 0
    %7193 = vmatpush1.bf16.msra.mxu0 0
    %7194 = vmatprep.subr.bf16.mxu0 0
    %7195 = vmatpush1.bf16.msra.mxu0 0
    %7196 = vmatprep.subr.bf16.mxu0 0
    %7197 = vmatpush1.bf16.msra.mxu0 0
    %7198 = vmatprep.subr.bf16.mxu0 0
    %7199 = vmatpush1.bf16.msra.mxu0 0
    %7200 = vmatprep.subr.bf16.mxu0 0
    %7201 = vmatpush1.bf16.msra.mxu0 0
    %7202 = vmatprep.subr.bf16.mxu0 0
    %7203 = vmatpush1.bf16.msra.mxu0 0
    %7204 = vmatprep.subr.bf16.mxu0 0
    %7205 = vmatpush1.bf16.msra.mxu0 0
    %7206 = vmatprep.subr.bf16.mxu0 0
    %7207 = vmatpush1.bf16.msra.mxu0 0
    %7208 = vmatprep.mubr.bf16.mxu0 0
    %7209 = vmatmul.mubr.bf16.gmra.mrb[0].mxu0 %v6983
    %v7210 = vpop.f32.mrb[0].mxu0
    %v7211 = vadd.f32 0.0, %v7210
    %v7212 = vpop.f32.mrb[0].mxu0
    %v7213 = vadd.f32 0.0, %v7212
    %v7214 = vpop.f32.mrb[0].mxu0
    %v7215 = vpop.f32.mrb[0].mxu0
    %7216 = vdwg.mxu0
    %7217 = vmatprep.subr.bf16.mxu0 %v7115
    %7218 = vmatpush1.bf16.msra.mxu0 %v7114
    %7219 = vmatprep.subr.bf16.mxu0 %v7119
    %7220 = vmatpush1.bf16.msra.mxu0 %v7118
    %7221 = vmatprep.subr.bf16.mxu0 %v7123
    %7222 = vmatpush1.bf16.msra.mxu0 %v7122
    %7223 = vmatprep.subr.bf16.mxu0 %v7127
    %7224 = vmatpush1.bf16.msra.mxu0 %v7126
    %7225 = vmatprep.subr.bf16.mxu0 %v7131
    %7226 = vmatpush1.bf16.msra.mxu0 %v7130
    %7227 = vmatprep.subr.bf16.mxu0 %v7135
    %7228 = vmatpush1.bf16.msra.mxu0 %v7134
    %7229 = vmatprep.subr.bf16.mxu0 %v7139
    %7230 = vmatpush1.bf16.msra.mxu0 %v7138
    %7231 = vmatprep.subr.bf16.mxu0 %v7143
    %7232 = vmatpush1.bf16.msra.mxu0 %v7142
    %7233 = vmatprep.subr.bf16.mxu0 0
    %7234 = vmatpush1.bf16.msra.mxu0 0
    %7235 = vmatprep.subr.bf16.mxu0 0
    %7236 = vmatpush1.bf16.msra.mxu0 0
    %7237 = vmatprep.subr.bf16.mxu0 0
    %7238 = vmatpush1.bf16.msra.mxu0 0
    %7239 = vmatprep.subr.bf16.mxu0 0
    %7240 = vmatpush1.bf16.msra.mxu0 0
    %7241 = vmatprep.subr.bf16.mxu0 0
    %7242 = vmatpush1.bf16.msra.mxu0 0
    %7243 = vmatprep.subr.bf16.mxu0 0
    %7244 = vmatpush1.bf16.msra.mxu0 0
    %7245 = vmatprep.subr.bf16.mxu0 0
    %7246 = vmatpush1.bf16.msra.mxu0 0
    %7247 = vmatprep.subr.bf16.mxu0 0
    %7248 = vmatpush1.bf16.msra.mxu0 0
    %7249 = vmatprep.mubr.bf16.mxu0 0
    %7250 = vmatmul.mubr.bf16.gmra.mrb[0].mxu0 %v6983
    %v7251 = vpop.f32.mrb[0].mxu0
    %v7252 = vadd.f32 0.0, %v7251
    %v7253 = vpop.f32.mrb[0].mxu0
    %v7254 = vadd.f32 0.0, %v7253
    %v7255 = vpop.f32.mrb[0].mxu0
    %v7256 = vpop.f32.mrb[0].mxu0
    %7257 = vdwg.mxu0
    %v7290 = vunpack.c.l.b16 %v6950
    %v7291 = vunpack.c.h.b16 %v6950
    %v7292 = vunpack.c.l.b16 %v6951
    %v7293 = vunpack.c.h.b16 %v6951
    %v7294 = vunpack.c.l.b16 %v6952
    %v7295 = vunpack.c.h.b16 %v6952
    %v7296 = vunpack.c.l.b16 %v6953
    %v7297 = vunpack.c.h.b16 %v6953
    %v7298 = vunpack.c.l.b16 %v6954
    %v7299 = vunpack.c.h.b16 %v6954
    %v7300 = vunpack.c.l.b16 %v6955
    %v7301 = vunpack.c.h.b16 %v6955
    %v7302 = vunpack.c.l.b16 %v6956
    %v7303 = vunpack.c.h.b16 %v6956
    %v7304 = vunpack.c.l.b16 %v6957
    %v7305 = vunpack.c.h.b16 %v6957
    %v7306 = vunpack.c.l.b16 %v6958
    %v7307 = vunpack.c.h.b16 %v6958
    %v7308 = vunpack.c.l.b16 %v6959
    %v7309 = vunpack.c.h.b16 %v6959
    %v7310 = vunpack.c.l.b16 %v6960
    %v7311 = vunpack.c.h.b16 %v6960
    %v7312 = vunpack.c.l.b16 %v6961
    %v7313 = vunpack.c.h.b16 %v6961
    %v7314 = vunpack.c.l.b16 %v6962
    %v7315 = vunpack.c.h.b16 %v6962
    %v7316 = vunpack.c.l.b16 %v6963
    %v7317 = vunpack.c.h.b16 %v6963
    %v7318 = vunpack.c.l.b16 %v6964
    %v7319 = vunpack.c.h.b16 %v6964
    %v7320 = vunpack.c.l.b16 %v6965
    %v7321 = vunpack.c.h.b16 %v6965
    %v7322 = vunpack.c.l.b16 %v6966
    %v7323 = vunpack.c.h.b16 %v6966
    %v7324 = vunpack.c.l.b16 %v6967
    %v7325 = vunpack.c.h.b16 %v6967
    %v7326 = vunpack.c.l.b16 %v6968
    %v7327 = vunpack.c.h.b16 %v6968
    %v7328 = vunpack.c.l.b16 %v6969
    %v7329 = vunpack.c.h.b16 %v6969
    %v7330 = vunpack.c.l.b16 %v6970
    %v7331 = vunpack.c.h.b16 %v6970
    %v7332 = vunpack.c.l.b16 %v6971
    %v7333 = vunpack.c.h.b16 %v6971
    %v7334 = vunpack.c.l.b16 %v6972
    %v7335 = vunpack.c.h.b16 %v6972
    %v7336 = vunpack.c.l.b16 %v6973
    %v7337 = vunpack.c.h.b16 %v6973
    %v7338 = vunpack.c.l.b16 %v6974
    %v7339 = vunpack.c.h.b16 %v6974
    %v7340 = vunpack.c.l.b16 %v6975
    %v7341 = vunpack.c.h.b16 %v6975
    %v7342 = vunpack.c.l.b16 %v6976
    %v7343 = vunpack.c.h.b16 %v6976
    %v7344 = vunpack.c.l.b16 %v6977
    %v7345 = vunpack.c.h.b16 %v6977
    %v7346 = vunpack.c.l.b16 %v6978
    %v7347 = vunpack.c.h.b16 %v6978
    %v7348 = vunpack.c.l.b16 %v6979
    %v7349 = vunpack.c.h.b16 %v6979
    %v7350 = vunpack.c.l.b16 %v6980
    %v7351 = vunpack.c.h.b16 %v6980
    %v7352 = vunpack.c.l.b16 %v6981
    %v7353 = vunpack.c.h.b16 %v6981
    %v7354 = vpack.c.b16 %v7294, %v7290
    %v7355 = vpack.c.b16 %v7295, %v7291
    %v7356 = vpack.c.b16 %v7296, %v7292
    %v7357 = vpack.c.b16 %v7297, %v7293
    %v7358 = vpack.c.b16 %v7302, %v7298
    %v7359 = vpack.c.b16 %v7303, %v7299
    %v7360 = vpack.c.b16 %v7304, %v7300
    %v7361 = vpack.c.b16 %v7305, %v7301
    %v7362 = vpack.c.b16 %v7310, %v7306
    %v7363 = vpack.c.b16 %v7311, %v7307
    %v7364 = vpack.c.b16 %v7312, %v7308
    %v7365 = vpack.c.b16 %v7313, %v7309
    %v7366 = vpack.c.b16 %v7318, %v7314
    %v7367 = vpack.c.b16 %v7319, %v7315
    %v7368 = vpack.c.b16 %v7320, %v7316
    %v7369 = vpack.c.b16 %v7321, %v7317
    %v7370 = vpack.c.b16 %v7326, %v7322
    %v7371 = vpack.c.b16 %v7327, %v7323
    %v7372 = vpack.c.b16 %v7328, %v7324
    %v7373 = vpack.c.b16 %v7329, %v7325
    %v7374 = vpack.c.b16 %v7334, %v7330
    %v7375 = vpack.c.b16 %v7335, %v7331
    %v7376 = vpack.c.b16 %v7336, %v7332
    %v7377 = vpack.c.b16 %v7337, %v7333
    %v7378 = vpack.c.b16 %v7342, %v7338
    %v7379 = vpack.c.b16 %v7343, %v7339
    %v7380 = vpack.c.b16 %v7344, %v7340
    %v7381 = vpack.c.b16 %v7345, %v7341
    %v7382 = vpack.c.b16 %v7350, %v7346
    %v7383 = vpack.c.b16 %v7351, %v7347
    %v7384 = vpack.c.b16 %v7352, %v7348
    %v7385 = vpack.c.b16 %v7353, %v7349
    %7418 = vmatprep.subr.bf16.mxu0 %v7355
    %7419 = vmatpush1.bf16.msra.mxu0 %v7354
    %7420 = vmatprep.subr.bf16.mxu0 %v7359
    %7421 = vmatpush1.bf16.msra.mxu0 %v7358
    %7422 = vmatprep.subr.bf16.mxu0 %v7363
    %7423 = vmatpush1.bf16.msra.mxu0 %v7362
    %7424 = vmatprep.subr.bf16.mxu0 %v7367
    %7425 = vmatpush1.bf16.msra.mxu0 %v7366
    %7426 = vmatprep.subr.bf16.mxu0 %v7371
    %7427 = vmatpush1.bf16.msra.mxu0 %v7370
    %7428 = vmatprep.subr.bf16.mxu0 %v7375
    %7429 = vmatpush1.bf16.msra.mxu0 %v7374
    %7430 = vmatprep.subr.bf16.mxu0 %v7379
    %7431 = vmatpush1.bf16.msra.mxu0 %v7378
    %7432 = vmatprep.subr.bf16.mxu0 %v7383
    %7433 = vmatpush1.bf16.msra.mxu0 %v7382
    %7434 = vmatprep.subr.bf16.mxu0 0
    %7435 = vmatpush1.bf16.msra.mxu0 0
    %7436 = vmatprep.subr.bf16.mxu0 0
    %7437 = vmatpush1.bf16.msra.mxu0 0
    %7438 = vmatprep.subr.bf16.mxu0 0
    %7439 = vmatpush1.bf16.msra.mxu0 0
    %7440 = vmatprep.subr.bf16.mxu0 0
    %7441 = vmatpush1.bf16.msra.mxu0 0
    %7442 = vmatprep.subr.bf16.mxu0 0
    %7443 = vmatpush1.bf16.msra.mxu0 0
    %7444 = vmatprep.subr.bf16.mxu0 0
    %7445 = vmatpush1.bf16.msra.mxu0 0
    %7446 = vmatprep.subr.bf16.mxu0 0
    %7447 = vmatpush1.bf16.msra.mxu0 0
    %7448 = vmatprep.subr.bf16.mxu0 0
    %7449 = vmatpush1.bf16.msra.mxu0 0
    %7450 = vmatprep.mubr.bf16.mxu0 0
    %7451 = vmatmul.mubr.bf16.gmra.mrb[0].mxu0 %v6949
    %v7452 = vpop.f32.mrb[0].mxu0
    %v7453 = vadd.f32 %v7211, %v7452
    %v7454 = vpop.f32.mrb[0].mxu0
    %v7455 = vadd.f32 %v7213, %v7454
    %v7456 = vpop.f32.mrb[0].mxu0
    %v7457 = vpop.f32.mrb[0].mxu0
    %7458 = vdwg.mxu0
    %7459 = vmatprep.subr.bf16.mxu0 %v7357
    %7460 = vmatpush1.bf16.msra.mxu0 %v7356
    %7461 = vmatprep.subr.bf16.mxu0 %v7361
    %7462 = vmatpush1.bf16.msra.mxu0 %v7360
    %7463 = vmatprep.subr.bf16.mxu0 %v7365
    %7464 = vmatpush1.bf16.msra.mxu0 %v7364
    %7465 = vmatprep.subr.bf16.mxu0 %v7369
    %7466 = vmatpush1.bf16.msra.mxu0 %v7368
    %7467 = vmatprep.subr.bf16.mxu0 %v7373
    %7468 = vmatpush1.bf16.msra.mxu0 %v7372
    %7469 = vmatprep.subr.bf16.mxu0 %v7377
    %7470 = vmatpush1.bf16.msra.mxu0 %v7376
    %7471 = vmatprep.subr.bf16.mxu0 %v7381
    %7472 = vmatpush1.bf16.msra.mxu0 %v7380
    %7473 = vmatprep.subr.bf16.mxu0 %v7385
    %7474 = vmatpush1.bf16.msra.mxu0 %v7384
    %7475 = vmatprep.subr.bf16.mxu0 0
    %7476 = vmatpush1.bf16.msra.mxu0 0
    %7477 = vmatprep.subr.bf16.mxu0 0
    %7478 = vmatpush1.bf16.msra.mxu0 0
    %7479 = vmatprep.subr.bf16.mxu0 0
    %7480 = vmatpush1.bf16.msra.mxu0 0
    %7481 = vmatprep.subr.bf16.mxu0 0
    %7482 = vmatpush1.bf16.msra.mxu0 0
    %7483 = vmatprep.subr.bf16.mxu0 0
    %7484 = vmatpush1.bf16.msra.mxu0 0
    %7485 = vmatprep.subr.bf16.mxu0 0
    %7486 = vmatpush1.bf16.msra.mxu0 0
    %7487 = vmatprep.subr.bf16.mxu0 0
    %7488 = vmatpush1.bf16.msra.mxu0 0
    %7489 = vmatprep.subr.bf16.mxu0 0
    %7490 = vmatpush1.bf16.msra.mxu0 0
    %7491 = vmatprep.mubr.bf16.mxu0 0
    %7492 = vmatmul.mubr.bf16.gmra.mrb[0].mxu0 %v6949
    %v7493 = vpop.f32.mrb[0].mxu0
    %v7494 = vadd.f32 %v7252, %v7493
    %v7495 = vpop.f32.mrb[0].mxu0
    %v7496 = vadd.f32 %v7254, %v7495
    %v7497 = vpop.f32.mrb[0].mxu0
    %v7498 = vpop.f32.mrb[0].mxu0
    %7499 = vdwg.mxu0
    %v7500 = vadd.f32 %v7453, %v113
    %v7501 = vadd.f32 %v7455, %v114
    %v7502 = vadd.f32 %v7494, %v115
    %v7503 = vadd.f32 %v7496, %v116
    %v7504 = vxor.u32 %v7500, 2147483648
    %v7505 = vmul.f32 %v7504, 1.442695
    %v7506 = vpow.pop %v7505
    %v7507 = vadd.f32 %v7506, 1.0
    %v7508 = vrcp.pop %v7507
    %v7509 = vmul.f32 1.0, %v7508
    %v7510 = vxor.u32 %v7501, 2147483648
    %v7511 = vmul.f32 %v7510, 1.442695
    %v7512 = vpow.pop %v7511
    %v7513 = vadd.f32 %v7512, 1.0
    %v7514 = vrcp.pop %v7513
    %v7515 = vmul.f32 1.0, %v7514
    %v7516 = vtanh.pop %v7502
    %v7517 = vxor.u32 %v7503, 2147483648
    %v7518 = vmul.f32 %v7517, 1.442695
    %v7519 = vpow.pop %v7518
    %v7520 = vadd.f32 %v7519, 1.0
    %v7521 = vrcp.pop %v7520
    %v7522 = vmul.f32 1.0, %v7521
    %v7523 = vld [vmem:[#allocation3] sm:$0xff]
    %v7524 = vmul.f32 %v7515, %v7523
    %v7525 = vmul.f32 %v7509, %v7516
    %v7526 = vadd.f32 %v7524, %v7525
    %7527 = vst [vmem:[#allocation3] sm:$0xff] %v7526
    %v7528 = vtanh.pop %v7526
    %v7529 = vmul.f32 %v7522, %v7528
    %7530 = vst [vmem:[#allocation2] sm:$0xff] %v7529
    %v7531 = vld [vmem:[#allocation2] sm:$0xff]
    %v7532 = vpack.c.bf16 %v7531, %v7531
    %v7533 = vld [vmem:[#allocation12] sm:$0xf]
    %v7534 = vld [vmem:[#allocation12 + $0x4] sm:$0xf]
    %v7535 = vld [vmem:[#allocation12 + $0x8] sm:$0xf]
    %v7536 = vld [vmem:[#allocation12 + $0xc] sm:$0xf]
    %v7537 = vld [vmem:[#allocation12 + $0x10] sm:$0xf]
    %v7538 = vld [vmem:[#allocation12 + $0x14] sm:$0xf]
    %v7539 = vld [vmem:[#allocation12 + $0x18] sm:$0xf]
    %v7540 = vld [vmem:[#allocation12 + $0x1c] sm:$0xf]
    %v7541 = vld [vmem:[#allocation12 + $0x20] sm:$0xf]
    %v7542 = vld [vmem:[#allocation12 + $0x24] sm:$0xf]
    %v7543 = vld [vmem:[#allocation12 + $0x28] sm:$0xf]
    %v7544 = vld [vmem:[#allocation12 + $0x2c] sm:$0xf]
    %v7545 = vld [vmem:[#allocation12 + $0x30] sm:$0xf]
    %v7546 = vld [vmem:[#allocation12 + $0x34] sm:$0xf]
    %v7547 = vld [vmem:[#allocation12 + $0x38] sm:$0xf]
    %v7548 = vld [vmem:[#allocation12 + $0x3c] sm:$0xf]
    %v7565 = vunpack.c.l.b16 %v7533
    %v7566 = vunpack.c.l.b16 %v7534
    %v7567 = vunpack.c.l.b16 %v7535
    %v7568 = vunpack.c.l.b16 %v7536
    %v7569 = vunpack.c.l.b16 %v7537
    %v7570 = vunpack.c.l.b16 %v7538
    %v7571 = vunpack.c.l.b16 %v7539
    %v7572 = vunpack.c.l.b16 %v7540
    %v7573 = vunpack.c.l.b16 %v7541
    %v7574 = vunpack.c.l.b16 %v7542
    %v7575 = vunpack.c.l.b16 %v7543
    %v7576 = vunpack.c.l.b16 %v7544
    %v7577 = vunpack.c.l.b16 %v7545
    %v7578 = vunpack.c.l.b16 %v7546
    %v7579 = vunpack.c.l.b16 %v7547
    %v7580 = vunpack.c.l.b16 %v7548
    %v7581 = vpack.c.b16 %v7566, %v7565
    %v7582 = vpack.c.b16 %v7568, %v7567
    %v7583 = vpack.c.b16 %v7570, %v7569
    %v7584 = vpack.c.b16 %v7572, %v7571
    %v7585 = vpack.c.b16 %v7574, %v7573
    %v7586 = vpack.c.b16 %v7576, %v7575
    %v7587 = vpack.c.b16 %v7578, %v7577
    %v7588 = vpack.c.b16 %v7580, %v7579
    %7597 = vmatprep.subr.bf16.mxu0 0
    %7598 = vmatpush1.bf16.msra.mxu0 %v7581
    %7599 = vmatprep.subr.bf16.mxu0 0
    %7600 = vmatpush1.bf16.msra.mxu0 %v7582
    %7601 = vmatprep.subr.bf16.mxu0 0
    %7602 = vmatpush1.bf16.msra.mxu0 %v7583
    %7603 = vmatprep.subr.bf16.mxu0 0
    %7604 = vmatpush1.bf16.msra.mxu0 %v7584
    %7605 = vmatprep.subr.bf16.mxu0 0
    %7606 = vmatpush1.bf16.msra.mxu0 %v7585
    %7607 = vmatprep.subr.bf16.mxu0 0
    %7608 = vmatpush1.bf16.msra.mxu0 %v7586
    %7609 = vmatprep.subr.bf16.mxu0 0
    %7610 = vmatpush1.bf16.msra.mxu0 %v7587
    %7611 = vmatprep.subr.bf16.mxu0 0
    %7612 = vmatpush1.bf16.msra.mxu0 %v7588
    %7613 = vmatprep.subr.bf16.mxu0 0
    %7614 = vmatpush1.bf16.msra.mxu0 0
    %7615 = vmatprep.subr.bf16.mxu0 0
    %7616 = vmatpush1.bf16.msra.mxu0 0
    %7617 = vmatprep.subr.bf16.mxu0 0
    %7618 = vmatpush1.bf16.msra.mxu0 0
    %7619 = vmatprep.subr.bf16.mxu0 0
    %7620 = vmatpush1.bf16.msra.mxu0 0
    %7621 = vmatprep.subr.bf16.mxu0 0
    %7622 = vmatpush1.bf16.msra.mxu0 0
    %7623 = vmatprep.subr.bf16.mxu0 0
    %7624 = vmatpush1.bf16.msra.mxu0 0
    %7625 = vmatprep.subr.bf16.mxu0 0
    %7626 = vmatpush1.bf16.msra.mxu0 0
    %7627 = vmatprep.subr.bf16.mxu0 0
    %7628 = vmatpush1.bf16.msra.mxu0 0
    %7629 = vmatprep.mubr.bf16.mxu0 0
    %7630 = vmatmul.mubr.bf16.gmra.mrb[0].mxu0 %v7532
    %v7631 = vpop.f32.mrb[0].mxu0
    %v7632 = vadd.f32 %v117, %v7631
    %v7633 = vpop.f32.mrb[0].mxu0
    %v7634 = vpop.f32.mrb[0].mxu0
    %v7635 = vpop.f32.mrb[0].mxu0
    %7636 = vdwg.mxu0
    %s7637 = scalar_lea.vmem %s11, 32
    %7638 = vst [vmem:[%s7637] sm:$0xff] %v7632
    %7639 = vmax.xlane.f32.xlu0 %v7632
    %v7640 = vpop.xlane.xlu0 %7639
    %vm7641 = vcmp.ge.f32.partialorder %v7632, %v7640
    %v7642 = vsel %vm7641, %v119, 128
    %v7643 = vand.u32 %v7642, 65535
    %v7644 = vshra.s32 %v7642, 16
    %v7645 = vcvt.s32.f32 %v7643
    %v7646 = vcvt.s32.f32 %v7644
    %7647 = vmin.xlane.f32.xlu0 %v7646
    %v7648 = vpop.xlane.xlu0 %7647
    %vm7649 = vcmp.eq.f32.partialorder %v7646, %v7648
    %v7650 = vsel %vm7649, %v7645, inf
    %7651 = vmin.xlane.f32.xlu0 %v7650
    %v7652 = vpop.xlane.xlu0 %7651
    %v7653 = vcvt.f32.s32 %v7652
    %v7654 = vcvt.f32.s32 %v7648
    %v7655 = vshll.u32 %v7654, 16
    %v7656 = vadd.s32 %v7655, %v7653
    %vm7657 = vcmp.eq.s32.totalorder %v119, %v7656
    %v7658 = vsel %vm7657, 1, 0
    %v7659 = vcvt.s32.f32 %v7658
    %v7660 = vpack.c.bf16 %v7659, %v7659
    %s7661 = sld [smem:[#allocation5 + $0x4]]
    %p7662 = scmp.gt.s32.totalorder %s7661, 0
    %s7663 = scalar_lea.vmem %s2, 16
    %v7664 = vld [vmem:[%s7663] sm:$0xf]
    %s7665 = scalar_select %p7662, 1, 0
    %v7666 = vstv %s7665
    %vm7667 = vcmp.eq.s32.totalorder %v7666, 1
    %v7668 = vsel %vm7667, %v7664, %v7660
    %7669 = vst [vmem:[#allocation4] sm:$0xf] %v7668
    %v7670 = vld [vmem:[#allocation4] sm:$0xf]
    %v7671 = vld [vmem:[#allocation9] sm:$0xff]
    %v7672 = vld [vmem:[#allocation9 + $0x8] sm:$0xff]
    %v7673 = vld [vmem:[#allocation9 + $0x10] sm:$0xff]
    %v7674 = vld [vmem:[#allocation9 + $0x18] sm:$0xff]
    %v7675 = vld [vmem:[#allocation9 + $0x20] sm:$0xff]
    %v7676 = vld [vmem:[#allocation9 + $0x28] sm:$0xff]
    %v7677 = vld [vmem:[#allocation9 + $0x30] sm:$0xff]
    %v7678 = vld [vmem:[#allocation9 + $0x38] sm:$0xff]
    %v7679 = vld [vmem:[#allocation9 + $0x40] sm:$0xff]
    %v7680 = vld [vmem:[#allocation9 + $0x48] sm:$0xff]
    %v7681 = vld [vmem:[#allocation9 + $0x50] sm:$0xff]
    %v7682 = vld [vmem:[#allocation9 + $0x58] sm:$0xff]
    %v7683 = vld [vmem:[#allocation9 + $0x60] sm:$0xff]
    %v7684 = vld [vmem:[#allocation9 + $0x68] sm:$0xff]
    %v7685 = vld [vmem:[#allocation9 + $0x70] sm:$0xff]
    %v7686 = vld [vmem:[#allocation9 + $0x78] sm:$0xff]
    %v7687 = vld [vmem:[#allocation9 + $0x80] sm:$0xff]
    %v7688 = vld [vmem:[#allocation9 + $0x88] sm:$0xff]
    %v7689 = vld [vmem:[#allocation9 + $0x90] sm:$0xff]
    %v7690 = vld [vmem:[#allocation9 + $0x98] sm:$0xff]
    %v7691 = vld [vmem:[#allocation9 + $0xa0] sm:$0xff]
    %v7692 = vld [vmem:[#allocation9 + $0xa8] sm:$0xff]
    %v7693 = vld [vmem:[#allocation9 + $0xb0] sm:$0xff]
    %v7694 = vld [vmem:[#allocation9 + $0xb8] sm:$0xff]
    %v7695 = vld [vmem:[#allocation9 + $0xc0] sm:$0xff]
    %v7696 = vld [vmem:[#allocation9 + $0xc8] sm:$0xff]
    %v7697 = vld [vmem:[#allocation9 + $0xd0] sm:$0xff]
    %v7698 = vld [vmem:[#allocation9 + $0xd8] sm:$0xff]
    %v7699 = vld [vmem:[#allocation9 + $0xe0] sm:$0xff]
    %v7700 = vld [vmem:[#allocation9 + $0xe8] sm:$0xff]
    %v7701 = vld [vmem:[#allocation9 + $0xf0] sm:$0xff]
    %v7702 = vld [vmem:[#allocation9 + $0xf8] sm:$0xff]
    %v7703 = vld [vmem:[#allocation2] sm:$0xff]
    %v7704 = vpack.c.bf16 %v7703, %v7703
    %v7705 = vld [vmem:[#allocation11] sm:$0xff]
    %v7706 = vld [vmem:[#allocation11 + $0x8] sm:$0xff]
    %v7707 = vld [vmem:[#allocation11 + $0x10] sm:$0xff]
    %v7708 = vld [vmem:[#allocation11 + $0x18] sm:$0xff]
    %v7709 = vld [vmem:[#allocation11 + $0x20] sm:$0xff]
    %v7710 = vld [vmem:[#allocation11 + $0x28] sm:$0xff]
    %v7711 = vld [vmem:[#allocation11 + $0x30] sm:$0xff]
    %v7712 = vld [vmem:[#allocation11 + $0x38] sm:$0xff]
    %v7713 = vld [vmem:[#allocation11 + $0x40] sm:$0xff]
    %v7714 = vld [vmem:[#allocation11 + $0x48] sm:$0xff]
    %v7715 = vld [vmem:[#allocation11 + $0x50] sm:$0xff]
    %v7716 = vld [vmem:[#allocation11 + $0x58] sm:$0xff]
    %v7717 = vld [vmem:[#allocation11 + $0x60] sm:$0xff]
    %v7718 = vld [vmem:[#allocation11 + $0x68] sm:$0xff]
    %v7719 = vld [vmem:[#allocation11 + $0x70] sm:$0xff]
    %v7720 = vld [vmem:[#allocation11 + $0x78] sm:$0xff]
    %v7721 = vld [vmem:[#allocation11 + $0x80] sm:$0xff]
    %v7722 = vld [vmem:[#allocation11 + $0x88] sm:$0xff]
    %v7723 = vld [vmem:[#allocation11 + $0x90] sm:$0xff]
    %v7724 = vld [vmem:[#allocation11 + $0x98] sm:$0xff]
    %v7725 = vld [vmem:[#allocation11 + $0xa0] sm:$0xff]
    %v7726 = vld [vmem:[#allocation11 + $0xa8] sm:$0xff]
    %v7727 = vld [vmem:[#allocation11 + $0xb0] sm:$0xff]
    %v7728 = vld [vmem:[#allocation11 + $0xb8] sm:$0xff]
    %v7729 = vld [vmem:[#allocation11 + $0xc0] sm:$0xff]
    %v7730 = vld [vmem:[#allocation11 + $0xc8] sm:$0xff]
    %v7731 = vld [vmem:[#allocation11 + $0xd0] sm:$0xff]
    %v7732 = vld [vmem:[#allocation11 + $0xd8] sm:$0xff]
    %v7733 = vld [vmem:[#allocation11 + $0xe0] sm:$0xff]
    %v7734 = vld [vmem:[#allocation11 + $0xe8] sm:$0xff]
    %v7735 = vld [vmem:[#allocation11 + $0xf0] sm:$0xff]
    %v7736 = vld [vmem:[#allocation11 + $0xf8] sm:$0xff]
    %v7769 = vunpack.c.l.b16 %v7705
    %v7770 = vunpack.c.h.b16 %v7705
    %v7771 = vunpack.c.l.b16 %v7706
    %v7772 = vunpack.c.h.b16 %v7706
    %v7773 = vunpack.c.l.b16 %v7707
    %v7774 = vunpack.c.h.b16 %v7707
    %v7775 = vunpack.c.l.b16 %v7708
    %v7776 = vunpack.c.h.b16 %v7708
    %v7777 = vunpack.c.l.b16 %v7709
    %v7778 = vunpack.c.h.b16 %v7709
    %v7779 = vunpack.c.l.b16 %v7710
    %v7780 = vunpack.c.h.b16 %v7710
    %v7781 = vunpack.c.l.b16 %v7711
    %v7782 = vunpack.c.h.b16 %v7711
    %v7783 = vunpack.c.l.b16 %v7712
    %v7784 = vunpack.c.h.b16 %v7712
    %v7785 = vunpack.c.l.b16 %v7713
    %v7786 = vunpack.c.h.b16 %v7713
    %v7787 = vunpack.c.l.b16 %v7714
    %v7788 = vunpack.c.h.b16 %v7714
    %v7789 = vunpack.c.l.b16 %v7715
    %v7790 = vunpack.c.h.b16 %v7715
    %v7791 = vunpack.c.l.b16 %v7716
    %v7792 = vunpack.c.h.b16 %v7716
    %v7793 = vunpack.c.l.b16 %v7717
    %v7794 = vunpack.c.h.b16 %v7717
    %v7795 = vunpack.c.l.b16 %v7718
    %v7796 = vunpack.c.h.b16 %v7718
    %v7797 = vunpack.c.l.b16 %v7719
    %v7798 = vunpack.c.h.b16 %v7719
    %v7799 = vunpack.c.l.b16 %v7720
    %v7800 = vunpack.c.h.b16 %v7720
    %v7801 = vunpack.c.l.b16 %v7721
    %v7802 = vunpack.c.h.b16 %v7721
    %v7803 = vunpack.c.l.b16 %v7722
    %v7804 = vunpack.c.h.b16 %v7722
    %v7805 = vunpack.c.l.b16 %v7723
    %v7806 = vunpack.c.h.b16 %v7723
    %v7807 = vunpack.c.l.b16 %v7724
    %v7808 = vunpack.c.h.b16 %v7724
    %v7809 = vunpack.c.l.b16 %v7725
    %v7810 = vunpack.c.h.b16 %v7725
    %v7811 = vunpack.c.l.b16 %v7726
    %v7812 = vunpack.c.h.b16 %v7726
    %v7813 = vunpack.c.l.b16 %v7727
    %v7814 = vunpack.c.h.b16 %v7727
    %v7815 = vunpack.c.l.b16 %v7728
    %v7816 = vunpack.c.h.b16 %v7728
    %v7817 = vunpack.c.l.b16 %v7729
    %v7818 = vunpack.c.h.b16 %v7729
    %v7819 = vunpack.c.l.b16 %v7730
    %v7820 = vunpack.c.h.b16 %v7730
    %v7821 = vunpack.c.l.b16 %v7731
    %v7822 = vunpack.c.h.b16 %v7731
    %v7823 = vunpack.c.l.b16 %v7732
    %v7824 = vunpack.c.h.b16 %v7732
    %v7825 = vunpack.c.l.b16 %v7733
    %v7826 = vunpack.c.h.b16 %v7733
    %v7827 = vunpack.c.l.b16 %v7734
    %v7828 = vunpack.c.h.b16 %v7734
    %v7829 = vunpack.c.l.b16 %v7735
    %v7830 = vunpack.c.h.b16 %v7735
    %v7831 = vunpack.c.l.b16 %v7736
    %v7832 = vunpack.c.h.b16 %v7736
    %v7833 = vpack.c.b16 %v7773, %v7769
    %v7834 = vpack.c.b16 %v7774, %v7770
    %v7835 = vpack.c.b16 %v7775, %v7771
    %v7836 = vpack.c.b16 %v7776, %v7772
    %v7837 = vpack.c.b16 %v7781, %v7777
    %v7838 = vpack.c.b16 %v7782, %v7778
    %v7839 = vpack.c.b16 %v7783, %v7779
    %v7840 = vpack.c.b16 %v7784, %v7780
    %v7841 = vpack.c.b16 %v7789, %v7785
    %v7842 = vpack.c.b16 %v7790, %v7786
    %v7843 = vpack.c.b16 %v7791, %v7787
    %v7844 = vpack.c.b16 %v7792, %v7788
    %v7845 = vpack.c.b16 %v7797, %v7793
    %v7846 = vpack.c.b16 %v7798, %v7794
    %v7847 = vpack.c.b16 %v7799, %v7795
    %v7848 = vpack.c.b16 %v7800, %v7796
    %v7849 = vpack.c.b16 %v7805, %v7801
    %v7850 = vpack.c.b16 %v7806, %v7802
    %v7851 = vpack.c.b16 %v7807, %v7803
    %v7852 = vpack.c.b16 %v7808, %v7804
    %v7853 = vpack.c.b16 %v7813, %v7809
    %v7854 = vpack.c.b16 %v7814, %v7810
    %v7855 = vpack.c.b16 %v7815, %v7811
    %v7856 = vpack.c.b16 %v7816, %v7812
    %v7857 = vpack.c.b16 %v7821, %v7817
    %v7858 = vpack.c.b16 %v7822, %v7818
    %v7859 = vpack.c.b16 %v7823, %v7819
    %v7860 = vpack.c.b16 %v7824, %v7820
    %v7861 = vpack.c.b16 %v7829, %v7825
    %v7862 = vpack.c.b16 %v7830, %v7826
    %v7863 = vpack.c.b16 %v7831, %v7827
    %v7864 = vpack.c.b16 %v7832, %v7828
    %7897 = vmatprep.subr.bf16.mxu0 %v7834
    %7898 = vmatpush1.bf16.msra.mxu0 %v7833
    %7899 = vmatprep.subr.bf16.mxu0 %v7838
    %7900 = vmatpush1.bf16.msra.mxu0 %v7837
    %7901 = vmatprep.subr.bf16.mxu0 %v7842
    %7902 = vmatpush1.bf16.msra.mxu0 %v7841
    %7903 = vmatprep.subr.bf16.mxu0 %v7846
    %7904 = vmatpush1.bf16.msra.mxu0 %v7845
    %7905 = vmatprep.subr.bf16.mxu0 %v7850
    %7906 = vmatpush1.bf16.msra.mxu0 %v7849
    %7907 = vmatprep.subr.bf16.mxu0 %v7854
    %7908 = vmatpush1.bf16.msra.mxu0 %v7853
    %7909 = vmatprep.subr.bf16.mxu0 %v7858
    %7910 = vmatpush1.bf16.msra.mxu0 %v7857
    %7911 = vmatprep.subr.bf16.mxu0 %v7862
    %7912 = vmatpush1.bf16.msra.mxu0 %v7861
    %7913 = vmatprep.subr.bf16.mxu0 0
    %7914 = vmatpush1.bf16.msra.mxu0 0
    %7915 = vmatprep.subr.bf16.mxu0 0
    %7916 = vmatpush1.bf16.msra.mxu0 0
    %7917 = vmatprep.subr.bf16.mxu0 0
    %7918 = vmatpush1.bf16.msra.mxu0 0
    %7919 = vmatprep.subr.bf16.mxu0 0
    %7920 = vmatpush1.bf16.msra.mxu0 0
    %7921 = vmatprep.subr.bf16.mxu0 0
    %7922 = vmatpush1.bf16.msra.mxu0 0
    %7923 = vmatprep.subr.bf16.mxu0 0
    %7924 = vmatpush1.bf16.msra.mxu0 0
    %7925 = vmatprep.subr.bf16.mxu0 0
    %7926 = vmatpush1.bf16.msra.mxu0 0
    %7927 = vmatprep.subr.bf16.mxu0 0
    %7928 = vmatpush1.bf16.msra.mxu0 0
    %7929 = vmatprep.mubr.bf16.mxu0 0
    %7930 = vmatmul.mubr.bf16.gmra.mrb[0].mxu0 %v7704
    %v7931 = vpop.f32.mrb[0].mxu0
    %v7932 = vadd.f32 0.0, %v7931
    %v7933 = vpop.f32.mrb[0].mxu0
    %v7934 = vadd.f32 0.0, %v7933
    %v7935 = vpop.f32.mrb[0].mxu0
    %v7936 = vpop.f32.mrb[0].mxu0
    %7937 = vdwg.mxu0
    %7938 = vmatprep.subr.bf16.mxu0 %v7836
    %7939 = vmatpush1.bf16.msra.mxu0 %v7835
    %7940 = vmatprep.subr.bf16.mxu0 %v7840
    %7941 = vmatpush1.bf16.msra.mxu0 %v7839
    %7942 = vmatprep.subr.bf16.mxu0 %v7844
    %7943 = vmatpush1.bf16.msra.mxu0 %v7843
    %7944 = vmatprep.subr.bf16.mxu0 %v7848
    %7945 = vmatpush1.bf16.msra.mxu0 %v7847
    %7946 = vmatprep.subr.bf16.mxu0 %v7852
    %7947 = vmatpush1.bf16.msra.mxu0 %v7851
    %7948 = vmatprep.subr.bf16.mxu0 %v7856
    %7949 = vmatpush1.bf16.msra.mxu0 %v7855
    %7950 = vmatprep.subr.bf16.mxu0 %v7860
    %7951 = vmatpush1.bf16.msra.mxu0 %v7859
    %7952 = vmatprep.subr.bf16.mxu0 %v7864
    %7953 = vmatpush1.bf16.msra.mxu0 %v7863
    %7954 = vmatprep.subr.bf16.mxu0 0
    %7955 = vmatpush1.bf16.msra.mxu0 0
    %7956 = vmatprep.subr.bf16.mxu0 0
    %7957 = vmatpush1.bf16.msra.mxu0 0
    %7958 = vmatprep.subr.bf16.mxu0 0
    %7959 = vmatpush1.bf16.msra.mxu0 0
    %7960 = vmatprep.subr.bf16.mxu0 0
    %7961 = vmatpush1.bf16.msra.mxu0 0
    %7962 = vmatprep.subr.bf16.mxu0 0
    %7963 = vmatpush1.bf16.msra.mxu0 0
    %7964 = vmatprep.subr.bf16.mxu0 0
    %7965 = vmatpush1.bf16.msra.mxu0 0
    %7966 = vmatprep.subr.bf16.mxu0 0
    %7967 = vmatpush1.bf16.msra.mxu0 0
    %7968 = vmatprep.subr.bf16.mxu0 0
    %7969 = vmatpush1.bf16.msra.mxu0 0
    %7970 = vmatprep.mubr.bf16.mxu0 0
    %7971 = vmatmul.mubr.bf16.gmra.mrb[0].mxu0 %v7704
    %v7972 = vpop.f32.mrb[0].mxu0
    %v7973 = vadd.f32 0.0, %v7972
    %v7974 = vpop.f32.mrb[0].mxu0
    %v7975 = vadd.f32 0.0, %v7974
    %v7976 = vpop.f32.mrb[0].mxu0
    %v7977 = vpop.f32.mrb[0].mxu0
    %7978 = vdwg.mxu0
    %v8011 = vunpack.c.l.b16 %v7671
    %v8012 = vunpack.c.h.b16 %v7671
    %v8013 = vunpack.c.l.b16 %v7672
    %v8014 = vunpack.c.h.b16 %v7672
    %v8015 = vunpack.c.l.b16 %v7673
    %v8016 = vunpack.c.h.b16 %v7673
    %v8017 = vunpack.c.l.b16 %v7674
    %v8018 = vunpack.c.h.b16 %v7674
    %v8019 = vunpack.c.l.b16 %v7675
    %v8020 = vunpack.c.h.b16 %v7675
    %v8021 = vunpack.c.l.b16 %v7676
    %v8022 = vunpack.c.h.b16 %v7676
    %v8023 = vunpack.c.l.b16 %v7677
    %v8024 = vunpack.c.h.b16 %v7677
    %v8025 = vunpack.c.l.b16 %v7678
    %v8026 = vunpack.c.h.b16 %v7678
    %v8027 = vunpack.c.l.b16 %v7679
    %v8028 = vunpack.c.h.b16 %v7679
    %v8029 = vunpack.c.l.b16 %v7680
    %v8030 = vunpack.c.h.b16 %v7680
    %v8031 = vunpack.c.l.b16 %v7681
    %v8032 = vunpack.c.h.b16 %v7681
    %v8033 = vunpack.c.l.b16 %v7682
    %v8034 = vunpack.c.h.b16 %v7682
    %v8035 = vunpack.c.l.b16 %v7683
    %v8036 = vunpack.c.h.b16 %v7683
    %v8037 = vunpack.c.l.b16 %v7684
    %v8038 = vunpack.c.h.b16 %v7684
    %v8039 = vunpack.c.l.b16 %v7685
    %v8040 = vunpack.c.h.b16 %v7685
    %v8041 = vunpack.c.l.b16 %v7686
    %v8042 = vunpack.c.h.b16 %v7686
    %v8043 = vunpack.c.l.b16 %v7687
    %v8044 = vunpack.c.h.b16 %v7687
    %v8045 = vunpack.c.l.b16 %v7688
    %v8046 = vunpack.c.h.b16 %v7688
    %v8047 = vunpack.c.l.b16 %v7689
    %v8048 = vunpack.c.h.b16 %v7689
    %v8049 = vunpack.c.l.b16 %v7690
    %v8050 = vunpack.c.h.b16 %v7690
    %v8051 = vunpack.c.l.b16 %v7691
    %v8052 = vunpack.c.h.b16 %v7691
    %v8053 = vunpack.c.l.b16 %v7692
    %v8054 = vunpack.c.h.b16 %v7692
    %v8055 = vunpack.c.l.b16 %v7693
    %v8056 = vunpack.c.h.b16 %v7693
    %v8057 = vunpack.c.l.b16 %v7694
    %v8058 = vunpack.c.h.b16 %v7694
    %v8059 = vunpack.c.l.b16 %v7695
    %v8060 = vunpack.c.h.b16 %v7695
    %v8061 = vunpack.c.l.b16 %v7696
    %v8062 = vunpack.c.h.b16 %v7696
    %v8063 = vunpack.c.l.b16 %v7697
    %v8064 = vunpack.c.h.b16 %v7697
    %v8065 = vunpack.c.l.b16 %v7698
    %v8066 = vunpack.c.h.b16 %v7698
    %v8067 = vunpack.c.l.b16 %v7699
    %v8068 = vunpack.c.h.b16 %v7699
    %v8069 = vunpack.c.l.b16 %v7700
    %v8070 = vunpack.c.h.b16 %v7700
    %v8071 = vunpack.c.l.b16 %v7701
    %v8072 = vunpack.c.h.b16 %v7701
    %v8073 = vunpack.c.l.b16 %v7702
    %v8074 = vunpack.c.h.b16 %v7702
    %v8075 = vpack.c.b16 %v8015, %v8011
    %v8076 = vpack.c.b16 %v8016, %v8012
    %v8077 = vpack.c.b16 %v8017, %v8013
    %v8078 = vpack.c.b16 %v8018, %v8014
    %v8079 = vpack.c.b16 %v8023, %v8019
    %v8080 = vpack.c.b16 %v8024, %v8020
    %v8081 = vpack.c.b16 %v8025, %v8021
    %v8082 = vpack.c.b16 %v8026, %v8022
    %v8083 = vpack.c.b16 %v8031, %v8027
    %v8084 = vpack.c.b16 %v8032, %v8028
    %v8085 = vpack.c.b16 %v8033, %v8029
    %v8086 = vpack.c.b16 %v8034, %v8030
    %v8087 = vpack.c.b16 %v8039, %v8035
    %v8088 = vpack.c.b16 %v8040, %v8036
    %v8089 = vpack.c.b16 %v8041, %v8037
    %v8090 = vpack.c.b16 %v8042, %v8038
    %v8091 = vpack.c.b16 %v8047, %v8043
    %v8092 = vpack.c.b16 %v8048, %v8044
    %v8093 = vpack.c.b16 %v8049, %v8045
    %v8094 = vpack.c.b16 %v8050, %v8046
    %v8095 = vpack.c.b16 %v8055, %v8051
    %v8096 = vpack.c.b16 %v8056, %v8052
    %v8097 = vpack.c.b16 %v8057, %v8053
    %v8098 = vpack.c.b16 %v8058, %v8054
    %v8099 = vpack.c.b16 %v8063, %v8059
    %v8100 = vpack.c.b16 %v8064, %v8060
    %v8101 = vpack.c.b16 %v8065, %v8061
    %v8102 = vpack.c.b16 %v8066, %v8062
    %v8103 = vpack.c.b16 %v8071, %v8067
    %v8104 = vpack.c.b16 %v8072, %v8068
    %v8105 = vpack.c.b16 %v8073, %v8069
    %v8106 = vpack.c.b16 %v8074, %v8070
    %8139 = vmatprep.subr.bf16.mxu0 %v8076
    %8140 = vmatpush1.bf16.msra.mxu0 %v8075
    %8141 = vmatprep.subr.bf16.mxu0 %v8080
    %8142 = vmatpush1.bf16.msra.mxu0 %v8079
    %8143 = vmatprep.subr.bf16.mxu0 %v8084
    %8144 = vmatpush1.bf16.msra.mxu0 %v8083
    %8145 = vmatprep.subr.bf16.mxu0 %v8088
    %8146 = vmatpush1.bf16.msra.mxu0 %v8087
    %8147 = vmatprep.subr.bf16.mxu0 %v8092
    %8148 = vmatpush1.bf16.msra.mxu0 %v8091
    %8149 = vmatprep.subr.bf16.mxu0 %v8096
    %8150 = vmatpush1.bf16.msra.mxu0 %v8095
    %8151 = vmatprep.subr.bf16.mxu0 %v8100
    %8152 = vmatpush1.bf16.msra.mxu0 %v8099
    %8153 = vmatprep.subr.bf16.mxu0 %v8104
    %8154 = vmatpush1.bf16.msra.mxu0 %v8103
    %8155 = vmatprep.subr.bf16.mxu0 0
    %8156 = vmatpush1.bf16.msra.mxu0 0
    %8157 = vmatprep.subr.bf16.mxu0 0
    %8158 = vmatpush1.bf16.msra.mxu0 0
    %8159 = vmatprep.subr.bf16.mxu0 0
    %8160 = vmatpush1.bf16.msra.mxu0 0
    %8161 = vmatprep.subr.bf16.mxu0 0
    %8162 = vmatpush1.bf16.msra.mxu0 0
    %8163 = vmatprep.subr.bf16.mxu0 0
    %8164 = vmatpush1.bf16.msra.mxu0 0
    %8165 = vmatprep.subr.bf16.mxu0 0
    %8166 = vmatpush1.bf16.msra.mxu0 0
    %8167 = vmatprep.subr.bf16.mxu0 0
    %8168 = vmatpush1.bf16.msra.mxu0 0
    %8169 = vmatprep.subr.bf16.mxu0 0
    %8170 = vmatpush1.bf16.msra.mxu0 0
    %8171 = vmatprep.mubr.bf16.mxu0 0
    %8172 = vmatmul.mubr.bf16.gmra.mrb[0].mxu0 %v7670
    %v8173 = vpop.f32.mrb[0].mxu0
    %v8174 = vadd.f32 %v7932, %v8173
    %v8175 = vpop.f32.mrb[0].mxu0
    %v8176 = vadd.f32 %v7934, %v8175
    %v8177 = vpop.f32.mrb[0].mxu0
    %v8178 = vpop.f32.mrb[0].mxu0
    %8179 = vdwg.mxu0
    %8180 = vmatprep.subr.bf16.mxu0 %v8078
    %8181 = vmatpush1.bf16.msra.mxu0 %v8077
    %8182 = vmatprep.subr.bf16.mxu0 %v8082
    %8183 = vmatpush1.bf16.msra.mxu0 %v8081
    %8184 = vmatprep.subr.bf16.mxu0 %v8086
    %8185 = vmatpush1.bf16.msra.mxu0 %v8085
    %8186 = vmatprep.subr.bf16.mxu0 %v8090
    %8187 = vmatpush1.bf16.msra.mxu0 %v8089
    %8188 = vmatprep.subr.bf16.mxu0 %v8094
    %8189 = vmatpush1.bf16.msra.mxu0 %v8093
    %8190 = vmatprep.subr.bf16.mxu0 %v8098
    %8191 = vmatpush1.bf16.msra.mxu0 %v8097
    %8192 = vmatprep.subr.bf16.mxu0 %v8102
    %8193 = vmatpush1.bf16.msra.mxu0 %v8101
    %8194 = vmatprep.subr.bf16.mxu0 %v8106
    %8195 = vmatpush1.bf16.msra.mxu0 %v8105
    %8196 = vmatprep.subr.bf16.mxu0 0
    %8197 = vmatpush1.bf16.msra.mxu0 0
    %8198 = vmatprep.subr.bf16.mxu0 0
    %8199 = vmatpush1.bf16.msra.mxu0 0
    %8200 = vmatprep.subr.bf16.mxu0 0
    %8201 = vmatpush1.bf16.msra.mxu0 0
    %8202 = vmatprep.subr.bf16.mxu0 0
    %8203 = vmatpush1.bf16.msra.mxu0 0
    %8204 = vmatprep.subr.bf16.mxu0 0
    %8205 = vmatpush1.bf16.msra.mxu0 0
    %8206 = vmatprep.subr.bf16.mxu0 0
    %8207 = vmatpush1.bf16.msra.mxu0 0
    %8208 = vmatprep.subr.bf16.mxu0 0
    %8209 = vmatpush1.bf16.msra.mxu0 0
    %8210 = vmatprep.subr.bf16.mxu0 0
    %8211 = vmatpush1.bf16.msra.mxu0 0
    %8212 = vmatprep.mubr.bf16.mxu0 0
    %8213 = vmatmul.mubr.bf16.gmra.mrb[0].mxu0 %v7670
    %v8214 = vpop.f32.mrb[0].mxu0
    %v8215 = vadd.f32 %v7973, %v8214
    %v8216 = vpop.f32.mrb[0].mxu0
    %v8217 = vadd.f32 %v7975, %v8216
    %v8218 = vpop.f32.mrb[0].mxu0
    %v8219 = vpop.f32.mrb[0].mxu0
    %8220 = vdwg.mxu0
    %v8221 = vadd.f32 %v8174, %v113
    %v8222 = vadd.f32 %v8176, %v114
    %v8223 = vadd.f32 %v8215, %v115
    %v8224 = vadd.f32 %v8217, %v116
    %v8225 = vxor.u32 %v8221, 2147483648
    %v8226 = vmul.f32 %v8225, 1.442695
    %v8227 = vpow.pop %v8226
    %v8228 = vadd.f32 %v8227, 1.0
    %v8229 = vrcp.pop %v8228
    %v8230 = vmul.f32 1.0, %v8229
    %v8231 = vxor.u32 %v8222, 2147483648
    %v8232 = vmul.f32 %v8231, 1.442695
    %v8233 = vpow.pop %v8232
    %v8234 = vadd.f32 %v8233, 1.0
    %v8235 = vrcp.pop %v8234
    %v8236 = vmul.f32 1.0, %v8235
    %v8237 = vtanh.pop %v8223
    %v8238 = vxor.u32 %v8224, 2147483648
    %v8239 = vmul.f32 %v8238, 1.442695
    %v8240 = vpow.pop %v8239
    %v8241 = vadd.f32 %v8240, 1.0
    %v8242 = vrcp.pop %v8241
    %v8243 = vmul.f32 1.0, %v8242
    %v8244 = vld [vmem:[#allocation3] sm:$0xff]
    %v8245 = vmul.f32 %v8236, %v8244
    %v8246 = vmul.f32 %v8230, %v8237
    %v8247 = vadd.f32 %v8245, %v8246
    %8248 = vst [vmem:[#allocation3] sm:$0xff] %v8247
    %v8249 = vtanh.pop %v8247
    %v8250 = vmul.f32 %v8243, %v8249
    %8251 = vst [vmem:[#allocation2] sm:$0xff] %v8250
    %v8252 = vld [vmem:[#allocation2] sm:$0xff]
    %v8253 = vpack.c.bf16 %v8252, %v8252
    %v8254 = vld [vmem:[#allocation12] sm:$0xf]
    %v8255 = vld [vmem:[#allocation12 + $0x4] sm:$0xf]
    %v8256 = vld [vmem:[#allocation12 + $0x8] sm:$0xf]
    %v8257 = vld [vmem:[#allocation12 + $0xc] sm:$0xf]
    %v8258 = vld [vmem:[#allocation12 + $0x10] sm:$0xf]
    %v8259 = vld [vmem:[#allocation12 + $0x14] sm:$0xf]
    %v8260 = vld [vmem:[#allocation12 + $0x18] sm:$0xf]
    %v8261 = vld [vmem:[#allocation12 + $0x1c] sm:$0xf]
    %v8262 = vld [vmem:[#allocation12 + $0x20] sm:$0xf]
    %v8263 = vld [vmem:[#allocation12 + $0x24] sm:$0xf]
    %v8264 = vld [vmem:[#allocation12 + $0x28] sm:$0xf]
    %v8265 = vld [vmem:[#allocation12 + $0x2c] sm:$0xf]
    %v8266 = vld [vmem:[#allocation12 + $0x30] sm:$0xf]
    %v8267 = vld [vmem:[#allocation12 + $0x34] sm:$0xf]
    %v8268 = vld [vmem:[#allocation12 + $0x38] sm:$0xf]
    %v8269 = vld [vmem:[#allocation12 + $0x3c] sm:$0xf]
    %v8286 = vunpack.c.l.b16 %v8254
    %v8287 = vunpack.c.l.b16 %v8255
    %v8288 = vunpack.c.l.b16 %v8256
    %v8289 = vunpack.c.l.b16 %v8257
    %v8290 = vunpack.c.l.b16 %v8258
    %v8291 = vunpack.c.l.b16 %v8259
    %v8292 = vunpack.c.l.b16 %v8260
    %v8293 = vunpack.c.l.b16 %v8261
    %v8294 = vunpack.c.l.b16 %v8262
    %v8295 = vunpack.c.l.b16 %v8263
    %v8296 = vunpack.c.l.b16 %v8264
    %v8297 = vunpack.c.l.b16 %v8265
    %v8298 = vunpack.c.l.b16 %v8266
    %v8299 = vunpack.c.l.b16 %v8267
    %v8300 = vunpack.c.l.b16 %v8268
    %v8301 = vunpack.c.l.b16 %v8269
    %v8302 = vpack.c.b16 %v8287, %v8286
    %v8303 = vpack.c.b16 %v8289, %v8288
    %v8304 = vpack.c.b16 %v8291, %v8290
    %v8305 = vpack.c.b16 %v8293, %v8292
    %v8306 = vpack.c.b16 %v8295, %v8294
    %v8307 = vpack.c.b16 %v8297, %v8296
    %v8308 = vpack.c.b16 %v8299, %v8298
    %v8309 = vpack.c.b16 %v8301, %v8300
    %8318 = vmatprep.subr.bf16.mxu0 0
    %8319 = vmatpush1.bf16.msra.mxu0 %v8302
    %8320 = vmatprep.subr.bf16.mxu0 0
    %8321 = vmatpush1.bf16.msra.mxu0 %v8303
    %8322 = vmatprep.subr.bf16.mxu0 0
    %8323 = vmatpush1.bf16.msra.mxu0 %v8304
    %8324 = vmatprep.subr.bf16.mxu0 0
    %8325 = vmatpush1.bf16.msra.mxu0 %v8305
    %8326 = vmatprep.subr.bf16.mxu0 0
    %8327 = vmatpush1.bf16.msra.mxu0 %v8306
    %8328 = vmatprep.subr.bf16.mxu0 0
    %8329 = vmatpush1.bf16.msra.mxu0 %v8307
    %8330 = vmatprep.subr.bf16.mxu0 0
    %8331 = vmatpush1.bf16.msra.mxu0 %v8308
    %8332 = vmatprep.subr.bf16.mxu0 0
    %8333 = vmatpush1.bf16.msra.mxu0 %v8309
    %8334 = vmatprep.subr.bf16.mxu0 0
    %8335 = vmatpush1.bf16.msra.mxu0 0
    %8336 = vmatprep.subr.bf16.mxu0 0
    %8337 = vmatpush1.bf16.msra.mxu0 0
    %8338 = vmatprep.subr.bf16.mxu0 0
    %8339 = vmatpush1.bf16.msra.mxu0 0
    %8340 = vmatprep.subr.bf16.mxu0 0
    %8341 = vmatpush1.bf16.msra.mxu0 0
    %8342 = vmatprep.subr.bf16.mxu0 0
    %8343 = vmatpush1.bf16.msra.mxu0 0
    %8344 = vmatprep.subr.bf16.mxu0 0
    %8345 = vmatpush1.bf16.msra.mxu0 0
    %8346 = vmatprep.subr.bf16.mxu0 0
    %8347 = vmatpush1.bf16.msra.mxu0 0
    %8348 = vmatprep.subr.bf16.mxu0 0
    %8349 = vmatpush1.bf16.msra.mxu0 0
    %8350 = vmatprep.mubr.bf16.mxu0 0
    %8351 = vmatmul.mubr.bf16.gmra.mrb[0].mxu0 %v8253
    %v8352 = vpop.f32.mrb[0].mxu0
    %v8353 = vadd.f32 %v117, %v8352
    %v8354 = vpop.f32.mrb[0].mxu0
    %v8355 = vpop.f32.mrb[0].mxu0
    %v8356 = vpop.f32.mrb[0].mxu0
    %8357 = vdwg.mxu0
    %s8358 = scalar_lea.vmem %s11, 40
    %8359 = vst [vmem:[%s8358] sm:$0xff] %v8353
    %8360 = vmax.xlane.f32.xlu0 %v8353
    %v8361 = vpop.xlane.xlu0 %8360
    %vm8362 = vcmp.ge.f32.partialorder %v8353, %v8361
    %v8363 = vsel %vm8362, %v119, 128
    %v8364 = vand.u32 %v8363, 65535
    %v8365 = vshra.s32 %v8363, 16
    %v8366 = vcvt.s32.f32 %v8364
    %v8367 = vcvt.s32.f32 %v8365
    %8368 = vmin.xlane.f32.xlu0 %v8367
    %v8369 = vpop.xlane.xlu0 %8368
    %vm8370 = vcmp.eq.f32.partialorder %v8367, %v8369
    %v8371 = vsel %vm8370, %v8366, inf
    %8372 = vmin.xlane.f32.xlu0 %v8371
    %v8373 = vpop.xlane.xlu0 %8372
    %v8374 = vcvt.f32.s32 %v8373
    %v8375 = vcvt.f32.s32 %v8369
    %v8376 = vshll.u32 %v8375, 16
    %v8377 = vadd.s32 %v8376, %v8374
    %vm8378 = vcmp.eq.s32.totalorder %v119, %v8377
    %v8379 = vsel %vm8378, 1, 0
    %v8380 = vcvt.s32.f32 %v8379
    %v8381 = vpack.c.bf16 %v8380, %v8380
    %s8382 = sld [smem:[#allocation5 + $0x5]]
    %p8383 = scmp.gt.s32.totalorder %s8382, 0
    %s8384 = scalar_lea.vmem %s2, 20
    %v8385 = vld [vmem:[%s8384] sm:$0xf]
    %s8386 = scalar_select %p8383, 1, 0
    %v8387 = vstv %s8386
    %vm8388 = vcmp.eq.s32.totalorder %v8387, 1
    %v8389 = vsel %vm8388, %v8385, %v8381
    %8390 = vst [vmem:[#allocation4] sm:$0xf] %v8389
    %v8391 = vld [vmem:[#allocation4] sm:$0xf]
    %v8392 = vld [vmem:[#allocation9] sm:$0xff]
    %v8393 = vld [vmem:[#allocation9 + $0x8] sm:$0xff]
    %v8394 = vld [vmem:[#allocation9 + $0x10] sm:$0xff]
    %v8395 = vld [vmem:[#allocation9 + $0x18] sm:$0xff]
    %v8396 = vld [vmem:[#allocation9 + $0x20] sm:$0xff]
    %v8397 = vld [vmem:[#allocation9 + $0x28] sm:$0xff]
    %v8398 = vld [vmem:[#allocation9 + $0x30] sm:$0xff]
    %v8399 = vld [vmem:[#allocation9 + $0x38] sm:$0xff]
    %v8400 = vld [vmem:[#allocation9 + $0x40] sm:$0xff]
    %v8401 = vld [vmem:[#allocation9 + $0x48] sm:$0xff]
    %v8402 = vld [vmem:[#allocation9 + $0x50] sm:$0xff]
    %v8403 = vld [vmem:[#allocation9 + $0x58] sm:$0xff]
    %v8404 = vld [vmem:[#allocation9 + $0x60] sm:$0xff]
    %v8405 = vld [vmem:[#allocation9 + $0x68] sm:$0xff]
    %v8406 = vld [vmem:[#allocation9 + $0x70] sm:$0xff]
    %v8407 = vld [vmem:[#allocation9 + $0x78] sm:$0xff]
    %v8408 = vld [vmem:[#allocation9 + $0x80] sm:$0xff]
    %v8409 = vld [vmem:[#allocation9 + $0x88] sm:$0xff]
    %v8410 = vld [vmem:[#allocation9 + $0x90] sm:$0xff]
    %v8411 = vld [vmem:[#allocation9 + $0x98] sm:$0xff]
    %v8412 = vld [vmem:[#allocation9 + $0xa0] sm:$0xff]
    %v8413 = vld [vmem:[#allocation9 + $0xa8] sm:$0xff]
    %v8414 = vld [vmem:[#allocation9 + $0xb0] sm:$0xff]
    %v8415 = vld [vmem:[#allocation9 + $0xb8] sm:$0xff]
    %v8416 = vld [vmem:[#allocation9 + $0xc0] sm:$0xff]
    %v8417 = vld [vmem:[#allocation9 + $0xc8] sm:$0xff]
    %v8418 = vld [vmem:[#allocation9 + $0xd0] sm:$0xff]
    %v8419 = vld [vmem:[#allocation9 + $0xd8] sm:$0xff]
    %v8420 = vld [vmem:[#allocation9 + $0xe0] sm:$0xff]
    %v8421 = vld [vmem:[#allocation9 + $0xe8] sm:$0xff]
    %v8422 = vld [vmem:[#allocation9 + $0xf0] sm:$0xff]
    %v8423 = vld [vmem:[#allocation9 + $0xf8] sm:$0xff]
    %v8424 = vld [vmem:[#allocation2] sm:$0xff]
    %v8425 = vpack.c.bf16 %v8424, %v8424
    %v8426 = vld [vmem:[#allocation11] sm:$0xff]
    %v8427 = vld [vmem:[#allocation11 + $0x8] sm:$0xff]
    %v8428 = vld [vmem:[#allocation11 + $0x10] sm:$0xff]
    %v8429 = vld [vmem:[#allocation11 + $0x18] sm:$0xff]
    %v8430 = vld [vmem:[#allocation11 + $0x20] sm:$0xff]
    %v8431 = vld [vmem:[#allocation11 + $0x28] sm:$0xff]
    %v8432 = vld [vmem:[#allocation11 + $0x30] sm:$0xff]
    %v8433 = vld [vmem:[#allocation11 + $0x38] sm:$0xff]
    %v8434 = vld [vmem:[#allocation11 + $0x40] sm:$0xff]
    %v8435 = vld [vmem:[#allocation11 + $0x48] sm:$0xff]
    %v8436 = vld [vmem:[#allocation11 + $0x50] sm:$0xff]
    %v8437 = vld [vmem:[#allocation11 + $0x58] sm:$0xff]
    %v8438 = vld [vmem:[#allocation11 + $0x60] sm:$0xff]
    %v8439 = vld [vmem:[#allocation11 + $0x68] sm:$0xff]
    %v8440 = vld [vmem:[#allocation11 + $0x70] sm:$0xff]
    %v8441 = vld [vmem:[#allocation11 + $0x78] sm:$0xff]
    %v8442 = vld [vmem:[#allocation11 + $0x80] sm:$0xff]
    %v8443 = vld [vmem:[#allocation11 + $0x88] sm:$0xff]
    %v8444 = vld [vmem:[#allocation11 + $0x90] sm:$0xff]
    %v8445 = vld [vmem:[#allocation11 + $0x98] sm:$0xff]
    %v8446 = vld [vmem:[#allocation11 + $0xa0] sm:$0xff]
    %v8447 = vld [vmem:[#allocation11 + $0xa8] sm:$0xff]
    %v8448 = vld [vmem:[#allocation11 + $0xb0] sm:$0xff]
    %v8449 = vld [vmem:[#allocation11 + $0xb8] sm:$0xff]
    %v8450 = vld [vmem:[#allocation11 + $0xc0] sm:$0xff]
    %v8451 = vld [vmem:[#allocation11 + $0xc8] sm:$0xff]
    %v8452 = vld [vmem:[#allocation11 + $0xd0] sm:$0xff]
    %v8453 = vld [vmem:[#allocation11 + $0xd8] sm:$0xff]
    %v8454 = vld [vmem:[#allocation11 + $0xe0] sm:$0xff]
    %v8455 = vld [vmem:[#allocation11 + $0xe8] sm:$0xff]
    %v8456 = vld [vmem:[#allocation11 + $0xf0] sm:$0xff]
    %v8457 = vld [vmem:[#allocation11 + $0xf8] sm:$0xff]
    %v8490 = vunpack.c.l.b16 %v8426
    %v8491 = vunpack.c.h.b16 %v8426
    %v8492 = vunpack.c.l.b16 %v8427
    %v8493 = vunpack.c.h.b16 %v8427
    %v8494 = vunpack.c.l.b16 %v8428
    %v8495 = vunpack.c.h.b16 %v8428
    %v8496 = vunpack.c.l.b16 %v8429
    %v8497 = vunpack.c.h.b16 %v8429
    %v8498 = vunpack.c.l.b16 %v8430
    %v8499 = vunpack.c.h.b16 %v8430
    %v8500 = vunpack.c.l.b16 %v8431
    %v8501 = vunpack.c.h.b16 %v8431
    %v8502 = vunpack.c.l.b16 %v8432
    %v8503 = vunpack.c.h.b16 %v8432
    %v8504 = vunpack.c.l.b16 %v8433
    %v8505 = vunpack.c.h.b16 %v8433
    %v8506 = vunpack.c.l.b16 %v8434
    %v8507 = vunpack.c.h.b16 %v8434
    %v8508 = vunpack.c.l.b16 %v8435
    %v8509 = vunpack.c.h.b16 %v8435
    %v8510 = vunpack.c.l.b16 %v8436
    %v8511 = vunpack.c.h.b16 %v8436
    %v8512 = vunpack.c.l.b16 %v8437
    %v8513 = vunpack.c.h.b16 %v8437
    %v8514 = vunpack.c.l.b16 %v8438
    %v8515 = vunpack.c.h.b16 %v8438
    %v8516 = vunpack.c.l.b16 %v8439
    %v8517 = vunpack.c.h.b16 %v8439
    %v8518 = vunpack.c.l.b16 %v8440
    %v8519 = vunpack.c.h.b16 %v8440
    %v8520 = vunpack.c.l.b16 %v8441
    %v8521 = vunpack.c.h.b16 %v8441
    %v8522 = vunpack.c.l.b16 %v8442
    %v8523 = vunpack.c.h.b16 %v8442
    %v8524 = vunpack.c.l.b16 %v8443
    %v8525 = vunpack.c.h.b16 %v8443
    %v8526 = vunpack.c.l.b16 %v8444
    %v8527 = vunpack.c.h.b16 %v8444
    %v8528 = vunpack.c.l.b16 %v8445
    %v8529 = vunpack.c.h.b16 %v8445
    %v8530 = vunpack.c.l.b16 %v8446
    %v8531 = vunpack.c.h.b16 %v8446
    %v8532 = vunpack.c.l.b16 %v8447
    %v8533 = vunpack.c.h.b16 %v8447
    %v8534 = vunpack.c.l.b16 %v8448
    %v8535 = vunpack.c.h.b16 %v8448
    %v8536 = vunpack.c.l.b16 %v8449
    %v8537 = vunpack.c.h.b16 %v8449
    %v8538 = vunpack.c.l.b16 %v8450
    %v8539 = vunpack.c.h.b16 %v8450
    %v8540 = vunpack.c.l.b16 %v8451
    %v8541 = vunpack.c.h.b16 %v8451
    %v8542 = vunpack.c.l.b16 %v8452
    %v8543 = vunpack.c.h.b16 %v8452
    %v8544 = vunpack.c.l.b16 %v8453
    %v8545 = vunpack.c.h.b16 %v8453
    %v8546 = vunpack.c.l.b16 %v8454
    %v8547 = vunpack.c.h.b16 %v8454
    %v8548 = vunpack.c.l.b16 %v8455
    %v8549 = vunpack.c.h.b16 %v8455
    %v8550 = vunpack.c.l.b16 %v8456
    %v8551 = vunpack.c.h.b16 %v8456
    %v8552 = vunpack.c.l.b16 %v8457
    %v8553 = vunpack.c.h.b16 %v8457
    %v8554 = vpack.c.b16 %v8494, %v8490
    %v8555 = vpack.c.b16 %v8495, %v8491
    %v8556 = vpack.c.b16 %v8496, %v8492
    %v8557 = vpack.c.b16 %v8497, %v8493
    %v8558 = vpack.c.b16 %v8502, %v8498
    %v8559 = vpack.c.b16 %v8503, %v8499
    %v8560 = vpack.c.b16 %v8504, %v8500
    %v8561 = vpack.c.b16 %v8505, %v8501
    %v8562 = vpack.c.b16 %v8510, %v8506
    %v8563 = vpack.c.b16 %v8511, %v8507
    %v8564 = vpack.c.b16 %v8512, %v8508
    %v8565 = vpack.c.b16 %v8513, %v8509
    %v8566 = vpack.c.b16 %v8518, %v8514
    %v8567 = vpack.c.b16 %v8519, %v8515
    %v8568 = vpack.c.b16 %v8520, %v8516
    %v8569 = vpack.c.b16 %v8521, %v8517
    %v8570 = vpack.c.b16 %v8526, %v8522
    %v8571 = vpack.c.b16 %v8527, %v8523
    %v8572 = vpack.c.b16 %v8528, %v8524
    %v8573 = vpack.c.b16 %v8529, %v8525
    %v8574 = vpack.c.b16 %v8534, %v8530
    %v8575 = vpack.c.b16 %v8535, %v8531
    %v8576 = vpack.c.b16 %v8536, %v8532
    %v8577 = vpack.c.b16 %v8537, %v8533
    %v8578 = vpack.c.b16 %v8542, %v8538
    %v8579 = vpack.c.b16 %v8543, %v8539
    %v8580 = vpack.c.b16 %v8544, %v8540
    %v8581 = vpack.c.b16 %v8545, %v8541
    %v8582 = vpack.c.b16 %v8550, %v8546
    %v8583 = vpack.c.b16 %v8551, %v8547
    %v8584 = vpack.c.b16 %v8552, %v8548
    %v8585 = vpack.c.b16 %v8553, %v8549
    %8618 = vmatprep.subr.bf16.mxu0 %v8555
    %8619 = vmatpush1.bf16.msra.mxu0 %v8554
    %8620 = vmatprep.subr.bf16.mxu0 %v8559
    %8621 = vmatpush1.bf16.msra.mxu0 %v8558
    %8622 = vmatprep.subr.bf16.mxu0 %v8563
    %8623 = vmatpush1.bf16.msra.mxu0 %v8562
    %8624 = vmatprep.subr.bf16.mxu0 %v8567
    %8625 = vmatpush1.bf16.msra.mxu0 %v8566
    %8626 = vmatprep.subr.bf16.mxu0 %v8571
    %8627 = vmatpush1.bf16.msra.mxu0 %v8570
    %8628 = vmatprep.subr.bf16.mxu0 %v8575
    %8629 = vmatpush1.bf16.msra.mxu0 %v8574
    %8630 = vmatprep.subr.bf16.mxu0 %v8579
    %8631 = vmatpush1.bf16.msra.mxu0 %v8578
    %8632 = vmatprep.subr.bf16.mxu0 %v8583
    %8633 = vmatpush1.bf16.msra.mxu0 %v8582
    %8634 = vmatprep.subr.bf16.mxu0 0
    %8635 = vmatpush1.bf16.msra.mxu0 0
    %8636 = vmatprep.subr.bf16.mxu0 0
    %8637 = vmatpush1.bf16.msra.mxu0 0
    %8638 = vmatprep.subr.bf16.mxu0 0
    %8639 = vmatpush1.bf16.msra.mxu0 0
    %8640 = vmatprep.subr.bf16.mxu0 0
    %8641 = vmatpush1.bf16.msra.mxu0 0
    %8642 = vmatprep.subr.bf16.mxu0 0
    %8643 = vmatpush1.bf16.msra.mxu0 0
    %8644 = vmatprep.subr.bf16.mxu0 0
    %8645 = vmatpush1.bf16.msra.mxu0 0
    %8646 = vmatprep.subr.bf16.mxu0 0
    %8647 = vmatpush1.bf16.msra.mxu0 0
    %8648 = vmatprep.subr.bf16.mxu0 0
    %8649 = vmatpush1.bf16.msra.mxu0 0
    %8650 = vmatprep.mubr.bf16.mxu0 0
    %8651 = vmatmul.mubr.bf16.gmra.mrb[0].mxu0 %v8425
    %v8652 = vpop.f32.mrb[0].mxu0
    %v8653 = vadd.f32 0.0, %v8652
    %v8654 = vpop.f32.mrb[0].mxu0
    %v8655 = vadd.f32 0.0, %v8654
    %v8656 = vpop.f32.mrb[0].mxu0
    %v8657 = vpop.f32.mrb[0].mxu0
    %8658 = vdwg.mxu0
    %8659 = vmatprep.subr.bf16.mxu0 %v8557
    %8660 = vmatpush1.bf16.msra.mxu0 %v8556
    %8661 = vmatprep.subr.bf16.mxu0 %v8561
    %8662 = vmatpush1.bf16.msra.mxu0 %v8560
    %8663 = vmatprep.subr.bf16.mxu0 %v8565
    %8664 = vmatpush1.bf16.msra.mxu0 %v8564
    %8665 = vmatprep.subr.bf16.mxu0 %v8569
    %8666 = vmatpush1.bf16.msra.mxu0 %v8568
    %8667 = vmatprep.subr.bf16.mxu0 %v8573
    %8668 = vmatpush1.bf16.msra.mxu0 %v8572
    %8669 = vmatprep.subr.bf16.mxu0 %v8577
    %8670 = vmatpush1.bf16.msra.mxu0 %v8576
    %8671 = vmatprep.subr.bf16.mxu0 %v8581
    %8672 = vmatpush1.bf16.msra.mxu0 %v8580
    %8673 = vmatprep.subr.bf16.mxu0 %v8585
    %8674 = vmatpush1.bf16.msra.mxu0 %v8584
    %8675 = vmatprep.subr.bf16.mxu0 0
    %8676 = vmatpush1.bf16.msra.mxu0 0
    %8677 = vmatprep.subr.bf16.mxu0 0
    %8678 = vmatpush1.bf16.msra.mxu0 0
    %8679 = vmatprep.subr.bf16.mxu0 0
    %8680 = vmatpush1.bf16.msra.mxu0 0
    %8681 = vmatprep.subr.bf16.mxu0 0
    %8682 = vmatpush1.bf16.msra.mxu0 0
    %8683 = vmatprep.subr.bf16.mxu0 0
    %8684 = vmatpush1.bf16.msra.mxu0 0
    %8685 = vmatprep.subr.bf16.mxu0 0
    %8686 = vmatpush1.bf16.msra.mxu0 0
    %8687 = vmatprep.subr.bf16.mxu0 0
    %8688 = vmatpush1.bf16.msra.mxu0 0
    %8689 = vmatprep.subr.bf16.mxu0 0
    %8690 = vmatpush1.bf16.msra.mxu0 0
    %8691 = vmatprep.mubr.bf16.mxu0 0
    %8692 = vmatmul.mubr.bf16.gmra.mrb[0].mxu0 %v8425
    %v8693 = vpop.f32.mrb[0].mxu0
    %v8694 = vadd.f32 0.0, %v8693
    %v8695 = vpop.f32.mrb[0].mxu0
    %v8696 = vadd.f32 0.0, %v8695
    %v8697 = vpop.f32.mrb[0].mxu0
    %v8698 = vpop.f32.mrb[0].mxu0
    %8699 = vdwg.mxu0
    %v8732 = vunpack.c.l.b16 %v8392
    %v8733 = vunpack.c.h.b16 %v8392
    %v8734 = vunpack.c.l.b16 %v8393
    %v8735 = vunpack.c.h.b16 %v8393
    %v8736 = vunpack.c.l.b16 %v8394
    %v8737 = vunpack.c.h.b16 %v8394
    %v8738 = vunpack.c.l.b16 %v8395
    %v8739 = vunpack.c.h.b16 %v8395
    %v8740 = vunpack.c.l.b16 %v8396
    %v8741 = vunpack.c.h.b16 %v8396
    %v8742 = vunpack.c.l.b16 %v8397
    %v8743 = vunpack.c.h.b16 %v8397
    %v8744 = vunpack.c.l.b16 %v8398
    %v8745 = vunpack.c.h.b16 %v8398
    %v8746 = vunpack.c.l.b16 %v8399
    %v8747 = vunpack.c.h.b16 %v8399
    %v8748 = vunpack.c.l.b16 %v8400
    %v8749 = vunpack.c.h.b16 %v8400
    %v8750 = vunpack.c.l.b16 %v8401
    %v8751 = vunpack.c.h.b16 %v8401
    %v8752 = vunpack.c.l.b16 %v8402
    %v8753 = vunpack.c.h.b16 %v8402
    %v8754 = vunpack.c.l.b16 %v8403
    %v8755 = vunpack.c.h.b16 %v8403
    %v8756 = vunpack.c.l.b16 %v8404
    %v8757 = vunpack.c.h.b16 %v8404
    %v8758 = vunpack.c.l.b16 %v8405
    %v8759 = vunpack.c.h.b16 %v8405
    %v8760 = vunpack.c.l.b16 %v8406
    %v8761 = vunpack.c.h.b16 %v8406
    %v8762 = vunpack.c.l.b16 %v8407
    %v8763 = vunpack.c.h.b16 %v8407
    %v8764 = vunpack.c.l.b16 %v8408
    %v8765 = vunpack.c.h.b16 %v8408
    %v8766 = vunpack.c.l.b16 %v8409
    %v8767 = vunpack.c.h.b16 %v8409
    %v8768 = vunpack.c.l.b16 %v8410
    %v8769 = vunpack.c.h.b16 %v8410
    %v8770 = vunpack.c.l.b16 %v8411
    %v8771 = vunpack.c.h.b16 %v8411
    %v8772 = vunpack.c.l.b16 %v8412
    %v8773 = vunpack.c.h.b16 %v8412
    %v8774 = vunpack.c.l.b16 %v8413
    %v8775 = vunpack.c.h.b16 %v8413
    %v8776 = vunpack.c.l.b16 %v8414
    %v8777 = vunpack.c.h.b16 %v8414
    %v8778 = vunpack.c.l.b16 %v8415
    %v8779 = vunpack.c.h.b16 %v8415
    %v8780 = vunpack.c.l.b16 %v8416
    %v8781 = vunpack.c.h.b16 %v8416
    %v8782 = vunpack.c.l.b16 %v8417
    %v8783 = vunpack.c.h.b16 %v8417
    %v8784 = vunpack.c.l.b16 %v8418
    %v8785 = vunpack.c.h.b16 %v8418
    %v8786 = vunpack.c.l.b16 %v8419
    %v8787 = vunpack.c.h.b16 %v8419
    %v8788 = vunpack.c.l.b16 %v8420
    %v8789 = vunpack.c.h.b16 %v8420
    %v8790 = vunpack.c.l.b16 %v8421
    %v8791 = vunpack.c.h.b16 %v8421
    %v8792 = vunpack.c.l.b16 %v8422
    %v8793 = vunpack.c.h.b16 %v8422
    %v8794 = vunpack.c.l.b16 %v8423
    %v8795 = vunpack.c.h.b16 %v8423
    %v8796 = vpack.c.b16 %v8736, %v8732
    %v8797 = vpack.c.b16 %v8737, %v8733
    %v8798 = vpack.c.b16 %v8738, %v8734
    %v8799 = vpack.c.b16 %v8739, %v8735
    %v8800 = vpack.c.b16 %v8744, %v8740
    %v8801 = vpack.c.b16 %v8745, %v8741
    %v8802 = vpack.c.b16 %v8746, %v8742
    %v8803 = vpack.c.b16 %v8747, %v8743
    %v8804 = vpack.c.b16 %v8752, %v8748
    %v8805 = vpack.c.b16 %v8753, %v8749
    %v8806 = vpack.c.b16 %v8754, %v8750
    %v8807 = vpack.c.b16 %v8755, %v8751
    %v8808 = vpack.c.b16 %v8760, %v8756
    %v8809 = vpack.c.b16 %v8761, %v8757
    %v8810 = vpack.c.b16 %v8762, %v8758
    %v8811 = vpack.c.b16 %v8763, %v8759
    %v8812 = vpack.c.b16 %v8768, %v8764
    %v8813 = vpack.c.b16 %v8769, %v8765
    %v8814 = vpack.c.b16 %v8770, %v8766
    %v8815 = vpack.c.b16 %v8771, %v8767
    %v8816 = vpack.c.b16 %v8776, %v8772
    %v8817 = vpack.c.b16 %v8777, %v8773
    %v8818 = vpack.c.b16 %v8778, %v8774
    %v8819 = vpack.c.b16 %v8779, %v8775
    %v8820 = vpack.c.b16 %v8784, %v8780
    %v8821 = vpack.c.b16 %v8785, %v8781
    %v8822 = vpack.c.b16 %v8786, %v8782
    %v8823 = vpack.c.b16 %v8787, %v8783
    %v8824 = vpack.c.b16 %v8792, %v8788
    %v8825 = vpack.c.b16 %v8793, %v8789
    %v8826 = vpack.c.b16 %v8794, %v8790
    %v8827 = vpack.c.b16 %v8795, %v8791
    %8860 = vmatprep.subr.bf16.mxu0 %v8797
    %8861 = vmatpush1.bf16.msra.mxu0 %v8796
    %8862 = vmatprep.subr.bf16.mxu0 %v8801
    %8863 = vmatpush1.bf16.msra.mxu0 %v8800
    %8864 = vmatprep.subr.bf16.mxu0 %v8805
    %8865 = vmatpush1.bf16.msra.mxu0 %v8804
    %8866 = vmatprep.subr.bf16.mxu0 %v8809
    %8867 = vmatpush1.bf16.msra.mxu0 %v8808
    %8868 = vmatprep.subr.bf16.mxu0 %v8813
    %8869 = vmatpush1.bf16.msra.mxu0 %v8812
    %8870 = vmatprep.subr.bf16.mxu0 %v8817
    %8871 = vmatpush1.bf16.msra.mxu0 %v8816
    %8872 = vmatprep.subr.bf16.mxu0 %v8821
    %8873 = vmatpush1.bf16.msra.mxu0 %v8820
    %8874 = vmatprep.subr.bf16.mxu0 %v8825
    %8875 = vmatpush1.bf16.msra.mxu0 %v8824
    %8876 = vmatprep.subr.bf16.mxu0 0
    %8877 = vmatpush1.bf16.msra.mxu0 0
    %8878 = vmatprep.subr.bf16.mxu0 0
    %8879 = vmatpush1.bf16.msra.mxu0 0
    %8880 = vmatprep.subr.bf16.mxu0 0
    %8881 = vmatpush1.bf16.msra.mxu0 0
    %8882 = vmatprep.subr.bf16.mxu0 0
    %8883 = vmatpush1.bf16.msra.mxu0 0
    %8884 = vmatprep.subr.bf16.mxu0 0
    %8885 = vmatpush1.bf16.msra.mxu0 0
    %8886 = vmatprep.subr.bf16.mxu0 0
    %8887 = vmatpush1.bf16.msra.mxu0 0
    %8888 = vmatprep.subr.bf16.mxu0 0
    %8889 = vmatpush1.bf16.msra.mxu0 0
    %8890 = vmatprep.subr.bf16.mxu0 0
    %8891 = vmatpush1.bf16.msra.mxu0 0
    %8892 = vmatprep.mubr.bf16.mxu0 0
    %8893 = vmatmul.mubr.bf16.gmra.mrb[0].mxu0 %v8391
    %v8894 = vpop.f32.mrb[0].mxu0
    %v8895 = vadd.f32 %v8653, %v8894
    %v8896 = vpop.f32.mrb[0].mxu0
    %v8897 = vadd.f32 %v8655, %v8896
    %v8898 = vpop.f32.mrb[0].mxu0
    %v8899 = vpop.f32.mrb[0].mxu0
    %8900 = vdwg.mxu0
    %8901 = vmatprep.subr.bf16.mxu0 %v8799
    %8902 = vmatpush1.bf16.msra.mxu0 %v8798
    %8903 = vmatprep.subr.bf16.mxu0 %v8803
    %8904 = vmatpush1.bf16.msra.mxu0 %v8802
    %8905 = vmatprep.subr.bf16.mxu0 %v8807
    %8906 = vmatpush1.bf16.msra.mxu0 %v8806
    %8907 = vmatprep.subr.bf16.mxu0 %v8811
    %8908 = vmatpush1.bf16.msra.mxu0 %v8810
    %8909 = vmatprep.subr.bf16.mxu0 %v8815
    %8910 = vmatpush1.bf16.msra.mxu0 %v8814
    %8911 = vmatprep.subr.bf16.mxu0 %v8819
    %8912 = vmatpush1.bf16.msra.mxu0 %v8818
    %8913 = vmatprep.subr.bf16.mxu0 %v8823
    %8914 = vmatpush1.bf16.msra.mxu0 %v8822
    %8915 = vmatprep.subr.bf16.mxu0 %v8827
    %8916 = vmatpush1.bf16.msra.mxu0 %v8826
    %8917 = vmatprep.subr.bf16.mxu0 0
    %8918 = vmatpush1.bf16.msra.mxu0 0
    %8919 = vmatprep.subr.bf16.mxu0 0
    %8920 = vmatpush1.bf16.msra.mxu0 0
    %8921 = vmatprep.subr.bf16.mxu0 0
    %8922 = vmatpush1.bf16.msra.mxu0 0
    %8923 = vmatprep.subr.bf16.mxu0 0
    %8924 = vmatpush1.bf16.msra.mxu0 0
    %8925 = vmatprep.subr.bf16.mxu0 0
    %8926 = vmatpush1.bf16.msra.mxu0 0
    %8927 = vmatprep.subr.bf16.mxu0 0
    %8928 = vmatpush1.bf16.msra.mxu0 0
    %8929 = vmatprep.subr.bf16.mxu0 0
    %8930 = vmatpush1.bf16.msra.mxu0 0
    %8931 = vmatprep.subr.bf16.mxu0 0
    %8932 = vmatpush1.bf16.msra.mxu0 0
    %8933 = vmatprep.mubr.bf16.mxu0 0
    %8934 = vmatmul.mubr.bf16.gmra.mrb[0].mxu0 %v8391
    %v8935 = vpop.f32.mrb[0].mxu0
    %v8936 = vadd.f32 %v8694, %v8935
    %v8937 = vpop.f32.mrb[0].mxu0
    %v8938 = vadd.f32 %v8696, %v8937
    %v8939 = vpop.f32.mrb[0].mxu0
    %v8940 = vpop.f32.mrb[0].mxu0
    %8941 = vdwg.mxu0
    %v8942 = vadd.f32 %v8895, %v113
    %v8943 = vadd.f32 %v8897, %v114
    %v8944 = vadd.f32 %v8936, %v115
    %v8945 = vadd.f32 %v8938, %v116
    %v8946 = vxor.u32 %v8942, 2147483648
    %v8947 = vmul.f32 %v8946, 1.442695
    %v8948 = vpow.pop %v8947
    %v8949 = vadd.f32 %v8948, 1.0
    %v8950 = vrcp.pop %v8949
    %v8951 = vmul.f32 1.0, %v8950
    %v8952 = vxor.u32 %v8943, 2147483648
    %v8953 = vmul.f32 %v8952, 1.442695
    %v8954 = vpow.pop %v8953
    %v8955 = vadd.f32 %v8954, 1.0
    %v8956 = vrcp.pop %v8955
    %v8957 = vmul.f32 1.0, %v8956
    %v8958 = vtanh.pop %v8944
    %v8959 = vxor.u32 %v8945, 2147483648
    %v8960 = vmul.f32 %v8959, 1.442695
    %v8961 = vpow.pop %v8960
    %v8962 = vadd.f32 %v8961, 1.0
    %v8963 = vrcp.pop %v8962
    %v8964 = vmul.f32 1.0, %v8963
    %v8965 = vld [vmem:[#allocation3] sm:$0xff]
    %v8966 = vmul.f32 %v8957, %v8965
    %v8967 = vmul.f32 %v8951, %v8958
    %v8968 = vadd.f32 %v8966, %v8967
    %8969 = vst [vmem:[#allocation3] sm:$0xff] %v8968
    %v8970 = vtanh.pop %v8968
    %v8971 = vmul.f32 %v8964, %v8970
    %8972 = vst [vmem:[#allocation2] sm:$0xff] %v8971
    %v8973 = vld [vmem:[#allocation2] sm:$0xff]
    %v8974 = vpack.c.bf16 %v8973, %v8973
    %v8975 = vld [vmem:[#allocation12] sm:$0xf]
    %v8976 = vld [vmem:[#allocation12 + $0x4] sm:$0xf]
    %v8977 = vld [vmem:[#allocation12 + $0x8] sm:$0xf]
    %v8978 = vld [vmem:[#allocation12 + $0xc] sm:$0xf]
    %v8979 = vld [vmem:[#allocation12 + $0x10] sm:$0xf]
    %v8980 = vld [vmem:[#allocation12 + $0x14] sm:$0xf]
    %v8981 = vld [vmem:[#allocation12 + $0x18] sm:$0xf]
    %v8982 = vld [vmem:[#allocation12 + $0x1c] sm:$0xf]
    %v8983 = vld [vmem:[#allocation12 + $0x20] sm:$0xf]
    %v8984 = vld [vmem:[#allocation12 + $0x24] sm:$0xf]
    %v8985 = vld [vmem:[#allocation12 + $0x28] sm:$0xf]
    %v8986 = vld [vmem:[#allocation12 + $0x2c] sm:$0xf]
    %v8987 = vld [vmem:[#allocation12 + $0x30] sm:$0xf]
    %v8988 = vld [vmem:[#allocation12 + $0x34] sm:$0xf]
    %v8989 = vld [vmem:[#allocation12 + $0x38] sm:$0xf]
    %v8990 = vld [vmem:[#allocation12 + $0x3c] sm:$0xf]
    %v9007 = vunpack.c.l.b16 %v8975
    %v9008 = vunpack.c.l.b16 %v8976
    %v9009 = vunpack.c.l.b16 %v8977
    %v9010 = vunpack.c.l.b16 %v8978
    %v9011 = vunpack.c.l.b16 %v8979
    %v9012 = vunpack.c.l.b16 %v8980
    %v9013 = vunpack.c.l.b16 %v8981
    %v9014 = vunpack.c.l.b16 %v8982
    %v9015 = vunpack.c.l.b16 %v8983
    %v9016 = vunpack.c.l.b16 %v8984
    %v9017 = vunpack.c.l.b16 %v8985
    %v9018 = vunpack.c.l.b16 %v8986
    %v9019 = vunpack.c.l.b16 %v8987
    %v9020 = vunpack.c.l.b16 %v8988
    %v9021 = vunpack.c.l.b16 %v8989
    %v9022 = vunpack.c.l.b16 %v8990
    %v9023 = vpack.c.b16 %v9008, %v9007
    %v9024 = vpack.c.b16 %v9010, %v9009
    %v9025 = vpack.c.b16 %v9012, %v9011
    %v9026 = vpack.c.b16 %v9014, %v9013
    %v9027 = vpack.c.b16 %v9016, %v9015
    %v9028 = vpack.c.b16 %v9018, %v9017
    %v9029 = vpack.c.b16 %v9020, %v9019
    %v9030 = vpack.c.b16 %v9022, %v9021
    %9039 = vmatprep.subr.bf16.mxu0 0
    %9040 = vmatpush1.bf16.msra.mxu0 %v9023
    %9041 = vmatprep.subr.bf16.mxu0 0
    %9042 = vmatpush1.bf16.msra.mxu0 %v9024
    %9043 = vmatprep.subr.bf16.mxu0 0
    %9044 = vmatpush1.bf16.msra.mxu0 %v9025
    %9045 = vmatprep.subr.bf16.mxu0 0
    %9046 = vmatpush1.bf16.msra.mxu0 %v9026
    %9047 = vmatprep.subr.bf16.mxu0 0
    %9048 = vmatpush1.bf16.msra.mxu0 %v9027
    %9049 = vmatprep.subr.bf16.mxu0 0
    %9050 = vmatpush1.bf16.msra.mxu0 %v9028
    %9051 = vmatprep.subr.bf16.mxu0 0
    %9052 = vmatpush1.bf16.msra.mxu0 %v9029
    %9053 = vmatprep.subr.bf16.mxu0 0
    %9054 = vmatpush1.bf16.msra.mxu0 %v9030
    %9055 = vmatprep.subr.bf16.mxu0 0
    %9056 = vmatpush1.bf16.msra.mxu0 0
    %9057 = vmatprep.subr.bf16.mxu0 0
    %9058 = vmatpush1.bf16.msra.mxu0 0
    %9059 = vmatprep.subr.bf16.mxu0 0
    %9060 = vmatpush1.bf16.msra.mxu0 0
    %9061 = vmatprep.subr.bf16.mxu0 0
    %9062 = vmatpush1.bf16.msra.mxu0 0
    %9063 = vmatprep.subr.bf16.mxu0 0
    %9064 = vmatpush1.bf16.msra.mxu0 0
    %9065 = vmatprep.subr.bf16.mxu0 0
    %9066 = vmatpush1.bf16.msra.mxu0 0
    %9067 = vmatprep.subr.bf16.mxu0 0
    %9068 = vmatpush1.bf16.msra.mxu0 0
    %9069 = vmatprep.subr.bf16.mxu0 0
    %9070 = vmatpush1.bf16.msra.mxu0 0
    %9071 = vmatprep.mubr.bf16.mxu0 0
    %9072 = vmatmul.mubr.bf16.gmra.mrb[0].mxu0 %v8974
    %v9073 = vpop.f32.mrb[0].mxu0
    %v9074 = vadd.f32 %v117, %v9073
    %v9075 = vpop.f32.mrb[0].mxu0
    %v9076 = vpop.f32.mrb[0].mxu0
    %v9077 = vpop.f32.mrb[0].mxu0
    %9078 = vdwg.mxu0
    %s9079 = scalar_lea.vmem %s11, 48
    %9080 = vst [vmem:[%s9079] sm:$0xff] %v9074
    %9081 = vmax.xlane.f32.xlu0 %v9074
    %v9082 = vpop.xlane.xlu0 %9081
    %vm9083 = vcmp.ge.f32.partialorder %v9074, %v9082
    %v9084 = vsel %vm9083, %v119, 128
    %v9085 = vand.u32 %v9084, 65535
    %v9086 = vshra.s32 %v9084, 16
    %v9087 = vcvt.s32.f32 %v9085
    %v9088 = vcvt.s32.f32 %v9086
    %9089 = vmin.xlane.f32.xlu0 %v9088
    %v9090 = vpop.xlane.xlu0 %9089
    %vm9091 = vcmp.eq.f32.partialorder %v9088, %v9090
    %v9092 = vsel %vm9091, %v9087, inf
    %9093 = vmin.xlane.f32.xlu0 %v9092
    %v9094 = vpop.xlane.xlu0 %9093
    %v9095 = vcvt.f32.s32 %v9094
    %v9096 = vcvt.f32.s32 %v9090
    %v9097 = vshll.u32 %v9096, 16
    %v9098 = vadd.s32 %v9097, %v9095
    %vm9099 = vcmp.eq.s32.totalorder %v119, %v9098
    %v9100 = vsel %vm9099, 1, 0
    %v9101 = vcvt.s32.f32 %v9100
    %v9102 = vpack.c.bf16 %v9101, %v9101
    %s9103 = sld [smem:[#allocation5 + $0x6]]
    %p9104 = scmp.gt.s32.totalorder %s9103, 0
    %s9105 = scalar_lea.vmem %s2, 24
    %v9106 = vld [vmem:[%s9105] sm:$0xf]
    %s9107 = scalar_select %p9104, 1, 0
    %v9108 = vstv %s9107
    %vm9109 = vcmp.eq.s32.totalorder %v9108, 1
    %v9110 = vsel %vm9109, %v9106, %v9102
    %9111 = vst [vmem:[#allocation4] sm:$0xf] %v9110
    %v9112 = vld [vmem:[#allocation4] sm:$0xf]
    %v9113 = vld [vmem:[#allocation9] sm:$0xff]
    %v9114 = vld [vmem:[#allocation9 + $0x8] sm:$0xff]
    %v9115 = vld [vmem:[#allocation9 + $0x10] sm:$0xff]
    %v9116 = vld [vmem:[#allocation9 + $0x18] sm:$0xff]
    %v9117 = vld [vmem:[#allocation9 + $0x20] sm:$0xff]
    %v9118 = vld [vmem:[#allocation9 + $0x28] sm:$0xff]
    %v9119 = vld [vmem:[#allocation9 + $0x30] sm:$0xff]
    %v9120 = vld [vmem:[#allocation9 + $0x38] sm:$0xff]
    %v9121 = vld [vmem:[#allocation9 + $0x40] sm:$0xff]
    %v9122 = vld [vmem:[#allocation9 + $0x48] sm:$0xff]
    %v9123 = vld [vmem:[#allocation9 + $0x50] sm:$0xff]
    %v9124 = vld [vmem:[#allocation9 + $0x58] sm:$0xff]
    %v9125 = vld [vmem:[#allocation9 + $0x60] sm:$0xff]
    %v9126 = vld [vmem:[#allocation9 + $0x68] sm:$0xff]
    %v9127 = vld [vmem:[#allocation9 + $0x70] sm:$0xff]
    %v9128 = vld [vmem:[#allocation9 + $0x78] sm:$0xff]
    %v9129 = vld [vmem:[#allocation9 + $0x80] sm:$0xff]
    %v9130 = vld [vmem:[#allocation9 + $0x88] sm:$0xff]
    %v9131 = vld [vmem:[#allocation9 + $0x90] sm:$0xff]
    %v9132 = vld [vmem:[#allocation9 + $0x98] sm:$0xff]
    %v9133 = vld [vmem:[#allocation9 + $0xa0] sm:$0xff]
    %v9134 = vld [vmem:[#allocation9 + $0xa8] sm:$0xff]
    %v9135 = vld [vmem:[#allocation9 + $0xb0] sm:$0xff]
    %v9136 = vld [vmem:[#allocation9 + $0xb8] sm:$0xff]
    %v9137 = vld [vmem:[#allocation9 + $0xc0] sm:$0xff]
    %v9138 = vld [vmem:[#allocation9 + $0xc8] sm:$0xff]
    %v9139 = vld [vmem:[#allocation9 + $0xd0] sm:$0xff]
    %v9140 = vld [vmem:[#allocation9 + $0xd8] sm:$0xff]
    %v9141 = vld [vmem:[#allocation9 + $0xe0] sm:$0xff]
    %v9142 = vld [vmem:[#allocation9 + $0xe8] sm:$0xff]
    %v9143 = vld [vmem:[#allocation9 + $0xf0] sm:$0xff]
    %v9144 = vld [vmem:[#allocation9 + $0xf8] sm:$0xff]
    %v9145 = vld [vmem:[#allocation2] sm:$0xff]
    %v9146 = vpack.c.bf16 %v9145, %v9145
    %v9147 = vld [vmem:[#allocation11] sm:$0xff]
    %v9148 = vld [vmem:[#allocation11 + $0x8] sm:$0xff]
    %v9149 = vld [vmem:[#allocation11 + $0x10] sm:$0xff]
    %v9150 = vld [vmem:[#allocation11 + $0x18] sm:$0xff]
    %v9151 = vld [vmem:[#allocation11 + $0x20] sm:$0xff]
    %v9152 = vld [vmem:[#allocation11 + $0x28] sm:$0xff]
    %v9153 = vld [vmem:[#allocation11 + $0x30] sm:$0xff]
    %v9154 = vld [vmem:[#allocation11 + $0x38] sm:$0xff]
    %v9155 = vld [vmem:[#allocation11 + $0x40] sm:$0xff]
    %v9156 = vld [vmem:[#allocation11 + $0x48] sm:$0xff]
    %v9157 = vld [vmem:[#allocation11 + $0x50] sm:$0xff]
    %v9158 = vld [vmem:[#allocation11 + $0x58] sm:$0xff]
    %v9159 = vld [vmem:[#allocation11 + $0x60] sm:$0xff]
    %v9160 = vld [vmem:[#allocation11 + $0x68] sm:$0xff]
    %v9161 = vld [vmem:[#allocation11 + $0x70] sm:$0xff]
    %v9162 = vld [vmem:[#allocation11 + $0x78] sm:$0xff]
    %v9163 = vld [vmem:[#allocation11 + $0x80] sm:$0xff]
    %v9164 = vld [vmem:[#allocation11 + $0x88] sm:$0xff]
    %v9165 = vld [vmem:[#allocation11 + $0x90] sm:$0xff]
    %v9166 = vld [vmem:[#allocation11 + $0x98] sm:$0xff]
    %v9167 = vld [vmem:[#allocation11 + $0xa0] sm:$0xff]
    %v9168 = vld [vmem:[#allocation11 + $0xa8] sm:$0xff]
    %v9169 = vld [vmem:[#allocation11 + $0xb0] sm:$0xff]
    %v9170 = vld [vmem:[#allocation11 + $0xb8] sm:$0xff]
    %v9171 = vld [vmem:[#allocation11 + $0xc0] sm:$0xff]
    %v9172 = vld [vmem:[#allocation11 + $0xc8] sm:$0xff]
    %v9173 = vld [vmem:[#allocation11 + $0xd0] sm:$0xff]
    %v9174 = vld [vmem:[#allocation11 + $0xd8] sm:$0xff]
    %v9175 = vld [vmem:[#allocation11 + $0xe0] sm:$0xff]
    %v9176 = vld [vmem:[#allocation11 + $0xe8] sm:$0xff]
    %v9177 = vld [vmem:[#allocation11 + $0xf0] sm:$0xff]
    %v9178 = vld [vmem:[#allocation11 + $0xf8] sm:$0xff]
    %v9211 = vunpack.c.l.b16 %v9147
    %v9212 = vunpack.c.h.b16 %v9147
    %v9213 = vunpack.c.l.b16 %v9148
    %v9214 = vunpack.c.h.b16 %v9148
    %v9215 = vunpack.c.l.b16 %v9149
    %v9216 = vunpack.c.h.b16 %v9149
    %v9217 = vunpack.c.l.b16 %v9150
    %v9218 = vunpack.c.h.b16 %v9150
    %v9219 = vunpack.c.l.b16 %v9151
    %v9220 = vunpack.c.h.b16 %v9151
    %v9221 = vunpack.c.l.b16 %v9152
    %v9222 = vunpack.c.h.b16 %v9152
    %v9223 = vunpack.c.l.b16 %v9153
    %v9224 = vunpack.c.h.b16 %v9153
    %v9225 = vunpack.c.l.b16 %v9154
    %v9226 = vunpack.c.h.b16 %v9154
    %v9227 = vunpack.c.l.b16 %v9155
    %v9228 = vunpack.c.h.b16 %v9155
    %v9229 = vunpack.c.l.b16 %v9156
    %v9230 = vunpack.c.h.b16 %v9156
    %v9231 = vunpack.c.l.b16 %v9157
    %v9232 = vunpack.c.h.b16 %v9157
    %v9233 = vunpack.c.l.b16 %v9158
    %v9234 = vunpack.c.h.b16 %v9158
    %v9235 = vunpack.c.l.b16 %v9159
    %v9236 = vunpack.c.h.b16 %v9159
    %v9237 = vunpack.c.l.b16 %v9160
    %v9238 = vunpack.c.h.b16 %v9160
    %v9239 = vunpack.c.l.b16 %v9161
    %v9240 = vunpack.c.h.b16 %v9161
    %v9241 = vunpack.c.l.b16 %v9162
    %v9242 = vunpack.c.h.b16 %v9162
    %v9243 = vunpack.c.l.b16 %v9163
    %v9244 = vunpack.c.h.b16 %v9163
    %v9245 = vunpack.c.l.b16 %v9164
    %v9246 = vunpack.c.h.b16 %v9164
    %v9247 = vunpack.c.l.b16 %v9165
    %v9248 = vunpack.c.h.b16 %v9165
    %v9249 = vunpack.c.l.b16 %v9166
    %v9250 = vunpack.c.h.b16 %v9166
    %v9251 = vunpack.c.l.b16 %v9167
    %v9252 = vunpack.c.h.b16 %v9167
    %v9253 = vunpack.c.l.b16 %v9168
    %v9254 = vunpack.c.h.b16 %v9168
    %v9255 = vunpack.c.l.b16 %v9169
    %v9256 = vunpack.c.h.b16 %v9169
    %v9257 = vunpack.c.l.b16 %v9170
    %v9258 = vunpack.c.h.b16 %v9170
    %v9259 = vunpack.c.l.b16 %v9171
    %v9260 = vunpack.c.h.b16 %v9171
    %v9261 = vunpack.c.l.b16 %v9172
    %v9262 = vunpack.c.h.b16 %v9172
    %v9263 = vunpack.c.l.b16 %v9173
    %v9264 = vunpack.c.h.b16 %v9173
    %v9265 = vunpack.c.l.b16 %v9174
    %v9266 = vunpack.c.h.b16 %v9174
    %v9267 = vunpack.c.l.b16 %v9175
    %v9268 = vunpack.c.h.b16 %v9175
    %v9269 = vunpack.c.l.b16 %v9176
    %v9270 = vunpack.c.h.b16 %v9176
    %v9271 = vunpack.c.l.b16 %v9177
    %v9272 = vunpack.c.h.b16 %v9177
    %v9273 = vunpack.c.l.b16 %v9178
    %v9274 = vunpack.c.h.b16 %v9178
    %v9275 = vpack.c.b16 %v9215, %v9211
    %v9276 = vpack.c.b16 %v9216, %v9212
    %v9277 = vpack.c.b16 %v9217, %v9213
    %v9278 = vpack.c.b16 %v9218, %v9214
    %v9279 = vpack.c.b16 %v9223, %v9219
    %v9280 = vpack.c.b16 %v9224, %v9220
    %v9281 = vpack.c.b16 %v9225, %v9221
    %v9282 = vpack.c.b16 %v9226, %v9222
    %v9283 = vpack.c.b16 %v9231, %v9227
    %v9284 = vpack.c.b16 %v9232, %v9228
    %v9285 = vpack.c.b16 %v9233, %v9229
    %v9286 = vpack.c.b16 %v9234, %v9230
    %v9287 = vpack.c.b16 %v9239, %v9235
    %v9288 = vpack.c.b16 %v9240, %v9236
    %v9289 = vpack.c.b16 %v9241, %v9237
    %v9290 = vpack.c.b16 %v9242, %v9238
    %v9291 = vpack.c.b16 %v9247, %v9243
    %v9292 = vpack.c.b16 %v9248, %v9244
    %v9293 = vpack.c.b16 %v9249, %v9245
    %v9294 = vpack.c.b16 %v9250, %v9246
    %v9295 = vpack.c.b16 %v9255, %v9251
    %v9296 = vpack.c.b16 %v9256, %v9252
    %v9297 = vpack.c.b16 %v9257, %v9253
    %v9298 = vpack.c.b16 %v9258, %v9254
    %v9299 = vpack.c.b16 %v9263, %v9259
    %v9300 = vpack.c.b16 %v9264, %v9260
    %v9301 = vpack.c.b16 %v9265, %v9261
    %v9302 = vpack.c.b16 %v9266, %v9262
    %v9303 = vpack.c.b16 %v9271, %v9267
    %v9304 = vpack.c.b16 %v9272, %v9268
    %v9305 = vpack.c.b16 %v9273, %v9269
    %v9306 = vpack.c.b16 %v9274, %v9270
    %9339 = vmatprep.subr.bf16.mxu0 %v9276
    %9340 = vmatpush1.bf16.msra.mxu0 %v9275
    %9341 = vmatprep.subr.bf16.mxu0 %v9280
    %9342 = vmatpush1.bf16.msra.mxu0 %v9279
    %9343 = vmatprep.subr.bf16.mxu0 %v9284
    %9344 = vmatpush1.bf16.msra.mxu0 %v9283
    %9345 = vmatprep.subr.bf16.mxu0 %v9288
    %9346 = vmatpush1.bf16.msra.mxu0 %v9287
    %9347 = vmatprep.subr.bf16.mxu0 %v9292
    %9348 = vmatpush1.bf16.msra.mxu0 %v9291
    %9349 = vmatprep.subr.bf16.mxu0 %v9296
    %9350 = vmatpush1.bf16.msra.mxu0 %v9295
    %9351 = vmatprep.subr.bf16.mxu0 %v9300
    %9352 = vmatpush1.bf16.msra.mxu0 %v9299
    %9353 = vmatprep.subr.bf16.mxu0 %v9304
    %9354 = vmatpush1.bf16.msra.mxu0 %v9303
    %9355 = vmatprep.subr.bf16.mxu0 0
    %9356 = vmatpush1.bf16.msra.mxu0 0
    %9357 = vmatprep.subr.bf16.mxu0 0
    %9358 = vmatpush1.bf16.msra.mxu0 0
    %9359 = vmatprep.subr.bf16.mxu0 0
    %9360 = vmatpush1.bf16.msra.mxu0 0
    %9361 = vmatprep.subr.bf16.mxu0 0
    %9362 = vmatpush1.bf16.msra.mxu0 0
    %9363 = vmatprep.subr.bf16.mxu0 0
    %9364 = vmatpush1.bf16.msra.mxu0 0
    %9365 = vmatprep.subr.bf16.mxu0 0
    %9366 = vmatpush1.bf16.msra.mxu0 0
    %9367 = vmatprep.subr.bf16.mxu0 0
    %9368 = vmatpush1.bf16.msra.mxu0 0
    %9369 = vmatprep.subr.bf16.mxu0 0
    %9370 = vmatpush1.bf16.msra.mxu0 0
    %9371 = vmatprep.mubr.bf16.mxu0 0
    %9372 = vmatmul.mubr.bf16.gmra.mrb[0].mxu0 %v9146
    %v9373 = vpop.f32.mrb[0].mxu0
    %v9374 = vadd.f32 0.0, %v9373
    %v9375 = vpop.f32.mrb[0].mxu0
    %v9376 = vadd.f32 0.0, %v9375
    %v9377 = vpop.f32.mrb[0].mxu0
    %v9378 = vpop.f32.mrb[0].mxu0
    %9379 = vdwg.mxu0
    %9380 = vmatprep.subr.bf16.mxu0 %v9278
    %9381 = vmatpush1.bf16.msra.mxu0 %v9277
    %9382 = vmatprep.subr.bf16.mxu0 %v9282
    %9383 = vmatpush1.bf16.msra.mxu0 %v9281
    %9384 = vmatprep.subr.bf16.mxu0 %v9286
    %9385 = vmatpush1.bf16.msra.mxu0 %v9285
    %9386 = vmatprep.subr.bf16.mxu0 %v9290
    %9387 = vmatpush1.bf16.msra.mxu0 %v9289
    %9388 = vmatprep.subr.bf16.mxu0 %v9294
    %9389 = vmatpush1.bf16.msra.mxu0 %v9293
    %9390 = vmatprep.subr.bf16.mxu0 %v9298
    %9391 = vmatpush1.bf16.msra.mxu0 %v9297
    %9392 = vmatprep.subr.bf16.mxu0 %v9302
    %9393 = vmatpush1.bf16.msra.mxu0 %v9301
    %9394 = vmatprep.subr.bf16.mxu0 %v9306
    %9395 = vmatpush1.bf16.msra.mxu0 %v9305
    %9396 = vmatprep.subr.bf16.mxu0 0
    %9397 = vmatpush1.bf16.msra.mxu0 0
    %9398 = vmatprep.subr.bf16.mxu0 0
    %9399 = vmatpush1.bf16.msra.mxu0 0
    %9400 = vmatprep.subr.bf16.mxu0 0
    %9401 = vmatpush1.bf16.msra.mxu0 0
    %9402 = vmatprep.subr.bf16.mxu0 0
    %9403 = vmatpush1.bf16.msra.mxu0 0
    %9404 = vmatprep.subr.bf16.mxu0 0
    %9405 = vmatpush1.bf16.msra.mxu0 0
    %9406 = vmatprep.subr.bf16.mxu0 0
    %9407 = vmatpush1.bf16.msra.mxu0 0
    %9408 = vmatprep.subr.bf16.mxu0 0
    %9409 = vmatpush1.bf16.msra.mxu0 0
    %9410 = vmatprep.subr.bf16.mxu0 0
    %9411 = vmatpush1.bf16.msra.mxu0 0
    %9412 = vmatprep.mubr.bf16.mxu0 0
    %9413 = vmatmul.mubr.bf16.gmra.mrb[0].mxu0 %v9146
    %v9414 = vpop.f32.mrb[0].mxu0
    %v9415 = vadd.f32 0.0, %v9414
    %v9416 = vpop.f32.mrb[0].mxu0
    %v9417 = vadd.f32 0.0, %v9416
    %v9418 = vpop.f32.mrb[0].mxu0
    %v9419 = vpop.f32.mrb[0].mxu0
    %9420 = vdwg.mxu0
    %v9453 = vunpack.c.l.b16 %v9113
    %v9454 = vunpack.c.h.b16 %v9113
    %v9455 = vunpack.c.l.b16 %v9114
    %v9456 = vunpack.c.h.b16 %v9114
    %v9457 = vunpack.c.l.b16 %v9115
    %v9458 = vunpack.c.h.b16 %v9115
    %v9459 = vunpack.c.l.b16 %v9116
    %v9460 = vunpack.c.h.b16 %v9116
    %v9461 = vunpack.c.l.b16 %v9117
    %v9462 = vunpack.c.h.b16 %v9117
    %v9463 = vunpack.c.l.b16 %v9118
    %v9464 = vunpack.c.h.b16 %v9118
    %v9465 = vunpack.c.l.b16 %v9119
    %v9466 = vunpack.c.h.b16 %v9119
    %v9467 = vunpack.c.l.b16 %v9120
    %v9468 = vunpack.c.h.b16 %v9120
    %v9469 = vunpack.c.l.b16 %v9121
    %v9470 = vunpack.c.h.b16 %v9121
    %v9471 = vunpack.c.l.b16 %v9122
    %v9472 = vunpack.c.h.b16 %v9122
    %v9473 = vunpack.c.l.b16 %v9123
    %v9474 = vunpack.c.h.b16 %v9123
    %v9475 = vunpack.c.l.b16 %v9124
    %v9476 = vunpack.c.h.b16 %v9124
    %v9477 = vunpack.c.l.b16 %v9125
    %v9478 = vunpack.c.h.b16 %v9125
    %v9479 = vunpack.c.l.b16 %v9126
    %v9480 = vunpack.c.h.b16 %v9126
    %v9481 = vunpack.c.l.b16 %v9127
    %v9482 = vunpack.c.h.b16 %v9127
    %v9483 = vunpack.c.l.b16 %v9128
    %v9484 = vunpack.c.h.b16 %v9128
    %v9485 = vunpack.c.l.b16 %v9129
    %v9486 = vunpack.c.h.b16 %v9129
    %v9487 = vunpack.c.l.b16 %v9130
    %v9488 = vunpack.c.h.b16 %v9130
    %v9489 = vunpack.c.l.b16 %v9131
    %v9490 = vunpack.c.h.b16 %v9131
    %v9491 = vunpack.c.l.b16 %v9132
    %v9492 = vunpack.c.h.b16 %v9132
    %v9493 = vunpack.c.l.b16 %v9133
    %v9494 = vunpack.c.h.b16 %v9133
    %v9495 = vunpack.c.l.b16 %v9134
    %v9496 = vunpack.c.h.b16 %v9134
    %v9497 = vunpack.c.l.b16 %v9135
    %v9498 = vunpack.c.h.b16 %v9135
    %v9499 = vunpack.c.l.b16 %v9136
    %v9500 = vunpack.c.h.b16 %v9136
    %v9501 = vunpack.c.l.b16 %v9137
    %v9502 = vunpack.c.h.b16 %v9137
    %v9503 = vunpack.c.l.b16 %v9138
    %v9504 = vunpack.c.h.b16 %v9138
    %v9505 = vunpack.c.l.b16 %v9139
    %v9506 = vunpack.c.h.b16 %v9139
    %v9507 = vunpack.c.l.b16 %v9140
    %v9508 = vunpack.c.h.b16 %v9140
    %v9509 = vunpack.c.l.b16 %v9141
    %v9510 = vunpack.c.h.b16 %v9141
    %v9511 = vunpack.c.l.b16 %v9142
    %v9512 = vunpack.c.h.b16 %v9142
    %v9513 = vunpack.c.l.b16 %v9143
    %v9514 = vunpack.c.h.b16 %v9143
    %v9515 = vunpack.c.l.b16 %v9144
    %v9516 = vunpack.c.h.b16 %v9144
    %v9517 = vpack.c.b16 %v9457, %v9453
    %v9518 = vpack.c.b16 %v9458, %v9454
    %v9519 = vpack.c.b16 %v9459, %v9455
    %v9520 = vpack.c.b16 %v9460, %v9456
    %v9521 = vpack.c.b16 %v9465, %v9461
    %v9522 = vpack.c.b16 %v9466, %v9462
    %v9523 = vpack.c.b16 %v9467, %v9463
    %v9524 = vpack.c.b16 %v9468, %v9464
    %v9525 = vpack.c.b16 %v9473, %v9469
    %v9526 = vpack.c.b16 %v9474, %v9470
    %v9527 = vpack.c.b16 %v9475, %v9471
    %v9528 = vpack.c.b16 %v9476, %v9472
    %v9529 = vpack.c.b16 %v9481, %v9477
    %v9530 = vpack.c.b16 %v9482, %v9478
    %v9531 = vpack.c.b16 %v9483, %v9479
    %v9532 = vpack.c.b16 %v9484, %v9480
    %v9533 = vpack.c.b16 %v9489, %v9485
    %v9534 = vpack.c.b16 %v9490, %v9486
    %v9535 = vpack.c.b16 %v9491, %v9487
    %v9536 = vpack.c.b16 %v9492, %v9488
    %v9537 = vpack.c.b16 %v9497, %v9493
    %v9538 = vpack.c.b16 %v9498, %v9494
    %v9539 = vpack.c.b16 %v9499, %v9495
    %v9540 = vpack.c.b16 %v9500, %v9496
    %v9541 = vpack.c.b16 %v9505, %v9501
    %v9542 = vpack.c.b16 %v9506, %v9502
    %v9543 = vpack.c.b16 %v9507, %v9503
    %v9544 = vpack.c.b16 %v9508, %v9504
    %v9545 = vpack.c.b16 %v9513, %v9509
    %v9546 = vpack.c.b16 %v9514, %v9510
    %v9547 = vpack.c.b16 %v9515, %v9511
    %v9548 = vpack.c.b16 %v9516, %v9512
    %9581 = vmatprep.subr.bf16.mxu0 %v9518
    %9582 = vmatpush1.bf16.msra.mxu0 %v9517
    %9583 = vmatprep.subr.bf16.mxu0 %v9522
    %9584 = vmatpush1.bf16.msra.mxu0 %v9521
    %9585 = vmatprep.subr.bf16.mxu0 %v9526
    %9586 = vmatpush1.bf16.msra.mxu0 %v9525
    %9587 = vmatprep.subr.bf16.mxu0 %v9530
    %9588 = vmatpush1.bf16.msra.mxu0 %v9529
    %9589 = vmatprep.subr.bf16.mxu0 %v9534
    %9590 = vmatpush1.bf16.msra.mxu0 %v9533
    %9591 = vmatprep.subr.bf16.mxu0 %v9538
    %9592 = vmatpush1.bf16.msra.mxu0 %v9537
    %9593 = vmatprep.subr.bf16.mxu0 %v9542
    %9594 = vmatpush1.bf16.msra.mxu0 %v9541
    %9595 = vmatprep.subr.bf16.mxu0 %v9546
    %9596 = vmatpush1.bf16.msra.mxu0 %v9545
    %9597 = vmatprep.subr.bf16.mxu0 0
    %9598 = vmatpush1.bf16.msra.mxu0 0
    %9599 = vmatprep.subr.bf16.mxu0 0
    %9600 = vmatpush1.bf16.msra.mxu0 0
    %9601 = vmatprep.subr.bf16.mxu0 0
    %9602 = vmatpush1.bf16.msra.mxu0 0
    %9603 = vmatprep.subr.bf16.mxu0 0
    %9604 = vmatpush1.bf16.msra.mxu0 0
    %9605 = vmatprep.subr.bf16.mxu0 0
    %9606 = vmatpush1.bf16.msra.mxu0 0
    %9607 = vmatprep.subr.bf16.mxu0 0
    %9608 = vmatpush1.bf16.msra.mxu0 0
    %9609 = vmatprep.subr.bf16.mxu0 0
    %9610 = vmatpush1.bf16.msra.mxu0 0
    %9611 = vmatprep.subr.bf16.mxu0 0
    %9612 = vmatpush1.bf16.msra.mxu0 0
    %9613 = vmatprep.mubr.bf16.mxu0 0
    %9614 = vmatmul.mubr.bf16.gmra.mrb[0].mxu0 %v9112
    %v9615 = vpop.f32.mrb[0].mxu0
    %v9616 = vadd.f32 %v9374, %v9615
    %v9617 = vpop.f32.mrb[0].mxu0
    %v9618 = vadd.f32 %v9376, %v9617
    %v9619 = vpop.f32.mrb[0].mxu0
    %v9620 = vpop.f32.mrb[0].mxu0
    %9621 = vdwg.mxu0
    %9622 = vmatprep.subr.bf16.mxu0 %v9520
    %9623 = vmatpush1.bf16.msra.mxu0 %v9519
    %9624 = vmatprep.subr.bf16.mxu0 %v9524
    %9625 = vmatpush1.bf16.msra.mxu0 %v9523
    %9626 = vmatprep.subr.bf16.mxu0 %v9528
    %9627 = vmatpush1.bf16.msra.mxu0 %v9527
    %9628 = vmatprep.subr.bf16.mxu0 %v9532
    %9629 = vmatpush1.bf16.msra.mxu0 %v9531
    %9630 = vmatprep.subr.bf16.mxu0 %v9536
    %9631 = vmatpush1.bf16.msra.mxu0 %v9535
    %9632 = vmatprep.subr.bf16.mxu0 %v9540
    %9633 = vmatpush1.bf16.msra.mxu0 %v9539
    %9634 = vmatprep.subr.bf16.mxu0 %v9544
    %9635 = vmatpush1.bf16.msra.mxu0 %v9543
    %9636 = vmatprep.subr.bf16.mxu0 %v9548
    %9637 = vmatpush1.bf16.msra.mxu0 %v9547
    %9638 = vmatprep.subr.bf16.mxu0 0
    %9639 = vmatpush1.bf16.msra.mxu0 0
    %9640 = vmatprep.subr.bf16.mxu0 0
    %9641 = vmatpush1.bf16.msra.mxu0 0
    %9642 = vmatprep.subr.bf16.mxu0 0
    %9643 = vmatpush1.bf16.msra.mxu0 0
    %9644 = vmatprep.subr.bf16.mxu0 0
    %9645 = vmatpush1.bf16.msra.mxu0 0
    %9646 = vmatprep.subr.bf16.mxu0 0
    %9647 = vmatpush1.bf16.msra.mxu0 0
    %9648 = vmatprep.subr.bf16.mxu0 0
    %9649 = vmatpush1.bf16.msra.mxu0 0
    %9650 = vmatprep.subr.bf16.mxu0 0
    %9651 = vmatpush1.bf16.msra.mxu0 0
    %9652 = vmatprep.subr.bf16.mxu0 0
    %9653 = vmatpush1.bf16.msra.mxu0 0
    %9654 = vmatprep.mubr.bf16.mxu0 0
    %9655 = vmatmul.mubr.bf16.gmra.mrb[0].mxu0 %v9112
    %v9656 = vpop.f32.mrb[0].mxu0
    %v9657 = vadd.f32 %v9415, %v9656
    %v9658 = vpop.f32.mrb[0].mxu0
    %v9659 = vadd.f32 %v9417, %v9658
    %v9660 = vpop.f32.mrb[0].mxu0
    %v9661 = vpop.f32.mrb[0].mxu0
    %9662 = vdwg.mxu0
    %v9663 = vadd.f32 %v9616, %v113
    %v9664 = vadd.f32 %v9618, %v114
    %v9665 = vadd.f32 %v9657, %v115
    %v9666 = vadd.f32 %v9659, %v116
    %v9667 = vxor.u32 %v9663, 2147483648
    %v9668 = vmul.f32 %v9667, 1.442695
    %v9669 = vpow.pop %v9668
    %v9670 = vadd.f32 %v9669, 1.0
    %v9671 = vrcp.pop %v9670
    %v9672 = vmul.f32 1.0, %v9671
    %v9673 = vxor.u32 %v9664, 2147483648
    %v9674 = vmul.f32 %v9673, 1.442695
    %v9675 = vpow.pop %v9674
    %v9676 = vadd.f32 %v9675, 1.0
    %v9677 = vrcp.pop %v9676
    %v9678 = vmul.f32 1.0, %v9677
    %v9679 = vtanh.pop %v9665
    %v9680 = vxor.u32 %v9666, 2147483648
    %v9681 = vmul.f32 %v9680, 1.442695
    %v9682 = vpow.pop %v9681
    %v9683 = vadd.f32 %v9682, 1.0
    %v9684 = vrcp.pop %v9683
    %v9685 = vmul.f32 1.0, %v9684
    %v9686 = vld [vmem:[#allocation3] sm:$0xff]
    %v9687 = vmul.f32 %v9678, %v9686
    %v9688 = vmul.f32 %v9672, %v9679
    %v9689 = vadd.f32 %v9687, %v9688
    %9690 = vst [vmem:[#allocation3] sm:$0xff] %v9689
    %v9691 = vtanh.pop %v9689
    %v9692 = vmul.f32 %v9685, %v9691
    %9693 = vst [vmem:[#allocation2] sm:$0xff] %v9692
    %v9694 = vld [vmem:[#allocation2] sm:$0xff]
    %v9695 = vpack.c.bf16 %v9694, %v9694
    %v9696 = vld [vmem:[#allocation12] sm:$0xf]
    %v9697 = vld [vmem:[#allocation12 + $0x4] sm:$0xf]
    %v9698 = vld [vmem:[#allocation12 + $0x8] sm:$0xf]
    %v9699 = vld [vmem:[#allocation12 + $0xc] sm:$0xf]
    %v9700 = vld [vmem:[#allocation12 + $0x10] sm:$0xf]
    %v9701 = vld [vmem:[#allocation12 + $0x14] sm:$0xf]
    %v9702 = vld [vmem:[#allocation12 + $0x18] sm:$0xf]
    %v9703 = vld [vmem:[#allocation12 + $0x1c] sm:$0xf]
    %v9704 = vld [vmem:[#allocation12 + $0x20] sm:$0xf]
    %v9705 = vld [vmem:[#allocation12 + $0x24] sm:$0xf]
    %v9706 = vld [vmem:[#allocation12 + $0x28] sm:$0xf]
    %v9707 = vld [vmem:[#allocation12 + $0x2c] sm:$0xf]
    %v9708 = vld [vmem:[#allocation12 + $0x30] sm:$0xf]
    %v9709 = vld [vmem:[#allocation12 + $0x34] sm:$0xf]
    %v9710 = vld [vmem:[#allocation12 + $0x38] sm:$0xf]
    %v9711 = vld [vmem:[#allocation12 + $0x3c] sm:$0xf]
    %v9728 = vunpack.c.l.b16 %v9696
    %v9729 = vunpack.c.l.b16 %v9697
    %v9730 = vunpack.c.l.b16 %v9698
    %v9731 = vunpack.c.l.b16 %v9699
    %v9732 = vunpack.c.l.b16 %v9700
    %v9733 = vunpack.c.l.b16 %v9701
    %v9734 = vunpack.c.l.b16 %v9702
    %v9735 = vunpack.c.l.b16 %v9703
    %v9736 = vunpack.c.l.b16 %v9704
    %v9737 = vunpack.c.l.b16 %v9705
    %v9738 = vunpack.c.l.b16 %v9706
    %v9739 = vunpack.c.l.b16 %v9707
    %v9740 = vunpack.c.l.b16 %v9708
    %v9741 = vunpack.c.l.b16 %v9709
    %v9742 = vunpack.c.l.b16 %v9710
    %v9743 = vunpack.c.l.b16 %v9711
    %v9744 = vpack.c.b16 %v9729, %v9728
    %v9745 = vpack.c.b16 %v9731, %v9730
    %v9746 = vpack.c.b16 %v9733, %v9732
    %v9747 = vpack.c.b16 %v9735, %v9734
    %v9748 = vpack.c.b16 %v9737, %v9736
    %v9749 = vpack.c.b16 %v9739, %v9738
    %v9750 = vpack.c.b16 %v9741, %v9740
    %v9751 = vpack.c.b16 %v9743, %v9742
    %9760 = vmatprep.subr.bf16.mxu0 0
    %9761 = vmatpush1.bf16.msra.mxu0 %v9744
    %9762 = vmatprep.subr.bf16.mxu0 0
    %9763 = vmatpush1.bf16.msra.mxu0 %v9745
    %9764 = vmatprep.subr.bf16.mxu0 0
    %9765 = vmatpush1.bf16.msra.mxu0 %v9746
    %9766 = vmatprep.subr.bf16.mxu0 0
    %9767 = vmatpush1.bf16.msra.mxu0 %v9747
    %9768 = vmatprep.subr.bf16.mxu0 0
    %9769 = vmatpush1.bf16.msra.mxu0 %v9748
    %9770 = vmatprep.subr.bf16.mxu0 0
    %9771 = vmatpush1.bf16.msra.mxu0 %v9749
    %9772 = vmatprep.subr.bf16.mxu0 0
    %9773 = vmatpush1.bf16.msra.mxu0 %v9750
    %9774 = vmatprep.subr.bf16.mxu0 0
    %9775 = vmatpush1.bf16.msra.mxu0 %v9751
    %9776 = vmatprep.subr.bf16.mxu0 0
    %9777 = vmatpush1.bf16.msra.mxu0 0
    %9778 = vmatprep.subr.bf16.mxu0 0
    %9779 = vmatpush1.bf16.msra.mxu0 0
    %9780 = vmatprep.subr.bf16.mxu0 0
    %9781 = vmatpush1.bf16.msra.mxu0 0
    %9782 = vmatprep.subr.bf16.mxu0 0
    %9783 = vmatpush1.bf16.msra.mxu0 0
    %9784 = vmatprep.subr.bf16.mxu0 0
    %9785 = vmatpush1.bf16.msra.mxu0 0
    %9786 = vmatprep.subr.bf16.mxu0 0
    %9787 = vmatpush1.bf16.msra.mxu0 0
    %9788 = vmatprep.subr.bf16.mxu0 0
    %9789 = vmatpush1.bf16.msra.mxu0 0
    %9790 = vmatprep.subr.bf16.mxu0 0
    %9791 = vmatpush1.bf16.msra.mxu0 0
    %9792 = vmatprep.mubr.bf16.mxu0 0
    %9793 = vmatmul.mubr.bf16.gmra.mrb[0].mxu0 %v9695
    %v9794 = vpop.f32.mrb[0].mxu0
    %v9795 = vadd.f32 %v117, %v9794
    %v9796 = vpop.f32.mrb[0].mxu0
    %v9797 = vpop.f32.mrb[0].mxu0
    %v9798 = vpop.f32.mrb[0].mxu0
    %9799 = vdwg.mxu0
    %s9800 = scalar_lea.vmem %s11, 56
    %9801 = vst [vmem:[%s9800] sm:$0xff] %v9795
    %9802 = vmax.xlane.f32.xlu0 %v9795
    %v9803 = vpop.xlane.xlu0 %9802
    %vm9804 = vcmp.ge.f32.partialorder %v9795, %v9803
    %v9805 = vsel %vm9804, %v119, 128
    %v9806 = vand.u32 %v9805, 65535
    %v9807 = vshra.s32 %v9805, 16
    %v9808 = vcvt.s32.f32 %v9806
    %v9809 = vcvt.s32.f32 %v9807
    %9810 = vmin.xlane.f32.xlu0 %v9809
    %v9811 = vpop.xlane.xlu0 %9810
    %vm9812 = vcmp.eq.f32.partialorder %v9809, %v9811
    %v9813 = vsel %vm9812, %v9808, inf
    %9814 = vmin.xlane.f32.xlu0 %v9813
    %v9815 = vpop.xlane.xlu0 %9814
    %v9816 = vcvt.f32.s32 %v9815
    %v9817 = vcvt.f32.s32 %v9811
    %v9818 = vshll.u32 %v9817, 16
    %v9819 = vadd.s32 %v9818, %v9816
    %vm9820 = vcmp.eq.s32.totalorder %v119, %v9819
    %v9821 = vsel %vm9820, 1, 0
    %v9822 = vcvt.s32.f32 %v9821
    %v9823 = vpack.c.bf16 %v9822, %v9822
    %s9824 = sld [smem:[#allocation5 + $0x7]]
    %p9825 = scmp.gt.s32.totalorder %s9824, 0
    %s9826 = scalar_lea.vmem %s2, 28
    %v9827 = vld [vmem:[%s9826] sm:$0xf]
    %s9828 = scalar_select %p9825, 1, 0
    %v9829 = vstv %s9828
    %vm9830 = vcmp.eq.s32.totalorder %v9829, 1
    %v9831 = vsel %vm9830, %v9827, %v9823
    %9832 = vst [vmem:[#allocation4] sm:$0xf] %v9831
    // Predicated region
    $region66: #{lstm_seq2seq.1} parent=1 // pred_check
      _
    $region67: #{lstm_seq2seq.1} parent=1 // pred_check_branch
      %9834 = sbr.rel (0) target = $region69
    $region68: #{lstm_seq2seq.1} parent=1 // pred_region
      _
    $region69: #{lstm_seq2seq.1} parent=1 // pred_fallthru
      _
    // Predicated region
    $region70: #{lstm_seq2seq.1} parent=1 // pred_check
      _
    $region71: #{lstm_seq2seq.1} parent=1 // pred_check_branch
      %9836 = sbr.rel (0) target = $region73
    $region72: #{lstm_seq2seq.1} parent=1 // pred_region
      _
    $region73: #{lstm_seq2seq.1} parent=1 // pred_fallthru
      _
    %9837 = vsyncpa [#allocation6], 1
    %9838 = vsyncpa [#allocation10], 1
    %9839 = vsyncpa [#allocation13], 1
    %9840 = vsyncpa [#allocation7], 1

</llo_original>
